<compile_context>
chip_gen: v7x
topology: tpu7x:2x2x1
jax: 0.10.0
libtpu: 0.0.40
codegen_flags: <defaults>
</compile_context>

<pallas_src>
import functools
import math

import jax
import jax.numpy as jnp
from jax.experimental import pallas as pl
from jax.experimental.pallas import tpu as pltpu


# ----------------------------------------------------------------------------
# Fused DMN+ forward kernel.
#   ctx_ref : (S*B, T, H)  position-encoded-input embeddings (seq-major rows s*B+b)
#   l_ref   : (T, H)       position-encoding matrix
#   q_ref   : (Q*B, H)     question token embeddings (seq-major rows t*B+b)
#   GRU params: wih/whh (H, 3H) in PyTorch gate order [r|z|n], bih/bhh (1, 3H)
#   AttnGRU: wf/wc (H, 2H) = [Wr|W] / [Ur|U], bf/bc (1, 2H)
#   out_ref : (B, V) logits
# ----------------------------------------------------------------------------
def dmn_kernel(num_hop, B, S, Q, H,
               ctx_ref, l_ref, q_ref,
               wih_f_ref, whh_f_ref, bih_f_ref, bhh_f_ref,
               wih_b_ref, whh_b_ref, bih_b_ref, bhh_b_ref,
               wih_q_ref, whh_q_ref, bih_q_ref, bhh_q_ref,
               wih_m_ref, whh_m_ref, bih_m_ref, bhh_m_ref,
               ep_w1_ref, ep_b1_ref, ep_w2_ref, ep_b2_ref,
               agru_wf_ref, agru_wc_ref, agru_bf_ref, agru_bc_ref,
               next_w_ref, next_b_ref, ans_w_ref, ans_b_ref,
               out_ref):
    f32 = jnp.float32

    def dot(a, b):
        return jnp.dot(a, b, preferred_element_type=f32)

    # ---- hoist weight / bias loads out of all loops ----------------------
    whh_f = whh_f_ref[...]; bhh_f = bhh_f_ref[...]
    whh_b = whh_b_ref[...]; bhh_b = bhh_b_ref[...]
    whh_q = whh_q_ref[...]; bhh_q = bhh_q_ref[...]
    whh_m = whh_m_ref[...]; bhh_m = bhh_m_ref[...]
    wih_m = wih_m_ref[...]; bih_m = bih_m_ref[...]
    w1 = ep_w1_ref[...]; b1 = ep_b1_ref[...]
    w2 = ep_w2_ref[...]; b2 = ep_b2_ref[...]
    agru_wf = agru_wf_ref[...]; agru_bf = agru_bf_ref[...]
    agru_wc = agru_wc_ref[...]; agru_bc = agru_bc_ref[...]
    next_w = next_w_ref[...]; next_b = next_b_ref[...]
    ans_w = ans_w_ref[...]; ans_b = ans_b_ref[...]

    def gru_step(xw, h, whh, bhh):
        # xw = x @ W_ih + b_ih (precomputed);  PyTorch gate order r, z, n.
        hw = dot(h, whh) + bhh
        r = jax.nn.sigmoid(xw[:, :H] + hw[:, :H])
        z = jax.nn.sigmoid(xw[:, H:2 * H] + hw[:, H:2 * H])
        n = jnp.tanh(xw[:, 2 * H:] + r * hw[:, 2 * H:])
        return (1.0 - z) * n + z * h

    # ---- InputModule: position encoding + bidirectional GRU (summed) -----
    pe = jnp.sum(ctx_ref[...] * l_ref[...][None, :, :], axis=1)       # (S*B, H)
    xw_f = dot(pe, wih_f_ref[...]) + bih_f_ref[...]                   # (S*B, 3H)
    xw_b = dot(pe, wih_b_ref[...]) + bih_b_ref[...]                   # (S*B, 3H)

    h_f = jnp.zeros((B, H), f32)
    h_b = jnp.zeros((B, H), f32)
    fwd = []
    bwd = [None] * S
    for s in range(S):
        h_f = gru_step(xw_f[s * B:(s + 1) * B], h_f, whh_f, bhh_f)
        fwd.append(h_f)
        sb = S - 1 - s
        h_b = gru_step(xw_b[sb * B:(sb + 1) * B], h_b, whh_b, bhh_b)
        bwd[sb] = h_b
    facts = [fwd[s] + bwd[s] for s in range(S)]                       # S x (B, H)

    # ---- QuestionModule: GRU over tokens, final hidden --------------------
    xw_q = dot(q_ref[...], wih_q_ref[...]) + bih_q_ref[...]           # (Q*B, 3H)
    q_vec = jnp.zeros((B, H), f32)
    for t in range(Q):
        q_vec = gru_step(xw_q[t * B:(t + 1) * B], q_vec, whh_q, bhh_q)

    # ---- hop-invariant precompute -----------------------------------------
    fW = [dot(facts[s], agru_wf) + agru_bf for s in range(S)]         # S x (B, 2H)
    fq = [facts[s] * q_vec for s in range(S)]                         # S x (B, H)
    afq = [jnp.abs(facts[s] - q_vec) for s in range(S)]               # S x (B, H)

    # ---- Episodic memory hops (update_rule == 1) --------------------------
    M = q_vec
    for _ in range(num_hop):
        # attention gates: z = [f*q, f*m, |f-q|, |f-m|] ; G = softmax_S(w2(tanh(w1 z)))
        cols = []
        for s in range(S):
            feat = jnp.concatenate(
                [fq[s], facts[s] * M, afq[s], jnp.abs(facts[s] - M)], axis=1)  # (B, 4H)
            hid = jnp.tanh(dot(feat, w1) + b1)                                 # (B, H)
            cols.append(dot(hid, w2))                                          # (B, 1)
        scores = jnp.concatenate(cols, axis=1) + b2                            # (B, S)
        scores = scores - jnp.max(scores, axis=1, keepdims=True)
        e = jnp.exp(scores)
        g = e / jnp.sum(e, axis=1, keepdims=True)                              # (B, S)

        # attention GRU over sentences (context C starts at zero)
        C = jnp.zeros((B, H), f32)
        for s in range(S):
            g_s = g[:, s:s + 1]                                                # (B, 1)
            cw = dot(C, agru_wc) + agru_bc                                     # (B, 2H)
            r = jax.nn.sigmoid(fW[s][:, :H] + cw[:, :H])
            h_t = jnp.tanh(fW[s][:, H:] + r * cw[:, H:])
            C = g_s * h_t + (1.0 - g_s) * C

        # new_M = ReLU(Linear([M, C, q]));  M = GRUstep(new_M, hidden=M)
        cat = jnp.concatenate([M, C, q_vec], axis=1)                           # (B, 3H)
        new_M = jax.nn.relu(dot(cat, next_w) + next_b)                         # (B, H)
        xw_m = dot(new_M, wih_m) + bih_m                                       # (B, 3H)
        M = gru_step(xw_m, M, whh_m, bhh_m)

    # ---- AnswerModule (dropout identity) -----------------------------------
    ans_in = jnp.concatenate([M, q_vec], axis=1)                               # (B, 2H)
    out_ref[...] = dot(ans_in, ans_w) + ans_b                                  # (B, V)


# ----------------------------------------------------------------------------
# Parameters (deterministic synthetic init).
# ----------------------------------------------------------------------------
def init_params(key, V, H):
    keys = list(jax.random.split(key, 32))
    it = iter(keys)

    def nrm(shape, scale):
        return scale * jax.random.normal(next(it), shape, dtype=jnp.float32)

    def gru_p():
        sh = 1.0 / math.sqrt(H)
        return (nrm((H, 3 * H), sh), nrm((H, 3 * H), sh),
                nrm((1, 3 * H), 0.01), nrm((1, 3 * H), 0.01))

    emb = jax.random.uniform(next(it), (V, H), minval=-math.sqrt(3.0),
                             maxval=math.sqrt(3.0), dtype=jnp.float32)
    return dict(
        embedding=emb,
        gru_in_fwd=gru_p(),
        gru_in_bwd=gru_p(),
        gru_q=gru_p(),
        gru_mem=gru_p(),
        ep_w1=nrm((4 * H, H), 1.0 / math.sqrt(4 * H)),
        ep_b1=nrm((1, H), 0.01),
        ep_w2=nrm((H, 1), 1.0 / math.sqrt(H)),
        ep_b2=nrm((1, 1), 0.01),
        agru_wf=nrm((H, 2 * H), 1.0 / math.sqrt(H)),
        agru_wc=nrm((H, 2 * H), 1.0 / math.sqrt(H)),
        agru_bf=nrm((1, 2 * H), 0.01),
        agru_bc=nrm((1, 2 * H), 0.01),
        next_w=nrm((3 * H, H), 1.0 / math.sqrt(3 * H)),
        next_b=nrm((1, H), 0.01),
        ans_w=nrm((2 * H, V), 1.0 / math.sqrt(2 * H)),
        ans_b=nrm((1, V), 0.01),
    )


# ----------------------------------------------------------------------------
# DMNPlus forward: XLA glue (embedding gather, layout) + one fused Pallas call.
# ----------------------------------------------------------------------------
@functools.partial(jax.jit, static_argnames=("num_hop",))
def dmn_forward(params, contexts, questions, num_hop=3):
    B, S, T = contexts.shape
    Q = questions.shape[1]
    H = params["embedding"].shape[1]
    V = params["ans_b"].shape[1]
    emb = params["embedding"]

    # word embedding lookups (glue)
    ctx_emb = emb[contexts].astype(jnp.float32)     # (B, S, T, H)
    q_emb = emb[questions].astype(jnp.float32)      # (B, Q, H)

    # seq-major flattening so in-kernel row slices [step*B:(step+1)*B] are static
    ctx_flat = jnp.transpose(ctx_emb, (1, 0, 2, 3)).reshape(S * B, T, H)
    q_flat = jnp.transpose(q_emb, (1, 0, 2)).reshape(Q * B, H)

    # position encoding matrix l[t, e] (0-indexed, matches reference formula)
    dt = float(max(T - 1, 1))
    de = float(max(H - 1, 1))
    t_idx = jnp.arange(T, dtype=jnp.float32)[:, None] / dt
    e_idx = jnp.arange(H, dtype=jnp.float32)[None, :] / de
    l = 1.0 - t_idx - e_idx * (1.0 - 2.0 * t_idx)   # (T, H)

    args = (ctx_flat, l, q_flat,
            *params["gru_in_fwd"], *params["gru_in_bwd"],
            *params["gru_q"], *params["gru_mem"],
            params["ep_w1"], params["ep_b1"], params["ep_w2"], params["ep_b2"],
            params["agru_wf"], params["agru_wc"],
            params["agru_bf"], params["agru_bc"],
            params["next_w"], params["next_b"],
            params["ans_w"], params["ans_b"])

    kernel = functools.partial(dmn_kernel, num_hop, B, S, Q, H)
    vmem_spec = pl.BlockSpec(memory_space=pltpu.MemorySpace.VMEM)
    preds = pl.pallas_call(
        kernel,
        out_shape=jax.ShapeDtypeStruct((B, V), jnp.float32),
        in_specs=[vmem_spec] * len(args),
        out_specs=vmem_spec,
    )(*args)
    return preds                                    # (B, V)


if __name__ == "__main__":
    B, S, T, Q, H, V = 2, 6, 7, 5, 32, 24
    NUM_HOP = 3

    key = jax.random.PRNGKey(0)
    pkey, ckey, qkey = jax.random.split(key, 3)
    params = init_params(pkey, V, H)
    contexts = jax.random.randint(ckey, (B, S, T), 0, V, dtype=jnp.int32)
    questions = jax.random.randint(qkey, (B, Q), 0, V, dtype=jnp.int32)

    preds = dmn_forward(params, contexts, questions, num_hop=NUM_HOP)
    preds = jax.block_until_ready(preds)
    assert preds.shape == (B, V) and preds.dtype == jnp.float32
    assert bool(jnp.all(jnp.isfinite(preds)))
    print("KERNEL_OK")
</pallas_src>

<mosaic_0001>
module attributes {stable_mosaic.version = 11 : i64} {
  func.func @dmn_kernel(%arg0: memref<12x7x32xf32, #tpu.memory_space<vmem>>, %arg1: memref<7x32xf32, #tpu.memory_space<vmem>>, %arg2: memref<10x32xf32, #tpu.memory_space<vmem>>, %arg3: memref<32x96xf32, #tpu.memory_space<vmem>>, %arg4: memref<32x96xf32, #tpu.memory_space<vmem>>, %arg5: memref<1x96xf32, #tpu.memory_space<vmem>>, %arg6: memref<1x96xf32, #tpu.memory_space<vmem>>, %arg7: memref<32x96xf32, #tpu.memory_space<vmem>>, %arg8: memref<32x96xf32, #tpu.memory_space<vmem>>, %arg9: memref<1x96xf32, #tpu.memory_space<vmem>>, %arg10: memref<1x96xf32, #tpu.memory_space<vmem>>, %arg11: memref<32x96xf32, #tpu.memory_space<vmem>>, %arg12: memref<32x96xf32, #tpu.memory_space<vmem>>, %arg13: memref<1x96xf32, #tpu.memory_space<vmem>>, %arg14: memref<1x96xf32, #tpu.memory_space<vmem>>, %arg15: memref<32x96xf32, #tpu.memory_space<vmem>>, %arg16: memref<32x96xf32, #tpu.memory_space<vmem>>, %arg17: memref<1x96xf32, #tpu.memory_space<vmem>>, %arg18: memref<1x96xf32, #tpu.memory_space<vmem>>, %arg19: memref<128x32xf32, #tpu.memory_space<vmem>>, %arg20: memref<1x32xf32, #tpu.memory_space<vmem>>, %arg21: memref<32x1xf32, #tpu.memory_space<vmem>>, %arg22: memref<1x1xf32, #tpu.memory_space<vmem>>, %arg23: memref<32x64xf32, #tpu.memory_space<vmem>>, %arg24: memref<32x64xf32, #tpu.memory_space<vmem>>, %arg25: memref<1x64xf32, #tpu.memory_space<vmem>>, %arg26: memref<1x64xf32, #tpu.memory_space<vmem>>, %arg27: memref<96x32xf32, #tpu.memory_space<vmem>>, %arg28: memref<1x32xf32, #tpu.memory_space<vmem>>, %arg29: memref<64x24xf32, #tpu.memory_space<vmem>>, %arg30: memref<1x24xf32, #tpu.memory_space<vmem>>, %arg31: memref<2x24xf32, #tpu.memory_space<vmem>>) attributes {dimension_semantics = [], scalar_prefetch = 0 : i64, scratch_operands = 0 : i64, tpu.core_type = #tpu.core_type<tc>} {
    %c0 = arith.constant 0 : index
    %c0_0 = arith.constant 0 : index
    %0 = vector.load %arg4[%c0, %c0_0] : memref<32x96xf32, #tpu.memory_space<vmem>>, vector<32x96xf32>
    %c0_1 = arith.constant 0 : index
    %c0_2 = arith.constant 0 : index
    %1 = vector.load %arg6[%c0_1, %c0_2] : memref<1x96xf32, #tpu.memory_space<vmem>>, vector<1x96xf32>
    %c0_3 = arith.constant 0 : index
    %c0_4 = arith.constant 0 : index
    %2 = vector.load %arg8[%c0_3, %c0_4] : memref<32x96xf32, #tpu.memory_space<vmem>>, vector<32x96xf32>
    %c0_5 = arith.constant 0 : index
    %c0_6 = arith.constant 0 : index
    %3 = vector.load %arg10[%c0_5, %c0_6] : memref<1x96xf32, #tpu.memory_space<vmem>>, vector<1x96xf32>
    %c0_7 = arith.constant 0 : index
    %c0_8 = arith.constant 0 : index
    %4 = vector.load %arg12[%c0_7, %c0_8] : memref<32x96xf32, #tpu.memory_space<vmem>>, vector<32x96xf32>
    %c0_9 = arith.constant 0 : index
    %c0_10 = arith.constant 0 : index
    %5 = vector.load %arg14[%c0_9, %c0_10] : memref<1x96xf32, #tpu.memory_space<vmem>>, vector<1x96xf32>
    %c0_11 = arith.constant 0 : index
    %c0_12 = arith.constant 0 : index
    %6 = vector.load %arg16[%c0_11, %c0_12] : memref<32x96xf32, #tpu.memory_space<vmem>>, vector<32x96xf32>
    %c0_13 = arith.constant 0 : index
    %c0_14 = arith.constant 0 : index
    %7 = vector.load %arg18[%c0_13, %c0_14] : memref<1x96xf32, #tpu.memory_space<vmem>>, vector<1x96xf32>
    %c0_15 = arith.constant 0 : index
    %c0_16 = arith.constant 0 : index
    %8 = vector.load %arg15[%c0_15, %c0_16] : memref<32x96xf32, #tpu.memory_space<vmem>>, vector<32x96xf32>
    %c0_17 = arith.constant 0 : index
    %c0_18 = arith.constant 0 : index
    %9 = vector.load %arg17[%c0_17, %c0_18] : memref<1x96xf32, #tpu.memory_space<vmem>>, vector<1x96xf32>
    %c0_19 = arith.constant 0 : index
    %c0_20 = arith.constant 0 : index
    %10 = vector.load %arg19[%c0_19, %c0_20] : memref<128x32xf32, #tpu.memory_space<vmem>>, vector<128x32xf32>
    %c0_21 = arith.constant 0 : index
    %c0_22 = arith.constant 0 : index
    %11 = vector.load %arg20[%c0_21, %c0_22] : memref<1x32xf32, #tpu.memory_space<vmem>>, vector<1x32xf32>
    %c0_23 = arith.constant 0 : index
    %c0_24 = arith.constant 0 : index
    %12 = vector.load %arg21[%c0_23, %c0_24] : memref<32x1xf32, #tpu.memory_space<vmem>>, vector<32x1xf32>
    %c0_25 = arith.constant 0 : index
    %c0_26 = arith.constant 0 : index
    %13 = vector.load %arg22[%c0_25, %c0_26] : memref<1x1xf32, #tpu.memory_space<vmem>>, vector<1x1xf32>
    %c0_27 = arith.constant 0 : index
    %c0_28 = arith.constant 0 : index
    %14 = vector.load %arg23[%c0_27, %c0_28] : memref<32x64xf32, #tpu.memory_space<vmem>>, vector<32x64xf32>
    %c0_29 = arith.constant 0 : index
    %c0_30 = arith.constant 0 : index
    %15 = vector.load %arg25[%c0_29, %c0_30] : memref<1x64xf32, #tpu.memory_space<vmem>>, vector<1x64xf32>
    %c0_31 = arith.constant 0 : index
    %c0_32 = arith.constant 0 : index
    %16 = vector.load %arg24[%c0_31, %c0_32] : memref<32x64xf32, #tpu.memory_space<vmem>>, vector<32x64xf32>
    %c0_33 = arith.constant 0 : index
    %c0_34 = arith.constant 0 : index
    %17 = vector.load %arg26[%c0_33, %c0_34] : memref<1x64xf32, #tpu.memory_space<vmem>>, vector<1x64xf32>
    %c0_35 = arith.constant 0 : index
    %c0_36 = arith.constant 0 : index
    %18 = vector.load %arg27[%c0_35, %c0_36] : memref<96x32xf32, #tpu.memory_space<vmem>>, vector<96x32xf32>
    %c0_37 = arith.constant 0 : index
    %c0_38 = arith.constant 0 : index
    %19 = vector.load %arg28[%c0_37, %c0_38] : memref<1x32xf32, #tpu.memory_space<vmem>>, vector<1x32xf32>
    %c0_39 = arith.constant 0 : index
    %c0_40 = arith.constant 0 : index
    %20 = vector.load %arg29[%c0_39, %c0_40] : memref<64x24xf32, #tpu.memory_space<vmem>>, vector<64x24xf32>
    %c0_41 = arith.constant 0 : index
    %c0_42 = arith.constant 0 : index
    %21 = vector.load %arg30[%c0_41, %c0_42] : memref<1x24xf32, #tpu.memory_space<vmem>>, vector<1x24xf32>
    %c0_43 = arith.constant 0 : index
    %c0_44 = arith.constant 0 : index
    %c0_45 = arith.constant 0 : index
    %22 = vector.load %arg0[%c0_43, %c0_44, %c0_45] : memref<12x7x32xf32, #tpu.memory_space<vmem>>, vector<12x7x32xf32>
    %c0_46 = arith.constant 0 : index
    %c0_47 = arith.constant 0 : index
    %23 = vector.load %arg1[%c0_46, %c0_47] : memref<7x32xf32, #tpu.memory_space<vmem>>, vector<7x32xf32>
    %24 = vector.shape_cast %23 : vector<7x32xf32> to vector<1x7x32xf32>
    %25 = vector.broadcast %24 : vector<1x7x32xf32> to vector<12x7x32xf32>
    %26 = arith.mulf %22, %25 : vector<12x7x32xf32>
    %cst = arith.constant dense<0.000000e+00> : vector<12x32xf32>
    %27 = vector.multi_reduction <add>, %26, %cst [1] : vector<12x7x32xf32> to vector<12x32xf32>
    %c0_48 = arith.constant 0 : index
    %c0_49 = arith.constant 0 : index
    %28 = vector.load %arg3[%c0_48, %c0_49] : memref<32x96xf32, #tpu.memory_space<vmem>>, vector<32x96xf32>
    %cst_50 = arith.constant dense<0.000000e+00> : vector<12x96xf32>
    %29 = tpu.matmul %27, %28, %cst_50 {dimension_numbers = #tpu.dot_dimension_numbers<[1], [0], [0], [1], [0, 0, 1, 1], [], []>} : vector<12x32xf32>, vector<32x96xf32>, vector<12x96xf32> -> vector<12x96xf32>
    %c0_51 = arith.constant 0 : index
    %c0_52 = arith.constant 0 : index
    %30 = vector.load %arg5[%c0_51, %c0_52] : memref<1x96xf32, #tpu.memory_space<vmem>>, vector<1x96xf32>
    %31 = vector.broadcast %30 : vector<1x96xf32> to vector<12x96xf32>
    %32 = arith.addf %29, %31 : vector<12x96xf32>
    %c0_53 = arith.constant 0 : index
    %c0_54 = arith.constant 0 : index
    %33 = vector.load %arg7[%c0_53, %c0_54] : memref<32x96xf32, #tpu.memory_space<vmem>>, vector<32x96xf32>
    %cst_55 = arith.constant dense<0.000000e+00> : vector<12x96xf32>
    %34 = tpu.matmul %27, %33, %cst_55 {dimension_numbers = #tpu.dot_dimension_numbers<[1], [0], [0], [1], [0, 0, 1, 1], [], []>} : vector<12x32xf32>, vector<32x96xf32>, vector<12x96xf32> -> vector<12x96xf32>
    %c0_56 = arith.constant 0 : index
    %c0_57 = arith.constant 0 : index
    %35 = vector.load %arg9[%c0_56, %c0_57] : memref<1x96xf32, #tpu.memory_space<vmem>>, vector<1x96xf32>
    %36 = vector.broadcast %35 : vector<1x96xf32> to vector<12x96xf32>
    %37 = arith.addf %34, %36 : vector<12x96xf32>
    %cst_58 = arith.constant 0.000000e+00 : f32
    %38 = vector.broadcast %cst_58 : f32 to vector<2x32xf32>
    %cst_59 = arith.constant 0.000000e+00 : f32
    %39 = vector.broadcast %cst_59 : f32 to vector<2x32xf32>
    %40 = vector.extract_strided_slice %32 {offsets = [0, 0], sizes = [2, 96], strides = [1, 1]} : vector<12x96xf32> to vector<2x96xf32>
    %cst_60 = arith.constant dense<0.000000e+00> : vector<2x96xf32>
    %41 = tpu.matmul %38, %0, %cst_60 {dimension_numbers = #tpu.dot_dimension_numbers<[1], [0], [0], [1], [0, 0, 1, 1], [], []>} : vector<2x32xf32>, vector<32x96xf32>, vector<2x96xf32> -> vector<2x96xf32>
    %42 = vector.broadcast %1 : vector<1x96xf32> to vector<2x96xf32>
    %43 = arith.addf %41, %42 : vector<2x96xf32>
    %44 = vector.extract_strided_slice %40 {offsets = [0, 0], sizes = [2, 32], strides = [1, 1]} : vector<2x96xf32> to vector<2x32xf32>
    %45 = vector.extract_strided_slice %43 {offsets = [0, 0], sizes = [2, 32], strides = [1, 1]} : vector<2x96xf32> to vector<2x32xf32>
    %46 = arith.addf %44, %45 : vector<2x32xf32>
    %47 = arith.negf %46 : vector<2x32xf32>
    %48 = math.exp %47 : vector<2x32xf32>
    %cst_61 = arith.constant 1.000000e+00 : f32
    %49 = vector.broadcast %cst_61 : f32 to vector<2x32xf32>
    %50 = arith.addf %49, %48 : vector<2x32xf32>
    %51 = arith.divf %49, %50 : vector<2x32xf32>
    %52 = vector.extract_strided_slice %40 {offsets = [0, 32], sizes = [2, 32], strides = [1, 1]} : vector<2x96xf32> to vector<2x32xf32>
    %53 = vector.extract_strided_slice %43 {offsets = [0, 32], sizes = [2, 32], strides = [1, 1]} : vector<2x96xf32> to vector<2x32xf32>
    %54 = arith.addf %52, %53 : vector<2x32xf32>
    %55 = arith.negf %54 : vector<2x32xf32>
    %56 = math.exp %55 : vector<2x32xf32>
    %cst_62 = arith.constant 1.000000e+00 : f32
    %57 = vector.broadcast %cst_62 : f32 to vector<2x32xf32>
    %58 = arith.addf %57, %56 : vector<2x32xf32>
    %59 = arith.divf %57, %58 : vector<2x32xf32>
    %60 = vector.extract_strided_slice %40 {offsets = [0, 64], sizes = [2, 32], strides = [1, 1]} : vector<2x96xf32> to vector<2x32xf32>
    %61 = vector.extract_strided_slice %43 {offsets = [0, 64], sizes = [2, 32], strides = [1, 1]} : vector<2x96xf32> to vector<2x32xf32>
    %62 = arith.mulf %51, %61 : vector<2x32xf32>
    %63 = arith.addf %60, %62 : vector<2x32xf32>
    %64 = math.tanh %63 : vector<2x32xf32>
    %cst_63 = arith.constant 1.000000e+00 : f32
    %65 = vector.broadcast %cst_63 : f32 to vector<2x32xf32>
    %66 = arith.subf %65, %59 : vector<2x32xf32>
    %67 = arith.mulf %66, %64 : vector<2x32xf32>
    %68 = arith.mulf %59, %38 : vector<2x32xf32>
    %69 = arith.addf %67, %68 : vector<2x32xf32>
    %70 = vector.extract_strided_slice %37 {offsets = [10, 0], sizes = [2, 96], strides = [1, 1]} : vector<12x96xf32> to vector<2x96xf32>
    %cst_64 = arith.constant dense<0.000000e+00> : vector<2x96xf32>
    %71 = tpu.matmul %39, %2, %cst_64 {dimension_numbers = #tpu.dot_dimension_numbers<[1], [0], [0], [1], [0, 0, 1, 1], [], []>} : vector<2x32xf32>, vector<32x96xf32>, vector<2x96xf32> -> vector<2x96xf32>
    %72 = vector.broadcast %3 : vector<1x96xf32> to vector<2x96xf32>
    %73 = arith.addf %71, %72 : vector<2x96xf32>
    %74 = vector.extract_strided_slice %70 {offsets = [0, 0], sizes = [2, 32], strides = [1, 1]} : vector<2x96xf32> to vector<2x32xf32>
    %75 = vector.extract_strided_slice %73 {offsets = [0, 0], sizes = [2, 32], strides = [1, 1]} : vector<2x96xf32> to vector<2x32xf32>
    %76 = arith.addf %74, %75 : vector<2x32xf32>
    %77 = arith.negf %76 : vector<2x32xf32>
    %78 = math.exp %77 : vector<2x32xf32>
    %cst_65 = arith.constant 1.000000e+00 : f32
    %79 = vector.broadcast %cst_65 : f32 to vector<2x32xf32>
    %80 = arith.addf %79, %78 : vector<2x32xf32>
    %81 = arith.divf %79, %80 : vector<2x32xf32>
    %82 = vector.extract_strided_slice %70 {offsets = [0, 32], sizes = [2, 32], strides = [1, 1]} : vector<2x96xf32> to vector<2x32xf32>
    %83 = vector.extract_strided_slice %73 {offsets = [0, 32], sizes = [2, 32], strides = [1, 1]} : vector<2x96xf32> to vector<2x32xf32>
    %84 = arith.addf %82, %83 : vector<2x32xf32>
    %85 = arith.negf %84 : vector<2x32xf32>
    %86 = math.exp %85 : vector<2x32xf32>
    %cst_66 = arith.constant 1.000000e+00 : f32
    %87 = vector.broadcast %cst_66 : f32 to vector<2x32xf32>
    %88 = arith.addf %87, %86 : vector<2x32xf32>
    %89 = arith.divf %87, %88 : vector<2x32xf32>
    %90 = vector.extract_strided_slice %70 {offsets = [0, 64], sizes = [2, 32], strides = [1, 1]} : vector<2x96xf32> to vector<2x32xf32>
    %91 = vector.extract_strided_slice %73 {offsets = [0, 64], sizes = [2, 32], strides = [1, 1]} : vector<2x96xf32> to vector<2x32xf32>
    %92 = arith.mulf %81, %91 : vector<2x32xf32>
    %93 = arith.addf %90, %92 : vector<2x32xf32>
    %94 = math.tanh %93 : vector<2x32xf32>
    %cst_67 = arith.constant 1.000000e+00 : f32
    %95 = vector.broadcast %cst_67 : f32 to vector<2x32xf32>
    %96 = arith.subf %95, %89 : vector<2x32xf32>
    %97 = arith.mulf %96, %94 : vector<2x32xf32>
    %98 = arith.mulf %89, %39 : vector<2x32xf32>
    %99 = arith.addf %97, %98 : vector<2x32xf32>
    %100 = vector.extract_strided_slice %32 {offsets = [2, 0], sizes = [2, 96], strides = [1, 1]} : vector<12x96xf32> to vector<2x96xf32>
    %cst_68 = arith.constant dense<0.000000e+00> : vector<2x96xf32>
    %101 = tpu.matmul %69, %0, %cst_68 {dimension_numbers = #tpu.dot_dimension_numbers<[1], [0], [0], [1], [0, 0, 1, 1], [], []>} : vector<2x32xf32>, vector<32x96xf32>, vector<2x96xf32> -> vector<2x96xf32>
    %102 = vector.broadcast %1 : vector<1x96xf32> to vector<2x96xf32>
    %103 = arith.addf %101, %102 : vector<2x96xf32>
    %104 = vector.extract_strided_slice %100 {offsets = [0, 0], sizes = [2, 32], strides = [1, 1]} : vector<2x96xf32> to vector<2x32xf32>
    %105 = vector.extract_strided_slice %103 {offsets = [0, 0], sizes = [2, 32], strides = [1, 1]} : vector<2x96xf32> to vector<2x32xf32>
    %106 = arith.addf %104, %105 : vector<2x32xf32>
    %107 = arith.negf %106 : vector<2x32xf32>
    %108 = math.exp %107 : vector<2x32xf32>
    %cst_69 = arith.constant 1.000000e+00 : f32
    %109 = vector.broadcast %cst_69 : f32 to vector<2x32xf32>
    %110 = arith.addf %109, %108 : vector<2x32xf32>
    %111 = arith.divf %109, %110 : vector<2x32xf32>
    %112 = vector.extract_strided_slice %100 {offsets = [0, 32], sizes = [2, 32], strides = [1, 1]} : vector<2x96xf32> to vector<2x32xf32>
    %113 = vector.extract_strided_slice %103 {offsets = [0, 32], sizes = [2, 32], strides = [1, 1]} : vector<2x96xf32> to vector<2x32xf32>
    %114 = arith.addf %112, %113 : vector<2x32xf32>
    %115 = arith.negf %114 : vector<2x32xf32>
    %116 = math.exp %115 : vector<2x32xf32>
    %cst_70 = arith.constant 1.000000e+00 : f32
    %117 = vector.broadcast %cst_70 : f32 to vector<2x32xf32>
    %118 = arith.addf %117, %116 : vector<2x32xf32>
    %119 = arith.divf %117, %118 : vector<2x32xf32>
    %120 = vector.extract_strided_slice %100 {offsets = [0, 64], sizes = [2, 32], strides = [1, 1]} : vector<2x96xf32> to vector<2x32xf32>
    %121 = vector.extract_strided_slice %103 {offsets = [0, 64], sizes = [2, 32], strides = [1, 1]} : vector<2x96xf32> to vector<2x32xf32>
    %122 = arith.mulf %111, %121 : vector<2x32xf32>
    %123 = arith.addf %120, %122 : vector<2x32xf32>
    %124 = math.tanh %123 : vector<2x32xf32>
    %cst_71 = arith.constant 1.000000e+00 : f32
    %125 = vector.broadcast %cst_71 : f32 to vector<2x32xf32>
    %126 = arith.subf %125, %119 : vector<2x32xf32>
    %127 = arith.mulf %126, %124 : vector<2x32xf32>
    %128 = arith.mulf %119, %69 : vector<2x32xf32>
    %129 = arith.addf %127, %128 : vector<2x32xf32>
    %130 = vector.extract_strided_slice %37 {offsets = [8, 0], sizes = [2, 96], strides = [1, 1]} : vector<12x96xf32> to vector<2x96xf32>
    %cst_72 = arith.constant dense<0.000000e+00> : vector<2x96xf32>
    %131 = tpu.matmul %99, %2, %cst_72 {dimension_numbers = #tpu.dot_dimension_numbers<[1], [0], [0], [1], [0, 0, 1, 1], [], []>} : vector<2x32xf32>, vector<32x96xf32>, vector<2x96xf32> -> vector<2x96xf32>
    %132 = vector.broadcast %3 : vector<1x96xf32> to vector<2x96xf32>
    %133 = arith.addf %131, %132 : vector<2x96xf32>
    %134 = vector.extract_strided_slice %130 {offsets = [0, 0], sizes = [2, 32], strides = [1, 1]} : vector<2x96xf32> to vector<2x32xf32>
    %135 = vector.extract_strided_slice %133 {offsets = [0, 0], sizes = [2, 32], strides = [1, 1]} : vector<2x96xf32> to vector<2x32xf32>
    %136 = arith.addf %134, %135 : vector<2x32xf32>
    %137 = arith.negf %136 : vector<2x32xf32>
    %138 = math.exp %137 : vector<2x32xf32>
    %cst_73 = arith.constant 1.000000e+00 : f32
    %139 = vector.broadcast %cst_73 : f32 to vector<2x32xf32>
    %140 = arith.addf %139, %138 : vector<2x32xf32>
    %141 = arith.divf %139, %140 : vector<2x32xf32>
    %142 = vector.extract_strided_slice %130 {offsets = [0, 32], sizes = [2, 32], strides = [1, 1]} : vector<2x96xf32> to vector<2x32xf32>
    %143 = vector.extract_strided_slice %133 {offsets = [0, 32], sizes = [2, 32], strides = [1, 1]} : vector<2x96xf32> to vector<2x32xf32>
    %144 = arith.addf %142, %143 : vector<2x32xf32>
    %145 = arith.negf %144 : vector<2x32xf32>
    %146 = math.exp %145 : vector<2x32xf32>
    %cst_74 = arith.constant 1.000000e+00 : f32
    %147 = vector.broadcast %cst_74 : f32 to vector<2x32xf32>
    %148 = arith.addf %147, %146 : vector<2x32xf32>
    %149 = arith.divf %147, %148 : vector<2x32xf32>
    %150 = vector.extract_strided_slice %130 {offsets = [0, 64], sizes = [2, 32], strides = [1, 1]} : vector<2x96xf32> to vector<2x32xf32>
    %151 = vector.extract_strided_slice %133 {offsets = [0, 64], sizes = [2, 32], strides = [1, 1]} : vector<2x96xf32> to vector<2x32xf32>
    %152 = arith.mulf %141, %151 : vector<2x32xf32>
    %153 = arith.addf %150, %152 : vector<2x32xf32>
    %154 = math.tanh %153 : vector<2x32xf32>
    %cst_75 = arith.constant 1.000000e+00 : f32
    %155 = vector.broadcast %cst_75 : f32 to vector<2x32xf32>
    %156 = arith.subf %155, %149 : vector<2x32xf32>
    %157 = arith.mulf %156, %154 : vector<2x32xf32>
    %158 = arith.mulf %149, %99 : vector<2x32xf32>
    %159 = arith.addf %157, %158 : vector<2x32xf32>
    %160 = vector.extract_strided_slice %32 {offsets = [4, 0], sizes = [2, 96], strides = [1, 1]} : vector<12x96xf32> to vector<2x96xf32>
    %cst_76 = arith.constant dense<0.000000e+00> : vector<2x96xf32>
    %161 = tpu.matmul %129, %0, %cst_76 {dimension_numbers = #tpu.dot_dimension_numbers<[1], [0], [0], [1], [0, 0, 1, 1], [], []>} : vector<2x32xf32>, vector<32x96xf32>, vector<2x96xf32> -> vector<2x96xf32>
    %162 = vector.broadcast %1 : vector<1x96xf32> to vector<2x96xf32>
    %163 = arith.addf %161, %162 : vector<2x96xf32>
    %164 = vector.extract_strided_slice %160 {offsets = [0, 0], sizes = [2, 32], strides = [1, 1]} : vector<2x96xf32> to vector<2x32xf32>
    %165 = vector.extract_strided_slice %163 {offsets = [0, 0], sizes = [2, 32], strides = [1, 1]} : vector<2x96xf32> to vector<2x32xf32>
    %166 = arith.addf %164, %165 : vector<2x32xf32>
    %167 = arith.negf %166 : vector<2x32xf32>
    %168 = math.exp %167 : vector<2x32xf32>
    %cst_77 = arith.constant 1.000000e+00 : f32
    %169 = vector.broadcast %cst_77 : f32 to vector<2x32xf32>
    %170 = arith.addf %169, %168 : vector<2x32xf32>
    %171 = arith.divf %169, %170 : vector<2x32xf32>
    %172 = vector.extract_strided_slice %160 {offsets = [0, 32], sizes = [2, 32], strides = [1, 1]} : vector<2x96xf32> to vector<2x32xf32>
    %173 = vector.extract_strided_slice %163 {offsets = [0, 32], sizes = [2, 32], strides = [1, 1]} : vector<2x96xf32> to vector<2x32xf32>
    %174 = arith.addf %172, %173 : vector<2x32xf32>
    %175 = arith.negf %174 : vector<2x32xf32>
    %176 = math.exp %175 : vector<2x32xf32>
    %cst_78 = arith.constant 1.000000e+00 : f32
    %177 = vector.broadcast %cst_78 : f32 to vector<2x32xf32>
    %178 = arith.addf %177, %176 : vector<2x32xf32>
    %179 = arith.divf %177, %178 : vector<2x32xf32>
    %180 = vector.extract_strided_slice %160 {offsets = [0, 64], sizes = [2, 32], strides = [1, 1]} : vector<2x96xf32> to vector<2x32xf32>
    %181 = vector.extract_strided_slice %163 {offsets = [0, 64], sizes = [2, 32], strides = [1, 1]} : vector<2x96xf32> to vector<2x32xf32>
    %182 = arith.mulf %171, %181 : vector<2x32xf32>
    %183 = arith.addf %180, %182 : vector<2x32xf32>
    %184 = math.tanh %183 : vector<2x32xf32>
    %cst_79 = arith.constant 1.000000e+00 : f32
    %185 = vector.broadcast %cst_79 : f32 to vector<2x32xf32>
    %186 = arith.subf %185, %179 : vector<2x32xf32>
    %187 = arith.mulf %186, %184 : vector<2x32xf32>
    %188 = arith.mulf %179, %129 : vector<2x32xf32>
    %189 = arith.addf %187, %188 : vector<2x32xf32>
    %190 = vector.extract_strided_slice %37 {offsets = [6, 0], sizes = [2, 96], strides = [1, 1]} : vector<12x96xf32> to vector<2x96xf32>
    %cst_80 = arith.constant dense<0.000000e+00> : vector<2x96xf32>
    %191 = tpu.matmul %159, %2, %cst_80 {dimension_numbers = #tpu.dot_dimension_numbers<[1], [0], [0], [1], [0, 0, 1, 1], [], []>} : vector<2x32xf32>, vector<32x96xf32>, vector<2x96xf32> -> vector<2x96xf32>
    %192 = vector.broadcast %3 : vector<1x96xf32> to vector<2x96xf32>
    %193 = arith.addf %191, %192 : vector<2x96xf32>
    %194 = vector.extract_strided_slice %190 {offsets = [0, 0], sizes = [2, 32], strides = [1, 1]} : vector<2x96xf32> to vector<2x32xf32>
    %195 = vector.extract_strided_slice %193 {offsets = [0, 0], sizes = [2, 32], strides = [1, 1]} : vector<2x96xf32> to vector<2x32xf32>
    %196 = arith.addf %194, %195 : vector<2x32xf32>
    %197 = arith.negf %196 : vector<2x32xf32>
    %198 = math.exp %197 : vector<2x32xf32>
    %cst_81 = arith.constant 1.000000e+00 : f32
    %199 = vector.broadcast %cst_81 : f32 to vector<2x32xf32>
    %200 = arith.addf %199, %198 : vector<2x32xf32>
    %201 = arith.divf %199, %200 : vector<2x32xf32>
    %202 = vector.extract_strided_slice %190 {offsets = [0, 32], sizes = [2, 32], strides = [1, 1]} : vector<2x96xf32> to vector<2x32xf32>
    %203 = vector.extract_strided_slice %193 {offsets = [0, 32], sizes = [2, 32], strides = [1, 1]} : vector<2x96xf32> to vector<2x32xf32>
    %204 = arith.addf %202, %203 : vector<2x32xf32>
    %205 = arith.negf %204 : vector<2x32xf32>
    %206 = math.exp %205 : vector<2x32xf32>
    %cst_82 = arith.constant 1.000000e+00 : f32
    %207 = vector.broadcast %cst_82 : f32 to vector<2x32xf32>
    %208 = arith.addf %207, %206 : vector<2x32xf32>
    %209 = arith.divf %207, %208 : vector<2x32xf32>
    %210 = vector.extract_strided_slice %190 {offsets = [0, 64], sizes = [2, 32], strides = [1, 1]} : vector<2x96xf32> to vector<2x32xf32>
    %211 = vector.extract_strided_slice %193 {offsets = [0, 64], sizes = [2, 32], strides = [1, 1]} : vector<2x96xf32> to vector<2x32xf32>
    %212 = arith.mulf %201, %211 : vector<2x32xf32>
    %213 = arith.addf %210, %212 : vector<2x32xf32>
    %214 = math.tanh %213 : vector<2x32xf32>
    %cst_83 = arith.constant 1.000000e+00 : f32
    %215 = vector.broadcast %cst_83 : f32 to vector<2x32xf32>
    %216 = arith.subf %215, %209 : vector<2x32xf32>
    %217 = arith.mulf %216, %214 : vector<2x32xf32>
    %218 = arith.mulf %209, %159 : vector<2x32xf32>
    %219 = arith.addf %217, %218 : vector<2x32xf32>
    %220 = vector.extract_strided_slice %32 {offsets = [6, 0], sizes = [2, 96], strides = [1, 1]} : vector<12x96xf32> to vector<2x96xf32>
    %cst_84 = arith.constant dense<0.000000e+00> : vector<2x96xf32>
    %221 = tpu.matmul %189, %0, %cst_84 {dimension_numbers = #tpu.dot_dimension_numbers<[1], [0], [0], [1], [0, 0, 1, 1], [], []>} : vector<2x32xf32>, vector<32x96xf32>, vector<2x96xf32> -> vector<2x96xf32>
    %222 = vector.broadcast %1 : vector<1x96xf32> to vector<2x96xf32>
    %223 = arith.addf %221, %222 : vector<2x96xf32>
    %224 = vector.extract_strided_slice %220 {offsets = [0, 0], sizes = [2, 32], strides = [1, 1]} : vector<2x96xf32> to vector<2x32xf32>
    %225 = vector.extract_strided_slice %223 {offsets = [0, 0], sizes = [2, 32], strides = [1, 1]} : vector<2x96xf32> to vector<2x32xf32>
    %226 = arith.addf %224, %225 : vector<2x32xf32>
    %227 = arith.negf %226 : vector<2x32xf32>
    %228 = math.exp %227 : vector<2x32xf32>
    %cst_85 = arith.constant 1.000000e+00 : f32
    %229 = vector.broadcast %cst_85 : f32 to vector<2x32xf32>
    %230 = arith.addf %229, %228 : vector<2x32xf32>
    %231 = arith.divf %229, %230 : vector<2x32xf32>
    %232 = vector.extract_strided_slice %220 {offsets = [0, 32], sizes = [2, 32], strides = [1, 1]} : vector<2x96xf32> to vector<2x32xf32>
    %233 = vector.extract_strided_slice %223 {offsets = [0, 32], sizes = [2, 32], strides = [1, 1]} : vector<2x96xf32> to vector<2x32xf32>
    %234 = arith.addf %232, %233 : vector<2x32xf32>
    %235 = arith.negf %234 : vector<2x32xf32>
    %236 = math.exp %235 : vector<2x32xf32>
    %cst_86 = arith.constant 1.000000e+00 : f32
    %237 = vector.broadcast %cst_86 : f32 to vector<2x32xf32>
    %238 = arith.addf %237, %236 : vector<2x32xf32>
    %239 = arith.divf %237, %238 : vector<2x32xf32>
    %240 = vector.extract_strided_slice %220 {offsets = [0, 64], sizes = [2, 32], strides = [1, 1]} : vector<2x96xf32> to vector<2x32xf32>
    %241 = vector.extract_strided_slice %223 {offsets = [0, 64], sizes = [2, 32], strides = [1, 1]} : vector<2x96xf32> to vector<2x32xf32>
    %242 = arith.mulf %231, %241 : vector<2x32xf32>
    %243 = arith.addf %240, %242 : vector<2x32xf32>
    %244 = math.tanh %243 : vector<2x32xf32>
    %cst_87 = arith.constant 1.000000e+00 : f32
    %245 = vector.broadcast %cst_87 : f32 to vector<2x32xf32>
    %246 = arith.subf %245, %239 : vector<2x32xf32>
    %247 = arith.mulf %246, %244 : vector<2x32xf32>
    %248 = arith.mulf %239, %189 : vector<2x32xf32>
    %249 = arith.addf %247, %248 : vector<2x32xf32>
    %250 = vector.extract_strided_slice %37 {offsets = [4, 0], sizes = [2, 96], strides = [1, 1]} : vector<12x96xf32> to vector<2x96xf32>
    %cst_88 = arith.constant dense<0.000000e+00> : vector<2x96xf32>
    %251 = tpu.matmul %219, %2, %cst_88 {dimension_numbers = #tpu.dot_dimension_numbers<[1], [0], [0], [1], [0, 0, 1, 1], [], []>} : vector<2x32xf32>, vector<32x96xf32>, vector<2x96xf32> -> vector<2x96xf32>
    %252 = vector.broadcast %3 : vector<1x96xf32> to vector<2x96xf32>
    %253 = arith.addf %251, %252 : vector<2x96xf32>
    %254 = vector.extract_strided_slice %250 {offsets = [0, 0], sizes = [2, 32], strides = [1, 1]} : vector<2x96xf32> to vector<2x32xf32>
    %255 = vector.extract_strided_slice %253 {offsets = [0, 0], sizes = [2, 32], strides = [1, 1]} : vector<2x96xf32> to vector<2x32xf32>
    %256 = arith.addf %254, %255 : vector<2x32xf32>
    %257 = arith.negf %256 : vector<2x32xf32>
    %258 = math.exp %257 : vector<2x32xf32>
    %cst_89 = arith.constant 1.000000e+00 : f32
    %259 = vector.broadcast %cst_89 : f32 to vector<2x32xf32>
    %260 = arith.addf %259, %258 : vector<2x32xf32>
    %261 = arith.divf %259, %260 : vector<2x32xf32>
    %262 = vector.extract_strided_slice %250 {offsets = [0, 32], sizes = [2, 32], strides = [1, 1]} : vector<2x96xf32> to vector<2x32xf32>
    %263 = vector.extract_strided_slice %253 {offsets = [0, 32], sizes = [2, 32], strides = [1, 1]} : vector<2x96xf32> to vector<2x32xf32>
    %264 = arith.addf %262, %263 : vector<2x32xf32>
    %265 = arith.negf %264 : vector<2x32xf32>
    %266 = math.exp %265 : vector<2x32xf32>
    %cst_90 = arith.constant 1.000000e+00 : f32
    %267 = vector.broadcast %cst_90 : f32 to vector<2x32xf32>
    %268 = arith.addf %267, %266 : vector<2x32xf32>
    %269 = arith.divf %267, %268 : vector<2x32xf32>
    %270 = vector.extract_strided_slice %250 {offsets = [0, 64], sizes = [2, 32], strides = [1, 1]} : vector<2x96xf32> to vector<2x32xf32>
    %271 = vector.extract_strided_slice %253 {offsets = [0, 64], sizes = [2, 32], strides = [1, 1]} : vector<2x96xf32> to vector<2x32xf32>
    %272 = arith.mulf %261, %271 : vector<2x32xf32>
    %273 = arith.addf %270, %272 : vector<2x32xf32>
    %274 = math.tanh %273 : vector<2x32xf32>
    %cst_91 = arith.constant 1.000000e+00 : f32
    %275 = vector.broadcast %cst_91 : f32 to vector<2x32xf32>
    %276 = arith.subf %275, %269 : vector<2x32xf32>
    %277 = arith.mulf %276, %274 : vector<2x32xf32>
    %278 = arith.mulf %269, %219 : vector<2x32xf32>
    %279 = arith.addf %277, %278 : vector<2x32xf32>
    %280 = vector.extract_strided_slice %32 {offsets = [8, 0], sizes = [2, 96], strides = [1, 1]} : vector<12x96xf32> to vector<2x96xf32>
    %cst_92 = arith.constant dense<0.000000e+00> : vector<2x96xf32>
    %281 = tpu.matmul %249, %0, %cst_92 {dimension_numbers = #tpu.dot_dimension_numbers<[1], [0], [0], [1], [0, 0, 1, 1], [], []>} : vector<2x32xf32>, vector<32x96xf32>, vector<2x96xf32> -> vector<2x96xf32>
    %282 = vector.broadcast %1 : vector<1x96xf32> to vector<2x96xf32>
    %283 = arith.addf %281, %282 : vector<2x96xf32>
    %284 = vector.extract_strided_slice %280 {offsets = [0, 0], sizes = [2, 32], strides = [1, 1]} : vector<2x96xf32> to vector<2x32xf32>
    %285 = vector.extract_strided_slice %283 {offsets = [0, 0], sizes = [2, 32], strides = [1, 1]} : vector<2x96xf32> to vector<2x32xf32>
    %286 = arith.addf %284, %285 : vector<2x32xf32>
    %287 = arith.negf %286 : vector<2x32xf32>
    %288 = math.exp %287 : vector<2x32xf32>
    %cst_93 = arith.constant 1.000000e+00 : f32
    %289 = vector.broadcast %cst_93 : f32 to vector<2x32xf32>
    %290 = arith.addf %289, %288 : vector<2x32xf32>
    %291 = arith.divf %289, %290 : vector<2x32xf32>
    %292 = vector.extract_strided_slice %280 {offsets = [0, 32], sizes = [2, 32], strides = [1, 1]} : vector<2x96xf32> to vector<2x32xf32>
    %293 = vector.extract_strided_slice %283 {offsets = [0, 32], sizes = [2, 32], strides = [1, 1]} : vector<2x96xf32> to vector<2x32xf32>
    %294 = arith.addf %292, %293 : vector<2x32xf32>
    %295 = arith.negf %294 : vector<2x32xf32>
    %296 = math.exp %295 : vector<2x32xf32>
    %cst_94 = arith.constant 1.000000e+00 : f32
    %297 = vector.broadcast %cst_94 : f32 to vector<2x32xf32>
    %298 = arith.addf %297, %296 : vector<2x32xf32>
    %299 = arith.divf %297, %298 : vector<2x32xf32>
    %300 = vector.extract_strided_slice %280 {offsets = [0, 64], sizes = [2, 32], strides = [1, 1]} : vector<2x96xf32> to vector<2x32xf32>
    %301 = vector.extract_strided_slice %283 {offsets = [0, 64], sizes = [2, 32], strides = [1, 1]} : vector<2x96xf32> to vector<2x32xf32>
    %302 = arith.mulf %291, %301 : vector<2x32xf32>
    %303 = arith.addf %300, %302 : vector<2x32xf32>
    %304 = math.tanh %303 : vector<2x32xf32>
    %cst_95 = arith.constant 1.000000e+00 : f32
    %305 = vector.broadcast %cst_95 : f32 to vector<2x32xf32>
    %306 = arith.subf %305, %299 : vector<2x32xf32>
    %307 = arith.mulf %306, %304 : vector<2x32xf32>
    %308 = arith.mulf %299, %249 : vector<2x32xf32>
    %309 = arith.addf %307, %308 : vector<2x32xf32>
    %310 = vector.extract_strided_slice %37 {offsets = [2, 0], sizes = [2, 96], strides = [1, 1]} : vector<12x96xf32> to vector<2x96xf32>
    %cst_96 = arith.constant dense<0.000000e+00> : vector<2x96xf32>
    %311 = tpu.matmul %279, %2, %cst_96 {dimension_numbers = #tpu.dot_dimension_numbers<[1], [0], [0], [1], [0, 0, 1, 1], [], []>} : vector<2x32xf32>, vector<32x96xf32>, vector<2x96xf32> -> vector<2x96xf32>
    %312 = vector.broadcast %3 : vector<1x96xf32> to vector<2x96xf32>
    %313 = arith.addf %311, %312 : vector<2x96xf32>
    %314 = vector.extract_strided_slice %310 {offsets = [0, 0], sizes = [2, 32], strides = [1, 1]} : vector<2x96xf32> to vector<2x32xf32>
    %315 = vector.extract_strided_slice %313 {offsets = [0, 0], sizes = [2, 32], strides = [1, 1]} : vector<2x96xf32> to vector<2x32xf32>
    %316 = arith.addf %314, %315 : vector<2x32xf32>
    %317 = arith.negf %316 : vector<2x32xf32>
    %318 = math.exp %317 : vector<2x32xf32>
    %cst_97 = arith.constant 1.000000e+00 : f32
    %319 = vector.broadcast %cst_97 : f32 to vector<2x32xf32>
    %320 = arith.addf %319, %318 : vector<2x32xf32>
    %321 = arith.divf %319, %320 : vector<2x32xf32>
    %322 = vector.extract_strided_slice %310 {offsets = [0, 32], sizes = [2, 32], strides = [1, 1]} : vector<2x96xf32> to vector<2x32xf32>
    %323 = vector.extract_strided_slice %313 {offsets = [0, 32], sizes = [2, 32], strides = [1, 1]} : vector<2x96xf32> to vector<2x32xf32>
    %324 = arith.addf %322, %323 : vector<2x32xf32>
    %325 = arith.negf %324 : vector<2x32xf32>
    %326 = math.exp %325 : vector<2x32xf32>
    %cst_98 = arith.constant 1.000000e+00 : f32
    %327 = vector.broadcast %cst_98 : f32 to vector<2x32xf32>
    %328 = arith.addf %327, %326 : vector<2x32xf32>
    %329 = arith.divf %327, %328 : vector<2x32xf32>
    %330 = vector.extract_strided_slice %310 {offsets = [0, 64], sizes = [2, 32], strides = [1, 1]} : vector<2x96xf32> to vector<2x32xf32>
    %331 = vector.extract_strided_slice %313 {offsets = [0, 64], sizes = [2, 32], strides = [1, 1]} : vector<2x96xf32> to vector<2x32xf32>
    %332 = arith.mulf %321, %331 : vector<2x32xf32>
    %333 = arith.addf %330, %332 : vector<2x32xf32>
    %334 = math.tanh %333 : vector<2x32xf32>
    %cst_99 = arith.constant 1.000000e+00 : f32
    %335 = vector.broadcast %cst_99 : f32 to vector<2x32xf32>
    %336 = arith.subf %335, %329 : vector<2x32xf32>
    %337 = arith.mulf %336, %334 : vector<2x32xf32>
    %338 = arith.mulf %329, %279 : vector<2x32xf32>
    %339 = arith.addf %337, %338 : vector<2x32xf32>
    %340 = vector.extract_strided_slice %32 {offsets = [10, 0], sizes = [2, 96], strides = [1, 1]} : vector<12x96xf32> to vector<2x96xf32>
    %cst_100 = arith.constant dense<0.000000e+00> : vector<2x96xf32>
    %341 = tpu.matmul %309, %0, %cst_100 {dimension_numbers = #tpu.dot_dimension_numbers<[1], [0], [0], [1], [0, 0, 1, 1], [], []>} : vector<2x32xf32>, vector<32x96xf32>, vector<2x96xf32> -> vector<2x96xf32>
    %342 = vector.broadcast %1 : vector<1x96xf32> to vector<2x96xf32>
    %343 = arith.addf %341, %342 : vector<2x96xf32>
    %344 = vector.extract_strided_slice %340 {offsets = [0, 0], sizes = [2, 32], strides = [1, 1]} : vector<2x96xf32> to vector<2x32xf32>
    %345 = vector.extract_strided_slice %343 {offsets = [0, 0], sizes = [2, 32], strides = [1, 1]} : vector<2x96xf32> to vector<2x32xf32>
    %346 = arith.addf %344, %345 : vector<2x32xf32>
    %347 = arith.negf %346 : vector<2x32xf32>
    %348 = math.exp %347 : vector<2x32xf32>
    %cst_101 = arith.constant 1.000000e+00 : f32
    %349 = vector.broadcast %cst_101 : f32 to vector<2x32xf32>
    %350 = arith.addf %349, %348 : vector<2x32xf32>
    %351 = arith.divf %349, %350 : vector<2x32xf32>
    %352 = vector.extract_strided_slice %340 {offsets = [0, 32], sizes = [2, 32], strides = [1, 1]} : vector<2x96xf32> to vector<2x32xf32>
    %353 = vector.extract_strided_slice %343 {offsets = [0, 32], sizes = [2, 32], strides = [1, 1]} : vector<2x96xf32> to vector<2x32xf32>
    %354 = arith.addf %352, %353 : vector<2x32xf32>
    %355 = arith.negf %354 : vector<2x32xf32>
    %356 = math.exp %355 : vector<2x32xf32>
    %cst_102 = arith.constant 1.000000e+00 : f32
    %357 = vector.broadcast %cst_102 : f32 to vector<2x32xf32>
    %358 = arith.addf %357, %356 : vector<2x32xf32>
    %359 = arith.divf %357, %358 : vector<2x32xf32>
    %360 = vector.extract_strided_slice %340 {offsets = [0, 64], sizes = [2, 32], strides = [1, 1]} : vector<2x96xf32> to vector<2x32xf32>
    %361 = vector.extract_strided_slice %343 {offsets = [0, 64], sizes = [2, 32], strides = [1, 1]} : vector<2x96xf32> to vector<2x32xf32>
    %362 = arith.mulf %351, %361 : vector<2x32xf32>
    %363 = arith.addf %360, %362 : vector<2x32xf32>
    %364 = math.tanh %363 : vector<2x32xf32>
    %cst_103 = arith.constant 1.000000e+00 : f32
    %365 = vector.broadcast %cst_103 : f32 to vector<2x32xf32>
    %366 = arith.subf %365, %359 : vector<2x32xf32>
    %367 = arith.mulf %366, %364 : vector<2x32xf32>
    %368 = arith.mulf %359, %309 : vector<2x32xf32>
    %369 = arith.addf %367, %368 : vector<2x32xf32>
    %370 = vector.extract_strided_slice %37 {offsets = [0, 0], sizes = [2, 96], strides = [1, 1]} : vector<12x96xf32> to vector<2x96xf32>
    %cst_104 = arith.constant dense<0.000000e+00> : vector<2x96xf32>
    %371 = tpu.matmul %339, %2, %cst_104 {dimension_numbers = #tpu.dot_dimension_numbers<[1], [0], [0], [1], [0, 0, 1, 1], [], []>} : vector<2x32xf32>, vector<32x96xf32>, vector<2x96xf32> -> vector<2x96xf32>
    %372 = vector.broadcast %3 : vector<1x96xf32> to vector<2x96xf32>
    %373 = arith.addf %371, %372 : vector<2x96xf32>
    %374 = vector.extract_strided_slice %370 {offsets = [0, 0], sizes = [2, 32], strides = [1, 1]} : vector<2x96xf32> to vector<2x32xf32>
    %375 = vector.extract_strided_slice %373 {offsets = [0, 0], sizes = [2, 32], strides = [1, 1]} : vector<2x96xf32> to vector<2x32xf32>
    %376 = arith.addf %374, %375 : vector<2x32xf32>
    %377 = arith.negf %376 : vector<2x32xf32>
    %378 = math.exp %377 : vector<2x32xf32>
    %cst_105 = arith.constant 1.000000e+00 : f32
    %379 = vector.broadcast %cst_105 : f32 to vector<2x32xf32>
    %380 = arith.addf %379, %378 : vector<2x32xf32>
    %381 = arith.divf %379, %380 : vector<2x32xf32>
    %382 = vector.extract_strided_slice %370 {offsets = [0, 32], sizes = [2, 32], strides = [1, 1]} : vector<2x96xf32> to vector<2x32xf32>
    %383 = vector.extract_strided_slice %373 {offsets = [0, 32], sizes = [2, 32], strides = [1, 1]} : vector<2x96xf32> to vector<2x32xf32>
    %384 = arith.addf %382, %383 : vector<2x32xf32>
    %385 = arith.negf %384 : vector<2x32xf32>
    %386 = math.exp %385 : vector<2x32xf32>
    %cst_106 = arith.constant 1.000000e+00 : f32
    %387 = vector.broadcast %cst_106 : f32 to vector<2x32xf32>
    %388 = arith.addf %387, %386 : vector<2x32xf32>
    %389 = arith.divf %387, %388 : vector<2x32xf32>
    %390 = vector.extract_strided_slice %370 {offsets = [0, 64], sizes = [2, 32], strides = [1, 1]} : vector<2x96xf32> to vector<2x32xf32>
    %391 = vector.extract_strided_slice %373 {offsets = [0, 64], sizes = [2, 32], strides = [1, 1]} : vector<2x96xf32> to vector<2x32xf32>
    %392 = arith.mulf %381, %391 : vector<2x32xf32>
    %393 = arith.addf %390, %392 : vector<2x32xf32>
    %394 = math.tanh %393 : vector<2x32xf32>
    %cst_107 = arith.constant 1.000000e+00 : f32
    %395 = vector.broadcast %cst_107 : f32 to vector<2x32xf32>
    %396 = arith.subf %395, %389 : vector<2x32xf32>
    %397 = arith.mulf %396, %394 : vector<2x32xf32>
    %398 = arith.mulf %389, %339 : vector<2x32xf32>
    %399 = arith.addf %397, %398 : vector<2x32xf32>
    %400 = arith.addf %69, %399 : vector<2x32xf32>
    %401 = arith.addf %129, %339 : vector<2x32xf32>
    %402 = arith.addf %189, %279 : vector<2x32xf32>
    %403 = arith.addf %249, %219 : vector<2x32xf32>
    %404 = arith.addf %309, %159 : vector<2x32xf32>
    %405 = arith.addf %369, %99 : vector<2x32xf32>
    %c0_108 = arith.constant 0 : index
    %c0_109 = arith.constant 0 : index
    %406 = vector.load %arg2[%c0_108, %c0_109] : memref<10x32xf32, #tpu.memory_space<vmem>>, vector<10x32xf32>
    %c0_110 = arith.constant 0 : index
    %c0_111 = arith.constant 0 : index
    %407 = vector.load %arg11[%c0_110, %c0_111] : memref<32x96xf32, #tpu.memory_space<vmem>>, vector<32x96xf32>
    %cst_112 = arith.constant dense<0.000000e+00> : vector<10x96xf32>
    %408 = tpu.matmul %406, %407, %cst_112 {dimension_numbers = #tpu.dot_dimension_numbers<[1], [0], [0], [1], [0, 0, 1, 1], [], []>} : vector<10x32xf32>, vector<32x96xf32>, vector<10x96xf32> -> vector<10x96xf32>
    %c0_113 = arith.constant 0 : index
    %c0_114 = arith.constant 0 : index
    %409 = vector.load %arg13[%c0_113, %c0_114] : memref<1x96xf32, #tpu.memory_space<vmem>>, vector<1x96xf32>
    %410 = vector.broadcast %409 : vector<1x96xf32> to vector<10x96xf32>
    %411 = arith.addf %408, %410 : vector<10x96xf32>
    %cst_115 = arith.constant 0.000000e+00 : f32
    %412 = vector.broadcast %cst_115 : f32 to vector<2x32xf32>
    %413 = vector.extract_strided_slice %411 {offsets = [0, 0], sizes = [2, 96], strides = [1, 1]} : vector<10x96xf32> to vector<2x96xf32>
    %cst_116 = arith.constant dense<0.000000e+00> : vector<2x96xf32>
    %414 = tpu.matmul %412, %4, %cst_116 {dimension_numbers = #tpu.dot_dimension_numbers<[1], [0], [0], [1], [0, 0, 1, 1], [], []>} : vector<2x32xf32>, vector<32x96xf32>, vector<2x96xf32> -> vector<2x96xf32>
    %415 = vector.broadcast %5 : vector<1x96xf32> to vector<2x96xf32>
    %416 = arith.addf %414, %415 : vector<2x96xf32>
    %417 = vector.extract_strided_slice %413 {offsets = [0, 0], sizes = [2, 32], strides = [1, 1]} : vector<2x96xf32> to vector<2x32xf32>
    %418 = vector.extract_strided_slice %416 {offsets = [0, 0], sizes = [2, 32], strides = [1, 1]} : vector<2x96xf32> to vector<2x32xf32>
    %419 = arith.addf %417, %418 : vector<2x32xf32>
    %420 = arith.negf %419 : vector<2x32xf32>
    %421 = math.exp %420 : vector<2x32xf32>
    %cst_117 = arith.constant 1.000000e+00 : f32
    %422 = vector.broadcast %cst_117 : f32 to vector<2x32xf32>
    %423 = arith.addf %422, %421 : vector<2x32xf32>
    %424 = arith.divf %422, %423 : vector<2x32xf32>
    %425 = vector.extract_strided_slice %413 {offsets = [0, 32], sizes = [2, 32], strides = [1, 1]} : vector<2x96xf32> to vector<2x32xf32>
    %426 = vector.extract_strided_slice %416 {offsets = [0, 32], sizes = [2, 32], strides = [1, 1]} : vector<2x96xf32> to vector<2x32xf32>
    %427 = arith.addf %425, %426 : vector<2x32xf32>
    %428 = arith.negf %427 : vector<2x32xf32>
    %429 = math.exp %428 : vector<2x32xf32>
    %cst_118 = arith.constant 1.000000e+00 : f32
    %430 = vector.broadcast %cst_118 : f32 to vector<2x32xf32>
    %431 = arith.addf %430, %429 : vector<2x32xf32>
    %432 = arith.divf %430, %431 : vector<2x32xf32>
    %433 = vector.extract_strided_slice %413 {offsets = [0, 64], sizes = [2, 32], strides = [1, 1]} : vector<2x96xf32> to vector<2x32xf32>
    %434 = vector.extract_strided_slice %416 {offsets = [0, 64], sizes = [2, 32], strides = [1, 1]} : vector<2x96xf32> to vector<2x32xf32>
    %435 = arith.mulf %424, %434 : vector<2x32xf32>
    %436 = arith.addf %433, %435 : vector<2x32xf32>
    %437 = math.tanh %436 : vector<2x32xf32>
    %cst_119 = arith.constant 1.000000e+00 : f32
    %438 = vector.broadcast %cst_119 : f32 to vector<2x32xf32>
    %439 = arith.subf %438, %432 : vector<2x32xf32>
    %440 = arith.mulf %439, %437 : vector<2x32xf32>
    %441 = arith.mulf %432, %412 : vector<2x32xf32>
    %442 = arith.addf %440, %441 : vector<2x32xf32>
    %443 = vector.extract_strided_slice %411 {offsets = [2, 0], sizes = [2, 96], strides = [1, 1]} : vector<10x96xf32> to vector<2x96xf32>
    %cst_120 = arith.constant dense<0.000000e+00> : vector<2x96xf32>
    %444 = tpu.matmul %442, %4, %cst_120 {dimension_numbers = #tpu.dot_dimension_numbers<[1], [0], [0], [1], [0, 0, 1, 1], [], []>} : vector<2x32xf32>, vector<32x96xf32>, vector<2x96xf32> -> vector<2x96xf32>
    %445 = vector.broadcast %5 : vector<1x96xf32> to vector<2x96xf32>
    %446 = arith.addf %444, %445 : vector<2x96xf32>
    %447 = vector.extract_strided_slice %443 {offsets = [0, 0], sizes = [2, 32], strides = [1, 1]} : vector<2x96xf32> to vector<2x32xf32>
    %448 = vector.extract_strided_slice %446 {offsets = [0, 0], sizes = [2, 32], strides = [1, 1]} : vector<2x96xf32> to vector<2x32xf32>
    %449 = arith.addf %447, %448 : vector<2x32xf32>
    %450 = arith.negf %449 : vector<2x32xf32>
    %451 = math.exp %450 : vector<2x32xf32>
    %cst_121 = arith.constant 1.000000e+00 : f32
    %452 = vector.broadcast %cst_121 : f32 to vector<2x32xf32>
    %453 = arith.addf %452, %451 : vector<2x32xf32>
    %454 = arith.divf %452, %453 : vector<2x32xf32>
    %455 = vector.extract_strided_slice %443 {offsets = [0, 32], sizes = [2, 32], strides = [1, 1]} : vector<2x96xf32> to vector<2x32xf32>
    %456 = vector.extract_strided_slice %446 {offsets = [0, 32], sizes = [2, 32], strides = [1, 1]} : vector<2x96xf32> to vector<2x32xf32>
    %457 = arith.addf %455, %456 : vector<2x32xf32>
    %458 = arith.negf %457 : vector<2x32xf32>
    %459 = math.exp %458 : vector<2x32xf32>
    %cst_122 = arith.constant 1.000000e+00 : f32
    %460 = vector.broadcast %cst_122 : f32 to vector<2x32xf32>
    %461 = arith.addf %460, %459 : vector<2x32xf32>
    %462 = arith.divf %460, %461 : vector<2x32xf32>
    %463 = vector.extract_strided_slice %443 {offsets = [0, 64], sizes = [2, 32], strides = [1, 1]} : vector<2x96xf32> to vector<2x32xf32>
    %464 = vector.extract_strided_slice %446 {offsets = [0, 64], sizes = [2, 32], strides = [1, 1]} : vector<2x96xf32> to vector<2x32xf32>
    %465 = arith.mulf %454, %464 : vector<2x32xf32>
    %466 = arith.addf %463, %465 : vector<2x32xf32>
    %467 = math.tanh %466 : vector<2x32xf32>
    %cst_123 = arith.constant 1.000000e+00 : f32
    %468 = vector.broadcast %cst_123 : f32 to vector<2x32xf32>
    %469 = arith.subf %468, %462 : vector<2x32xf32>
    %470 = arith.mulf %469, %467 : vector<2x32xf32>
    %471 = arith.mulf %462, %442 : vector<2x32xf32>
    %472 = arith.addf %470, %471 : vector<2x32xf32>
    %473 = vector.extract_strided_slice %411 {offsets = [4, 0], sizes = [2, 96], strides = [1, 1]} : vector<10x96xf32> to vector<2x96xf32>
    %cst_124 = arith.constant dense<0.000000e+00> : vector<2x96xf32>
    %474 = tpu.matmul %472, %4, %cst_124 {dimension_numbers = #tpu.dot_dimension_numbers<[1], [0], [0], [1], [0, 0, 1, 1], [], []>} : vector<2x32xf32>, vector<32x96xf32>, vector<2x96xf32> -> vector<2x96xf32>
    %475 = vector.broadcast %5 : vector<1x96xf32> to vector<2x96xf32>
    %476 = arith.addf %474, %475 : vector<2x96xf32>
    %477 = vector.extract_strided_slice %473 {offsets = [0, 0], sizes = [2, 32], strides = [1, 1]} : vector<2x96xf32> to vector<2x32xf32>
    %478 = vector.extract_strided_slice %476 {offsets = [0, 0], sizes = [2, 32], strides = [1, 1]} : vector<2x96xf32> to vector<2x32xf32>
    %479 = arith.addf %477, %478 : vector<2x32xf32>
    %480 = arith.negf %479 : vector<2x32xf32>
    %481 = math.exp %480 : vector<2x32xf32>
    %cst_125 = arith.constant 1.000000e+00 : f32
    %482 = vector.broadcast %cst_125 : f32 to vector<2x32xf32>
    %483 = arith.addf %482, %481 : vector<2x32xf32>
    %484 = arith.divf %482, %483 : vector<2x32xf32>
    %485 = vector.extract_strided_slice %473 {offsets = [0, 32], sizes = [2, 32], strides = [1, 1]} : vector<2x96xf32> to vector<2x32xf32>
    %486 = vector.extract_strided_slice %476 {offsets = [0, 32], sizes = [2, 32], strides = [1, 1]} : vector<2x96xf32> to vector<2x32xf32>
    %487 = arith.addf %485, %486 : vector<2x32xf32>
    %488 = arith.negf %487 : vector<2x32xf32>
    %489 = math.exp %488 : vector<2x32xf32>
    %cst_126 = arith.constant 1.000000e+00 : f32
    %490 = vector.broadcast %cst_126 : f32 to vector<2x32xf32>
    %491 = arith.addf %490, %489 : vector<2x32xf32>
    %492 = arith.divf %490, %491 : vector<2x32xf32>
    %493 = vector.extract_strided_slice %473 {offsets = [0, 64], sizes = [2, 32], strides = [1, 1]} : vector<2x96xf32> to vector<2x32xf32>
    %494 = vector.extract_strided_slice %476 {offsets = [0, 64], sizes = [2, 32], strides = [1, 1]} : vector<2x96xf32> to vector<2x32xf32>
    %495 = arith.mulf %484, %494 : vector<2x32xf32>
    %496 = arith.addf %493, %495 : vector<2x32xf32>
    %497 = math.tanh %496 : vector<2x32xf32>
    %cst_127 = arith.constant 1.000000e+00 : f32
    %498 = vector.broadcast %cst_127 : f32 to vector<2x32xf32>
    %499 = arith.subf %498, %492 : vector<2x32xf32>
    %500 = arith.mulf %499, %497 : vector<2x32xf32>
    %501 = arith.mulf %492, %472 : vector<2x32xf32>
    %502 = arith.addf %500, %501 : vector<2x32xf32>
    %503 = vector.extract_strided_slice %411 {offsets = [6, 0], sizes = [2, 96], strides = [1, 1]} : vector<10x96xf32> to vector<2x96xf32>
    %cst_128 = arith.constant dense<0.000000e+00> : vector<2x96xf32>
    %504 = tpu.matmul %502, %4, %cst_128 {dimension_numbers = #tpu.dot_dimension_numbers<[1], [0], [0], [1], [0, 0, 1, 1], [], []>} : vector<2x32xf32>, vector<32x96xf32>, vector<2x96xf32> -> vector<2x96xf32>
    %505 = vector.broadcast %5 : vector<1x96xf32> to vector<2x96xf32>
    %506 = arith.addf %504, %505 : vector<2x96xf32>
    %507 = vector.extract_strided_slice %503 {offsets = [0, 0], sizes = [2, 32], strides = [1, 1]} : vector<2x96xf32> to vector<2x32xf32>
    %508 = vector.extract_strided_slice %506 {offsets = [0, 0], sizes = [2, 32], strides = [1, 1]} : vector<2x96xf32> to vector<2x32xf32>
    %509 = arith.addf %507, %508 : vector<2x32xf32>
    %510 = arith.negf %509 : vector<2x32xf32>
    %511 = math.exp %510 : vector<2x32xf32>
    %cst_129 = arith.constant 1.000000e+00 : f32
    %512 = vector.broadcast %cst_129 : f32 to vector<2x32xf32>
    %513 = arith.addf %512, %511 : vector<2x32xf32>
    %514 = arith.divf %512, %513 : vector<2x32xf32>
    %515 = vector.extract_strided_slice %503 {offsets = [0, 32], sizes = [2, 32], strides = [1, 1]} : vector<2x96xf32> to vector<2x32xf32>
    %516 = vector.extract_strided_slice %506 {offsets = [0, 32], sizes = [2, 32], strides = [1, 1]} : vector<2x96xf32> to vector<2x32xf32>
    %517 = arith.addf %515, %516 : vector<2x32xf32>
    %518 = arith.negf %517 : vector<2x32xf32>
    %519 = math.exp %518 : vector<2x32xf32>
    %cst_130 = arith.constant 1.000000e+00 : f32
    %520 = vector.broadcast %cst_130 : f32 to vector<2x32xf32>
    %521 = arith.addf %520, %519 : vector<2x32xf32>
    %522 = arith.divf %520, %521 : vector<2x32xf32>
    %523 = vector.extract_strided_slice %503 {offsets = [0, 64], sizes = [2, 32], strides = [1, 1]} : vector<2x96xf32> to vector<2x32xf32>
    %524 = vector.extract_strided_slice %506 {offsets = [0, 64], sizes = [2, 32], strides = [1, 1]} : vector<2x96xf32> to vector<2x32xf32>
    %525 = arith.mulf %514, %524 : vector<2x32xf32>
    %526 = arith.addf %523, %525 : vector<2x32xf32>
    %527 = math.tanh %526 : vector<2x32xf32>
    %cst_131 = arith.constant 1.000000e+00 : f32
    %528 = vector.broadcast %cst_131 : f32 to vector<2x32xf32>
    %529 = arith.subf %528, %522 : vector<2x32xf32>
    %530 = arith.mulf %529, %527 : vector<2x32xf32>
    %531 = arith.mulf %522, %502 : vector<2x32xf32>
    %532 = arith.addf %530, %531 : vector<2x32xf32>
    %533 = vector.extract_strided_slice %411 {offsets = [8, 0], sizes = [2, 96], strides = [1, 1]} : vector<10x96xf32> to vector<2x96xf32>
    %cst_132 = arith.constant dense<0.000000e+00> : vector<2x96xf32>
    %534 = tpu.matmul %532, %4, %cst_132 {dimension_numbers = #tpu.dot_dimension_numbers<[1], [0], [0], [1], [0, 0, 1, 1], [], []>} : vector<2x32xf32>, vector<32x96xf32>, vector<2x96xf32> -> vector<2x96xf32>
    %535 = vector.broadcast %5 : vector<1x96xf32> to vector<2x96xf32>
    %536 = arith.addf %534, %535 : vector<2x96xf32>
    %537 = vector.extract_strided_slice %533 {offsets = [0, 0], sizes = [2, 32], strides = [1, 1]} : vector<2x96xf32> to vector<2x32xf32>
    %538 = vector.extract_strided_slice %536 {offsets = [0, 0], sizes = [2, 32], strides = [1, 1]} : vector<2x96xf32> to vector<2x32xf32>
    %539 = arith.addf %537, %538 : vector<2x32xf32>
    %540 = arith.negf %539 : vector<2x32xf32>
    %541 = math.exp %540 : vector<2x32xf32>
    %cst_133 = arith.constant 1.000000e+00 : f32
    %542 = vector.broadcast %cst_133 : f32 to vector<2x32xf32>
    %543 = arith.addf %542, %541 : vector<2x32xf32>
    %544 = arith.divf %542, %543 : vector<2x32xf32>
    %545 = vector.extract_strided_slice %533 {offsets = [0, 32], sizes = [2, 32], strides = [1, 1]} : vector<2x96xf32> to vector<2x32xf32>
    %546 = vector.extract_strided_slice %536 {offsets = [0, 32], sizes = [2, 32], strides = [1, 1]} : vector<2x96xf32> to vector<2x32xf32>
    %547 = arith.addf %545, %546 : vector<2x32xf32>
    %548 = arith.negf %547 : vector<2x32xf32>
    %549 = math.exp %548 : vector<2x32xf32>
    %cst_134 = arith.constant 1.000000e+00 : f32
    %550 = vector.broadcast %cst_134 : f32 to vector<2x32xf32>
    %551 = arith.addf %550, %549 : vector<2x32xf32>
    %552 = arith.divf %550, %551 : vector<2x32xf32>
    %553 = vector.extract_strided_slice %533 {offsets = [0, 64], sizes = [2, 32], strides = [1, 1]} : vector<2x96xf32> to vector<2x32xf32>
    %554 = vector.extract_strided_slice %536 {offsets = [0, 64], sizes = [2, 32], strides = [1, 1]} : vector<2x96xf32> to vector<2x32xf32>
    %555 = arith.mulf %544, %554 : vector<2x32xf32>
    %556 = arith.addf %553, %555 : vector<2x32xf32>
    %557 = math.tanh %556 : vector<2x32xf32>
    %cst_135 = arith.constant 1.000000e+00 : f32
    %558 = vector.broadcast %cst_135 : f32 to vector<2x32xf32>
    %559 = arith.subf %558, %552 : vector<2x32xf32>
    %560 = arith.mulf %559, %557 : vector<2x32xf32>
    %561 = arith.mulf %552, %532 : vector<2x32xf32>
    %562 = arith.addf %560, %561 : vector<2x32xf32>
    %cst_136 = arith.constant dense<0.000000e+00> : vector<2x64xf32>
    %563 = tpu.matmul %400, %14, %cst_136 {dimension_numbers = #tpu.dot_dimension_numbers<[1], [0], [0], [1], [0, 0, 1, 1], [], []>} : vector<2x32xf32>, vector<32x64xf32>, vector<2x64xf32> -> vector<2x64xf32>
    %564 = vector.broadcast %15 : vector<1x64xf32> to vector<2x64xf32>
    %565 = arith.addf %563, %564 : vector<2x64xf32>
    %cst_137 = arith.constant dense<0.000000e+00> : vector<2x64xf32>
    %566 = tpu.matmul %401, %14, %cst_137 {dimension_numbers = #tpu.dot_dimension_numbers<[1], [0], [0], [1], [0, 0, 1, 1], [], []>} : vector<2x32xf32>, vector<32x64xf32>, vector<2x64xf32> -> vector<2x64xf32>
    %567 = vector.broadcast %15 : vector<1x64xf32> to vector<2x64xf32>
    %568 = arith.addf %566, %567 : vector<2x64xf32>
    %cst_138 = arith.constant dense<0.000000e+00> : vector<2x64xf32>
    %569 = tpu.matmul %402, %14, %cst_138 {dimension_numbers = #tpu.dot_dimension_numbers<[1], [0], [0], [1], [0, 0, 1, 1], [], []>} : vector<2x32xf32>, vector<32x64xf32>, vector<2x64xf32> -> vector<2x64xf32>
    %570 = vector.broadcast %15 : vector<1x64xf32> to vector<2x64xf32>
    %571 = arith.addf %569, %570 : vector<2x64xf32>
    %cst_139 = arith.constant dense<0.000000e+00> : vector<2x64xf32>
    %572 = tpu.matmul %403, %14, %cst_139 {dimension_numbers = #tpu.dot_dimension_numbers<[1], [0], [0], [1], [0, 0, 1, 1], [], []>} : vector<2x32xf32>, vector<32x64xf32>, vector<2x64xf32> -> vector<2x64xf32>
    %573 = vector.broadcast %15 : vector<1x64xf32> to vector<2x64xf32>
    %574 = arith.addf %572, %573 : vector<2x64xf32>
    %cst_140 = arith.constant dense<0.000000e+00> : vector<2x64xf32>
    %575 = tpu.matmul %404, %14, %cst_140 {dimension_numbers = #tpu.dot_dimension_numbers<[1], [0], [0], [1], [0, 0, 1, 1], [], []>} : vector<2x32xf32>, vector<32x64xf32>, vector<2x64xf32> -> vector<2x64xf32>
    %576 = vector.broadcast %15 : vector<1x64xf32> to vector<2x64xf32>
    %577 = arith.addf %575, %576 : vector<2x64xf32>
    %cst_141 = arith.constant dense<0.000000e+00> : vector<2x64xf32>
    %578 = tpu.matmul %405, %14, %cst_141 {dimension_numbers = #tpu.dot_dimension_numbers<[1], [0], [0], [1], [0, 0, 1, 1], [], []>} : vector<2x32xf32>, vector<32x64xf32>, vector<2x64xf32> -> vector<2x64xf32>
    %579 = vector.broadcast %15 : vector<1x64xf32> to vector<2x64xf32>
    %580 = arith.addf %578, %579 : vector<2x64xf32>
    %581 = arith.mulf %400, %562 : vector<2x32xf32>
    %582 = arith.mulf %401, %562 : vector<2x32xf32>
    %583 = arith.mulf %402, %562 : vector<2x32xf32>
    %584 = arith.mulf %403, %562 : vector<2x32xf32>
    %585 = arith.mulf %404, %562 : vector<2x32xf32>
    %586 = arith.mulf %405, %562 : vector<2x32xf32>
    %587 = arith.subf %400, %562 : vector<2x32xf32>
    %588 = math.absf %587 : vector<2x32xf32>
    %589 = arith.subf %401, %562 : vector<2x32xf32>
    %590 = math.absf %589 : vector<2x32xf32>
    %591 = arith.subf %402, %562 : vector<2x32xf32>
    %592 = math.absf %591 : vector<2x32xf32>
    %593 = arith.subf %403, %562 : vector<2x32xf32>
    %594 = math.absf %593 : vector<2x32xf32>
    %595 = arith.subf %404, %562 : vector<2x32xf32>
    %596 = math.absf %595 : vector<2x32xf32>
    %597 = arith.subf %405, %562 : vector<2x32xf32>
    %598 = math.absf %597 : vector<2x32xf32>
    %599 = arith.mulf %400, %562 : vector<2x32xf32>
    %600 = arith.subf %400, %562 : vector<2x32xf32>
    %601 = math.absf %600 : vector<2x32xf32>
    %602 = tpu.concatenate %581, %599, %588, %601 in 1 : vector<2x32xf32>, vector<2x32xf32>, vector<2x32xf32>, vector<2x32xf32> -> vector<2x128xf32>
    %cst_142 = arith.constant dense<0.000000e+00> : vector<2x32xf32>
    %603 = tpu.matmul %602, %10, %cst_142 {dimension_numbers = #tpu.dot_dimension_numbers<[1], [0], [0], [1], [0, 0, 1, 1], [], []>} : vector<2x128xf32>, vector<128x32xf32>, vector<2x32xf32> -> vector<2x32xf32>
    %604 = vector.broadcast %11 : vector<1x32xf32> to vector<2x32xf32>
    %605 = arith.addf %603, %604 : vector<2x32xf32>
    %606 = math.tanh %605 : vector<2x32xf32>
    %cst_143 = arith.constant dense<0.000000e+00> : vector<2x1xf32>
    %607 = tpu.matmul %606, %12, %cst_143 {dimension_numbers = #tpu.dot_dimension_numbers<[1], [0], [0], [1], [0, 0, 1, 1], [], []>} : vector<2x32xf32>, vector<32x1xf32>, vector<2x1xf32> -> vector<2x1xf32>
    %608 = arith.mulf %401, %562 : vector<2x32xf32>
    %609 = arith.subf %401, %562 : vector<2x32xf32>
    %610 = math.absf %609 : vector<2x32xf32>
    %611 = tpu.concatenate %582, %608, %590, %610 in 1 : vector<2x32xf32>, vector<2x32xf32>, vector<2x32xf32>, vector<2x32xf32> -> vector<2x128xf32>
    %cst_144 = arith.constant dense<0.000000e+00> : vector<2x32xf32>
    %612 = tpu.matmul %611, %10, %cst_144 {dimension_numbers = #tpu.dot_dimension_numbers<[1], [0], [0], [1], [0, 0, 1, 1], [], []>} : vector<2x128xf32>, vector<128x32xf32>, vector<2x32xf32> -> vector<2x32xf32>
    %613 = vector.broadcast %11 : vector<1x32xf32> to vector<2x32xf32>
    %614 = arith.addf %612, %613 : vector<2x32xf32>
    %615 = math.tanh %614 : vector<2x32xf32>
    %cst_145 = arith.constant dense<0.000000e+00> : vector<2x1xf32>
    %616 = tpu.matmul %615, %12, %cst_145 {dimension_numbers = #tpu.dot_dimension_numbers<[1], [0], [0], [1], [0, 0, 1, 1], [], []>} : vector<2x32xf32>, vector<32x1xf32>, vector<2x1xf32> -> vector<2x1xf32>
    %617 = arith.mulf %402, %562 : vector<2x32xf32>
    %618 = arith.subf %402, %562 : vector<2x32xf32>
    %619 = math.absf %618 : vector<2x32xf32>
    %620 = tpu.concatenate %583, %617, %592, %619 in 1 : vector<2x32xf32>, vector<2x32xf32>, vector<2x32xf32>, vector<2x32xf32> -> vector<2x128xf32>
    %cst_146 = arith.constant dense<0.000000e+00> : vector<2x32xf32>
    %621 = tpu.matmul %620, %10, %cst_146 {dimension_numbers = #tpu.dot_dimension_numbers<[1], [0], [0], [1], [0, 0, 1, 1], [], []>} : vector<2x128xf32>, vector<128x32xf32>, vector<2x32xf32> -> vector<2x32xf32>
    %622 = vector.broadcast %11 : vector<1x32xf32> to vector<2x32xf32>
    %623 = arith.addf %621, %622 : vector<2x32xf32>
    %624 = math.tanh %623 : vector<2x32xf32>
    %cst_147 = arith.constant dense<0.000000e+00> : vector<2x1xf32>
    %625 = tpu.matmul %624, %12, %cst_147 {dimension_numbers = #tpu.dot_dimension_numbers<[1], [0], [0], [1], [0, 0, 1, 1], [], []>} : vector<2x32xf32>, vector<32x1xf32>, vector<2x1xf32> -> vector<2x1xf32>
    %626 = arith.mulf %403, %562 : vector<2x32xf32>
    %627 = arith.subf %403, %562 : vector<2x32xf32>
    %628 = math.absf %627 : vector<2x32xf32>
    %629 = tpu.concatenate %584, %626, %594, %628 in 1 : vector<2x32xf32>, vector<2x32xf32>, vector<2x32xf32>, vector<2x32xf32> -> vector<2x128xf32>
    %cst_148 = arith.constant dense<0.000000e+00> : vector<2x32xf32>
    %630 = tpu.matmul %629, %10, %cst_148 {dimension_numbers = #tpu.dot_dimension_numbers<[1], [0], [0], [1], [0, 0, 1, 1], [], []>} : vector<2x128xf32>, vector<128x32xf32>, vector<2x32xf32> -> vector<2x32xf32>
    %631 = vector.broadcast %11 : vector<1x32xf32> to vector<2x32xf32>
    %632 = arith.addf %630, %631 : vector<2x32xf32>
    %633 = math.tanh %632 : vector<2x32xf32>
    %cst_149 = arith.constant dense<0.000000e+00> : vector<2x1xf32>
    %634 = tpu.matmul %633, %12, %cst_149 {dimension_numbers = #tpu.dot_dimension_numbers<[1], [0], [0], [1], [0, 0, 1, 1], [], []>} : vector<2x32xf32>, vector<32x1xf32>, vector<2x1xf32> -> vector<2x1xf32>
    %635 = arith.mulf %404, %562 : vector<2x32xf32>
    %636 = arith.subf %404, %562 : vector<2x32xf32>
    %637 = math.absf %636 : vector<2x32xf32>
    %638 = tpu.concatenate %585, %635, %596, %637 in 1 : vector<2x32xf32>, vector<2x32xf32>, vector<2x32xf32>, vector<2x32xf32> -> vector<2x128xf32>
    %cst_150 = arith.constant dense<0.000000e+00> : vector<2x32xf32>
    %639 = tpu.matmul %638, %10, %cst_150 {dimension_numbers = #tpu.dot_dimension_numbers<[1], [0], [0], [1], [0, 0, 1, 1], [], []>} : vector<2x128xf32>, vector<128x32xf32>, vector<2x32xf32> -> vector<2x32xf32>
    %640 = vector.broadcast %11 : vector<1x32xf32> to vector<2x32xf32>
    %641 = arith.addf %639, %640 : vector<2x32xf32>
    %642 = math.tanh %641 : vector<2x32xf32>
    %cst_151 = arith.constant dense<0.000000e+00> : vector<2x1xf32>
    %643 = tpu.matmul %642, %12, %cst_151 {dimension_numbers = #tpu.dot_dimension_numbers<[1], [0], [0], [1], [0, 0, 1, 1], [], []>} : vector<2x32xf32>, vector<32x1xf32>, vector<2x1xf32> -> vector<2x1xf32>
    %644 = arith.mulf %405, %562 : vector<2x32xf32>
    %645 = arith.subf %405, %562 : vector<2x32xf32>
    %646 = math.absf %645 : vector<2x32xf32>
    %647 = tpu.concatenate %586, %644, %598, %646 in 1 : vector<2x32xf32>, vector<2x32xf32>, vector<2x32xf32>, vector<2x32xf32> -> vector<2x128xf32>
    %cst_152 = arith.constant dense<0.000000e+00> : vector<2x32xf32>
    %648 = tpu.matmul %647, %10, %cst_152 {dimension_numbers = #tpu.dot_dimension_numbers<[1], [0], [0], [1], [0, 0, 1, 1], [], []>} : vector<2x128xf32>, vector<128x32xf32>, vector<2x32xf32> -> vector<2x32xf32>
    %649 = vector.broadcast %11 : vector<1x32xf32> to vector<2x32xf32>
    %650 = arith.addf %648, %649 : vector<2x32xf32>
    %651 = math.tanh %650 : vector<2x32xf32>
    %cst_153 = arith.constant dense<0.000000e+00> : vector<2x1xf32>
    %652 = tpu.matmul %651, %12, %cst_153 {dimension_numbers = #tpu.dot_dimension_numbers<[1], [0], [0], [1], [0, 0, 1, 1], [], []>} : vector<2x32xf32>, vector<32x1xf32>, vector<2x1xf32> -> vector<2x1xf32>
    %653 = tpu.concatenate %607, %616, %625, %634, %643, %652 in 1 : vector<2x1xf32>, vector<2x1xf32>, vector<2x1xf32>, vector<2x1xf32>, vector<2x1xf32>, vector<2x1xf32> -> vector<2x6xf32>
    %654 = vector.broadcast %13 : vector<1x1xf32> to vector<2x6xf32>
    %655 = arith.addf %653, %654 : vector<2x6xf32>
    %cst_154 = arith.constant dense<0xFF800000> : vector<2xf32>
    %656 = vector.multi_reduction <maximumf>, %655, %cst_154 [1] : vector<2x6xf32> to vector<2xf32>
    %657 = vector.shape_cast %656 : vector<2xf32> to vector<2x1xf32>
    %658 = vector.broadcast %657 : vector<2x1xf32> to vector<2x6xf32>
    %659 = arith.subf %655, %658 : vector<2x6xf32>
    %660 = math.exp %659 : vector<2x6xf32>
    %cst_155 = arith.constant dense<0.000000e+00> : vector<2xf32>
    %661 = vector.multi_reduction <add>, %660, %cst_155 [1] : vector<2x6xf32> to vector<2xf32>
    %662 = vector.shape_cast %661 : vector<2xf32> to vector<2x1xf32>
    %663 = vector.broadcast %662 : vector<2x1xf32> to vector<2x6xf32>
    %664 = arith.divf %660, %663 : vector<2x6xf32>
    %cst_156 = arith.constant 0.000000e+00 : f32
    %665 = vector.broadcast %cst_156 : f32 to vector<2x32xf32>
    %666 = vector.extract_strided_slice %664 {offsets = [0, 0], sizes = [2, 1], strides = [1, 1]} : vector<2x6xf32> to vector<2x1xf32>
    %cst_157 = arith.constant dense<0.000000e+00> : vector<2x64xf32>
    %667 = tpu.matmul %665, %16, %cst_157 {dimension_numbers = #tpu.dot_dimension_numbers<[1], [0], [0], [1], [0, 0, 1, 1], [], []>} : vector<2x32xf32>, vector<32x64xf32>, vector<2x64xf32> -> vector<2x64xf32>
    %668 = vector.broadcast %17 : vector<1x64xf32> to vector<2x64xf32>
    %669 = arith.addf %667, %668 : vector<2x64xf32>
    %670 = vector.extract_strided_slice %565 {offsets = [0, 0], sizes = [2, 32], strides = [1, 1]} : vector<2x64xf32> to vector<2x32xf32>
    %671 = vector.extract_strided_slice %669 {offsets = [0, 0], sizes = [2, 32], strides = [1, 1]} : vector<2x64xf32> to vector<2x32xf32>
    %672 = arith.addf %670, %671 : vector<2x32xf32>
    %673 = arith.negf %672 : vector<2x32xf32>
    %674 = math.exp %673 : vector<2x32xf32>
    %cst_158 = arith.constant 1.000000e+00 : f32
    %675 = vector.broadcast %cst_158 : f32 to vector<2x32xf32>
    %676 = arith.addf %675, %674 : vector<2x32xf32>
    %677 = arith.divf %675, %676 : vector<2x32xf32>
    %678 = vector.extract_strided_slice %565 {offsets = [0, 32], sizes = [2, 32], strides = [1, 1]} : vector<2x64xf32> to vector<2x32xf32>
    %679 = vector.extract_strided_slice %669 {offsets = [0, 32], sizes = [2, 32], strides = [1, 1]} : vector<2x64xf32> to vector<2x32xf32>
    %680 = arith.mulf %677, %679 : vector<2x32xf32>
    %681 = arith.addf %678, %680 : vector<2x32xf32>
    %682 = math.tanh %681 : vector<2x32xf32>
    %683 = vector.broadcast %666 : vector<2x1xf32> to vector<2x32xf32>
    %684 = arith.mulf %683, %682 : vector<2x32xf32>
    %cst_159 = arith.constant 1.000000e+00 : f32
    %685 = vector.broadcast %cst_159 : f32 to vector<2x1xf32>
    %686 = arith.subf %685, %666 : vector<2x1xf32>
    %687 = vector.broadcast %686 : vector<2x1xf32> to vector<2x32xf32>
    %688 = arith.mulf %687, %665 : vector<2x32xf32>
    %689 = arith.addf %684, %688 : vector<2x32xf32>
    %690 = vector.extract_strided_slice %664 {offsets = [0, 1], sizes = [2, 1], strides = [1, 1]} : vector<2x6xf32> to vector<2x1xf32>
    %cst_160 = arith.constant dense<0.000000e+00> : vector<2x64xf32>
    %691 = tpu.matmul %689, %16, %cst_160 {dimension_numbers = #tpu.dot_dimension_numbers<[1], [0], [0], [1], [0, 0, 1, 1], [], []>} : vector<2x32xf32>, vector<32x64xf32>, vector<2x64xf32> -> vector<2x64xf32>
    %692 = vector.broadcast %17 : vector<1x64xf32> to vector<2x64xf32>
    %693 = arith.addf %691, %692 : vector<2x64xf32>
    %694 = vector.extract_strided_slice %568 {offsets = [0, 0], sizes = [2, 32], strides = [1, 1]} : vector<2x64xf32> to vector<2x32xf32>
    %695 = vector.extract_strided_slice %693 {offsets = [0, 0], sizes = [2, 32], strides = [1, 1]} : vector<2x64xf32> to vector<2x32xf32>
    %696 = arith.addf %694, %695 : vector<2x32xf32>
    %697 = arith.negf %696 : vector<2x32xf32>
    %698 = math.exp %697 : vector<2x32xf32>
    %cst_161 = arith.constant 1.000000e+00 : f32
    %699 = vector.broadcast %cst_161 : f32 to vector<2x32xf32>
    %700 = arith.addf %699, %698 : vector<2x32xf32>
    %701 = arith.divf %699, %700 : vector<2x32xf32>
    %702 = vector.extract_strided_slice %568 {offsets = [0, 32], sizes = [2, 32], strides = [1, 1]} : vector<2x64xf32> to vector<2x32xf32>
    %703 = vector.extract_strided_slice %693 {offsets = [0, 32], sizes = [2, 32], strides = [1, 1]} : vector<2x64xf32> to vector<2x32xf32>
    %704 = arith.mulf %701, %703 : vector<2x32xf32>
    %705 = arith.addf %702, %704 : vector<2x32xf32>
    %706 = math.tanh %705 : vector<2x32xf32>
    %707 = vector.broadcast %690 : vector<2x1xf32> to vector<2x32xf32>
    %708 = arith.mulf %707, %706 : vector<2x32xf32>
    %cst_162 = arith.constant 1.000000e+00 : f32
    %709 = vector.broadcast %cst_162 : f32 to vector<2x1xf32>
    %710 = arith.subf %709, %690 : vector<2x1xf32>
    %711 = vector.broadcast %710 : vector<2x1xf32> to vector<2x32xf32>
    %712 = arith.mulf %711, %689 : vector<2x32xf32>
    %713 = arith.addf %708, %712 : vector<2x32xf32>
    %714 = vector.extract_strided_slice %664 {offsets = [0, 2], sizes = [2, 1], strides = [1, 1]} : vector<2x6xf32> to vector<2x1xf32>
    %cst_163 = arith.constant dense<0.000000e+00> : vector<2x64xf32>
    %715 = tpu.matmul %713, %16, %cst_163 {dimension_numbers = #tpu.dot_dimension_numbers<[1], [0], [0], [1], [0, 0, 1, 1], [], []>} : vector<2x32xf32>, vector<32x64xf32>, vector<2x64xf32> -> vector<2x64xf32>
    %716 = vector.broadcast %17 : vector<1x64xf32> to vector<2x64xf32>
    %717 = arith.addf %715, %716 : vector<2x64xf32>
    %718 = vector.extract_strided_slice %571 {offsets = [0, 0], sizes = [2, 32], strides = [1, 1]} : vector<2x64xf32> to vector<2x32xf32>
    %719 = vector.extract_strided_slice %717 {offsets = [0, 0], sizes = [2, 32], strides = [1, 1]} : vector<2x64xf32> to vector<2x32xf32>
    %720 = arith.addf %718, %719 : vector<2x32xf32>
    %721 = arith.negf %720 : vector<2x32xf32>
    %722 = math.exp %721 : vector<2x32xf32>
    %cst_164 = arith.constant 1.000000e+00 : f32
    %723 = vector.broadcast %cst_164 : f32 to vector<2x32xf32>
    %724 = arith.addf %723, %722 : vector<2x32xf32>
    %725 = arith.divf %723, %724 : vector<2x32xf32>
    %726 = vector.extract_strided_slice %571 {offsets = [0, 32], sizes = [2, 32], strides = [1, 1]} : vector<2x64xf32> to vector<2x32xf32>
    %727 = vector.extract_strided_slice %717 {offsets = [0, 32], sizes = [2, 32], strides = [1, 1]} : vector<2x64xf32> to vector<2x32xf32>
    %728 = arith.mulf %725, %727 : vector<2x32xf32>
    %729 = arith.addf %726, %728 : vector<2x32xf32>
    %730 = math.tanh %729 : vector<2x32xf32>
    %731 = vector.broadcast %714 : vector<2x1xf32> to vector<2x32xf32>
    %732 = arith.mulf %731, %730 : vector<2x32xf32>
    %cst_165 = arith.constant 1.000000e+00 : f32
    %733 = vector.broadcast %cst_165 : f32 to vector<2x1xf32>
    %734 = arith.subf %733, %714 : vector<2x1xf32>
    %735 = vector.broadcast %734 : vector<2x1xf32> to vector<2x32xf32>
    %736 = arith.mulf %735, %713 : vector<2x32xf32>
    %737 = arith.addf %732, %736 : vector<2x32xf32>
    %738 = vector.extract_strided_slice %664 {offsets = [0, 3], sizes = [2, 1], strides = [1, 1]} : vector<2x6xf32> to vector<2x1xf32>
    %cst_166 = arith.constant dense<0.000000e+00> : vector<2x64xf32>
    %739 = tpu.matmul %737, %16, %cst_166 {dimension_numbers = #tpu.dot_dimension_numbers<[1], [0], [0], [1], [0, 0, 1, 1], [], []>} : vector<2x32xf32>, vector<32x64xf32>, vector<2x64xf32> -> vector<2x64xf32>
    %740 = vector.broadcast %17 : vector<1x64xf32> to vector<2x64xf32>
    %741 = arith.addf %739, %740 : vector<2x64xf32>
    %742 = vector.extract_strided_slice %574 {offsets = [0, 0], sizes = [2, 32], strides = [1, 1]} : vector<2x64xf32> to vector<2x32xf32>
    %743 = vector.extract_strided_slice %741 {offsets = [0, 0], sizes = [2, 32], strides = [1, 1]} : vector<2x64xf32> to vector<2x32xf32>
    %744 = arith.addf %742, %743 : vector<2x32xf32>
    %745 = arith.negf %744 : vector<2x32xf32>
    %746 = math.exp %745 : vector<2x32xf32>
    %cst_167 = arith.constant 1.000000e+00 : f32
    %747 = vector.broadcast %cst_167 : f32 to vector<2x32xf32>
    %748 = arith.addf %747, %746 : vector<2x32xf32>
    %749 = arith.divf %747, %748 : vector<2x32xf32>
    %750 = vector.extract_strided_slice %574 {offsets = [0, 32], sizes = [2, 32], strides = [1, 1]} : vector<2x64xf32> to vector<2x32xf32>
    %751 = vector.extract_strided_slice %741 {offsets = [0, 32], sizes = [2, 32], strides = [1, 1]} : vector<2x64xf32> to vector<2x32xf32>
    %752 = arith.mulf %749, %751 : vector<2x32xf32>
    %753 = arith.addf %750, %752 : vector<2x32xf32>
    %754 = math.tanh %753 : vector<2x32xf32>
    %755 = vector.broadcast %738 : vector<2x1xf32> to vector<2x32xf32>
    %756 = arith.mulf %755, %754 : vector<2x32xf32>
    %cst_168 = arith.constant 1.000000e+00 : f32
    %757 = vector.broadcast %cst_168 : f32 to vector<2x1xf32>
    %758 = arith.subf %757, %738 : vector<2x1xf32>
    %759 = vector.broadcast %758 : vector<2x1xf32> to vector<2x32xf32>
    %760 = arith.mulf %759, %737 : vector<2x32xf32>
    %761 = arith.addf %756, %760 : vector<2x32xf32>
    %762 = vector.extract_strided_slice %664 {offsets = [0, 4], sizes = [2, 1], strides = [1, 1]} : vector<2x6xf32> to vector<2x1xf32>
    %cst_169 = arith.constant dense<0.000000e+00> : vector<2x64xf32>
    %763 = tpu.matmul %761, %16, %cst_169 {dimension_numbers = #tpu.dot_dimension_numbers<[1], [0], [0], [1], [0, 0, 1, 1], [], []>} : vector<2x32xf32>, vector<32x64xf32>, vector<2x64xf32> -> vector<2x64xf32>
    %764 = vector.broadcast %17 : vector<1x64xf32> to vector<2x64xf32>
    %765 = arith.addf %763, %764 : vector<2x64xf32>
    %766 = vector.extract_strided_slice %577 {offsets = [0, 0], sizes = [2, 32], strides = [1, 1]} : vector<2x64xf32> to vector<2x32xf32>
    %767 = vector.extract_strided_slice %765 {offsets = [0, 0], sizes = [2, 32], strides = [1, 1]} : vector<2x64xf32> to vector<2x32xf32>
    %768 = arith.addf %766, %767 : vector<2x32xf32>
    %769 = arith.negf %768 : vector<2x32xf32>
    %770 = math.exp %769 : vector<2x32xf32>
    %cst_170 = arith.constant 1.000000e+00 : f32
    %771 = vector.broadcast %cst_170 : f32 to vector<2x32xf32>
    %772 = arith.addf %771, %770 : vector<2x32xf32>
    %773 = arith.divf %771, %772 : vector<2x32xf32>
    %774 = vector.extract_strided_slice %577 {offsets = [0, 32], sizes = [2, 32], strides = [1, 1]} : vector<2x64xf32> to vector<2x32xf32>
    %775 = vector.extract_strided_slice %765 {offsets = [0, 32], sizes = [2, 32], strides = [1, 1]} : vector<2x64xf32> to vector<2x32xf32>
    %776 = arith.mulf %773, %775 : vector<2x32xf32>
    %777 = arith.addf %774, %776 : vector<2x32xf32>
    %778 = math.tanh %777 : vector<2x32xf32>
    %779 = vector.broadcast %762 : vector<2x1xf32> to vector<2x32xf32>
    %780 = arith.mulf %779, %778 : vector<2x32xf32>
    %cst_171 = arith.constant 1.000000e+00 : f32
    %781 = vector.broadcast %cst_171 : f32 to vector<2x1xf32>
    %782 = arith.subf %781, %762 : vector<2x1xf32>
    %783 = vector.broadcast %782 : vector<2x1xf32> to vector<2x32xf32>
    %784 = arith.mulf %783, %761 : vector<2x32xf32>
    %785 = arith.addf %780, %784 : vector<2x32xf32>
    %786 = vector.extract_strided_slice %664 {offsets = [0, 5], sizes = [2, 1], strides = [1, 1]} : vector<2x6xf32> to vector<2x1xf32>
    %cst_172 = arith.constant dense<0.000000e+00> : vector<2x64xf32>
    %787 = tpu.matmul %785, %16, %cst_172 {dimension_numbers = #tpu.dot_dimension_numbers<[1], [0], [0], [1], [0, 0, 1, 1], [], []>} : vector<2x32xf32>, vector<32x64xf32>, vector<2x64xf32> -> vector<2x64xf32>
    %788 = vector.broadcast %17 : vector<1x64xf32> to vector<2x64xf32>
    %789 = arith.addf %787, %788 : vector<2x64xf32>
    %790 = vector.extract_strided_slice %580 {offsets = [0, 0], sizes = [2, 32], strides = [1, 1]} : vector<2x64xf32> to vector<2x32xf32>
    %791 = vector.extract_strided_slice %789 {offsets = [0, 0], sizes = [2, 32], strides = [1, 1]} : vector<2x64xf32> to vector<2x32xf32>
    %792 = arith.addf %790, %791 : vector<2x32xf32>
    %793 = arith.negf %792 : vector<2x32xf32>
    %794 = math.exp %793 : vector<2x32xf32>
    %cst_173 = arith.constant 1.000000e+00 : f32
    %795 = vector.broadcast %cst_173 : f32 to vector<2x32xf32>
    %796 = arith.addf %795, %794 : vector<2x32xf32>
    %797 = arith.divf %795, %796 : vector<2x32xf32>
    %798 = vector.extract_strided_slice %580 {offsets = [0, 32], sizes = [2, 32], strides = [1, 1]} : vector<2x64xf32> to vector<2x32xf32>
    %799 = vector.extract_strided_slice %789 {offsets = [0, 32], sizes = [2, 32], strides = [1, 1]} : vector<2x64xf32> to vector<2x32xf32>
    %800 = arith.mulf %797, %799 : vector<2x32xf32>
    %801 = arith.addf %798, %800 : vector<2x32xf32>
    %802 = math.tanh %801 : vector<2x32xf32>
    %803 = vector.broadcast %786 : vector<2x1xf32> to vector<2x32xf32>
    %804 = arith.mulf %803, %802 : vector<2x32xf32>
    %cst_174 = arith.constant 1.000000e+00 : f32
    %805 = vector.broadcast %cst_174 : f32 to vector<2x1xf32>
    %806 = arith.subf %805, %786 : vector<2x1xf32>
    %807 = vector.broadcast %806 : vector<2x1xf32> to vector<2x32xf32>
    %808 = arith.mulf %807, %785 : vector<2x32xf32>
    %809 = arith.addf %804, %808 : vector<2x32xf32>
    %810 = tpu.concatenate %562, %809, %562 in 1 : vector<2x32xf32>, vector<2x32xf32>, vector<2x32xf32> -> vector<2x96xf32>
    %cst_175 = arith.constant dense<0.000000e+00> : vector<2x32xf32>
    %811 = tpu.matmul %810, %18, %cst_175 {dimension_numbers = #tpu.dot_dimension_numbers<[1], [0], [0], [1], [0, 0, 1, 1], [], []>} : vector<2x96xf32>, vector<96x32xf32>, vector<2x32xf32> -> vector<2x32xf32>
    %812 = vector.broadcast %19 : vector<1x32xf32> to vector<2x32xf32>
    %813 = arith.addf %811, %812 : vector<2x32xf32>
    %cst_176 = arith.constant 0.000000e+00 : f32
    %814 = vector.broadcast %cst_176 : f32 to vector<2x32xf32>
    %815 = arith.maximumf %813, %814 : vector<2x32xf32>
    %cst_177 = arith.constant dense<0.000000e+00> : vector<2x96xf32>
    %816 = tpu.matmul %815, %8, %cst_177 {dimension_numbers = #tpu.dot_dimension_numbers<[1], [0], [0], [1], [0, 0, 1, 1], [], []>} : vector<2x32xf32>, vector<32x96xf32>, vector<2x96xf32> -> vector<2x96xf32>
    %817 = vector.broadcast %9 : vector<1x96xf32> to vector<2x96xf32>
    %818 = arith.addf %816, %817 : vector<2x96xf32>
    %cst_178 = arith.constant dense<0.000000e+00> : vector<2x96xf32>
    %819 = tpu.matmul %562, %6, %cst_178 {dimension_numbers = #tpu.dot_dimension_numbers<[1], [0], [0], [1], [0, 0, 1, 1], [], []>} : vector<2x32xf32>, vector<32x96xf32>, vector<2x96xf32> -> vector<2x96xf32>
    %820 = vector.broadcast %7 : vector<1x96xf32> to vector<2x96xf32>
    %821 = arith.addf %819, %820 : vector<2x96xf32>
    %822 = vector.extract_strided_slice %818 {offsets = [0, 0], sizes = [2, 32], strides = [1, 1]} : vector<2x96xf32> to vector<2x32xf32>
    %823 = vector.extract_strided_slice %821 {offsets = [0, 0], sizes = [2, 32], strides = [1, 1]} : vector<2x96xf32> to vector<2x32xf32>
    %824 = arith.addf %822, %823 : vector<2x32xf32>
    %825 = arith.negf %824 : vector<2x32xf32>
    %826 = math.exp %825 : vector<2x32xf32>
    %cst_179 = arith.constant 1.000000e+00 : f32
    %827 = vector.broadcast %cst_179 : f32 to vector<2x32xf32>
    %828 = arith.addf %827, %826 : vector<2x32xf32>
    %829 = arith.divf %827, %828 : vector<2x32xf32>
    %830 = vector.extract_strided_slice %818 {offsets = [0, 32], sizes = [2, 32], strides = [1, 1]} : vector<2x96xf32> to vector<2x32xf32>
    %831 = vector.extract_strided_slice %821 {offsets = [0, 32], sizes = [2, 32], strides = [1, 1]} : vector<2x96xf32> to vector<2x32xf32>
    %832 = arith.addf %830, %831 : vector<2x32xf32>
    %833 = arith.negf %832 : vector<2x32xf32>
    %834 = math.exp %833 : vector<2x32xf32>
    %cst_180 = arith.constant 1.000000e+00 : f32
    %835 = vector.broadcast %cst_180 : f32 to vector<2x32xf32>
    %836 = arith.addf %835, %834 : vector<2x32xf32>
    %837 = arith.divf %835, %836 : vector<2x32xf32>
    %838 = vector.extract_strided_slice %818 {offsets = [0, 64], sizes = [2, 32], strides = [1, 1]} : vector<2x96xf32> to vector<2x32xf32>
    %839 = vector.extract_strided_slice %821 {offsets = [0, 64], sizes = [2, 32], strides = [1, 1]} : vector<2x96xf32> to vector<2x32xf32>
    %840 = arith.mulf %829, %839 : vector<2x32xf32>
    %841 = arith.addf %838, %840 : vector<2x32xf32>
    %842 = math.tanh %841 : vector<2x32xf32>
    %cst_181 = arith.constant 1.000000e+00 : f32
    %843 = vector.broadcast %cst_181 : f32 to vector<2x32xf32>
    %844 = arith.subf %843, %837 : vector<2x32xf32>
    %845 = arith.mulf %844, %842 : vector<2x32xf32>
    %846 = arith.mulf %837, %562 : vector<2x32xf32>
    %847 = arith.addf %845, %846 : vector<2x32xf32>
    %848 = arith.mulf %400, %847 : vector<2x32xf32>
    %849 = arith.subf %400, %847 : vector<2x32xf32>
    %850 = math.absf %849 : vector<2x32xf32>
    %851 = tpu.concatenate %581, %848, %588, %850 in 1 : vector<2x32xf32>, vector<2x32xf32>, vector<2x32xf32>, vector<2x32xf32> -> vector<2x128xf32>
    %cst_182 = arith.constant dense<0.000000e+00> : vector<2x32xf32>
    %852 = tpu.matmul %851, %10, %cst_182 {dimension_numbers = #tpu.dot_dimension_numbers<[1], [0], [0], [1], [0, 0, 1, 1], [], []>} : vector<2x128xf32>, vector<128x32xf32>, vector<2x32xf32> -> vector<2x32xf32>
    %853 = vector.broadcast %11 : vector<1x32xf32> to vector<2x32xf32>
    %854 = arith.addf %852, %853 : vector<2x32xf32>
    %855 = math.tanh %854 : vector<2x32xf32>
    %cst_183 = arith.constant dense<0.000000e+00> : vector<2x1xf32>
    %856 = tpu.matmul %855, %12, %cst_183 {dimension_numbers = #tpu.dot_dimension_numbers<[1], [0], [0], [1], [0, 0, 1, 1], [], []>} : vector<2x32xf32>, vector<32x1xf32>, vector<2x1xf32> -> vector<2x1xf32>
    %857 = arith.mulf %401, %847 : vector<2x32xf32>
    %858 = arith.subf %401, %847 : vector<2x32xf32>
    %859 = math.absf %858 : vector<2x32xf32>
    %860 = tpu.concatenate %582, %857, %590, %859 in 1 : vector<2x32xf32>, vector<2x32xf32>, vector<2x32xf32>, vector<2x32xf32> -> vector<2x128xf32>
    %cst_184 = arith.constant dense<0.000000e+00> : vector<2x32xf32>
    %861 = tpu.matmul %860, %10, %cst_184 {dimension_numbers = #tpu.dot_dimension_numbers<[1], [0], [0], [1], [0, 0, 1, 1], [], []>} : vector<2x128xf32>, vector<128x32xf32>, vector<2x32xf32> -> vector<2x32xf32>
    %862 = vector.broadcast %11 : vector<1x32xf32> to vector<2x32xf32>
    %863 = arith.addf %861, %862 : vector<2x32xf32>
    %864 = math.tanh %863 : vector<2x32xf32>
    %cst_185 = arith.constant dense<0.000000e+00> : vector<2x1xf32>
    %865 = tpu.matmul %864, %12, %cst_185 {dimension_numbers = #tpu.dot_dimension_numbers<[1], [0], [0], [1], [0, 0, 1, 1], [], []>} : vector<2x32xf32>, vector<32x1xf32>, vector<2x1xf32> -> vector<2x1xf32>
    %866 = arith.mulf %402, %847 : vector<2x32xf32>
    %867 = arith.subf %402, %847 : vector<2x32xf32>
    %868 = math.absf %867 : vector<2x32xf32>
    %869 = tpu.concatenate %583, %866, %592, %868 in 1 : vector<2x32xf32>, vector<2x32xf32>, vector<2x32xf32>, vector<2x32xf32> -> vector<2x128xf32>
    %cst_186 = arith.constant dense<0.000000e+00> : vector<2x32xf32>
    %870 = tpu.matmul %869, %10, %cst_186 {dimension_numbers = #tpu.dot_dimension_numbers<[1], [0], [0], [1], [0, 0, 1, 1], [], []>} : vector<2x128xf32>, vector<128x32xf32>, vector<2x32xf32> -> vector<2x32xf32>
    %871 = vector.broadcast %11 : vector<1x32xf32> to vector<2x32xf32>
    %872 = arith.addf %870, %871 : vector<2x32xf32>
    %873 = math.tanh %872 : vector<2x32xf32>
    %cst_187 = arith.constant dense<0.000000e+00> : vector<2x1xf32>
    %874 = tpu.matmul %873, %12, %cst_187 {dimension_numbers = #tpu.dot_dimension_numbers<[1], [0], [0], [1], [0, 0, 1, 1], [], []>} : vector<2x32xf32>, vector<32x1xf32>, vector<2x1xf32> -> vector<2x1xf32>
    %875 = arith.mulf %403, %847 : vector<2x32xf32>
    %876 = arith.subf %403, %847 : vector<2x32xf32>
    %877 = math.absf %876 : vector<2x32xf32>
    %878 = tpu.concatenate %584, %875, %594, %877 in 1 : vector<2x32xf32>, vector<2x32xf32>, vector<2x32xf32>, vector<2x32xf32> -> vector<2x128xf32>
    %cst_188 = arith.constant dense<0.000000e+00> : vector<2x32xf32>
    %879 = tpu.matmul %878, %10, %cst_188 {dimension_numbers = #tpu.dot_dimension_numbers<[1], [0], [0], [1], [0, 0, 1, 1], [], []>} : vector<2x128xf32>, vector<128x32xf32>, vector<2x32xf32> -> vector<2x32xf32>
    %880 = vector.broadcast %11 : vector<1x32xf32> to vector<2x32xf32>
    %881 = arith.addf %879, %880 : vector<2x32xf32>
    %882 = math.tanh %881 : vector<2x32xf32>
    %cst_189 = arith.constant dense<0.000000e+00> : vector<2x1xf32>
    %883 = tpu.matmul %882, %12, %cst_189 {dimension_numbers = #tpu.dot_dimension_numbers<[1], [0], [0], [1], [0, 0, 1, 1], [], []>} : vector<2x32xf32>, vector<32x1xf32>, vector<2x1xf32> -> vector<2x1xf32>
    %884 = arith.mulf %404, %847 : vector<2x32xf32>
    %885 = arith.subf %404, %847 : vector<2x32xf32>
    %886 = math.absf %885 : vector<2x32xf32>
    %887 = tpu.concatenate %585, %884, %596, %886 in 1 : vector<2x32xf32>, vector<2x32xf32>, vector<2x32xf32>, vector<2x32xf32> -> vector<2x128xf32>
    %cst_190 = arith.constant dense<0.000000e+00> : vector<2x32xf32>
    %888 = tpu.matmul %887, %10, %cst_190 {dimension_numbers = #tpu.dot_dimension_numbers<[1], [0], [0], [1], [0, 0, 1, 1], [], []>} : vector<2x128xf32>, vector<128x32xf32>, vector<2x32xf32> -> vector<2x32xf32>
    %889 = vector.broadcast %11 : vector<1x32xf32> to vector<2x32xf32>
    %890 = arith.addf %888, %889 : vector<2x32xf32>
    %891 = math.tanh %890 : vector<2x32xf32>
    %cst_191 = arith.constant dense<0.000000e+00> : vector<2x1xf32>
    %892 = tpu.matmul %891, %12, %cst_191 {dimension_numbers = #tpu.dot_dimension_numbers<[1], [0], [0], [1], [0, 0, 1, 1], [], []>} : vector<2x32xf32>, vector<32x1xf32>, vector<2x1xf32> -> vector<2x1xf32>
    %893 = arith.mulf %405, %847 : vector<2x32xf32>
    %894 = arith.subf %405, %847 : vector<2x32xf32>
    %895 = math.absf %894 : vector<2x32xf32>
    %896 = tpu.concatenate %586, %893, %598, %895 in 1 : vector<2x32xf32>, vector<2x32xf32>, vector<2x32xf32>, vector<2x32xf32> -> vector<2x128xf32>
    %cst_192 = arith.constant dense<0.000000e+00> : vector<2x32xf32>
    %897 = tpu.matmul %896, %10, %cst_192 {dimension_numbers = #tpu.dot_dimension_numbers<[1], [0], [0], [1], [0, 0, 1, 1], [], []>} : vector<2x128xf32>, vector<128x32xf32>, vector<2x32xf32> -> vector<2x32xf32>
    %898 = vector.broadcast %11 : vector<1x32xf32> to vector<2x32xf32>
    %899 = arith.addf %897, %898 : vector<2x32xf32>
    %900 = math.tanh %899 : vector<2x32xf32>
    %cst_193 = arith.constant dense<0.000000e+00> : vector<2x1xf32>
    %901 = tpu.matmul %900, %12, %cst_193 {dimension_numbers = #tpu.dot_dimension_numbers<[1], [0], [0], [1], [0, 0, 1, 1], [], []>} : vector<2x32xf32>, vector<32x1xf32>, vector<2x1xf32> -> vector<2x1xf32>
    %902 = tpu.concatenate %856, %865, %874, %883, %892, %901 in 1 : vector<2x1xf32>, vector<2x1xf32>, vector<2x1xf32>, vector<2x1xf32>, vector<2x1xf32>, vector<2x1xf32> -> vector<2x6xf32>
    %903 = vector.broadcast %13 : vector<1x1xf32> to vector<2x6xf32>
    %904 = arith.addf %902, %903 : vector<2x6xf32>
    %cst_194 = arith.constant dense<0xFF800000> : vector<2xf32>
    %905 = vector.multi_reduction <maximumf>, %904, %cst_194 [1] : vector<2x6xf32> to vector<2xf32>
    %906 = vector.shape_cast %905 : vector<2xf32> to vector<2x1xf32>
    %907 = vector.broadcast %906 : vector<2x1xf32> to vector<2x6xf32>
    %908 = arith.subf %904, %907 : vector<2x6xf32>
    %909 = math.exp %908 : vector<2x6xf32>
    %cst_195 = arith.constant dense<0.000000e+00> : vector<2xf32>
    %910 = vector.multi_reduction <add>, %909, %cst_195 [1] : vector<2x6xf32> to vector<2xf32>
    %911 = vector.shape_cast %910 : vector<2xf32> to vector<2x1xf32>
    %912 = vector.broadcast %911 : vector<2x1xf32> to vector<2x6xf32>
    %913 = arith.divf %909, %912 : vector<2x6xf32>
    %cst_196 = arith.constant 0.000000e+00 : f32
    %914 = vector.broadcast %cst_196 : f32 to vector<2x32xf32>
    %915 = vector.extract_strided_slice %913 {offsets = [0, 0], sizes = [2, 1], strides = [1, 1]} : vector<2x6xf32> to vector<2x1xf32>
    %cst_197 = arith.constant dense<0.000000e+00> : vector<2x64xf32>
    %916 = tpu.matmul %914, %16, %cst_197 {dimension_numbers = #tpu.dot_dimension_numbers<[1], [0], [0], [1], [0, 0, 1, 1], [], []>} : vector<2x32xf32>, vector<32x64xf32>, vector<2x64xf32> -> vector<2x64xf32>
    %917 = vector.broadcast %17 : vector<1x64xf32> to vector<2x64xf32>
    %918 = arith.addf %916, %917 : vector<2x64xf32>
    %919 = vector.extract_strided_slice %565 {offsets = [0, 0], sizes = [2, 32], strides = [1, 1]} : vector<2x64xf32> to vector<2x32xf32>
    %920 = vector.extract_strided_slice %918 {offsets = [0, 0], sizes = [2, 32], strides = [1, 1]} : vector<2x64xf32> to vector<2x32xf32>
    %921 = arith.addf %919, %920 : vector<2x32xf32>
    %922 = arith.negf %921 : vector<2x32xf32>
    %923 = math.exp %922 : vector<2x32xf32>
    %cst_198 = arith.constant 1.000000e+00 : f32
    %924 = vector.broadcast %cst_198 : f32 to vector<2x32xf32>
    %925 = arith.addf %924, %923 : vector<2x32xf32>
    %926 = arith.divf %924, %925 : vector<2x32xf32>
    %927 = vector.extract_strided_slice %565 {offsets = [0, 32], sizes = [2, 32], strides = [1, 1]} : vector<2x64xf32> to vector<2x32xf32>
    %928 = vector.extract_strided_slice %918 {offsets = [0, 32], sizes = [2, 32], strides = [1, 1]} : vector<2x64xf32> to vector<2x32xf32>
    %929 = arith.mulf %926, %928 : vector<2x32xf32>
    %930 = arith.addf %927, %929 : vector<2x32xf32>
    %931 = math.tanh %930 : vector<2x32xf32>
    %932 = vector.broadcast %915 : vector<2x1xf32> to vector<2x32xf32>
    %933 = arith.mulf %932, %931 : vector<2x32xf32>
    %cst_199 = arith.constant 1.000000e+00 : f32
    %934 = vector.broadcast %cst_199 : f32 to vector<2x1xf32>
    %935 = arith.subf %934, %915 : vector<2x1xf32>
    %936 = vector.broadcast %935 : vector<2x1xf32> to vector<2x32xf32>
    %937 = arith.mulf %936, %914 : vector<2x32xf32>
    %938 = arith.addf %933, %937 : vector<2x32xf32>
    %939 = vector.extract_strided_slice %913 {offsets = [0, 1], sizes = [2, 1], strides = [1, 1]} : vector<2x6xf32> to vector<2x1xf32>
    %cst_200 = arith.constant dense<0.000000e+00> : vector<2x64xf32>
    %940 = tpu.matmul %938, %16, %cst_200 {dimension_numbers = #tpu.dot_dimension_numbers<[1], [0], [0], [1], [0, 0, 1, 1], [], []>} : vector<2x32xf32>, vector<32x64xf32>, vector<2x64xf32> -> vector<2x64xf32>
    %941 = vector.broadcast %17 : vector<1x64xf32> to vector<2x64xf32>
    %942 = arith.addf %940, %941 : vector<2x64xf32>
    %943 = vector.extract_strided_slice %568 {offsets = [0, 0], sizes = [2, 32], strides = [1, 1]} : vector<2x64xf32> to vector<2x32xf32>
    %944 = vector.extract_strided_slice %942 {offsets = [0, 0], sizes = [2, 32], strides = [1, 1]} : vector<2x64xf32> to vector<2x32xf32>
    %945 = arith.addf %943, %944 : vector<2x32xf32>
    %946 = arith.negf %945 : vector<2x32xf32>
    %947 = math.exp %946 : vector<2x32xf32>
    %cst_201 = arith.constant 1.000000e+00 : f32
    %948 = vector.broadcast %cst_201 : f32 to vector<2x32xf32>
    %949 = arith.addf %948, %947 : vector<2x32xf32>
    %950 = arith.divf %948, %949 : vector<2x32xf32>
    %951 = vector.extract_strided_slice %568 {offsets = [0, 32], sizes = [2, 32], strides = [1, 1]} : vector<2x64xf32> to vector<2x32xf32>
    %952 = vector.extract_strided_slice %942 {offsets = [0, 32], sizes = [2, 32], strides = [1, 1]} : vector<2x64xf32> to vector<2x32xf32>
    %953 = arith.mulf %950, %952 : vector<2x32xf32>
    %954 = arith.addf %951, %953 : vector<2x32xf32>
    %955 = math.tanh %954 : vector<2x32xf32>
    %956 = vector.broadcast %939 : vector<2x1xf32> to vector<2x32xf32>
    %957 = arith.mulf %956, %955 : vector<2x32xf32>
    %cst_202 = arith.constant 1.000000e+00 : f32
    %958 = vector.broadcast %cst_202 : f32 to vector<2x1xf32>
    %959 = arith.subf %958, %939 : vector<2x1xf32>
    %960 = vector.broadcast %959 : vector<2x1xf32> to vector<2x32xf32>
    %961 = arith.mulf %960, %938 : vector<2x32xf32>
    %962 = arith.addf %957, %961 : vector<2x32xf32>
    %963 = vector.extract_strided_slice %913 {offsets = [0, 2], sizes = [2, 1], strides = [1, 1]} : vector<2x6xf32> to vector<2x1xf32>
    %cst_203 = arith.constant dense<0.000000e+00> : vector<2x64xf32>
    %964 = tpu.matmul %962, %16, %cst_203 {dimension_numbers = #tpu.dot_dimension_numbers<[1], [0], [0], [1], [0, 0, 1, 1], [], []>} : vector<2x32xf32>, vector<32x64xf32>, vector<2x64xf32> -> vector<2x64xf32>
    %965 = vector.broadcast %17 : vector<1x64xf32> to vector<2x64xf32>
    %966 = arith.addf %964, %965 : vector<2x64xf32>
    %967 = vector.extract_strided_slice %571 {offsets = [0, 0], sizes = [2, 32], strides = [1, 1]} : vector<2x64xf32> to vector<2x32xf32>
    %968 = vector.extract_strided_slice %966 {offsets = [0, 0], sizes = [2, 32], strides = [1, 1]} : vector<2x64xf32> to vector<2x32xf32>
    %969 = arith.addf %967, %968 : vector<2x32xf32>
    %970 = arith.negf %969 : vector<2x32xf32>
    %971 = math.exp %970 : vector<2x32xf32>
    %cst_204 = arith.constant 1.000000e+00 : f32
    %972 = vector.broadcast %cst_204 : f32 to vector<2x32xf32>
    %973 = arith.addf %972, %971 : vector<2x32xf32>
    %974 = arith.divf %972, %973 : vector<2x32xf32>
    %975 = vector.extract_strided_slice %571 {offsets = [0, 32], sizes = [2, 32], strides = [1, 1]} : vector<2x64xf32> to vector<2x32xf32>
    %976 = vector.extract_strided_slice %966 {offsets = [0, 32], sizes = [2, 32], strides = [1, 1]} : vector<2x64xf32> to vector<2x32xf32>
    %977 = arith.mulf %974, %976 : vector<2x32xf32>
    %978 = arith.addf %975, %977 : vector<2x32xf32>
    %979 = math.tanh %978 : vector<2x32xf32>
    %980 = vector.broadcast %963 : vector<2x1xf32> to vector<2x32xf32>
    %981 = arith.mulf %980, %979 : vector<2x32xf32>
    %cst_205 = arith.constant 1.000000e+00 : f32
    %982 = vector.broadcast %cst_205 : f32 to vector<2x1xf32>
    %983 = arith.subf %982, %963 : vector<2x1xf32>
    %984 = vector.broadcast %983 : vector<2x1xf32> to vector<2x32xf32>
    %985 = arith.mulf %984, %962 : vector<2x32xf32>
    %986 = arith.addf %981, %985 : vector<2x32xf32>
    %987 = vector.extract_strided_slice %913 {offsets = [0, 3], sizes = [2, 1], strides = [1, 1]} : vector<2x6xf32> to vector<2x1xf32>
    %cst_206 = arith.constant dense<0.000000e+00> : vector<2x64xf32>
    %988 = tpu.matmul %986, %16, %cst_206 {dimension_numbers = #tpu.dot_dimension_numbers<[1], [0], [0], [1], [0, 0, 1, 1], [], []>} : vector<2x32xf32>, vector<32x64xf32>, vector<2x64xf32> -> vector<2x64xf32>
    %989 = vector.broadcast %17 : vector<1x64xf32> to vector<2x64xf32>
    %990 = arith.addf %988, %989 : vector<2x64xf32>
    %991 = vector.extract_strided_slice %574 {offsets = [0, 0], sizes = [2, 32], strides = [1, 1]} : vector<2x64xf32> to vector<2x32xf32>
    %992 = vector.extract_strided_slice %990 {offsets = [0, 0], sizes = [2, 32], strides = [1, 1]} : vector<2x64xf32> to vector<2x32xf32>
    %993 = arith.addf %991, %992 : vector<2x32xf32>
    %994 = arith.negf %993 : vector<2x32xf32>
    %995 = math.exp %994 : vector<2x32xf32>
    %cst_207 = arith.constant 1.000000e+00 : f32
    %996 = vector.broadcast %cst_207 : f32 to vector<2x32xf32>
    %997 = arith.addf %996, %995 : vector<2x32xf32>
    %998 = arith.divf %996, %997 : vector<2x32xf32>
    %999 = vector.extract_strided_slice %574 {offsets = [0, 32], sizes = [2, 32], strides = [1, 1]} : vector<2x64xf32> to vector<2x32xf32>
    %1000 = vector.extract_strided_slice %990 {offsets = [0, 32], sizes = [2, 32], strides = [1, 1]} : vector<2x64xf32> to vector<2x32xf32>
    %1001 = arith.mulf %998, %1000 : vector<2x32xf32>
    %1002 = arith.addf %999, %1001 : vector<2x32xf32>
    %1003 = math.tanh %1002 : vector<2x32xf32>
    %1004 = vector.broadcast %987 : vector<2x1xf32> to vector<2x32xf32>
    %1005 = arith.mulf %1004, %1003 : vector<2x32xf32>
    %cst_208 = arith.constant 1.000000e+00 : f32
    %1006 = vector.broadcast %cst_208 : f32 to vector<2x1xf32>
    %1007 = arith.subf %1006, %987 : vector<2x1xf32>
    %1008 = vector.broadcast %1007 : vector<2x1xf32> to vector<2x32xf32>
    %1009 = arith.mulf %1008, %986 : vector<2x32xf32>
    %1010 = arith.addf %1005, %1009 : vector<2x32xf32>
    %1011 = vector.extract_strided_slice %913 {offsets = [0, 4], sizes = [2, 1], strides = [1, 1]} : vector<2x6xf32> to vector<2x1xf32>
    %cst_209 = arith.constant dense<0.000000e+00> : vector<2x64xf32>
    %1012 = tpu.matmul %1010, %16, %cst_209 {dimension_numbers = #tpu.dot_dimension_numbers<[1], [0], [0], [1], [0, 0, 1, 1], [], []>} : vector<2x32xf32>, vector<32x64xf32>, vector<2x64xf32> -> vector<2x64xf32>
    %1013 = vector.broadcast %17 : vector<1x64xf32> to vector<2x64xf32>
    %1014 = arith.addf %1012, %1013 : vector<2x64xf32>
    %1015 = vector.extract_strided_slice %577 {offsets = [0, 0], sizes = [2, 32], strides = [1, 1]} : vector<2x64xf32> to vector<2x32xf32>
    %1016 = vector.extract_strided_slice %1014 {offsets = [0, 0], sizes = [2, 32], strides = [1, 1]} : vector<2x64xf32> to vector<2x32xf32>
    %1017 = arith.addf %1015, %1016 : vector<2x32xf32>
    %1018 = arith.negf %1017 : vector<2x32xf32>
    %1019 = math.exp %1018 : vector<2x32xf32>
    %cst_210 = arith.constant 1.000000e+00 : f32
    %1020 = vector.broadcast %cst_210 : f32 to vector<2x32xf32>
    %1021 = arith.addf %1020, %1019 : vector<2x32xf32>
    %1022 = arith.divf %1020, %1021 : vector<2x32xf32>
    %1023 = vector.extract_strided_slice %577 {offsets = [0, 32], sizes = [2, 32], strides = [1, 1]} : vector<2x64xf32> to vector<2x32xf32>
    %1024 = vector.extract_strided_slice %1014 {offsets = [0, 32], sizes = [2, 32], strides = [1, 1]} : vector<2x64xf32> to vector<2x32xf32>
    %1025 = arith.mulf %1022, %1024 : vector<2x32xf32>
    %1026 = arith.addf %1023, %1025 : vector<2x32xf32>
    %1027 = math.tanh %1026 : vector<2x32xf32>
    %1028 = vector.broadcast %1011 : vector<2x1xf32> to vector<2x32xf32>
    %1029 = arith.mulf %1028, %1027 : vector<2x32xf32>
    %cst_211 = arith.constant 1.000000e+00 : f32
    %1030 = vector.broadcast %cst_211 : f32 to vector<2x1xf32>
    %1031 = arith.subf %1030, %1011 : vector<2x1xf32>
    %1032 = vector.broadcast %1031 : vector<2x1xf32> to vector<2x32xf32>
    %1033 = arith.mulf %1032, %1010 : vector<2x32xf32>
    %1034 = arith.addf %1029, %1033 : vector<2x32xf32>
    %1035 = vector.extract_strided_slice %913 {offsets = [0, 5], sizes = [2, 1], strides = [1, 1]} : vector<2x6xf32> to vector<2x1xf32>
    %cst_212 = arith.constant dense<0.000000e+00> : vector<2x64xf32>
    %1036 = tpu.matmul %1034, %16, %cst_212 {dimension_numbers = #tpu.dot_dimension_numbers<[1], [0], [0], [1], [0, 0, 1, 1], [], []>} : vector<2x32xf32>, vector<32x64xf32>, vector<2x64xf32> -> vector<2x64xf32>
    %1037 = vector.broadcast %17 : vector<1x64xf32> to vector<2x64xf32>
    %1038 = arith.addf %1036, %1037 : vector<2x64xf32>
    %1039 = vector.extract_strided_slice %580 {offsets = [0, 0], sizes = [2, 32], strides = [1, 1]} : vector<2x64xf32> to vector<2x32xf32>
    %1040 = vector.extract_strided_slice %1038 {offsets = [0, 0], sizes = [2, 32], strides = [1, 1]} : vector<2x64xf32> to vector<2x32xf32>
    %1041 = arith.addf %1039, %1040 : vector<2x32xf32>
    %1042 = arith.negf %1041 : vector<2x32xf32>
    %1043 = math.exp %1042 : vector<2x32xf32>
    %cst_213 = arith.constant 1.000000e+00 : f32
    %1044 = vector.broadcast %cst_213 : f32 to vector<2x32xf32>
    %1045 = arith.addf %1044, %1043 : vector<2x32xf32>
    %1046 = arith.divf %1044, %1045 : vector<2x32xf32>
    %1047 = vector.extract_strided_slice %580 {offsets = [0, 32], sizes = [2, 32], strides = [1, 1]} : vector<2x64xf32> to vector<2x32xf32>
    %1048 = vector.extract_strided_slice %1038 {offsets = [0, 32], sizes = [2, 32], strides = [1, 1]} : vector<2x64xf32> to vector<2x32xf32>
    %1049 = arith.mulf %1046, %1048 : vector<2x32xf32>
    %1050 = arith.addf %1047, %1049 : vector<2x32xf32>
    %1051 = math.tanh %1050 : vector<2x32xf32>
    %1052 = vector.broadcast %1035 : vector<2x1xf32> to vector<2x32xf32>
    %1053 = arith.mulf %1052, %1051 : vector<2x32xf32>
    %cst_214 = arith.constant 1.000000e+00 : f32
    %1054 = vector.broadcast %cst_214 : f32 to vector<2x1xf32>
    %1055 = arith.subf %1054, %1035 : vector<2x1xf32>
    %1056 = vector.broadcast %1055 : vector<2x1xf32> to vector<2x32xf32>
    %1057 = arith.mulf %1056, %1034 : vector<2x32xf32>
    %1058 = arith.addf %1053, %1057 : vector<2x32xf32>
    %1059 = tpu.concatenate %847, %1058, %562 in 1 : vector<2x32xf32>, vector<2x32xf32>, vector<2x32xf32> -> vector<2x96xf32>
    %cst_215 = arith.constant dense<0.000000e+00> : vector<2x32xf32>
    %1060 = tpu.matmul %1059, %18, %cst_215 {dimension_numbers = #tpu.dot_dimension_numbers<[1], [0], [0], [1], [0, 0, 1, 1], [], []>} : vector<2x96xf32>, vector<96x32xf32>, vector<2x32xf32> -> vector<2x32xf32>
    %1061 = vector.broadcast %19 : vector<1x32xf32> to vector<2x32xf32>
    %1062 = arith.addf %1060, %1061 : vector<2x32xf32>
    %cst_216 = arith.constant 0.000000e+00 : f32
    %1063 = vector.broadcast %cst_216 : f32 to vector<2x32xf32>
    %1064 = arith.maximumf %1062, %1063 : vector<2x32xf32>
    %cst_217 = arith.constant dense<0.000000e+00> : vector<2x96xf32>
    %1065 = tpu.matmul %1064, %8, %cst_217 {dimension_numbers = #tpu.dot_dimension_numbers<[1], [0], [0], [1], [0, 0, 1, 1], [], []>} : vector<2x32xf32>, vector<32x96xf32>, vector<2x96xf32> -> vector<2x96xf32>
    %1066 = vector.broadcast %9 : vector<1x96xf32> to vector<2x96xf32>
    %1067 = arith.addf %1065, %1066 : vector<2x96xf32>
    %cst_218 = arith.constant dense<0.000000e+00> : vector<2x96xf32>
    %1068 = tpu.matmul %847, %6, %cst_218 {dimension_numbers = #tpu.dot_dimension_numbers<[1], [0], [0], [1], [0, 0, 1, 1], [], []>} : vector<2x32xf32>, vector<32x96xf32>, vector<2x96xf32> -> vector<2x96xf32>
    %1069 = vector.broadcast %7 : vector<1x96xf32> to vector<2x96xf32>
    %1070 = arith.addf %1068, %1069 : vector<2x96xf32>
    %1071 = vector.extract_strided_slice %1067 {offsets = [0, 0], sizes = [2, 32], strides = [1, 1]} : vector<2x96xf32> to vector<2x32xf32>
    %1072 = vector.extract_strided_slice %1070 {offsets = [0, 0], sizes = [2, 32], strides = [1, 1]} : vector<2x96xf32> to vector<2x32xf32>
    %1073 = arith.addf %1071, %1072 : vector<2x32xf32>
    %1074 = arith.negf %1073 : vector<2x32xf32>
    %1075 = math.exp %1074 : vector<2x32xf32>
    %cst_219 = arith.constant 1.000000e+00 : f32
    %1076 = vector.broadcast %cst_219 : f32 to vector<2x32xf32>
    %1077 = arith.addf %1076, %1075 : vector<2x32xf32>
    %1078 = arith.divf %1076, %1077 : vector<2x32xf32>
    %1079 = vector.extract_strided_slice %1067 {offsets = [0, 32], sizes = [2, 32], strides = [1, 1]} : vector<2x96xf32> to vector<2x32xf32>
    %1080 = vector.extract_strided_slice %1070 {offsets = [0, 32], sizes = [2, 32], strides = [1, 1]} : vector<2x96xf32> to vector<2x32xf32>
    %1081 = arith.addf %1079, %1080 : vector<2x32xf32>
    %1082 = arith.negf %1081 : vector<2x32xf32>
    %1083 = math.exp %1082 : vector<2x32xf32>
    %cst_220 = arith.constant 1.000000e+00 : f32
    %1084 = vector.broadcast %cst_220 : f32 to vector<2x32xf32>
    %1085 = arith.addf %1084, %1083 : vector<2x32xf32>
    %1086 = arith.divf %1084, %1085 : vector<2x32xf32>
    %1087 = vector.extract_strided_slice %1067 {offsets = [0, 64], sizes = [2, 32], strides = [1, 1]} : vector<2x96xf32> to vector<2x32xf32>
    %1088 = vector.extract_strided_slice %1070 {offsets = [0, 64], sizes = [2, 32], strides = [1, 1]} : vector<2x96xf32> to vector<2x32xf32>
    %1089 = arith.mulf %1078, %1088 : vector<2x32xf32>
    %1090 = arith.addf %1087, %1089 : vector<2x32xf32>
    %1091 = math.tanh %1090 : vector<2x32xf32>
    %cst_221 = arith.constant 1.000000e+00 : f32
    %1092 = vector.broadcast %cst_221 : f32 to vector<2x32xf32>
    %1093 = arith.subf %1092, %1086 : vector<2x32xf32>
    %1094 = arith.mulf %1093, %1091 : vector<2x32xf32>
    %1095 = arith.mulf %1086, %847 : vector<2x32xf32>
    %1096 = arith.addf %1094, %1095 : vector<2x32xf32>
    %1097 = arith.mulf %400, %1096 : vector<2x32xf32>
    %1098 = arith.subf %400, %1096 : vector<2x32xf32>
    %1099 = math.absf %1098 : vector<2x32xf32>
    %1100 = tpu.concatenate %581, %1097, %588, %1099 in 1 : vector<2x32xf32>, vector<2x32xf32>, vector<2x32xf32>, vector<2x32xf32> -> vector<2x128xf32>
    %cst_222 = arith.constant dense<0.000000e+00> : vector<2x32xf32>
    %1101 = tpu.matmul %1100, %10, %cst_222 {dimension_numbers = #tpu.dot_dimension_numbers<[1], [0], [0], [1], [0, 0, 1, 1], [], []>} : vector<2x128xf32>, vector<128x32xf32>, vector<2x32xf32> -> vector<2x32xf32>
    %1102 = vector.broadcast %11 : vector<1x32xf32> to vector<2x32xf32>
    %1103 = arith.addf %1101, %1102 : vector<2x32xf32>
    %1104 = math.tanh %1103 : vector<2x32xf32>
    %cst_223 = arith.constant dense<0.000000e+00> : vector<2x1xf32>
    %1105 = tpu.matmul %1104, %12, %cst_223 {dimension_numbers = #tpu.dot_dimension_numbers<[1], [0], [0], [1], [0, 0, 1, 1], [], []>} : vector<2x32xf32>, vector<32x1xf32>, vector<2x1xf32> -> vector<2x1xf32>
    %1106 = arith.mulf %401, %1096 : vector<2x32xf32>
    %1107 = arith.subf %401, %1096 : vector<2x32xf32>
    %1108 = math.absf %1107 : vector<2x32xf32>
    %1109 = tpu.concatenate %582, %1106, %590, %1108 in 1 : vector<2x32xf32>, vector<2x32xf32>, vector<2x32xf32>, vector<2x32xf32> -> vector<2x128xf32>
    %cst_224 = arith.constant dense<0.000000e+00> : vector<2x32xf32>
    %1110 = tpu.matmul %1109, %10, %cst_224 {dimension_numbers = #tpu.dot_dimension_numbers<[1], [0], [0], [1], [0, 0, 1, 1], [], []>} : vector<2x128xf32>, vector<128x32xf32>, vector<2x32xf32> -> vector<2x32xf32>
    %1111 = vector.broadcast %11 : vector<1x32xf32> to vector<2x32xf32>
    %1112 = arith.addf %1110, %1111 : vector<2x32xf32>
    %1113 = math.tanh %1112 : vector<2x32xf32>
    %cst_225 = arith.constant dense<0.000000e+00> : vector<2x1xf32>
    %1114 = tpu.matmul %1113, %12, %cst_225 {dimension_numbers = #tpu.dot_dimension_numbers<[1], [0], [0], [1], [0, 0, 1, 1], [], []>} : vector<2x32xf32>, vector<32x1xf32>, vector<2x1xf32> -> vector<2x1xf32>
    %1115 = arith.mulf %402, %1096 : vector<2x32xf32>
    %1116 = arith.subf %402, %1096 : vector<2x32xf32>
    %1117 = math.absf %1116 : vector<2x32xf32>
    %1118 = tpu.concatenate %583, %1115, %592, %1117 in 1 : vector<2x32xf32>, vector<2x32xf32>, vector<2x32xf32>, vector<2x32xf32> -> vector<2x128xf32>
    %cst_226 = arith.constant dense<0.000000e+00> : vector<2x32xf32>
    %1119 = tpu.matmul %1118, %10, %cst_226 {dimension_numbers = #tpu.dot_dimension_numbers<[1], [0], [0], [1], [0, 0, 1, 1], [], []>} : vector<2x128xf32>, vector<128x32xf32>, vector<2x32xf32> -> vector<2x32xf32>
    %1120 = vector.broadcast %11 : vector<1x32xf32> to vector<2x32xf32>
    %1121 = arith.addf %1119, %1120 : vector<2x32xf32>
    %1122 = math.tanh %1121 : vector<2x32xf32>
    %cst_227 = arith.constant dense<0.000000e+00> : vector<2x1xf32>
    %1123 = tpu.matmul %1122, %12, %cst_227 {dimension_numbers = #tpu.dot_dimension_numbers<[1], [0], [0], [1], [0, 0, 1, 1], [], []>} : vector<2x32xf32>, vector<32x1xf32>, vector<2x1xf32> -> vector<2x1xf32>
    %1124 = arith.mulf %403, %1096 : vector<2x32xf32>
    %1125 = arith.subf %403, %1096 : vector<2x32xf32>
    %1126 = math.absf %1125 : vector<2x32xf32>
    %1127 = tpu.concatenate %584, %1124, %594, %1126 in 1 : vector<2x32xf32>, vector<2x32xf32>, vector<2x32xf32>, vector<2x32xf32> -> vector<2x128xf32>
    %cst_228 = arith.constant dense<0.000000e+00> : vector<2x32xf32>
    %1128 = tpu.matmul %1127, %10, %cst_228 {dimension_numbers = #tpu.dot_dimension_numbers<[1], [0], [0], [1], [0, 0, 1, 1], [], []>} : vector<2x128xf32>, vector<128x32xf32>, vector<2x32xf32> -> vector<2x32xf32>
    %1129 = vector.broadcast %11 : vector<1x32xf32> to vector<2x32xf32>
    %1130 = arith.addf %1128, %1129 : vector<2x32xf32>
    %1131 = math.tanh %1130 : vector<2x32xf32>
    %cst_229 = arith.constant dense<0.000000e+00> : vector<2x1xf32>
    %1132 = tpu.matmul %1131, %12, %cst_229 {dimension_numbers = #tpu.dot_dimension_numbers<[1], [0], [0], [1], [0, 0, 1, 1], [], []>} : vector<2x32xf32>, vector<32x1xf32>, vector<2x1xf32> -> vector<2x1xf32>
    %1133 = arith.mulf %404, %1096 : vector<2x32xf32>
    %1134 = arith.subf %404, %1096 : vector<2x32xf32>
    %1135 = math.absf %1134 : vector<2x32xf32>
    %1136 = tpu.concatenate %585, %1133, %596, %1135 in 1 : vector<2x32xf32>, vector<2x32xf32>, vector<2x32xf32>, vector<2x32xf32> -> vector<2x128xf32>
    %cst_230 = arith.constant dense<0.000000e+00> : vector<2x32xf32>
    %1137 = tpu.matmul %1136, %10, %cst_230 {dimension_numbers = #tpu.dot_dimension_numbers<[1], [0], [0], [1], [0, 0, 1, 1], [], []>} : vector<2x128xf32>, vector<128x32xf32>, vector<2x32xf32> -> vector<2x32xf32>
    %1138 = vector.broadcast %11 : vector<1x32xf32> to vector<2x32xf32>
    %1139 = arith.addf %1137, %1138 : vector<2x32xf32>
    %1140 = math.tanh %1139 : vector<2x32xf32>
    %cst_231 = arith.constant dense<0.000000e+00> : vector<2x1xf32>
    %1141 = tpu.matmul %1140, %12, %cst_231 {dimension_numbers = #tpu.dot_dimension_numbers<[1], [0], [0], [1], [0, 0, 1, 1], [], []>} : vector<2x32xf32>, vector<32x1xf32>, vector<2x1xf32> -> vector<2x1xf32>
    %1142 = arith.mulf %405, %1096 : vector<2x32xf32>
    %1143 = arith.subf %405, %1096 : vector<2x32xf32>
    %1144 = math.absf %1143 : vector<2x32xf32>
    %1145 = tpu.concatenate %586, %1142, %598, %1144 in 1 : vector<2x32xf32>, vector<2x32xf32>, vector<2x32xf32>, vector<2x32xf32> -> vector<2x128xf32>
    %cst_232 = arith.constant dense<0.000000e+00> : vector<2x32xf32>
    %1146 = tpu.matmul %1145, %10, %cst_232 {dimension_numbers = #tpu.dot_dimension_numbers<[1], [0], [0], [1], [0, 0, 1, 1], [], []>} : vector<2x128xf32>, vector<128x32xf32>, vector<2x32xf32> -> vector<2x32xf32>
    %1147 = vector.broadcast %11 : vector<1x32xf32> to vector<2x32xf32>
    %1148 = arith.addf %1146, %1147 : vector<2x32xf32>
    %1149 = math.tanh %1148 : vector<2x32xf32>
    %cst_233 = arith.constant dense<0.000000e+00> : vector<2x1xf32>
    %1150 = tpu.matmul %1149, %12, %cst_233 {dimension_numbers = #tpu.dot_dimension_numbers<[1], [0], [0], [1], [0, 0, 1, 1], [], []>} : vector<2x32xf32>, vector<32x1xf32>, vector<2x1xf32> -> vector<2x1xf32>
    %1151 = tpu.concatenate %1105, %1114, %1123, %1132, %1141, %1150 in 1 : vector<2x1xf32>, vector<2x1xf32>, vector<2x1xf32>, vector<2x1xf32>, vector<2x1xf32>, vector<2x1xf32> -> vector<2x6xf32>
    %1152 = vector.broadcast %13 : vector<1x1xf32> to vector<2x6xf32>
    %1153 = arith.addf %1151, %1152 : vector<2x6xf32>
    %cst_234 = arith.constant dense<0xFF800000> : vector<2xf32>
    %1154 = vector.multi_reduction <maximumf>, %1153, %cst_234 [1] : vector<2x6xf32> to vector<2xf32>
    %1155 = vector.shape_cast %1154 : vector<2xf32> to vector<2x1xf32>
    %1156 = vector.broadcast %1155 : vector<2x1xf32> to vector<2x6xf32>
    %1157 = arith.subf %1153, %1156 : vector<2x6xf32>
    %1158 = math.exp %1157 : vector<2x6xf32>
    %cst_235 = arith.constant dense<0.000000e+00> : vector<2xf32>
    %1159 = vector.multi_reduction <add>, %1158, %cst_235 [1] : vector<2x6xf32> to vector<2xf32>
    %1160 = vector.shape_cast %1159 : vector<2xf32> to vector<2x1xf32>
    %1161 = vector.broadcast %1160 : vector<2x1xf32> to vector<2x6xf32>
    %1162 = arith.divf %1158, %1161 : vector<2x6xf32>
    %cst_236 = arith.constant 0.000000e+00 : f32
    %1163 = vector.broadcast %cst_236 : f32 to vector<2x32xf32>
    %1164 = vector.extract_strided_slice %1162 {offsets = [0, 0], sizes = [2, 1], strides = [1, 1]} : vector<2x6xf32> to vector<2x1xf32>
    %cst_237 = arith.constant dense<0.000000e+00> : vector<2x64xf32>
    %1165 = tpu.matmul %1163, %16, %cst_237 {dimension_numbers = #tpu.dot_dimension_numbers<[1], [0], [0], [1], [0, 0, 1, 1], [], []>} : vector<2x32xf32>, vector<32x64xf32>, vector<2x64xf32> -> vector<2x64xf32>
    %1166 = vector.broadcast %17 : vector<1x64xf32> to vector<2x64xf32>
    %1167 = arith.addf %1165, %1166 : vector<2x64xf32>
    %1168 = vector.extract_strided_slice %565 {offsets = [0, 0], sizes = [2, 32], strides = [1, 1]} : vector<2x64xf32> to vector<2x32xf32>
    %1169 = vector.extract_strided_slice %1167 {offsets = [0, 0], sizes = [2, 32], strides = [1, 1]} : vector<2x64xf32> to vector<2x32xf32>
    %1170 = arith.addf %1168, %1169 : vector<2x32xf32>
    %1171 = arith.negf %1170 : vector<2x32xf32>
    %1172 = math.exp %1171 : vector<2x32xf32>
    %cst_238 = arith.constant 1.000000e+00 : f32
    %1173 = vector.broadcast %cst_238 : f32 to vector<2x32xf32>
    %1174 = arith.addf %1173, %1172 : vector<2x32xf32>
    %1175 = arith.divf %1173, %1174 : vector<2x32xf32>
    %1176 = vector.extract_strided_slice %565 {offsets = [0, 32], sizes = [2, 32], strides = [1, 1]} : vector<2x64xf32> to vector<2x32xf32>
    %1177 = vector.extract_strided_slice %1167 {offsets = [0, 32], sizes = [2, 32], strides = [1, 1]} : vector<2x64xf32> to vector<2x32xf32>
    %1178 = arith.mulf %1175, %1177 : vector<2x32xf32>
    %1179 = arith.addf %1176, %1178 : vector<2x32xf32>
    %1180 = math.tanh %1179 : vector<2x32xf32>
    %1181 = vector.broadcast %1164 : vector<2x1xf32> to vector<2x32xf32>
    %1182 = arith.mulf %1181, %1180 : vector<2x32xf32>
    %cst_239 = arith.constant 1.000000e+00 : f32
    %1183 = vector.broadcast %cst_239 : f32 to vector<2x1xf32>
    %1184 = arith.subf %1183, %1164 : vector<2x1xf32>
    %1185 = vector.broadcast %1184 : vector<2x1xf32> to vector<2x32xf32>
    %1186 = arith.mulf %1185, %1163 : vector<2x32xf32>
    %1187 = arith.addf %1182, %1186 : vector<2x32xf32>
    %1188 = vector.extract_strided_slice %1162 {offsets = [0, 1], sizes = [2, 1], strides = [1, 1]} : vector<2x6xf32> to vector<2x1xf32>
    %cst_240 = arith.constant dense<0.000000e+00> : vector<2x64xf32>
    %1189 = tpu.matmul %1187, %16, %cst_240 {dimension_numbers = #tpu.dot_dimension_numbers<[1], [0], [0], [1], [0, 0, 1, 1], [], []>} : vector<2x32xf32>, vector<32x64xf32>, vector<2x64xf32> -> vector<2x64xf32>
    %1190 = vector.broadcast %17 : vector<1x64xf32> to vector<2x64xf32>
    %1191 = arith.addf %1189, %1190 : vector<2x64xf32>
    %1192 = vector.extract_strided_slice %568 {offsets = [0, 0], sizes = [2, 32], strides = [1, 1]} : vector<2x64xf32> to vector<2x32xf32>
    %1193 = vector.extract_strided_slice %1191 {offsets = [0, 0], sizes = [2, 32], strides = [1, 1]} : vector<2x64xf32> to vector<2x32xf32>
    %1194 = arith.addf %1192, %1193 : vector<2x32xf32>
    %1195 = arith.negf %1194 : vector<2x32xf32>
    %1196 = math.exp %1195 : vector<2x32xf32>
    %cst_241 = arith.constant 1.000000e+00 : f32
    %1197 = vector.broadcast %cst_241 : f32 to vector<2x32xf32>
    %1198 = arith.addf %1197, %1196 : vector<2x32xf32>
    %1199 = arith.divf %1197, %1198 : vector<2x32xf32>
    %1200 = vector.extract_strided_slice %568 {offsets = [0, 32], sizes = [2, 32], strides = [1, 1]} : vector<2x64xf32> to vector<2x32xf32>
    %1201 = vector.extract_strided_slice %1191 {offsets = [0, 32], sizes = [2, 32], strides = [1, 1]} : vector<2x64xf32> to vector<2x32xf32>
    %1202 = arith.mulf %1199, %1201 : vector<2x32xf32>
    %1203 = arith.addf %1200, %1202 : vector<2x32xf32>
    %1204 = math.tanh %1203 : vector<2x32xf32>
    %1205 = vector.broadcast %1188 : vector<2x1xf32> to vector<2x32xf32>
    %1206 = arith.mulf %1205, %1204 : vector<2x32xf32>
    %cst_242 = arith.constant 1.000000e+00 : f32
    %1207 = vector.broadcast %cst_242 : f32 to vector<2x1xf32>
    %1208 = arith.subf %1207, %1188 : vector<2x1xf32>
    %1209 = vector.broadcast %1208 : vector<2x1xf32> to vector<2x32xf32>
    %1210 = arith.mulf %1209, %1187 : vector<2x32xf32>
    %1211 = arith.addf %1206, %1210 : vector<2x32xf32>
    %1212 = vector.extract_strided_slice %1162 {offsets = [0, 2], sizes = [2, 1], strides = [1, 1]} : vector<2x6xf32> to vector<2x1xf32>
    %cst_243 = arith.constant dense<0.000000e+00> : vector<2x64xf32>
    %1213 = tpu.matmul %1211, %16, %cst_243 {dimension_numbers = #tpu.dot_dimension_numbers<[1], [0], [0], [1], [0, 0, 1, 1], [], []>} : vector<2x32xf32>, vector<32x64xf32>, vector<2x64xf32> -> vector<2x64xf32>
    %1214 = vector.broadcast %17 : vector<1x64xf32> to vector<2x64xf32>
    %1215 = arith.addf %1213, %1214 : vector<2x64xf32>
    %1216 = vector.extract_strided_slice %571 {offsets = [0, 0], sizes = [2, 32], strides = [1, 1]} : vector<2x64xf32> to vector<2x32xf32>
    %1217 = vector.extract_strided_slice %1215 {offsets = [0, 0], sizes = [2, 32], strides = [1, 1]} : vector<2x64xf32> to vector<2x32xf32>
    %1218 = arith.addf %1216, %1217 : vector<2x32xf32>
    %1219 = arith.negf %1218 : vector<2x32xf32>
    %1220 = math.exp %1219 : vector<2x32xf32>
    %cst_244 = arith.constant 1.000000e+00 : f32
    %1221 = vector.broadcast %cst_244 : f32 to vector<2x32xf32>
    %1222 = arith.addf %1221, %1220 : vector<2x32xf32>
    %1223 = arith.divf %1221, %1222 : vector<2x32xf32>
    %1224 = vector.extract_strided_slice %571 {offsets = [0, 32], sizes = [2, 32], strides = [1, 1]} : vector<2x64xf32> to vector<2x32xf32>
    %1225 = vector.extract_strided_slice %1215 {offsets = [0, 32], sizes = [2, 32], strides = [1, 1]} : vector<2x64xf32> to vector<2x32xf32>
    %1226 = arith.mulf %1223, %1225 : vector<2x32xf32>
    %1227 = arith.addf %1224, %1226 : vector<2x32xf32>
    %1228 = math.tanh %1227 : vector<2x32xf32>
    %1229 = vector.broadcast %1212 : vector<2x1xf32> to vector<2x32xf32>
    %1230 = arith.mulf %1229, %1228 : vector<2x32xf32>
    %cst_245 = arith.constant 1.000000e+00 : f32
    %1231 = vector.broadcast %cst_245 : f32 to vector<2x1xf32>
    %1232 = arith.subf %1231, %1212 : vector<2x1xf32>
    %1233 = vector.broadcast %1232 : vector<2x1xf32> to vector<2x32xf32>
    %1234 = arith.mulf %1233, %1211 : vector<2x32xf32>
    %1235 = arith.addf %1230, %1234 : vector<2x32xf32>
    %1236 = vector.extract_strided_slice %1162 {offsets = [0, 3], sizes = [2, 1], strides = [1, 1]} : vector<2x6xf32> to vector<2x1xf32>
    %cst_246 = arith.constant dense<0.000000e+00> : vector<2x64xf32>
    %1237 = tpu.matmul %1235, %16, %cst_246 {dimension_numbers = #tpu.dot_dimension_numbers<[1], [0], [0], [1], [0, 0, 1, 1], [], []>} : vector<2x32xf32>, vector<32x64xf32>, vector<2x64xf32> -> vector<2x64xf32>
    %1238 = vector.broadcast %17 : vector<1x64xf32> to vector<2x64xf32>
    %1239 = arith.addf %1237, %1238 : vector<2x64xf32>
    %1240 = vector.extract_strided_slice %574 {offsets = [0, 0], sizes = [2, 32], strides = [1, 1]} : vector<2x64xf32> to vector<2x32xf32>
    %1241 = vector.extract_strided_slice %1239 {offsets = [0, 0], sizes = [2, 32], strides = [1, 1]} : vector<2x64xf32> to vector<2x32xf32>
    %1242 = arith.addf %1240, %1241 : vector<2x32xf32>
    %1243 = arith.negf %1242 : vector<2x32xf32>
    %1244 = math.exp %1243 : vector<2x32xf32>
    %cst_247 = arith.constant 1.000000e+00 : f32
    %1245 = vector.broadcast %cst_247 : f32 to vector<2x32xf32>
    %1246 = arith.addf %1245, %1244 : vector<2x32xf32>
    %1247 = arith.divf %1245, %1246 : vector<2x32xf32>
    %1248 = vector.extract_strided_slice %574 {offsets = [0, 32], sizes = [2, 32], strides = [1, 1]} : vector<2x64xf32> to vector<2x32xf32>
    %1249 = vector.extract_strided_slice %1239 {offsets = [0, 32], sizes = [2, 32], strides = [1, 1]} : vector<2x64xf32> to vector<2x32xf32>
    %1250 = arith.mulf %1247, %1249 : vector<2x32xf32>
    %1251 = arith.addf %1248, %1250 : vector<2x32xf32>
    %1252 = math.tanh %1251 : vector<2x32xf32>
    %1253 = vector.broadcast %1236 : vector<2x1xf32> to vector<2x32xf32>
    %1254 = arith.mulf %1253, %1252 : vector<2x32xf32>
    %cst_248 = arith.constant 1.000000e+00 : f32
    %1255 = vector.broadcast %cst_248 : f32 to vector<2x1xf32>
    %1256 = arith.subf %1255, %1236 : vector<2x1xf32>
    %1257 = vector.broadcast %1256 : vector<2x1xf32> to vector<2x32xf32>
    %1258 = arith.mulf %1257, %1235 : vector<2x32xf32>
    %1259 = arith.addf %1254, %1258 : vector<2x32xf32>
    %1260 = vector.extract_strided_slice %1162 {offsets = [0, 4], sizes = [2, 1], strides = [1, 1]} : vector<2x6xf32> to vector<2x1xf32>
    %cst_249 = arith.constant dense<0.000000e+00> : vector<2x64xf32>
    %1261 = tpu.matmul %1259, %16, %cst_249 {dimension_numbers = #tpu.dot_dimension_numbers<[1], [0], [0], [1], [0, 0, 1, 1], [], []>} : vector<2x32xf32>, vector<32x64xf32>, vector<2x64xf32> -> vector<2x64xf32>
    %1262 = vector.broadcast %17 : vector<1x64xf32> to vector<2x64xf32>
    %1263 = arith.addf %1261, %1262 : vector<2x64xf32>
    %1264 = vector.extract_strided_slice %577 {offsets = [0, 0], sizes = [2, 32], strides = [1, 1]} : vector<2x64xf32> to vector<2x32xf32>
    %1265 = vector.extract_strided_slice %1263 {offsets = [0, 0], sizes = [2, 32], strides = [1, 1]} : vector<2x64xf32> to vector<2x32xf32>
    %1266 = arith.addf %1264, %1265 : vector<2x32xf32>
    %1267 = arith.negf %1266 : vector<2x32xf32>
    %1268 = math.exp %1267 : vector<2x32xf32>
    %cst_250 = arith.constant 1.000000e+00 : f32
    %1269 = vector.broadcast %cst_250 : f32 to vector<2x32xf32>
    %1270 = arith.addf %1269, %1268 : vector<2x32xf32>
    %1271 = arith.divf %1269, %1270 : vector<2x32xf32>
    %1272 = vector.extract_strided_slice %577 {offsets = [0, 32], sizes = [2, 32], strides = [1, 1]} : vector<2x64xf32> to vector<2x32xf32>
    %1273 = vector.extract_strided_slice %1263 {offsets = [0, 32], sizes = [2, 32], strides = [1, 1]} : vector<2x64xf32> to vector<2x32xf32>
    %1274 = arith.mulf %1271, %1273 : vector<2x32xf32>
    %1275 = arith.addf %1272, %1274 : vector<2x32xf32>
    %1276 = math.tanh %1275 : vector<2x32xf32>
    %1277 = vector.broadcast %1260 : vector<2x1xf32> to vector<2x32xf32>
    %1278 = arith.mulf %1277, %1276 : vector<2x32xf32>
    %cst_251 = arith.constant 1.000000e+00 : f32
    %1279 = vector.broadcast %cst_251 : f32 to vector<2x1xf32>
    %1280 = arith.subf %1279, %1260 : vector<2x1xf32>
    %1281 = vector.broadcast %1280 : vector<2x1xf32> to vector<2x32xf32>
    %1282 = arith.mulf %1281, %1259 : vector<2x32xf32>
    %1283 = arith.addf %1278, %1282 : vector<2x32xf32>
    %1284 = vector.extract_strided_slice %1162 {offsets = [0, 5], sizes = [2, 1], strides = [1, 1]} : vector<2x6xf32> to vector<2x1xf32>
    %cst_252 = arith.constant dense<0.000000e+00> : vector<2x64xf32>
    %1285 = tpu.matmul %1283, %16, %cst_252 {dimension_numbers = #tpu.dot_dimension_numbers<[1], [0], [0], [1], [0, 0, 1, 1], [], []>} : vector<2x32xf32>, vector<32x64xf32>, vector<2x64xf32> -> vector<2x64xf32>
    %1286 = vector.broadcast %17 : vector<1x64xf32> to vector<2x64xf32>
    %1287 = arith.addf %1285, %1286 : vector<2x64xf32>
    %1288 = vector.extract_strided_slice %580 {offsets = [0, 0], sizes = [2, 32], strides = [1, 1]} : vector<2x64xf32> to vector<2x32xf32>
    %1289 = vector.extract_strided_slice %1287 {offsets = [0, 0], sizes = [2, 32], strides = [1, 1]} : vector<2x64xf32> to vector<2x32xf32>
    %1290 = arith.addf %1288, %1289 : vector<2x32xf32>
    %1291 = arith.negf %1290 : vector<2x32xf32>
    %1292 = math.exp %1291 : vector<2x32xf32>
    %cst_253 = arith.constant 1.000000e+00 : f32
    %1293 = vector.broadcast %cst_253 : f32 to vector<2x32xf32>
    %1294 = arith.addf %1293, %1292 : vector<2x32xf32>
    %1295 = arith.divf %1293, %1294 : vector<2x32xf32>
    %1296 = vector.extract_strided_slice %580 {offsets = [0, 32], sizes = [2, 32], strides = [1, 1]} : vector<2x64xf32> to vector<2x32xf32>
    %1297 = vector.extract_strided_slice %1287 {offsets = [0, 32], sizes = [2, 32], strides = [1, 1]} : vector<2x64xf32> to vector<2x32xf32>
    %1298 = arith.mulf %1295, %1297 : vector<2x32xf32>
    %1299 = arith.addf %1296, %1298 : vector<2x32xf32>
    %1300 = math.tanh %1299 : vector<2x32xf32>
    %1301 = vector.broadcast %1284 : vector<2x1xf32> to vector<2x32xf32>
    %1302 = arith.mulf %1301, %1300 : vector<2x32xf32>
    %cst_254 = arith.constant 1.000000e+00 : f32
    %1303 = vector.broadcast %cst_254 : f32 to vector<2x1xf32>
    %1304 = arith.subf %1303, %1284 : vector<2x1xf32>
    %1305 = vector.broadcast %1304 : vector<2x1xf32> to vector<2x32xf32>
    %1306 = arith.mulf %1305, %1283 : vector<2x32xf32>
    %1307 = arith.addf %1302, %1306 : vector<2x32xf32>
    %1308 = tpu.concatenate %1096, %1307, %562 in 1 : vector<2x32xf32>, vector<2x32xf32>, vector<2x32xf32> -> vector<2x96xf32>
    %cst_255 = arith.constant dense<0.000000e+00> : vector<2x32xf32>
    %1309 = tpu.matmul %1308, %18, %cst_255 {dimension_numbers = #tpu.dot_dimension_numbers<[1], [0], [0], [1], [0, 0, 1, 1], [], []>} : vector<2x96xf32>, vector<96x32xf32>, vector<2x32xf32> -> vector<2x32xf32>
    %1310 = vector.broadcast %19 : vector<1x32xf32> to vector<2x32xf32>
    %1311 = arith.addf %1309, %1310 : vector<2x32xf32>
    %cst_256 = arith.constant 0.000000e+00 : f32
    %1312 = vector.broadcast %cst_256 : f32 to vector<2x32xf32>
    %1313 = arith.maximumf %1311, %1312 : vector<2x32xf32>
    %cst_257 = arith.constant dense<0.000000e+00> : vector<2x96xf32>
    %1314 = tpu.matmul %1313, %8, %cst_257 {dimension_numbers = #tpu.dot_dimension_numbers<[1], [0], [0], [1], [0, 0, 1, 1], [], []>} : vector<2x32xf32>, vector<32x96xf32>, vector<2x96xf32> -> vector<2x96xf32>
    %1315 = vector.broadcast %9 : vector<1x96xf32> to vector<2x96xf32>
    %1316 = arith.addf %1314, %1315 : vector<2x96xf32>
    %cst_258 = arith.constant dense<0.000000e+00> : vector<2x96xf32>
    %1317 = tpu.matmul %1096, %6, %cst_258 {dimension_numbers = #tpu.dot_dimension_numbers<[1], [0], [0], [1], [0, 0, 1, 1], [], []>} : vector<2x32xf32>, vector<32x96xf32>, vector<2x96xf32> -> vector<2x96xf32>
    %1318 = vector.broadcast %7 : vector<1x96xf32> to vector<2x96xf32>
    %1319 = arith.addf %1317, %1318 : vector<2x96xf32>
    %1320 = vector.extract_strided_slice %1316 {offsets = [0, 0], sizes = [2, 32], strides = [1, 1]} : vector<2x96xf32> to vector<2x32xf32>
    %1321 = vector.extract_strided_slice %1319 {offsets = [0, 0], sizes = [2, 32], strides = [1, 1]} : vector<2x96xf32> to vector<2x32xf32>
    %1322 = arith.addf %1320, %1321 : vector<2x32xf32>
    %1323 = arith.negf %1322 : vector<2x32xf32>
    %1324 = math.exp %1323 : vector<2x32xf32>
    %cst_259 = arith.constant 1.000000e+00 : f32
    %1325 = vector.broadcast %cst_259 : f32 to vector<2x32xf32>
    %1326 = arith.addf %1325, %1324 : vector<2x32xf32>
    %1327 = arith.divf %1325, %1326 : vector<2x32xf32>
    %1328 = vector.extract_strided_slice %1316 {offsets = [0, 32], sizes = [2, 32], strides = [1, 1]} : vector<2x96xf32> to vector<2x32xf32>
    %1329 = vector.extract_strided_slice %1319 {offsets = [0, 32], sizes = [2, 32], strides = [1, 1]} : vector<2x96xf32> to vector<2x32xf32>
    %1330 = arith.addf %1328, %1329 : vector<2x32xf32>
    %1331 = arith.negf %1330 : vector<2x32xf32>
    %1332 = math.exp %1331 : vector<2x32xf32>
    %cst_260 = arith.constant 1.000000e+00 : f32
    %1333 = vector.broadcast %cst_260 : f32 to vector<2x32xf32>
    %1334 = arith.addf %1333, %1332 : vector<2x32xf32>
    %1335 = arith.divf %1333, %1334 : vector<2x32xf32>
    %1336 = vector.extract_strided_slice %1316 {offsets = [0, 64], sizes = [2, 32], strides = [1, 1]} : vector<2x96xf32> to vector<2x32xf32>
    %1337 = vector.extract_strided_slice %1319 {offsets = [0, 64], sizes = [2, 32], strides = [1, 1]} : vector<2x96xf32> to vector<2x32xf32>
    %1338 = arith.mulf %1327, %1337 : vector<2x32xf32>
    %1339 = arith.addf %1336, %1338 : vector<2x32xf32>
    %1340 = math.tanh %1339 : vector<2x32xf32>
    %cst_261 = arith.constant 1.000000e+00 : f32
    %1341 = vector.broadcast %cst_261 : f32 to vector<2x32xf32>
    %1342 = arith.subf %1341, %1335 : vector<2x32xf32>
    %1343 = arith.mulf %1342, %1340 : vector<2x32xf32>
    %1344 = arith.mulf %1335, %1096 : vector<2x32xf32>
    %1345 = arith.addf %1343, %1344 : vector<2x32xf32>
    %1346 = tpu.concatenate %1345, %562 in 1 : vector<2x32xf32>, vector<2x32xf32> -> vector<2x64xf32>
    %cst_262 = arith.constant dense<0.000000e+00> : vector<2x24xf32>
    %1347 = tpu.matmul %1346, %20, %cst_262 {dimension_numbers = #tpu.dot_dimension_numbers<[1], [0], [0], [1], [0, 0, 1, 1], [], []>} : vector<2x64xf32>, vector<64x24xf32>, vector<2x24xf32> -> vector<2x24xf32>
    %1348 = vector.broadcast %21 : vector<1x24xf32> to vector<2x24xf32>
    %1349 = arith.addf %1347, %1348 : vector<2x24xf32>
    %c0_263 = arith.constant 0 : index
    %c0_264 = arith.constant 0 : index
    %1350 = vector.load %arg31[%c0_263, %c0_264] : memref<2x24xf32, #tpu.memory_space<vmem>>, vector<2x24xf32>
    tpu.vector_store %arg31[%c0_263, %c0_264], %1349 {strides = array<i32>} : memref<2x24xf32, #tpu.memory_space<vmem>>, vector<2x24xf32>,
    return
  }
}

</mosaic_0001>

<llo_original>
// kernel: dmn_forward.1
$region0: #{dmn_forward.1}
  #allocation0 [shape = 'u32[]', space=smem, size = 0x4, offset = 0x4, fixed_abs, tag = 'smem constant byte address 0x4 - core index']
  #allocation1 [shape = 'u32[144,128]{1,0:T(1,128)}', space=vmem, size = 0x12000, scoped, tag = 'internal scratch']
  #allocation2 [shape = 'f32[1,1]{1,0:T(1,128)S(1)}', space=vmem, size = 0x200, scoped, tag = 'scoped memory for dmn_forward.1']
  %s0 = inlined_call_operand.smem [shape: u32[32], index: -1, kind: input, shape index: {}]
  %s1 = sld [smem:[%s0]]
  %s2 = scalar_lea.smem %s0, 1
  %s3 = sld [smem:[%s2]]
  %s4 = scalar_lea.smem %s0, 2
  %s5 = sld [smem:[%s4]]
  %s6 = scalar_lea.smem %s0, 3
  %s7 = sld [smem:[%s6]]
  %s8 = scalar_lea.smem %s0, 4
  %s9 = sld [smem:[%s8]]
  %s10 = scalar_lea.smem %s0, 5
  %s11 = sld [smem:[%s10]]
  %s12 = scalar_lea.smem %s0, 6
  %s13 = sld [smem:[%s12]]
  %s14 = scalar_lea.smem %s0, 7
  %s15 = sld [smem:[%s14]]
  %s16 = scalar_lea.smem %s0, 8
  %s17 = sld [smem:[%s16]]
  %s18 = scalar_lea.smem %s0, 9
  %s19 = sld [smem:[%s18]]
  %s20 = scalar_lea.smem %s0, 10
  %s21 = sld [smem:[%s20]]
  %s22 = scalar_lea.smem %s0, 11
  %s23 = sld [smem:[%s22]]
  %s24 = scalar_lea.smem %s0, 12
  %s25 = sld [smem:[%s24]]
  %s26 = scalar_lea.smem %s0, 13
  %s27 = sld [smem:[%s26]]
  %s28 = scalar_lea.smem %s0, 14
  %s29 = sld [smem:[%s28]]
  %s30 = scalar_lea.smem %s0, 15
  %s31 = sld [smem:[%s30]]
  %s32 = scalar_lea.smem %s0, 16
  %s33 = sld [smem:[%s32]]
  %s34 = scalar_lea.smem %s0, 17
  %s35 = sld [smem:[%s34]]
  %s36 = scalar_lea.smem %s0, 18
  %s37 = sld [smem:[%s36]]
  %s38 = scalar_lea.smem %s0, 19
  %s39 = sld [smem:[%s38]]
  %s40 = scalar_lea.smem %s0, 20
  %s41 = sld [smem:[%s40]]
  %s42 = scalar_lea.smem %s0, 21
  %s43 = sld [smem:[%s42]]
  %s44 = scalar_lea.smem %s0, 22
  %s45 = sld [smem:[%s44]]
  %s46 = scalar_lea.smem %s0, 23
  %s47 = sld [smem:[%s46]]
  %s48 = scalar_lea.smem %s0, 24
  %s49 = sld [smem:[%s48]]
  %s50 = scalar_lea.smem %s0, 25
  %s51 = sld [smem:[%s50]]
  %s52 = scalar_lea.smem %s0, 26
  %s53 = sld [smem:[%s52]]
  %s54 = scalar_lea.smem %s0, 27
  %s55 = sld [smem:[%s54]]
  %s56 = scalar_lea.smem %s0, 28
  %s57 = sld [smem:[%s56]]
  %s58 = scalar_lea.smem %s0, 29
  %s59 = sld [smem:[%s58]]
  %s60 = scalar_lea.smem %s0, 30
  %s61 = sld [smem:[%s60]]
  %s62 = scalar_lea.smem %s0, 31
  %s63 = sld [smem:[%s62]]
  %s64 = sld [smem:[#allocation0]]
  $region134: #{dmn_forward.1} parent=0
    _
  %s66 = ssub.s32 1, %s64
  %s67 = scalar_select 0, %s66, %s64
  %v68 = vstv %s45
  %69 = vst [vmem:[#allocation2] sm:$0x1] %v68
  $region1: #{dmn_forward.1} parent=0
    #allocation3 [shape = 'u8[1024]{0}', space=vmem, size = 0x400, scoped, tag = 'output window, operand 0, single buffered']
    #allocation4 [shape = 's32[1]{0}', space=sflag, size = 0x4, scoped, tag = 'scoped memory for dmn_forward.1']
    %70 = vsyncpa [#allocation4], 0
    // Predicated region
    $region2: #{dmn_forward.1} parent=1 // pred_check
      _
    $region3: #{dmn_forward.1} parent=1 // pred_check_branch
      %72 = sbr.rel (0) target = $region5
    $region4: #{dmn_forward.1} parent=1 // pred_region
      _
    $region5: #{dmn_forward.1} parent=1 // pred_fallthru
      _
    // Predicated region
    $region6: #{dmn_forward.1} parent=1 // pred_check
      _
    $region7: #{dmn_forward.1} parent=1 // pred_check_branch
      %74 = sbr.rel (0) target = $region9
    $region8: #{dmn_forward.1} parent=1 // pred_region
      _
    $region9: #{dmn_forward.1} parent=1 // pred_fallthru
      _
    // Predicated region
    $region10: #{dmn_forward.1} parent=1 // pred_check
      _
    $region11: #{dmn_forward.1} parent=1 // pred_check_branch
      %76 = sbr.rel (0) target = $region13
    $region12: #{dmn_forward.1} parent=1 // pred_region
      _
    $region13: #{dmn_forward.1} parent=1 // pred_fallthru
      _
    // Predicated region
    $region14: #{dmn_forward.1} parent=1 // pred_check
      _
    $region15: #{dmn_forward.1} parent=1 // pred_check_branch
      %78 = sbr.rel (0) target = $region17
    $region16: #{dmn_forward.1} parent=1 // pred_region
      _
    $region17: #{dmn_forward.1} parent=1 // pred_fallthru
      _
    // Predicated region
    $region18: #{dmn_forward.1} parent=1 // pred_check
      _
    $region19: #{dmn_forward.1} parent=1 // pred_check_branch
      %80 = sbr.rel (0) target = $region21
    $region20: #{dmn_forward.1} parent=1 // pred_region
      _
    $region21: #{dmn_forward.1} parent=1 // pred_fallthru
      _
    // Predicated region
    $region22: #{dmn_forward.1} parent=1 // pred_check
      _
    $region23: #{dmn_forward.1} parent=1 // pred_check_branch
      %82 = sbr.rel (0) target = $region25
    $region24: #{dmn_forward.1} parent=1 // pred_region
      _
    $region25: #{dmn_forward.1} parent=1 // pred_fallthru
      _
    // Predicated region
    $region26: #{dmn_forward.1} parent=1 // pred_check
      _
    $region27: #{dmn_forward.1} parent=1 // pred_check_branch
      %84 = sbr.rel (0) target = $region29
    $region28: #{dmn_forward.1} parent=1 // pred_region
      _
    $region29: #{dmn_forward.1} parent=1 // pred_fallthru
      _
    // Predicated region
    $region30: #{dmn_forward.1} parent=1 // pred_check
      _
    $region31: #{dmn_forward.1} parent=1 // pred_check_branch
      %86 = sbr.rel (0) target = $region33
    $region32: #{dmn_forward.1} parent=1 // pred_region
      _
    $region33: #{dmn_forward.1} parent=1 // pred_fallthru
      _
    // Predicated region
    $region34: #{dmn_forward.1} parent=1 // pred_check
      _
    $region35: #{dmn_forward.1} parent=1 // pred_check_branch
      %88 = sbr.rel (0) target = $region37
    $region36: #{dmn_forward.1} parent=1 // pred_region
      _
    $region37: #{dmn_forward.1} parent=1 // pred_fallthru
      _
    // Predicated region
    $region38: #{dmn_forward.1} parent=1 // pred_check
      _
    $region39: #{dmn_forward.1} parent=1 // pred_check_branch
      %90 = sbr.rel (0) target = $region41
    $region40: #{dmn_forward.1} parent=1 // pred_region
      _
    $region41: #{dmn_forward.1} parent=1 // pred_fallthru
      _
    // Predicated region
    $region42: #{dmn_forward.1} parent=1 // pred_check
      _
    $region43: #{dmn_forward.1} parent=1 // pred_check_branch
      %92 = sbr.rel (0) target = $region45
    $region44: #{dmn_forward.1} parent=1 // pred_region
      _
    $region45: #{dmn_forward.1} parent=1 // pred_fallthru
      _
    // Predicated region
    $region46: #{dmn_forward.1} parent=1 // pred_check
      _
    $region47: #{dmn_forward.1} parent=1 // pred_check_branch
      %94 = sbr.rel (0) target = $region49
    $region48: #{dmn_forward.1} parent=1 // pred_region
      _
    $region49: #{dmn_forward.1} parent=1 // pred_fallthru
      _
    // Predicated region
    $region50: #{dmn_forward.1} parent=1 // pred_check
      _
    $region51: #{dmn_forward.1} parent=1 // pred_check_branch
      %96 = sbr.rel (0) target = $region53
    $region52: #{dmn_forward.1} parent=1 // pred_region
      _
    $region53: #{dmn_forward.1} parent=1 // pred_fallthru
      _
    // Predicated region
    $region54: #{dmn_forward.1} parent=1 // pred_check
      _
    $region55: #{dmn_forward.1} parent=1 // pred_check_branch
      %98 = sbr.rel (0) target = $region57
    $region56: #{dmn_forward.1} parent=1 // pred_region
      _
    $region57: #{dmn_forward.1} parent=1 // pred_fallthru
      _
    // Predicated region
    $region58: #{dmn_forward.1} parent=1 // pred_check
      _
    $region59: #{dmn_forward.1} parent=1 // pred_check_branch
      %100 = sbr.rel (0) target = $region61
    $region60: #{dmn_forward.1} parent=1 // pred_region
      _
    $region61: #{dmn_forward.1} parent=1 // pred_fallthru
      _
    // Predicated region
    $region62: #{dmn_forward.1} parent=1 // pred_check
      _
    $region63: #{dmn_forward.1} parent=1 // pred_check_branch
      %102 = sbr.rel (0) target = $region65
    $region64: #{dmn_forward.1} parent=1 // pred_region
      _
    $region65: #{dmn_forward.1} parent=1 // pred_fallthru
      _
    // Predicated region
    $region66: #{dmn_forward.1} parent=1 // pred_check
      _
    $region67: #{dmn_forward.1} parent=1 // pred_check_branch
      %104 = sbr.rel (0) target = $region69
    $region68: #{dmn_forward.1} parent=1 // pred_region
      _
    $region69: #{dmn_forward.1} parent=1 // pred_fallthru
      _
    // Predicated region
    $region70: #{dmn_forward.1} parent=1 // pred_check
      _
    $region71: #{dmn_forward.1} parent=1 // pred_check_branch
      %106 = sbr.rel (0) target = $region73
    $region72: #{dmn_forward.1} parent=1 // pred_region
      _
    $region73: #{dmn_forward.1} parent=1 // pred_fallthru
      _
    // Predicated region
    $region74: #{dmn_forward.1} parent=1 // pred_check
      _
    $region75: #{dmn_forward.1} parent=1 // pred_check_branch
      %108 = sbr.rel (0) target = $region77
    $region76: #{dmn_forward.1} parent=1 // pred_region
      _
    $region77: #{dmn_forward.1} parent=1 // pred_fallthru
      _
    // Predicated region
    $region78: #{dmn_forward.1} parent=1 // pred_check
      _
    $region79: #{dmn_forward.1} parent=1 // pred_check_branch
      %110 = sbr.rel (0) target = $region81
    $region80: #{dmn_forward.1} parent=1 // pred_region
      _
    $region81: #{dmn_forward.1} parent=1 // pred_fallthru
      _
    // Predicated region
    $region82: #{dmn_forward.1} parent=1 // pred_check
      _
    $region83: #{dmn_forward.1} parent=1 // pred_check_branch
      %112 = sbr.rel (0) target = $region85
    $region84: #{dmn_forward.1} parent=1 // pred_region
      _
    $region85: #{dmn_forward.1} parent=1 // pred_fallthru
      _
    // Predicated region
    $region86: #{dmn_forward.1} parent=1 // pred_check
      _
    $region87: #{dmn_forward.1} parent=1 // pred_check_branch
      %114 = sbr.rel (0) target = $region89
    $region88: #{dmn_forward.1} parent=1 // pred_region
      _
    $region89: #{dmn_forward.1} parent=1 // pred_fallthru
      _
    // Predicated region
    $region90: #{dmn_forward.1} parent=1 // pred_check
      _
    $region91: #{dmn_forward.1} parent=1 // pred_check_branch
      %116 = sbr.rel (0) target = $region93
    $region92: #{dmn_forward.1} parent=1 // pred_region
      _
    $region93: #{dmn_forward.1} parent=1 // pred_fallthru
      _
    // Predicated region
    $region94: #{dmn_forward.1} parent=1 // pred_check
      _
    $region95: #{dmn_forward.1} parent=1 // pred_check_branch
      %118 = sbr.rel (0) target = $region97
    $region96: #{dmn_forward.1} parent=1 // pred_region
      _
    $region97: #{dmn_forward.1} parent=1 // pred_fallthru
      _
    // Predicated region
    $region98: #{dmn_forward.1} parent=1 // pred_check
      _
    $region99: #{dmn_forward.1} parent=1 // pred_check_branch
      %120 = sbr.rel (0) target = $region101
    $region100: #{dmn_forward.1} parent=1 // pred_region
      _
    $region101: #{dmn_forward.1} parent=1 // pred_fallthru
      _
    // Predicated region
    $region102: #{dmn_forward.1} parent=1 // pred_check
      _
    $region103: #{dmn_forward.1} parent=1 // pred_check_branch
      %122 = sbr.rel (0) target = $region105
    $region104: #{dmn_forward.1} parent=1 // pred_region
      _
    $region105: #{dmn_forward.1} parent=1 // pred_fallthru
      _
    // Predicated region
    $region106: #{dmn_forward.1} parent=1 // pred_check
      _
    $region107: #{dmn_forward.1} parent=1 // pred_check_branch
      %124 = sbr.rel (0) target = $region109
    $region108: #{dmn_forward.1} parent=1 // pred_region
      _
    $region109: #{dmn_forward.1} parent=1 // pred_fallthru
      _
    // Predicated region
    $region110: #{dmn_forward.1} parent=1 // pred_check
      _
    $region111: #{dmn_forward.1} parent=1 // pred_check_branch
      %126 = sbr.rel (0) target = $region113
    $region112: #{dmn_forward.1} parent=1 // pred_region
      _
    $region113: #{dmn_forward.1} parent=1 // pred_fallthru
      _
    // Predicated region
    $region114: #{dmn_forward.1} parent=1 // pred_check
      _
    $region115: #{dmn_forward.1} parent=1 // pred_check_branch
      %128 = sbr.rel (0) target = $region117
    $region116: #{dmn_forward.1} parent=1 // pred_region
      _
    $region117: #{dmn_forward.1} parent=1 // pred_fallthru
      _
    // Predicated region
    $region118: #{dmn_forward.1} parent=1 // pred_check
      _
    $region119: #{dmn_forward.1} parent=1 // pred_check_branch
      %130 = sbr.rel (0) target = $region121
    $region120: #{dmn_forward.1} parent=1 // pred_region
      _
    $region121: #{dmn_forward.1} parent=1 // pred_fallthru
      _
    // Predicated region
    $region122: #{dmn_forward.1} parent=1 // pred_check
      _
    $region123: #{dmn_forward.1} parent=1 // pred_check_branch
      %132 = sbr.rel (0) target = $region125
    $region124: #{dmn_forward.1} parent=1 // pred_region
      _
    $region125: #{dmn_forward.1} parent=1 // pred_fallthru
      _
    %v133 = vld [vmem:[%s9] sm:$0xff]
    %v134 = vld [vmem:[%s9 + $0x8] sm:$0xff]
    %v135 = vld [vmem:[%s9 + $0x10] sm:$0xff]
    %v136 = vld [vmem:[%s9 + $0x18] sm:$0xff]
    %v137 = vld [vmem:[%s13] sm:$0x1]
    %v138 = vld [vmem:[%s17] sm:$0xff]
    %v139 = vld [vmem:[%s17 + $0x8] sm:$0xff]
    %v140 = vld [vmem:[%s17 + $0x10] sm:$0xff]
    %v141 = vld [vmem:[%s17 + $0x18] sm:$0xff]
    %v142 = vld [vmem:[%s21] sm:$0x1]
    %v143 = vld [vmem:[%s25] sm:$0xff]
    %v144 = vld [vmem:[%s25 + $0x8] sm:$0xff]
    %v145 = vld [vmem:[%s25 + $0x10] sm:$0xff]
    %v146 = vld [vmem:[%s25 + $0x18] sm:$0xff]
    %v147 = vld [vmem:[%s29] sm:$0x1]
    %v148 = vld [vmem:[%s33] sm:$0xff]
    %v149 = vld [vmem:[%s33 + $0x8] sm:$0xff]
    %v150 = vld [vmem:[%s33 + $0x10] sm:$0xff]
    %v151 = vld [vmem:[%s33 + $0x18] sm:$0xff]
    %v152 = vld [vmem:[%s37] sm:$0x1]
    %v153 = vld [vmem:[%s31] sm:$0xff]
    %v154 = vld [vmem:[%s31 + $0x8] sm:$0xff]
    %v155 = vld [vmem:[%s31 + $0x10] sm:$0xff]
    %v156 = vld [vmem:[%s31 + $0x18] sm:$0xff]
    %v157 = vld [vmem:[%s35] sm:$0x1]
    %v158 = vld [vmem:[%s39] sm:$0xff]
    %v159 = vld [vmem:[%s39 + $0x8] sm:$0xff]
    %v160 = vld [vmem:[%s39 + $0x10] sm:$0xff]
    %v161 = vld [vmem:[%s39 + $0x18] sm:$0xff]
    %v162 = vld [vmem:[%s39 + $0x20] sm:$0xff]
    %v163 = vld [vmem:[%s39 + $0x28] sm:$0xff]
    %v164 = vld [vmem:[%s39 + $0x30] sm:$0xff]
    %v165 = vld [vmem:[%s39 + $0x38] sm:$0xff]
    %v166 = vld [vmem:[%s39 + $0x40] sm:$0xff]
    %v167 = vld [vmem:[%s39 + $0x48] sm:$0xff]
    %v168 = vld [vmem:[%s39 + $0x50] sm:$0xff]
    %v169 = vld [vmem:[%s39 + $0x58] sm:$0xff]
    %v170 = vld [vmem:[%s39 + $0x60] sm:$0xff]
    %v171 = vld [vmem:[%s39 + $0x68] sm:$0xff]
    %v172 = vld [vmem:[%s39 + $0x70] sm:$0xff]
    %v173 = vld [vmem:[%s39 + $0x78] sm:$0xff]
    %v174 = vld [vmem:[%s41] sm:$0x1]
    %v175 = vld [vmem:[%s43] sm:$0xff]
    %v176 = vld [vmem:[%s43 + $0x8] sm:$0xff]
    %v177 = vld [vmem:[%s43 + $0x10] sm:$0xff]
    %v178 = vld [vmem:[%s43 + $0x18] sm:$0xff]
    %v179 = vld [vmem:[#allocation2] sm:$0x1]
    %v180 = vld [vmem:[%s47] sm:$0xff]
    %v181 = vld [vmem:[%s47 + $0x8] sm:$0xff]
    %v182 = vld [vmem:[%s47 + $0x10] sm:$0xff]
    %v183 = vld [vmem:[%s47 + $0x18] sm:$0xff]
    %v184 = vld [vmem:[%s51] sm:$0x1]
    %v185 = vld [vmem:[%s49] sm:$0xff]
    %v186 = vld [vmem:[%s49 + $0x8] sm:$0xff]
    %v187 = vld [vmem:[%s49 + $0x10] sm:$0xff]
    %v188 = vld [vmem:[%s49 + $0x18] sm:$0xff]
    %v189 = vld [vmem:[%s53] sm:$0x1]
    %v190 = vld [vmem:[%s55] sm:$0xff]
    %v191 = vld [vmem:[%s55 + $0x8] sm:$0xff]
    %v192 = vld [vmem:[%s55 + $0x10] sm:$0xff]
    %v193 = vld [vmem:[%s55 + $0x18] sm:$0xff]
    %v194 = vld [vmem:[%s55 + $0x20] sm:$0xff]
    %v195 = vld [vmem:[%s55 + $0x28] sm:$0xff]
    %v196 = vld [vmem:[%s55 + $0x30] sm:$0xff]
    %v197 = vld [vmem:[%s55 + $0x38] sm:$0xff]
    %v198 = vld [vmem:[%s55 + $0x40] sm:$0xff]
    %v199 = vld [vmem:[%s55 + $0x48] sm:$0xff]
    %v200 = vld [vmem:[%s55 + $0x50] sm:$0xff]
    %v201 = vld [vmem:[%s55 + $0x58] sm:$0xff]
    %v202 = vld [vmem:[%s57] sm:$0x1]
    %v203 = vld [vmem:[%s59] sm:$0xff]
    %v204 = vld [vmem:[%s59 + $0x8] sm:$0xff]
    %v205 = vld [vmem:[%s59 + $0x10] sm:$0xff]
    %v206 = vld [vmem:[%s59 + $0x18] sm:$0xff]
    %v207 = vld [vmem:[%s59 + $0x20] sm:$0xff]
    %v208 = vld [vmem:[%s59 + $0x28] sm:$0xff]
    %v209 = vld [vmem:[%s59 + $0x30] sm:$0xff]
    %v210 = vld [vmem:[%s59 + $0x38] sm:$0xff]
    %v211 = vld [vmem:[%s61] sm:$0x1]
    %v212 = vld [vmem:[%s1] sm:$0x7f]
    %v213 = vld [vmem:[%s1 + $0x8] sm:$0x7f]
    %v214 = vld [vmem:[%s1 + $0x10] sm:$0x7f]
    %v215 = vld [vmem:[%s1 + $0x18] sm:$0x7f]
    %v216 = vld [vmem:[%s1 + $0x20] sm:$0x7f]
    %v217 = vld [vmem:[%s1 + $0x28] sm:$0x7f]
    %v218 = vld [vmem:[%s1 + $0x30] sm:$0x7f]
    %v219 = vld [vmem:[%s1 + $0x38] sm:$0x7f]
    %v220 = vld [vmem:[%s1 + $0x40] sm:$0x7f]
    %v221 = vld [vmem:[%s1 + $0x48] sm:$0x7f]
    %v222 = vld [vmem:[%s1 + $0x50] sm:$0x7f]
    %v223 = vld [vmem:[%s1 + $0x58] sm:$0x7f]
    %v224 = vld [vmem:[%s3] sm:$0x7f]
    %v225 = vmul.f32 %v212, %v224
    %v226 = vmul.f32 %v213, %v224
    %v227 = vmul.f32 %v214, %v224
    %v228 = vmul.f32 %v215, %v224
    %v229 = vmul.f32 %v216, %v224
    %v230 = vmul.f32 %v217, %v224
    %v231 = vmul.f32 %v218, %v224
    %v232 = vmul.f32 %v219, %v224
    %v233 = vmul.f32 %v220, %v224
    %v234 = vmul.f32 %v221, %v224
    %v235 = vmul.f32 %v222, %v224
    %v236 = vmul.f32 %v223, %v224
    %vm237 = vcmask 260096
    %v238 = vsel %vm237, %v225, 0.0
    %v239 = vrot.slane %v238, 4
    %v240 = vadd.f32 %v238, %v239
    %v241 = vrot.slane %v240, 2
    %v242 = vadd.f32 %v240, %v241
    %v243 = vrot.slane %v242, 1
    %v244 = vadd.f32 %v242, %v243
    %v245 = vsel %vm237, %v226, 0.0
    %v246 = vrot.slane %v245, 4
    %v247 = vadd.f32 %v245, %v246
    %v248 = vrot.slane %v247, 2
    %v249 = vadd.f32 %v247, %v248
    %v250 = vrot.slane %v249, 1
    %v251 = vadd.f32 %v249, %v250
    %v252 = vsel %vm237, %v227, 0.0
    %v253 = vrot.slane %v252, 4
    %v254 = vadd.f32 %v252, %v253
    %v255 = vrot.slane %v254, 2
    %v256 = vadd.f32 %v254, %v255
    %v257 = vrot.slane %v256, 1
    %v258 = vadd.f32 %v256, %v257
    %v259 = vsel %vm237, %v228, 0.0
    %v260 = vrot.slane %v259, 4
    %v261 = vadd.f32 %v259, %v260
    %v262 = vrot.slane %v261, 2
    %v263 = vadd.f32 %v261, %v262
    %v264 = vrot.slane %v263, 1
    %v265 = vadd.f32 %v263, %v264
    %v266 = vsel %vm237, %v229, 0.0
    %v267 = vrot.slane %v266, 4
    %v268 = vadd.f32 %v266, %v267
    %v269 = vrot.slane %v268, 2
    %v270 = vadd.f32 %v268, %v269
    %v271 = vrot.slane %v270, 1
    %v272 = vadd.f32 %v270, %v271
    %v273 = vsel %vm237, %v230, 0.0
    %v274 = vrot.slane %v273, 4
    %v275 = vadd.f32 %v273, %v274
    %v276 = vrot.slane %v275, 2
    %v277 = vadd.f32 %v275, %v276
    %v278 = vrot.slane %v277, 1
    %v279 = vadd.f32 %v277, %v278
    %v280 = vsel %vm237, %v231, 0.0
    %v281 = vrot.slane %v280, 4
    %v282 = vadd.f32 %v280, %v281
    %v283 = vrot.slane %v282, 2
    %v284 = vadd.f32 %v282, %v283
    %v285 = vrot.slane %v284, 1
    %v286 = vadd.f32 %v284, %v285
    %v287 = vsel %vm237, %v232, 0.0
    %v288 = vrot.slane %v287, 4
    %v289 = vadd.f32 %v287, %v288
    %v290 = vrot.slane %v289, 2
    %v291 = vadd.f32 %v289, %v290
    %v292 = vrot.slane %v291, 1
    %v293 = vadd.f32 %v291, %v292
    %v294 = vsel %vm237, %v233, 0.0
    %v295 = vrot.slane %v294, 4
    %v296 = vadd.f32 %v294, %v295
    %v297 = vrot.slane %v296, 2
    %v298 = vadd.f32 %v296, %v297
    %v299 = vrot.slane %v298, 1
    %v300 = vadd.f32 %v298, %v299
    %v301 = vsel %vm237, %v234, 0.0
    %v302 = vrot.slane %v301, 4
    %v303 = vadd.f32 %v301, %v302
    %v304 = vrot.slane %v303, 2
    %v305 = vadd.f32 %v303, %v304
    %v306 = vrot.slane %v305, 1
    %v307 = vadd.f32 %v305, %v306
    %v308 = vsel %vm237, %v235, 0.0
    %v309 = vrot.slane %v308, 4
    %v310 = vadd.f32 %v308, %v309
    %v311 = vrot.slane %v310, 2
    %v312 = vadd.f32 %v310, %v311
    %v313 = vrot.slane %v312, 1
    %v314 = vadd.f32 %v312, %v313
    %v315 = vsel %vm237, %v236, 0.0
    %v316 = vrot.slane %v315, 4
    %v317 = vadd.f32 %v315, %v316
    %v318 = vrot.slane %v317, 2
    %v319 = vadd.f32 %v317, %v318
    %v320 = vrot.slane %v319, 1
    %v321 = vadd.f32 %v319, %v320
    %v322 = vld [vmem:[%s7] sm:$0xff]
    %v323 = vld [vmem:[%s7 + $0x8] sm:$0xff]
    %v324 = vld [vmem:[%s7 + $0x10] sm:$0xff]
    %v325 = vld [vmem:[%s7 + $0x18] sm:$0xff]
    %v326 = vld [vmem:[%s11] sm:$0x1]
    %v328 = vlaneseq
    %v329 = vshrl.u32 %v328, 7
    %v330 = vsub.s32 0, %v329
    %v331 = vrot.slane %v326, %v330
    %vm345 = vcmask 1041409
    %v346 = vsel %vm345, %v251, %v244
    %vm347 = vcmask 1042434
    %v348 = vsel %vm347, %v258, %v346
    %vm349 = vcmask 1043459
    %v350 = vsel %vm349, %v265, %v348
    %vm351 = vcmask 1044484
    %v352 = vsel %vm351, %v272, %v350
    %vm353 = vcmask 1045509
    %v354 = vsel %vm353, %v279, %v352
    %vm355 = vcmask 1046534
    %v356 = vsel %vm355, %v286, %v354
    %vm357 = vcmask 1047559
    %v358 = vsel %vm357, %v293, %v356
    %v359 = vsel %vm345, %v307, %v300
    %v360 = vsel %vm347, %v314, %v359
    %v361 = vsel %vm349, %v321, %v360
    %vm362 = vcmask 261120
    %v363 = vsel %vm362, %v358, 0
    %v365 = vsel %vm362, %v361, 0
    %367 = vmatprep.subr.mxu0 0.0
    %368 = vmatpush1.msra.mxu0 %v322
    %369 = vmatprep.subr.mxu0 0.0
    %370 = vmatpush1.msra.mxu0 %v323
    %371 = vmatprep.subr.mxu0 0.0
    %372 = vmatpush1.msra.mxu0 %v324
    %373 = vmatprep.subr.mxu0 0.0
    %374 = vmatpush1.msra.mxu0 %v325
    %375 = vmatprep.subr.mxu0 0.0
    %376 = vmatpush1.msra.mxu0 0.0
    %377 = vmatprep.subr.mxu0 0.0
    %378 = vmatpush1.msra.mxu0 0.0
    %379 = vmatprep.subr.mxu0 0.0
    %380 = vmatpush1.msra.mxu0 0.0
    %381 = vmatprep.subr.mxu0 0.0
    %382 = vmatpush1.msra.mxu0 0.0
    %383 = vmatprep.subr.mxu0 0.0
    %384 = vmatpush1.msra.mxu0 0.0
    %385 = vmatprep.subr.mxu0 0.0
    %386 = vmatpush1.msra.mxu0 0.0
    %387 = vmatprep.subr.mxu0 0.0
    %388 = vmatpush1.msra.mxu0 0.0
    %389 = vmatprep.subr.mxu0 0.0
    %390 = vmatpush1.msra.mxu0 0.0
    %391 = vmatprep.subr.mxu0 0.0
    %392 = vmatpush1.msra.mxu0 0.0
    %393 = vmatprep.subr.mxu0 0.0
    %394 = vmatpush1.msra.mxu0 0.0
    %395 = vmatprep.subr.mxu0 0.0
    %396 = vmatpush1.msra.mxu0 0.0
    %397 = vmatprep.subr.mxu0 0.0
    %398 = vmatpush1.msra.mxu0 0.0
    %399 = vmatprep.subr.mxu0 0.0
    %400 = vmatpush1.msra.mxu0 0.0
    %401 = vmatprep.subr.mxu0 0.0
    %402 = vmatpush1.msra.mxu0 0.0
    %403 = vmatprep.subr.mxu0 0.0
    %404 = vmatpush1.msra.mxu0 0.0
    %405 = vmatprep.subr.mxu0 0.0
    %406 = vmatpush1.msra.mxu0 0.0
    %407 = vmatprep.subr.mxu0 0.0
    %408 = vmatpush1.msra.mxu0 0.0
    %409 = vmatprep.subr.mxu0 0.0
    %410 = vmatpush1.msra.mxu0 0.0
    %411 = vmatprep.subr.mxu0 0.0
    %412 = vmatpush1.msra.mxu0 0.0
    %413 = vmatprep.subr.mxu0 0.0
    %414 = vmatpush1.msra.mxu0 0.0
    %415 = vmatprep.subr.mxu0 0.0
    %416 = vmatpush1.msra.mxu0 0.0
    %417 = vmatprep.subr.mxu0 0.0
    %418 = vmatpush1.msra.mxu0 0.0
    %419 = vmatprep.subr.mxu0 0.0
    %420 = vmatpush1.msra.mxu0 0.0
    %421 = vmatprep.subr.mxu0 0.0
    %422 = vmatpush1.msra.mxu0 0.0
    %423 = vmatprep.subr.mxu0 0.0
    %424 = vmatpush1.msra.mxu0 0.0
    %425 = vmatprep.subr.mxu0 0.0
    %426 = vmatpush1.msra.mxu0 0.0
    %427 = vmatprep.subr.mxu0 0.0
    %428 = vmatpush1.msra.mxu0 0.0
    %429 = vmatprep.subr.mxu0 0.0
    %430 = vmatpush1.msra.mxu0 0.0
    %431 = vmatprep.mubr.f32.mxu0 0.0
    %432 = vmatmul.mubr.f32.gmra.mrb[0].mxu0 %v363
    %v433 = vpop.f32.mrb[0].mxu0
    %v434 = vadd.f32 %v331, %v433
    %v435 = vpop.f32.mrb[0].mxu0
    %436 = vmatprep.mubr.f32.mxu0 0.0
    %437 = vmatmul.mubr.f32.gmra.mrb[0].mxu0 %v365
    %v438 = vpop.f32.mrb[0].mxu0
    %v439 = vadd.f32 %v331, %v438
    %v440 = vpop.f32.mrb[0].mxu0
    %441 = vdwg.mxu0
    %v442 = vld [vmem:[%s15] sm:$0xff]
    %v443 = vld [vmem:[%s15 + $0x8] sm:$0xff]
    %v444 = vld [vmem:[%s15 + $0x10] sm:$0xff]
    %v445 = vld [vmem:[%s15 + $0x18] sm:$0xff]
    %v446 = vld [vmem:[%s19] sm:$0x1]
    %v448 = vlaneseq
    %v449 = vshrl.u32 %v448, 7
    %v450 = vsub.s32 0, %v449
    %v451 = vrot.slane %v446, %v450
    %453 = vmatprep.subr.mxu0 0.0
    %454 = vmatpush1.msra.mxu0 %v442
    %455 = vmatprep.subr.mxu0 0.0
    %456 = vmatpush1.msra.mxu0 %v443
    %457 = vmatprep.subr.mxu0 0.0
    %458 = vmatpush1.msra.mxu0 %v444
    %459 = vmatprep.subr.mxu0 0.0
    %460 = vmatpush1.msra.mxu0 %v445
    %461 = vmatprep.subr.mxu0 0.0
    %462 = vmatpush1.msra.mxu0 0.0
    %463 = vmatprep.subr.mxu0 0.0
    %464 = vmatpush1.msra.mxu0 0.0
    %465 = vmatprep.subr.mxu0 0.0
    %466 = vmatpush1.msra.mxu0 0.0
    %467 = vmatprep.subr.mxu0 0.0
    %468 = vmatpush1.msra.mxu0 0.0
    %469 = vmatprep.subr.mxu0 0.0
    %470 = vmatpush1.msra.mxu0 0.0
    %471 = vmatprep.subr.mxu0 0.0
    %472 = vmatpush1.msra.mxu0 0.0
    %473 = vmatprep.subr.mxu0 0.0
    %474 = vmatpush1.msra.mxu0 0.0
    %475 = vmatprep.subr.mxu0 0.0
    %476 = vmatpush1.msra.mxu0 0.0
    %477 = vmatprep.subr.mxu0 0.0
    %478 = vmatpush1.msra.mxu0 0.0
    %479 = vmatprep.subr.mxu0 0.0
    %480 = vmatpush1.msra.mxu0 0.0
    %481 = vmatprep.subr.mxu0 0.0
    %482 = vmatpush1.msra.mxu0 0.0
    %483 = vmatprep.subr.mxu0 0.0
    %484 = vmatpush1.msra.mxu0 0.0
    %485 = vmatprep.subr.mxu0 0.0
    %486 = vmatpush1.msra.mxu0 0.0
    %487 = vmatprep.subr.mxu0 0.0
    %488 = vmatpush1.msra.mxu0 0.0
    %489 = vmatprep.subr.mxu0 0.0
    %490 = vmatpush1.msra.mxu0 0.0
    %491 = vmatprep.subr.mxu0 0.0
    %492 = vmatpush1.msra.mxu0 0.0
    %493 = vmatprep.subr.mxu0 0.0
    %494 = vmatpush1.msra.mxu0 0.0
    %495 = vmatprep.subr.mxu0 0.0
    %496 = vmatpush1.msra.mxu0 0.0
    %497 = vmatprep.subr.mxu0 0.0
    %498 = vmatpush1.msra.mxu0 0.0
    %499 = vmatprep.subr.mxu0 0.0
    %500 = vmatpush1.msra.mxu0 0.0
    %501 = vmatprep.subr.mxu0 0.0
    %502 = vmatpush1.msra.mxu0 0.0
    %503 = vmatprep.subr.mxu0 0.0
    %504 = vmatpush1.msra.mxu0 0.0
    %505 = vmatprep.subr.mxu0 0.0
    %506 = vmatpush1.msra.mxu0 0.0
    %507 = vmatprep.subr.mxu0 0.0
    %508 = vmatpush1.msra.mxu0 0.0
    %509 = vmatprep.subr.mxu0 0.0
    %510 = vmatpush1.msra.mxu0 0.0
    %511 = vmatprep.subr.mxu0 0.0
    %512 = vmatpush1.msra.mxu0 0.0
    %513 = vmatprep.subr.mxu0 0.0
    %514 = vmatpush1.msra.mxu0 0.0
    %515 = vmatprep.subr.mxu0 0.0
    %516 = vmatpush1.msra.mxu0 0.0
    %517 = vmatprep.mubr.f32.mxu0 0.0
    %518 = vmatmul.mubr.f32.gmra.mrb[0].mxu0 %v363
    %v519 = vpop.f32.mrb[0].mxu0
    %v520 = vadd.f32 %v451, %v519
    %v521 = vpop.f32.mrb[0].mxu0
    %522 = vmatprep.mubr.f32.mxu0 0.0
    %523 = vmatmul.mubr.f32.gmra.mrb[0].mxu0 %v365
    %v524 = vpop.f32.mrb[0].mxu0
    %v525 = vadd.f32 %v451, %v524
    %v526 = vpop.f32.mrb[0].mxu0
    %527 = vdwg.mxu0
    %v529 = vlaneseq
    %v530 = vshrl.u32 %v529, 7
    %v531 = vsub.s32 0, %v530
    %v532 = vrot.slane %v137, %v531
    %v535 = vsel %vm362, 0.0, 0
    %537 = vmatprep.subr.mxu0 0.0
    %538 = vmatpush1.msra.mxu0 %v133
    %539 = vmatprep.subr.mxu0 0.0
    %540 = vmatpush1.msra.mxu0 %v134
    %541 = vmatprep.subr.mxu0 0.0
    %542 = vmatpush1.msra.mxu0 %v135
    %543 = vmatprep.subr.mxu0 0.0
    %544 = vmatpush1.msra.mxu0 %v136
    %545 = vmatprep.subr.mxu0 0.0
    %546 = vmatpush1.msra.mxu0 0.0
    %547 = vmatprep.subr.mxu0 0.0
    %548 = vmatpush1.msra.mxu0 0.0
    %549 = vmatprep.subr.mxu0 0.0
    %550 = vmatpush1.msra.mxu0 0.0
    %551 = vmatprep.subr.mxu0 0.0
    %552 = vmatpush1.msra.mxu0 0.0
    %553 = vmatprep.subr.mxu0 0.0
    %554 = vmatpush1.msra.mxu0 0.0
    %555 = vmatprep.subr.mxu0 0.0
    %556 = vmatpush1.msra.mxu0 0.0
    %557 = vmatprep.subr.mxu0 0.0
    %558 = vmatpush1.msra.mxu0 0.0
    %559 = vmatprep.subr.mxu0 0.0
    %560 = vmatpush1.msra.mxu0 0.0
    %561 = vmatprep.subr.mxu0 0.0
    %562 = vmatpush1.msra.mxu0 0.0
    %563 = vmatprep.subr.mxu0 0.0
    %564 = vmatpush1.msra.mxu0 0.0
    %565 = vmatprep.subr.mxu0 0.0
    %566 = vmatpush1.msra.mxu0 0.0
    %567 = vmatprep.subr.mxu0 0.0
    %568 = vmatpush1.msra.mxu0 0.0
    %569 = vmatprep.subr.mxu0 0.0
    %570 = vmatpush1.msra.mxu0 0.0
    %571 = vmatprep.subr.mxu0 0.0
    %572 = vmatpush1.msra.mxu0 0.0
    %573 = vmatprep.subr.mxu0 0.0
    %574 = vmatpush1.msra.mxu0 0.0
    %575 = vmatprep.subr.mxu0 0.0
    %576 = vmatpush1.msra.mxu0 0.0
    %577 = vmatprep.subr.mxu0 0.0
    %578 = vmatpush1.msra.mxu0 0.0
    %579 = vmatprep.subr.mxu0 0.0
    %580 = vmatpush1.msra.mxu0 0.0
    %581 = vmatprep.subr.mxu0 0.0
    %582 = vmatpush1.msra.mxu0 0.0
    %583 = vmatprep.subr.mxu0 0.0
    %584 = vmatpush1.msra.mxu0 0.0
    %585 = vmatprep.subr.mxu0 0.0
    %586 = vmatpush1.msra.mxu0 0.0
    %587 = vmatprep.subr.mxu0 0.0
    %588 = vmatpush1.msra.mxu0 0.0
    %589 = vmatprep.subr.mxu0 0.0
    %590 = vmatpush1.msra.mxu0 0.0
    %591 = vmatprep.subr.mxu0 0.0
    %592 = vmatpush1.msra.mxu0 0.0
    %593 = vmatprep.subr.mxu0 0.0
    %594 = vmatpush1.msra.mxu0 0.0
    %595 = vmatprep.subr.mxu0 0.0
    %596 = vmatpush1.msra.mxu0 0.0
    %597 = vmatprep.subr.mxu0 0.0
    %598 = vmatpush1.msra.mxu0 0.0
    %599 = vmatprep.subr.mxu0 0.0
    %600 = vmatpush1.msra.mxu0 0.0
    %601 = vmatprep.mubr.f32.mxu0 0.0
    %602 = vmatmul.mubr.f32.gmra.mrb[0].mxu0 %v535
    %v603 = vpop.f32.mrb[0].mxu0
    %v604 = vadd.f32 %v532, %v603
    %v605 = vpop.f32.mrb[0].mxu0
    %606 = vdwg.mxu0
    %v607 = vadd.f32 %v434, %v604
    %v608 = vxor.u32 %v607, 2147483648
    %v609 = vmul.f32 %v608, 1.442695
    %v610 = vpow.pop %v609
    %v611 = vadd.f32 %v610, 1.0
    %v612 = vrcp.pop %v611
    %v613 = vmul.f32 1.0, %v612
    %615 = vrot.lane.b32.xlu0 %v604, 64
    %v616 = vpop.permute.xlu0 %615
    %v618 = vmul.f32 %v613, %v616
    %620 = vrot.lane.b32.xlu0 %v618, 64
    %v621 = vpop.permute.xlu0 %620
    %v623 = vadd.f32 %v434, %v621
    %v624 = vtanh.pop %v623
    %v625 = vsub.f32 1.0, %v613
    %627 = vrot.lane.b32.xlu0 %v624, 96
    %v628 = vpop.permute.xlu0 %627
    %v630 = vmul.f32 %v625, %v628
    %v631 = vmul.f32 %v613, 0.0
    %v632 = vadd.f32 %v630, %v631
    %v634 = vlaneseq
    %v635 = vshrl.u32 %v634, 7
    %v636 = vsub.s32 0, %v635
    %v637 = vrot.slane %v142, %v636
    %639 = vmatprep.subr.mxu0 0.0
    %640 = vmatpush1.msra.mxu0 %v138
    %641 = vmatprep.subr.mxu0 0.0
    %642 = vmatpush1.msra.mxu0 %v139
    %643 = vmatprep.subr.mxu0 0.0
    %644 = vmatpush1.msra.mxu0 %v140
    %645 = vmatprep.subr.mxu0 0.0
    %646 = vmatpush1.msra.mxu0 %v141
    %647 = vmatprep.subr.mxu0 0.0
    %648 = vmatpush1.msra.mxu0 0.0
    %649 = vmatprep.subr.mxu0 0.0
    %650 = vmatpush1.msra.mxu0 0.0
    %651 = vmatprep.subr.mxu0 0.0
    %652 = vmatpush1.msra.mxu0 0.0
    %653 = vmatprep.subr.mxu0 0.0
    %654 = vmatpush1.msra.mxu0 0.0
    %655 = vmatprep.subr.mxu0 0.0
    %656 = vmatpush1.msra.mxu0 0.0
    %657 = vmatprep.subr.mxu0 0.0
    %658 = vmatpush1.msra.mxu0 0.0
    %659 = vmatprep.subr.mxu0 0.0
    %660 = vmatpush1.msra.mxu0 0.0
    %661 = vmatprep.subr.mxu0 0.0
    %662 = vmatpush1.msra.mxu0 0.0
    %663 = vmatprep.subr.mxu0 0.0
    %664 = vmatpush1.msra.mxu0 0.0
    %665 = vmatprep.subr.mxu0 0.0
    %666 = vmatpush1.msra.mxu0 0.0
    %667 = vmatprep.subr.mxu0 0.0
    %668 = vmatpush1.msra.mxu0 0.0
    %669 = vmatprep.subr.mxu0 0.0
    %670 = vmatpush1.msra.mxu0 0.0
    %671 = vmatprep.subr.mxu0 0.0
    %672 = vmatpush1.msra.mxu0 0.0
    %673 = vmatprep.subr.mxu0 0.0
    %674 = vmatpush1.msra.mxu0 0.0
    %675 = vmatprep.subr.mxu0 0.0
    %676 = vmatpush1.msra.mxu0 0.0
    %677 = vmatprep.subr.mxu0 0.0
    %678 = vmatpush1.msra.mxu0 0.0
    %679 = vmatprep.subr.mxu0 0.0
    %680 = vmatpush1.msra.mxu0 0.0
    %681 = vmatprep.subr.mxu0 0.0
    %682 = vmatpush1.msra.mxu0 0.0
    %683 = vmatprep.subr.mxu0 0.0
    %684 = vmatpush1.msra.mxu0 0.0
    %685 = vmatprep.subr.mxu0 0.0
    %686 = vmatpush1.msra.mxu0 0.0
    %687 = vmatprep.subr.mxu0 0.0
    %688 = vmatpush1.msra.mxu0 0.0
    %689 = vmatprep.subr.mxu0 0.0
    %690 = vmatpush1.msra.mxu0 0.0
    %691 = vmatprep.subr.mxu0 0.0
    %692 = vmatpush1.msra.mxu0 0.0
    %693 = vmatprep.subr.mxu0 0.0
    %694 = vmatpush1.msra.mxu0 0.0
    %695 = vmatprep.subr.mxu0 0.0
    %696 = vmatpush1.msra.mxu0 0.0
    %697 = vmatprep.subr.mxu0 0.0
    %698 = vmatpush1.msra.mxu0 0.0
    %699 = vmatprep.subr.mxu0 0.0
    %700 = vmatpush1.msra.mxu0 0.0
    %701 = vmatprep.subr.mxu0 0.0
    %702 = vmatpush1.msra.mxu0 0.0
    %703 = vmatprep.mubr.f32.mxu0 0.0
    %704 = vmatmul.mubr.f32.gmra.mrb[0].mxu0 %v535
    %v705 = vpop.f32.mrb[0].mxu0
    %v706 = vadd.f32 %v637, %v705
    %v707 = vpop.f32.mrb[0].mxu0
    %708 = vdwg.mxu0
    %v710 = vrot.slane %v706, 6
    %v712 = vadd.f32 %v525, %v710
    %v713 = vxor.u32 %v712, 2147483648
    %v714 = vmul.f32 %v713, 1.442695
    %v715 = vpow.pop %v714
    %v716 = vadd.f32 %v715, 1.0
    %v717 = vrcp.pop %v716
    %v718 = vmul.f32 1.0, %v717
    %719 = vrot.lane.b32.xlu0 %v710, 64
    %v720 = vpop.permute.xlu0 %719
    %v722 = vmul.f32 %v718, %v720
    %724 = vrot.lane.b32.xlu0 %v722, 64
    %v725 = vpop.permute.xlu0 %724
    %v727 = vadd.f32 %v525, %v725
    %v728 = vtanh.pop %v727
    %v729 = vsub.f32 1.0, %v718
    %731 = vrot.lane.b32.xlu0 %v728, 96
    %v732 = vpop.permute.xlu0 %731
    %v734 = vmul.f32 %v729, %v732
    %v735 = vmul.f32 %v718, 0.0
    %v736 = vadd.f32 %v734, %v735
    %738 = vrot.lane.b32.xlu0 %v632, 96
    %v739 = vpop.permute.xlu0 %738
    %v740 = vsel %vm362, %v739, 0
    %742 = vmatprep.subr.mxu0 0.0
    %743 = vmatpush1.msra.mxu0 %v133
    %744 = vmatprep.subr.mxu0 0.0
    %745 = vmatpush1.msra.mxu0 %v134
    %746 = vmatprep.subr.mxu0 0.0
    %747 = vmatpush1.msra.mxu0 %v135
    %748 = vmatprep.subr.mxu0 0.0
    %749 = vmatpush1.msra.mxu0 %v136
    %750 = vmatprep.subr.mxu0 0.0
    %751 = vmatpush1.msra.mxu0 0.0
    %752 = vmatprep.subr.mxu0 0.0
    %753 = vmatpush1.msra.mxu0 0.0
    %754 = vmatprep.subr.mxu0 0.0
    %755 = vmatpush1.msra.mxu0 0.0
    %756 = vmatprep.subr.mxu0 0.0
    %757 = vmatpush1.msra.mxu0 0.0
    %758 = vmatprep.subr.mxu0 0.0
    %759 = vmatpush1.msra.mxu0 0.0
    %760 = vmatprep.subr.mxu0 0.0
    %761 = vmatpush1.msra.mxu0 0.0
    %762 = vmatprep.subr.mxu0 0.0
    %763 = vmatpush1.msra.mxu0 0.0
    %764 = vmatprep.subr.mxu0 0.0
    %765 = vmatpush1.msra.mxu0 0.0
    %766 = vmatprep.subr.mxu0 0.0
    %767 = vmatpush1.msra.mxu0 0.0
    %768 = vmatprep.subr.mxu0 0.0
    %769 = vmatpush1.msra.mxu0 0.0
    %770 = vmatprep.subr.mxu0 0.0
    %771 = vmatpush1.msra.mxu0 0.0
    %772 = vmatprep.subr.mxu0 0.0
    %773 = vmatpush1.msra.mxu0 0.0
    %774 = vmatprep.subr.mxu0 0.0
    %775 = vmatpush1.msra.mxu0 0.0
    %776 = vmatprep.subr.mxu0 0.0
    %777 = vmatpush1.msra.mxu0 0.0
    %778 = vmatprep.subr.mxu0 0.0
    %779 = vmatpush1.msra.mxu0 0.0
    %780 = vmatprep.subr.mxu0 0.0
    %781 = vmatpush1.msra.mxu0 0.0
    %782 = vmatprep.subr.mxu0 0.0
    %783 = vmatpush1.msra.mxu0 0.0
    %784 = vmatprep.subr.mxu0 0.0
    %785 = vmatpush1.msra.mxu0 0.0
    %786 = vmatprep.subr.mxu0 0.0
    %787 = vmatpush1.msra.mxu0 0.0
    %788 = vmatprep.subr.mxu0 0.0
    %789 = vmatpush1.msra.mxu0 0.0
    %790 = vmatprep.subr.mxu0 0.0
    %791 = vmatpush1.msra.mxu0 0.0
    %792 = vmatprep.subr.mxu0 0.0
    %793 = vmatpush1.msra.mxu0 0.0
    %794 = vmatprep.subr.mxu0 0.0
    %795 = vmatpush1.msra.mxu0 0.0
    %796 = vmatprep.subr.mxu0 0.0
    %797 = vmatpush1.msra.mxu0 0.0
    %798 = vmatprep.subr.mxu0 0.0
    %799 = vmatpush1.msra.mxu0 0.0
    %800 = vmatprep.subr.mxu0 0.0
    %801 = vmatpush1.msra.mxu0 0.0
    %802 = vmatprep.subr.mxu0 0.0
    %803 = vmatpush1.msra.mxu0 0.0
    %804 = vmatprep.subr.mxu0 0.0
    %805 = vmatpush1.msra.mxu0 0.0
    %806 = vmatprep.mubr.f32.mxu0 0.0
    %807 = vmatmul.mubr.f32.gmra.mrb[0].mxu0 %v740
    %v808 = vpop.f32.mrb[0].mxu0
    %v809 = vadd.f32 %v532, %v808
    %v810 = vpop.f32.mrb[0].mxu0
    %811 = vdwg.mxu0
    %v813 = vrot.slane %v809, 6
    %v815 = vadd.f32 %v434, %v813
    %v816 = vxor.u32 %v815, 2147483648
    %v817 = vmul.f32 %v816, 1.442695
    %v818 = vpow.pop %v817
    %v819 = vadd.f32 %v818, 1.0
    %v820 = vrcp.pop %v819
    %v821 = vmul.f32 1.0, %v820
    %822 = vrot.lane.b32.xlu0 %v813, 64
    %v823 = vpop.permute.xlu0 %822
    %v825 = vmul.f32 %v821, %v823
    %827 = vrot.lane.b32.xlu0 %v825, 64
    %v828 = vpop.permute.xlu0 %827
    %v830 = vadd.f32 %v434, %v828
    %v831 = vtanh.pop %v830
    %v832 = vsub.f32 1.0, %v821
    %834 = vrot.lane.b32.xlu0 %v831, 96
    %v835 = vpop.permute.xlu0 %834
    %v837 = vmul.f32 %v832, %v835
    %v838 = vrot.slane %v632, 6
    %v840 = vmul.f32 %v821, %v838
    %v841 = vadd.f32 %v837, %v840
    %v843 = vrot.slane %v736, 2
    %844 = vrot.lane.b32.xlu0 %v843, 96
    %v845 = vpop.permute.xlu0 %844
    %v846 = vsel %vm362, %v845, 0
    %848 = vmatprep.subr.mxu0 0.0
    %849 = vmatpush1.msra.mxu0 %v138
    %850 = vmatprep.subr.mxu0 0.0
    %851 = vmatpush1.msra.mxu0 %v139
    %852 = vmatprep.subr.mxu0 0.0
    %853 = vmatpush1.msra.mxu0 %v140
    %854 = vmatprep.subr.mxu0 0.0
    %855 = vmatpush1.msra.mxu0 %v141
    %856 = vmatprep.subr.mxu0 0.0
    %857 = vmatpush1.msra.mxu0 0.0
    %858 = vmatprep.subr.mxu0 0.0
    %859 = vmatpush1.msra.mxu0 0.0
    %860 = vmatprep.subr.mxu0 0.0
    %861 = vmatpush1.msra.mxu0 0.0
    %862 = vmatprep.subr.mxu0 0.0
    %863 = vmatpush1.msra.mxu0 0.0
    %864 = vmatprep.subr.mxu0 0.0
    %865 = vmatpush1.msra.mxu0 0.0
    %866 = vmatprep.subr.mxu0 0.0
    %867 = vmatpush1.msra.mxu0 0.0
    %868 = vmatprep.subr.mxu0 0.0
    %869 = vmatpush1.msra.mxu0 0.0
    %870 = vmatprep.subr.mxu0 0.0
    %871 = vmatpush1.msra.mxu0 0.0
    %872 = vmatprep.subr.mxu0 0.0
    %873 = vmatpush1.msra.mxu0 0.0
    %874 = vmatprep.subr.mxu0 0.0
    %875 = vmatpush1.msra.mxu0 0.0
    %876 = vmatprep.subr.mxu0 0.0
    %877 = vmatpush1.msra.mxu0 0.0
    %878 = vmatprep.subr.mxu0 0.0
    %879 = vmatpush1.msra.mxu0 0.0
    %880 = vmatprep.subr.mxu0 0.0
    %881 = vmatpush1.msra.mxu0 0.0
    %882 = vmatprep.subr.mxu0 0.0
    %883 = vmatpush1.msra.mxu0 0.0
    %884 = vmatprep.subr.mxu0 0.0
    %885 = vmatpush1.msra.mxu0 0.0
    %886 = vmatprep.subr.mxu0 0.0
    %887 = vmatpush1.msra.mxu0 0.0
    %888 = vmatprep.subr.mxu0 0.0
    %889 = vmatpush1.msra.mxu0 0.0
    %890 = vmatprep.subr.mxu0 0.0
    %891 = vmatpush1.msra.mxu0 0.0
    %892 = vmatprep.subr.mxu0 0.0
    %893 = vmatpush1.msra.mxu0 0.0
    %894 = vmatprep.subr.mxu0 0.0
    %895 = vmatpush1.msra.mxu0 0.0
    %896 = vmatprep.subr.mxu0 0.0
    %897 = vmatpush1.msra.mxu0 0.0
    %898 = vmatprep.subr.mxu0 0.0
    %899 = vmatpush1.msra.mxu0 0.0
    %900 = vmatprep.subr.mxu0 0.0
    %901 = vmatpush1.msra.mxu0 0.0
    %902 = vmatprep.subr.mxu0 0.0
    %903 = vmatpush1.msra.mxu0 0.0
    %904 = vmatprep.subr.mxu0 0.0
    %905 = vmatpush1.msra.mxu0 0.0
    %906 = vmatprep.subr.mxu0 0.0
    %907 = vmatpush1.msra.mxu0 0.0
    %908 = vmatprep.subr.mxu0 0.0
    %909 = vmatpush1.msra.mxu0 0.0
    %910 = vmatprep.subr.mxu0 0.0
    %911 = vmatpush1.msra.mxu0 0.0
    %912 = vmatprep.mubr.f32.mxu0 0.0
    %913 = vmatmul.mubr.f32.gmra.mrb[0].mxu0 %v846
    %v914 = vpop.f32.mrb[0].mxu0
    %v915 = vadd.f32 %v637, %v914
    %v916 = vpop.f32.mrb[0].mxu0
    %917 = vdwg.mxu0
    %v918 = vadd.f32 %v525, %v915
    %v919 = vxor.u32 %v918, 2147483648
    %v920 = vmul.f32 %v919, 1.442695
    %v921 = vpow.pop %v920
    %v922 = vadd.f32 %v921, 1.0
    %v923 = vrcp.pop %v922
    %v924 = vmul.f32 1.0, %v923
    %926 = vrot.lane.b32.xlu0 %v915, 64
    %v927 = vpop.permute.xlu0 %926
    %v929 = vmul.f32 %v924, %v927
    %931 = vrot.lane.b32.xlu0 %v929, 64
    %v932 = vpop.permute.xlu0 %931
    %v934 = vadd.f32 %v525, %v932
    %v935 = vtanh.pop %v934
    %v936 = vsub.f32 1.0, %v924
    %938 = vrot.lane.b32.xlu0 %v935, 96
    %v939 = vpop.permute.xlu0 %938
    %v941 = vmul.f32 %v936, %v939
    %v943 = vmul.f32 %v924, %v843
    %v944 = vadd.f32 %v941, %v943
    %v946 = vrot.slane %v841, 2
    %947 = vrot.lane.b32.xlu0 %v946, 96
    %v948 = vpop.permute.xlu0 %947
    %v949 = vsel %vm362, %v948, 0
    %951 = vmatprep.subr.mxu0 0.0
    %952 = vmatpush1.msra.mxu0 %v133
    %953 = vmatprep.subr.mxu0 0.0
    %954 = vmatpush1.msra.mxu0 %v134
    %955 = vmatprep.subr.mxu0 0.0
    %956 = vmatpush1.msra.mxu0 %v135
    %957 = vmatprep.subr.mxu0 0.0
    %958 = vmatpush1.msra.mxu0 %v136
    %959 = vmatprep.subr.mxu0 0.0
    %960 = vmatpush1.msra.mxu0 0.0
    %961 = vmatprep.subr.mxu0 0.0
    %962 = vmatpush1.msra.mxu0 0.0
    %963 = vmatprep.subr.mxu0 0.0
    %964 = vmatpush1.msra.mxu0 0.0
    %965 = vmatprep.subr.mxu0 0.0
    %966 = vmatpush1.msra.mxu0 0.0
    %967 = vmatprep.subr.mxu0 0.0
    %968 = vmatpush1.msra.mxu0 0.0
    %969 = vmatprep.subr.mxu0 0.0
    %970 = vmatpush1.msra.mxu0 0.0
    %971 = vmatprep.subr.mxu0 0.0
    %972 = vmatpush1.msra.mxu0 0.0
    %973 = vmatprep.subr.mxu0 0.0
    %974 = vmatpush1.msra.mxu0 0.0
    %975 = vmatprep.subr.mxu0 0.0
    %976 = vmatpush1.msra.mxu0 0.0
    %977 = vmatprep.subr.mxu0 0.0
    %978 = vmatpush1.msra.mxu0 0.0
    %979 = vmatprep.subr.mxu0 0.0
    %980 = vmatpush1.msra.mxu0 0.0
    %981 = vmatprep.subr.mxu0 0.0
    %982 = vmatpush1.msra.mxu0 0.0
    %983 = vmatprep.subr.mxu0 0.0
    %984 = vmatpush1.msra.mxu0 0.0
    %985 = vmatprep.subr.mxu0 0.0
    %986 = vmatpush1.msra.mxu0 0.0
    %987 = vmatprep.subr.mxu0 0.0
    %988 = vmatpush1.msra.mxu0 0.0
    %989 = vmatprep.subr.mxu0 0.0
    %990 = vmatpush1.msra.mxu0 0.0
    %991 = vmatprep.subr.mxu0 0.0
    %992 = vmatpush1.msra.mxu0 0.0
    %993 = vmatprep.subr.mxu0 0.0
    %994 = vmatpush1.msra.mxu0 0.0
    %995 = vmatprep.subr.mxu0 0.0
    %996 = vmatpush1.msra.mxu0 0.0
    %997 = vmatprep.subr.mxu0 0.0
    %998 = vmatpush1.msra.mxu0 0.0
    %999 = vmatprep.subr.mxu0 0.0
    %1000 = vmatpush1.msra.mxu0 0.0
    %1001 = vmatprep.subr.mxu0 0.0
    %1002 = vmatpush1.msra.mxu0 0.0
    %1003 = vmatprep.subr.mxu0 0.0
    %1004 = vmatpush1.msra.mxu0 0.0
    %1005 = vmatprep.subr.mxu0 0.0
    %1006 = vmatpush1.msra.mxu0 0.0
    %1007 = vmatprep.subr.mxu0 0.0
    %1008 = vmatpush1.msra.mxu0 0.0
    %1009 = vmatprep.subr.mxu0 0.0
    %1010 = vmatpush1.msra.mxu0 0.0
    %1011 = vmatprep.subr.mxu0 0.0
    %1012 = vmatpush1.msra.mxu0 0.0
    %1013 = vmatprep.subr.mxu0 0.0
    %1014 = vmatpush1.msra.mxu0 0.0
    %1015 = vmatprep.mubr.f32.mxu0 0.0
    %1016 = vmatmul.mubr.f32.gmra.mrb[0].mxu0 %v949
    %v1017 = vpop.f32.mrb[0].mxu0
    %v1018 = vadd.f32 %v532, %v1017
    %v1019 = vpop.f32.mrb[0].mxu0
    %1020 = vdwg.mxu0
    %v1022 = vrot.slane %v1018, 4
    %v1024 = vadd.f32 %v434, %v1022
    %v1025 = vxor.u32 %v1024, 2147483648
    %v1026 = vmul.f32 %v1025, 1.442695
    %v1027 = vpow.pop %v1026
    %v1028 = vadd.f32 %v1027, 1.0
    %v1029 = vrcp.pop %v1028
    %v1030 = vmul.f32 1.0, %v1029
    %1031 = vrot.lane.b32.xlu0 %v1022, 64
    %v1032 = vpop.permute.xlu0 %1031
    %v1034 = vmul.f32 %v1030, %v1032
    %1036 = vrot.lane.b32.xlu0 %v1034, 64
    %v1037 = vpop.permute.xlu0 %1036
    %v1039 = vadd.f32 %v434, %v1037
    %v1040 = vtanh.pop %v1039
    %v1041 = vsub.f32 1.0, %v1030
    %1043 = vrot.lane.b32.xlu0 %v1040, 96
    %v1044 = vpop.permute.xlu0 %1043
    %v1046 = vmul.f32 %v1041, %v1044
    %v1047 = vrot.slane %v841, 6
    %v1049 = vmul.f32 %v1030, %v1047
    %v1050 = vadd.f32 %v1046, %v1049
    %1052 = vrot.lane.b32.xlu0 %v944, 96
    %v1053 = vpop.permute.xlu0 %1052
    %v1054 = vsel %vm362, %v1053, 0
    %1056 = vmatprep.subr.mxu0 0.0
    %1057 = vmatpush1.msra.mxu0 %v138
    %1058 = vmatprep.subr.mxu0 0.0
    %1059 = vmatpush1.msra.mxu0 %v139
    %1060 = vmatprep.subr.mxu0 0.0
    %1061 = vmatpush1.msra.mxu0 %v140
    %1062 = vmatprep.subr.mxu0 0.0
    %1063 = vmatpush1.msra.mxu0 %v141
    %1064 = vmatprep.subr.mxu0 0.0
    %1065 = vmatpush1.msra.mxu0 0.0
    %1066 = vmatprep.subr.mxu0 0.0
    %1067 = vmatpush1.msra.mxu0 0.0
    %1068 = vmatprep.subr.mxu0 0.0
    %1069 = vmatpush1.msra.mxu0 0.0
    %1070 = vmatprep.subr.mxu0 0.0
    %1071 = vmatpush1.msra.mxu0 0.0
    %1072 = vmatprep.subr.mxu0 0.0
    %1073 = vmatpush1.msra.mxu0 0.0
    %1074 = vmatprep.subr.mxu0 0.0
    %1075 = vmatpush1.msra.mxu0 0.0
    %1076 = vmatprep.subr.mxu0 0.0
    %1077 = vmatpush1.msra.mxu0 0.0
    %1078 = vmatprep.subr.mxu0 0.0
    %1079 = vmatpush1.msra.mxu0 0.0
    %1080 = vmatprep.subr.mxu0 0.0
    %1081 = vmatpush1.msra.mxu0 0.0
    %1082 = vmatprep.subr.mxu0 0.0
    %1083 = vmatpush1.msra.mxu0 0.0
    %1084 = vmatprep.subr.mxu0 0.0
    %1085 = vmatpush1.msra.mxu0 0.0
    %1086 = vmatprep.subr.mxu0 0.0
    %1087 = vmatpush1.msra.mxu0 0.0
    %1088 = vmatprep.subr.mxu0 0.0
    %1089 = vmatpush1.msra.mxu0 0.0
    %1090 = vmatprep.subr.mxu0 0.0
    %1091 = vmatpush1.msra.mxu0 0.0
    %1092 = vmatprep.subr.mxu0 0.0
    %1093 = vmatpush1.msra.mxu0 0.0
    %1094 = vmatprep.subr.mxu0 0.0
    %1095 = vmatpush1.msra.mxu0 0.0
    %1096 = vmatprep.subr.mxu0 0.0
    %1097 = vmatpush1.msra.mxu0 0.0
    %1098 = vmatprep.subr.mxu0 0.0
    %1099 = vmatpush1.msra.mxu0 0.0
    %1100 = vmatprep.subr.mxu0 0.0
    %1101 = vmatpush1.msra.mxu0 0.0
    %1102 = vmatprep.subr.mxu0 0.0
    %1103 = vmatpush1.msra.mxu0 0.0
    %1104 = vmatprep.subr.mxu0 0.0
    %1105 = vmatpush1.msra.mxu0 0.0
    %1106 = vmatprep.subr.mxu0 0.0
    %1107 = vmatpush1.msra.mxu0 0.0
    %1108 = vmatprep.subr.mxu0 0.0
    %1109 = vmatpush1.msra.mxu0 0.0
    %1110 = vmatprep.subr.mxu0 0.0
    %1111 = vmatpush1.msra.mxu0 0.0
    %1112 = vmatprep.subr.mxu0 0.0
    %1113 = vmatpush1.msra.mxu0 0.0
    %1114 = vmatprep.subr.mxu0 0.0
    %1115 = vmatpush1.msra.mxu0 0.0
    %1116 = vmatprep.subr.mxu0 0.0
    %1117 = vmatpush1.msra.mxu0 0.0
    %1118 = vmatprep.subr.mxu0 0.0
    %1119 = vmatpush1.msra.mxu0 0.0
    %1120 = vmatprep.mubr.f32.mxu0 0.0
    %1121 = vmatmul.mubr.f32.gmra.mrb[0].mxu0 %v1054
    %v1122 = vpop.f32.mrb[0].mxu0
    %v1123 = vadd.f32 %v637, %v1122
    %v1124 = vpop.f32.mrb[0].mxu0
    %1125 = vdwg.mxu0
    %v1127 = vrot.slane %v1123, 2
    %v1129 = vadd.f32 %v520, %v1127
    %v1130 = vxor.u32 %v1129, 2147483648
    %v1131 = vmul.f32 %v1130, 1.442695
    %v1132 = vpow.pop %v1131
    %v1133 = vadd.f32 %v1132, 1.0
    %v1134 = vrcp.pop %v1133
    %v1135 = vmul.f32 1.0, %v1134
    %1136 = vrot.lane.b32.xlu0 %v1127, 64
    %v1137 = vpop.permute.xlu0 %1136
    %v1139 = vmul.f32 %v1135, %v1137
    %1141 = vrot.lane.b32.xlu0 %v1139, 64
    %v1142 = vpop.permute.xlu0 %1141
    %v1144 = vadd.f32 %v520, %v1142
    %v1145 = vtanh.pop %v1144
    %v1146 = vsub.f32 1.0, %v1135
    %1148 = vrot.lane.b32.xlu0 %v1145, 96
    %v1149 = vpop.permute.xlu0 %1148
    %v1151 = vmul.f32 %v1146, %v1149
    %v1152 = vrot.slane %v944, 2
    %v1154 = vmul.f32 %v1135, %v1152
    %v1155 = vadd.f32 %v1151, %v1154
    %v1157 = vrot.slane %v1050, 4
    %1158 = vrot.lane.b32.xlu0 %v1157, 96
    %v1159 = vpop.permute.xlu0 %1158
    %v1160 = vsel %vm362, %v1159, 0
    %1162 = vmatprep.subr.mxu0 0.0
    %1163 = vmatpush1.msra.mxu0 %v133
    %1164 = vmatprep.subr.mxu0 0.0
    %1165 = vmatpush1.msra.mxu0 %v134
    %1166 = vmatprep.subr.mxu0 0.0
    %1167 = vmatpush1.msra.mxu0 %v135
    %1168 = vmatprep.subr.mxu0 0.0
    %1169 = vmatpush1.msra.mxu0 %v136
    %1170 = vmatprep.subr.mxu0 0.0
    %1171 = vmatpush1.msra.mxu0 0.0
    %1172 = vmatprep.subr.mxu0 0.0
    %1173 = vmatpush1.msra.mxu0 0.0
    %1174 = vmatprep.subr.mxu0 0.0
    %1175 = vmatpush1.msra.mxu0 0.0
    %1176 = vmatprep.subr.mxu0 0.0
    %1177 = vmatpush1.msra.mxu0 0.0
    %1178 = vmatprep.subr.mxu0 0.0
    %1179 = vmatpush1.msra.mxu0 0.0
    %1180 = vmatprep.subr.mxu0 0.0
    %1181 = vmatpush1.msra.mxu0 0.0
    %1182 = vmatprep.subr.mxu0 0.0
    %1183 = vmatpush1.msra.mxu0 0.0
    %1184 = vmatprep.subr.mxu0 0.0
    %1185 = vmatpush1.msra.mxu0 0.0
    %1186 = vmatprep.subr.mxu0 0.0
    %1187 = vmatpush1.msra.mxu0 0.0
    %1188 = vmatprep.subr.mxu0 0.0
    %1189 = vmatpush1.msra.mxu0 0.0
    %1190 = vmatprep.subr.mxu0 0.0
    %1191 = vmatpush1.msra.mxu0 0.0
    %1192 = vmatprep.subr.mxu0 0.0
    %1193 = vmatpush1.msra.mxu0 0.0
    %1194 = vmatprep.subr.mxu0 0.0
    %1195 = vmatpush1.msra.mxu0 0.0
    %1196 = vmatprep.subr.mxu0 0.0
    %1197 = vmatpush1.msra.mxu0 0.0
    %1198 = vmatprep.subr.mxu0 0.0
    %1199 = vmatpush1.msra.mxu0 0.0
    %1200 = vmatprep.subr.mxu0 0.0
    %1201 = vmatpush1.msra.mxu0 0.0
    %1202 = vmatprep.subr.mxu0 0.0
    %1203 = vmatpush1.msra.mxu0 0.0
    %1204 = vmatprep.subr.mxu0 0.0
    %1205 = vmatpush1.msra.mxu0 0.0
    %1206 = vmatprep.subr.mxu0 0.0
    %1207 = vmatpush1.msra.mxu0 0.0
    %1208 = vmatprep.subr.mxu0 0.0
    %1209 = vmatpush1.msra.mxu0 0.0
    %1210 = vmatprep.subr.mxu0 0.0
    %1211 = vmatpush1.msra.mxu0 0.0
    %1212 = vmatprep.subr.mxu0 0.0
    %1213 = vmatpush1.msra.mxu0 0.0
    %1214 = vmatprep.subr.mxu0 0.0
    %1215 = vmatpush1.msra.mxu0 0.0
    %1216 = vmatprep.subr.mxu0 0.0
    %1217 = vmatpush1.msra.mxu0 0.0
    %1218 = vmatprep.subr.mxu0 0.0
    %1219 = vmatpush1.msra.mxu0 0.0
    %1220 = vmatprep.subr.mxu0 0.0
    %1221 = vmatpush1.msra.mxu0 0.0
    %1222 = vmatprep.subr.mxu0 0.0
    %1223 = vmatpush1.msra.mxu0 0.0
    %1224 = vmatprep.subr.mxu0 0.0
    %1225 = vmatpush1.msra.mxu0 0.0
    %1226 = vmatprep.mubr.f32.mxu0 0.0
    %1227 = vmatmul.mubr.f32.gmra.mrb[0].mxu0 %v1160
    %v1228 = vpop.f32.mrb[0].mxu0
    %v1229 = vadd.f32 %v532, %v1228
    %v1230 = vpop.f32.mrb[0].mxu0
    %1231 = vdwg.mxu0
    %v1233 = vrot.slane %v1229, 2
    %v1235 = vadd.f32 %v434, %v1233
    %v1236 = vxor.u32 %v1235, 2147483648
    %v1237 = vmul.f32 %v1236, 1.442695
    %v1238 = vpow.pop %v1237
    %v1239 = vadd.f32 %v1238, 1.0
    %v1240 = vrcp.pop %v1239
    %v1241 = vmul.f32 1.0, %v1240
    %1242 = vrot.lane.b32.xlu0 %v1233, 64
    %v1243 = vpop.permute.xlu0 %1242
    %v1245 = vmul.f32 %v1241, %v1243
    %1247 = vrot.lane.b32.xlu0 %v1245, 64
    %v1248 = vpop.permute.xlu0 %1247
    %v1250 = vadd.f32 %v434, %v1248
    %v1251 = vtanh.pop %v1250
    %v1252 = vsub.f32 1.0, %v1241
    %1254 = vrot.lane.b32.xlu0 %v1251, 96
    %v1255 = vpop.permute.xlu0 %1254
    %v1257 = vmul.f32 %v1252, %v1255
    %v1258 = vrot.slane %v1050, 6
    %v1260 = vmul.f32 %v1241, %v1258
    %v1261 = vadd.f32 %v1257, %v1260
    %v1263 = vrot.slane %v1155, 6
    %1264 = vrot.lane.b32.xlu0 %v1263, 96
    %v1265 = vpop.permute.xlu0 %1264
    %v1266 = vsel %vm362, %v1265, 0
    %1268 = vmatprep.subr.mxu0 0.0
    %1269 = vmatpush1.msra.mxu0 %v138
    %1270 = vmatprep.subr.mxu0 0.0
    %1271 = vmatpush1.msra.mxu0 %v139
    %1272 = vmatprep.subr.mxu0 0.0
    %1273 = vmatpush1.msra.mxu0 %v140
    %1274 = vmatprep.subr.mxu0 0.0
    %1275 = vmatpush1.msra.mxu0 %v141
    %1276 = vmatprep.subr.mxu0 0.0
    %1277 = vmatpush1.msra.mxu0 0.0
    %1278 = vmatprep.subr.mxu0 0.0
    %1279 = vmatpush1.msra.mxu0 0.0
    %1280 = vmatprep.subr.mxu0 0.0
    %1281 = vmatpush1.msra.mxu0 0.0
    %1282 = vmatprep.subr.mxu0 0.0
    %1283 = vmatpush1.msra.mxu0 0.0
    %1284 = vmatprep.subr.mxu0 0.0
    %1285 = vmatpush1.msra.mxu0 0.0
    %1286 = vmatprep.subr.mxu0 0.0
    %1287 = vmatpush1.msra.mxu0 0.0
    %1288 = vmatprep.subr.mxu0 0.0
    %1289 = vmatpush1.msra.mxu0 0.0
    %1290 = vmatprep.subr.mxu0 0.0
    %1291 = vmatpush1.msra.mxu0 0.0
    %1292 = vmatprep.subr.mxu0 0.0
    %1293 = vmatpush1.msra.mxu0 0.0
    %1294 = vmatprep.subr.mxu0 0.0
    %1295 = vmatpush1.msra.mxu0 0.0
    %1296 = vmatprep.subr.mxu0 0.0
    %1297 = vmatpush1.msra.mxu0 0.0
    %1298 = vmatprep.subr.mxu0 0.0
    %1299 = vmatpush1.msra.mxu0 0.0
    %1300 = vmatprep.subr.mxu0 0.0
    %1301 = vmatpush1.msra.mxu0 0.0
    %1302 = vmatprep.subr.mxu0 0.0
    %1303 = vmatpush1.msra.mxu0 0.0
    %1304 = vmatprep.subr.mxu0 0.0
    %1305 = vmatpush1.msra.mxu0 0.0
    %1306 = vmatprep.subr.mxu0 0.0
    %1307 = vmatpush1.msra.mxu0 0.0
    %1308 = vmatprep.subr.mxu0 0.0
    %1309 = vmatpush1.msra.mxu0 0.0
    %1310 = vmatprep.subr.mxu0 0.0
    %1311 = vmatpush1.msra.mxu0 0.0
    %1312 = vmatprep.subr.mxu0 0.0
    %1313 = vmatpush1.msra.mxu0 0.0
    %1314 = vmatprep.subr.mxu0 0.0
    %1315 = vmatpush1.msra.mxu0 0.0
    %1316 = vmatprep.subr.mxu0 0.0
    %1317 = vmatpush1.msra.mxu0 0.0
    %1318 = vmatprep.subr.mxu0 0.0
    %1319 = vmatpush1.msra.mxu0 0.0
    %1320 = vmatprep.subr.mxu0 0.0
    %1321 = vmatpush1.msra.mxu0 0.0
    %1322 = vmatprep.subr.mxu0 0.0
    %1323 = vmatpush1.msra.mxu0 0.0
    %1324 = vmatprep.subr.mxu0 0.0
    %1325 = vmatpush1.msra.mxu0 0.0
    %1326 = vmatprep.subr.mxu0 0.0
    %1327 = vmatpush1.msra.mxu0 0.0
    %1328 = vmatprep.subr.mxu0 0.0
    %1329 = vmatpush1.msra.mxu0 0.0
    %1330 = vmatprep.subr.mxu0 0.0
    %1331 = vmatpush1.msra.mxu0 0.0
    %1332 = vmatprep.mubr.f32.mxu0 0.0
    %1333 = vmatmul.mubr.f32.gmra.mrb[0].mxu0 %v1266
    %v1334 = vpop.f32.mrb[0].mxu0
    %v1335 = vadd.f32 %v637, %v1334
    %v1336 = vpop.f32.mrb[0].mxu0
    %1337 = vdwg.mxu0
    %v1339 = vrot.slane %v1335, 4
    %v1341 = vadd.f32 %v520, %v1339
    %v1342 = vxor.u32 %v1341, 2147483648
    %v1343 = vmul.f32 %v1342, 1.442695
    %v1344 = vpow.pop %v1343
    %v1345 = vadd.f32 %v1344, 1.0
    %v1346 = vrcp.pop %v1345
    %v1347 = vmul.f32 1.0, %v1346
    %1348 = vrot.lane.b32.xlu0 %v1339, 64
    %v1349 = vpop.permute.xlu0 %1348
    %v1351 = vmul.f32 %v1347, %v1349
    %1353 = vrot.lane.b32.xlu0 %v1351, 64
    %v1354 = vpop.permute.xlu0 %1353
    %v1356 = vadd.f32 %v520, %v1354
    %v1357 = vtanh.pop %v1356
    %v1358 = vsub.f32 1.0, %v1347
    %1360 = vrot.lane.b32.xlu0 %v1357, 96
    %v1361 = vpop.permute.xlu0 %1360
    %v1363 = vmul.f32 %v1358, %v1361
    %v1364 = vrot.slane %v1155, 2
    %v1366 = vmul.f32 %v1347, %v1364
    %v1367 = vadd.f32 %v1363, %v1366
    %v1369 = vrot.slane %v1261, 6
    %1370 = vrot.lane.b32.xlu0 %v1369, 96
    %v1371 = vpop.permute.xlu0 %1370
    %v1372 = vsel %vm362, %v1371, 0
    %1374 = vmatprep.subr.mxu0 0.0
    %1375 = vmatpush1.msra.mxu0 %v133
    %1376 = vmatprep.subr.mxu0 0.0
    %1377 = vmatpush1.msra.mxu0 %v134
    %1378 = vmatprep.subr.mxu0 0.0
    %1379 = vmatpush1.msra.mxu0 %v135
    %1380 = vmatprep.subr.mxu0 0.0
    %1381 = vmatpush1.msra.mxu0 %v136
    %1382 = vmatprep.subr.mxu0 0.0
    %1383 = vmatpush1.msra.mxu0 0.0
    %1384 = vmatprep.subr.mxu0 0.0
    %1385 = vmatpush1.msra.mxu0 0.0
    %1386 = vmatprep.subr.mxu0 0.0
    %1387 = vmatpush1.msra.mxu0 0.0
    %1388 = vmatprep.subr.mxu0 0.0
    %1389 = vmatpush1.msra.mxu0 0.0
    %1390 = vmatprep.subr.mxu0 0.0
    %1391 = vmatpush1.msra.mxu0 0.0
    %1392 = vmatprep.subr.mxu0 0.0
    %1393 = vmatpush1.msra.mxu0 0.0
    %1394 = vmatprep.subr.mxu0 0.0
    %1395 = vmatpush1.msra.mxu0 0.0
    %1396 = vmatprep.subr.mxu0 0.0
    %1397 = vmatpush1.msra.mxu0 0.0
    %1398 = vmatprep.subr.mxu0 0.0
    %1399 = vmatpush1.msra.mxu0 0.0
    %1400 = vmatprep.subr.mxu0 0.0
    %1401 = vmatpush1.msra.mxu0 0.0
    %1402 = vmatprep.subr.mxu0 0.0
    %1403 = vmatpush1.msra.mxu0 0.0
    %1404 = vmatprep.subr.mxu0 0.0
    %1405 = vmatpush1.msra.mxu0 0.0
    %1406 = vmatprep.subr.mxu0 0.0
    %1407 = vmatpush1.msra.mxu0 0.0
    %1408 = vmatprep.subr.mxu0 0.0
    %1409 = vmatpush1.msra.mxu0 0.0
    %1410 = vmatprep.subr.mxu0 0.0
    %1411 = vmatpush1.msra.mxu0 0.0
    %1412 = vmatprep.subr.mxu0 0.0
    %1413 = vmatpush1.msra.mxu0 0.0
    %1414 = vmatprep.subr.mxu0 0.0
    %1415 = vmatpush1.msra.mxu0 0.0
    %1416 = vmatprep.subr.mxu0 0.0
    %1417 = vmatpush1.msra.mxu0 0.0
    %1418 = vmatprep.subr.mxu0 0.0
    %1419 = vmatpush1.msra.mxu0 0.0
    %1420 = vmatprep.subr.mxu0 0.0
    %1421 = vmatpush1.msra.mxu0 0.0
    %1422 = vmatprep.subr.mxu0 0.0
    %1423 = vmatpush1.msra.mxu0 0.0
    %1424 = vmatprep.subr.mxu0 0.0
    %1425 = vmatpush1.msra.mxu0 0.0
    %1426 = vmatprep.subr.mxu0 0.0
    %1427 = vmatpush1.msra.mxu0 0.0
    %1428 = vmatprep.subr.mxu0 0.0
    %1429 = vmatpush1.msra.mxu0 0.0
    %1430 = vmatprep.subr.mxu0 0.0
    %1431 = vmatpush1.msra.mxu0 0.0
    %1432 = vmatprep.subr.mxu0 0.0
    %1433 = vmatpush1.msra.mxu0 0.0
    %1434 = vmatprep.subr.mxu0 0.0
    %1435 = vmatpush1.msra.mxu0 0.0
    %1436 = vmatprep.subr.mxu0 0.0
    %1437 = vmatpush1.msra.mxu0 0.0
    %1438 = vmatprep.mubr.f32.mxu0 0.0
    %1439 = vmatmul.mubr.f32.gmra.mrb[0].mxu0 %v1372
    %v1440 = vpop.f32.mrb[0].mxu0
    %v1441 = vadd.f32 %v532, %v1440
    %v1442 = vpop.f32.mrb[0].mxu0
    %1443 = vdwg.mxu0
    %v1444 = vadd.f32 %v439, %v1441
    %v1445 = vxor.u32 %v1444, 2147483648
    %v1446 = vmul.f32 %v1445, 1.442695
    %v1447 = vpow.pop %v1446
    %v1448 = vadd.f32 %v1447, 1.0
    %v1449 = vrcp.pop %v1448
    %v1450 = vmul.f32 1.0, %v1449
    %1452 = vrot.lane.b32.xlu0 %v1441, 64
    %v1453 = vpop.permute.xlu0 %1452
    %v1455 = vmul.f32 %v1450, %v1453
    %1457 = vrot.lane.b32.xlu0 %v1455, 64
    %v1458 = vpop.permute.xlu0 %1457
    %v1460 = vadd.f32 %v439, %v1458
    %v1461 = vtanh.pop %v1460
    %v1462 = vsub.f32 1.0, %v1450
    %1464 = vrot.lane.b32.xlu0 %v1461, 96
    %v1465 = vpop.permute.xlu0 %1464
    %v1467 = vmul.f32 %v1462, %v1465
    %v1469 = vmul.f32 %v1450, %v1369
    %v1470 = vadd.f32 %v1467, %v1469
    %v1472 = vrot.slane %v1367, 4
    %1473 = vrot.lane.b32.xlu0 %v1472, 96
    %v1474 = vpop.permute.xlu0 %1473
    %v1475 = vsel %vm362, %v1474, 0
    %1477 = vmatprep.subr.mxu0 0.0
    %1478 = vmatpush1.msra.mxu0 %v138
    %1479 = vmatprep.subr.mxu0 0.0
    %1480 = vmatpush1.msra.mxu0 %v139
    %1481 = vmatprep.subr.mxu0 0.0
    %1482 = vmatpush1.msra.mxu0 %v140
    %1483 = vmatprep.subr.mxu0 0.0
    %1484 = vmatpush1.msra.mxu0 %v141
    %1485 = vmatprep.subr.mxu0 0.0
    %1486 = vmatpush1.msra.mxu0 0.0
    %1487 = vmatprep.subr.mxu0 0.0
    %1488 = vmatpush1.msra.mxu0 0.0
    %1489 = vmatprep.subr.mxu0 0.0
    %1490 = vmatpush1.msra.mxu0 0.0
    %1491 = vmatprep.subr.mxu0 0.0
    %1492 = vmatpush1.msra.mxu0 0.0
    %1493 = vmatprep.subr.mxu0 0.0
    %1494 = vmatpush1.msra.mxu0 0.0
    %1495 = vmatprep.subr.mxu0 0.0
    %1496 = vmatpush1.msra.mxu0 0.0
    %1497 = vmatprep.subr.mxu0 0.0
    %1498 = vmatpush1.msra.mxu0 0.0
    %1499 = vmatprep.subr.mxu0 0.0
    %1500 = vmatpush1.msra.mxu0 0.0
    %1501 = vmatprep.subr.mxu0 0.0
    %1502 = vmatpush1.msra.mxu0 0.0
    %1503 = vmatprep.subr.mxu0 0.0
    %1504 = vmatpush1.msra.mxu0 0.0
    %1505 = vmatprep.subr.mxu0 0.0
    %1506 = vmatpush1.msra.mxu0 0.0
    %1507 = vmatprep.subr.mxu0 0.0
    %1508 = vmatpush1.msra.mxu0 0.0
    %1509 = vmatprep.subr.mxu0 0.0
    %1510 = vmatpush1.msra.mxu0 0.0
    %1511 = vmatprep.subr.mxu0 0.0
    %1512 = vmatpush1.msra.mxu0 0.0
    %1513 = vmatprep.subr.mxu0 0.0
    %1514 = vmatpush1.msra.mxu0 0.0
    %1515 = vmatprep.subr.mxu0 0.0
    %1516 = vmatpush1.msra.mxu0 0.0
    %1517 = vmatprep.subr.mxu0 0.0
    %1518 = vmatpush1.msra.mxu0 0.0
    %1519 = vmatprep.subr.mxu0 0.0
    %1520 = vmatpush1.msra.mxu0 0.0
    %1521 = vmatprep.subr.mxu0 0.0
    %1522 = vmatpush1.msra.mxu0 0.0
    %1523 = vmatprep.subr.mxu0 0.0
    %1524 = vmatpush1.msra.mxu0 0.0
    %1525 = vmatprep.subr.mxu0 0.0
    %1526 = vmatpush1.msra.mxu0 0.0
    %1527 = vmatprep.subr.mxu0 0.0
    %1528 = vmatpush1.msra.mxu0 0.0
    %1529 = vmatprep.subr.mxu0 0.0
    %1530 = vmatpush1.msra.mxu0 0.0
    %1531 = vmatprep.subr.mxu0 0.0
    %1532 = vmatpush1.msra.mxu0 0.0
    %1533 = vmatprep.subr.mxu0 0.0
    %1534 = vmatpush1.msra.mxu0 0.0
    %1535 = vmatprep.subr.mxu0 0.0
    %1536 = vmatpush1.msra.mxu0 0.0
    %1537 = vmatprep.subr.mxu0 0.0
    %1538 = vmatpush1.msra.mxu0 0.0
    %1539 = vmatprep.subr.mxu0 0.0
    %1540 = vmatpush1.msra.mxu0 0.0
    %1541 = vmatprep.mubr.f32.mxu0 0.0
    %1542 = vmatmul.mubr.f32.gmra.mrb[0].mxu0 %v1475
    %v1543 = vpop.f32.mrb[0].mxu0
    %v1544 = vadd.f32 %v637, %v1543
    %v1545 = vpop.f32.mrb[0].mxu0
    %1546 = vdwg.mxu0
    %v1548 = vrot.slane %v1544, 6
    %v1550 = vadd.f32 %v520, %v1548
    %v1551 = vxor.u32 %v1550, 2147483648
    %v1552 = vmul.f32 %v1551, 1.442695
    %v1553 = vpow.pop %v1552
    %v1554 = vadd.f32 %v1553, 1.0
    %v1555 = vrcp.pop %v1554
    %v1556 = vmul.f32 1.0, %v1555
    %1557 = vrot.lane.b32.xlu0 %v1548, 64
    %v1558 = vpop.permute.xlu0 %1557
    %v1560 = vmul.f32 %v1556, %v1558
    %1562 = vrot.lane.b32.xlu0 %v1560, 64
    %v1563 = vpop.permute.xlu0 %1562
    %v1565 = vadd.f32 %v520, %v1563
    %v1566 = vtanh.pop %v1565
    %v1567 = vsub.f32 1.0, %v1556
    %1569 = vrot.lane.b32.xlu0 %v1566, 96
    %v1570 = vpop.permute.xlu0 %1569
    %v1572 = vmul.f32 %v1567, %v1570
    %v1573 = vrot.slane %v1367, 2
    %v1575 = vmul.f32 %v1556, %v1573
    %v1576 = vadd.f32 %v1572, %v1575
    %1578 = vrot.lane.b32.xlu0 %v1470, 96
    %v1579 = vpop.permute.xlu0 %1578
    %v1580 = vsel %vm362, %v1579, 0
    %1582 = vmatprep.subr.mxu0 0.0
    %1583 = vmatpush1.msra.mxu0 %v133
    %1584 = vmatprep.subr.mxu0 0.0
    %1585 = vmatpush1.msra.mxu0 %v134
    %1586 = vmatprep.subr.mxu0 0.0
    %1587 = vmatpush1.msra.mxu0 %v135
    %1588 = vmatprep.subr.mxu0 0.0
    %1589 = vmatpush1.msra.mxu0 %v136
    %1590 = vmatprep.subr.mxu0 0.0
    %1591 = vmatpush1.msra.mxu0 0.0
    %1592 = vmatprep.subr.mxu0 0.0
    %1593 = vmatpush1.msra.mxu0 0.0
    %1594 = vmatprep.subr.mxu0 0.0
    %1595 = vmatpush1.msra.mxu0 0.0
    %1596 = vmatprep.subr.mxu0 0.0
    %1597 = vmatpush1.msra.mxu0 0.0
    %1598 = vmatprep.subr.mxu0 0.0
    %1599 = vmatpush1.msra.mxu0 0.0
    %1600 = vmatprep.subr.mxu0 0.0
    %1601 = vmatpush1.msra.mxu0 0.0
    %1602 = vmatprep.subr.mxu0 0.0
    %1603 = vmatpush1.msra.mxu0 0.0
    %1604 = vmatprep.subr.mxu0 0.0
    %1605 = vmatpush1.msra.mxu0 0.0
    %1606 = vmatprep.subr.mxu0 0.0
    %1607 = vmatpush1.msra.mxu0 0.0
    %1608 = vmatprep.subr.mxu0 0.0
    %1609 = vmatpush1.msra.mxu0 0.0
    %1610 = vmatprep.subr.mxu0 0.0
    %1611 = vmatpush1.msra.mxu0 0.0
    %1612 = vmatprep.subr.mxu0 0.0
    %1613 = vmatpush1.msra.mxu0 0.0
    %1614 = vmatprep.subr.mxu0 0.0
    %1615 = vmatpush1.msra.mxu0 0.0
    %1616 = vmatprep.subr.mxu0 0.0
    %1617 = vmatpush1.msra.mxu0 0.0
    %1618 = vmatprep.subr.mxu0 0.0
    %1619 = vmatpush1.msra.mxu0 0.0
    %1620 = vmatprep.subr.mxu0 0.0
    %1621 = vmatpush1.msra.mxu0 0.0
    %1622 = vmatprep.subr.mxu0 0.0
    %1623 = vmatpush1.msra.mxu0 0.0
    %1624 = vmatprep.subr.mxu0 0.0
    %1625 = vmatpush1.msra.mxu0 0.0
    %1626 = vmatprep.subr.mxu0 0.0
    %1627 = vmatpush1.msra.mxu0 0.0
    %1628 = vmatprep.subr.mxu0 0.0
    %1629 = vmatpush1.msra.mxu0 0.0
    %1630 = vmatprep.subr.mxu0 0.0
    %1631 = vmatpush1.msra.mxu0 0.0
    %1632 = vmatprep.subr.mxu0 0.0
    %1633 = vmatpush1.msra.mxu0 0.0
    %1634 = vmatprep.subr.mxu0 0.0
    %1635 = vmatpush1.msra.mxu0 0.0
    %1636 = vmatprep.subr.mxu0 0.0
    %1637 = vmatpush1.msra.mxu0 0.0
    %1638 = vmatprep.subr.mxu0 0.0
    %1639 = vmatpush1.msra.mxu0 0.0
    %1640 = vmatprep.subr.mxu0 0.0
    %1641 = vmatpush1.msra.mxu0 0.0
    %1642 = vmatprep.subr.mxu0 0.0
    %1643 = vmatpush1.msra.mxu0 0.0
    %1644 = vmatprep.subr.mxu0 0.0
    %1645 = vmatpush1.msra.mxu0 0.0
    %1646 = vmatprep.mubr.f32.mxu0 0.0
    %1647 = vmatmul.mubr.f32.gmra.mrb[0].mxu0 %v1580
    %v1648 = vpop.f32.mrb[0].mxu0
    %v1649 = vadd.f32 %v532, %v1648
    %v1650 = vpop.f32.mrb[0].mxu0
    %1651 = vdwg.mxu0
    %v1653 = vrot.slane %v1649, 6
    %v1655 = vadd.f32 %v439, %v1653
    %v1656 = vxor.u32 %v1655, 2147483648
    %v1657 = vmul.f32 %v1656, 1.442695
    %v1658 = vpow.pop %v1657
    %v1659 = vadd.f32 %v1658, 1.0
    %v1660 = vrcp.pop %v1659
    %v1661 = vmul.f32 1.0, %v1660
    %1662 = vrot.lane.b32.xlu0 %v1653, 64
    %v1663 = vpop.permute.xlu0 %1662
    %v1665 = vmul.f32 %v1661, %v1663
    %1667 = vrot.lane.b32.xlu0 %v1665, 64
    %v1668 = vpop.permute.xlu0 %1667
    %v1670 = vadd.f32 %v439, %v1668
    %v1671 = vtanh.pop %v1670
    %v1672 = vsub.f32 1.0, %v1661
    %1674 = vrot.lane.b32.xlu0 %v1671, 96
    %v1675 = vpop.permute.xlu0 %1674
    %v1677 = vmul.f32 %v1672, %v1675
    %v1678 = vrot.slane %v1470, 6
    %v1680 = vmul.f32 %v1661, %v1678
    %v1681 = vadd.f32 %v1677, %v1680
    %v1683 = vrot.slane %v1576, 2
    %1684 = vrot.lane.b32.xlu0 %v1683, 96
    %v1685 = vpop.permute.xlu0 %1684
    %v1686 = vsel %vm362, %v1685, 0
    %1688 = vmatprep.subr.mxu0 0.0
    %1689 = vmatpush1.msra.mxu0 %v138
    %1690 = vmatprep.subr.mxu0 0.0
    %1691 = vmatpush1.msra.mxu0 %v139
    %1692 = vmatprep.subr.mxu0 0.0
    %1693 = vmatpush1.msra.mxu0 %v140
    %1694 = vmatprep.subr.mxu0 0.0
    %1695 = vmatpush1.msra.mxu0 %v141
    %1696 = vmatprep.subr.mxu0 0.0
    %1697 = vmatpush1.msra.mxu0 0.0
    %1698 = vmatprep.subr.mxu0 0.0
    %1699 = vmatpush1.msra.mxu0 0.0
    %1700 = vmatprep.subr.mxu0 0.0
    %1701 = vmatpush1.msra.mxu0 0.0
    %1702 = vmatprep.subr.mxu0 0.0
    %1703 = vmatpush1.msra.mxu0 0.0
    %1704 = vmatprep.subr.mxu0 0.0
    %1705 = vmatpush1.msra.mxu0 0.0
    %1706 = vmatprep.subr.mxu0 0.0
    %1707 = vmatpush1.msra.mxu0 0.0
    %1708 = vmatprep.subr.mxu0 0.0
    %1709 = vmatpush1.msra.mxu0 0.0
    %1710 = vmatprep.subr.mxu0 0.0
    %1711 = vmatpush1.msra.mxu0 0.0
    %1712 = vmatprep.subr.mxu0 0.0
    %1713 = vmatpush1.msra.mxu0 0.0
    %1714 = vmatprep.subr.mxu0 0.0
    %1715 = vmatpush1.msra.mxu0 0.0
    %1716 = vmatprep.subr.mxu0 0.0
    %1717 = vmatpush1.msra.mxu0 0.0
    %1718 = vmatprep.subr.mxu0 0.0
    %1719 = vmatpush1.msra.mxu0 0.0
    %1720 = vmatprep.subr.mxu0 0.0
    %1721 = vmatpush1.msra.mxu0 0.0
    %1722 = vmatprep.subr.mxu0 0.0
    %1723 = vmatpush1.msra.mxu0 0.0
    %1724 = vmatprep.subr.mxu0 0.0
    %1725 = vmatpush1.msra.mxu0 0.0
    %1726 = vmatprep.subr.mxu0 0.0
    %1727 = vmatpush1.msra.mxu0 0.0
    %1728 = vmatprep.subr.mxu0 0.0
    %1729 = vmatpush1.msra.mxu0 0.0
    %1730 = vmatprep.subr.mxu0 0.0
    %1731 = vmatpush1.msra.mxu0 0.0
    %1732 = vmatprep.subr.mxu0 0.0
    %1733 = vmatpush1.msra.mxu0 0.0
    %1734 = vmatprep.subr.mxu0 0.0
    %1735 = vmatpush1.msra.mxu0 0.0
    %1736 = vmatprep.subr.mxu0 0.0
    %1737 = vmatpush1.msra.mxu0 0.0
    %1738 = vmatprep.subr.mxu0 0.0
    %1739 = vmatpush1.msra.mxu0 0.0
    %1740 = vmatprep.subr.mxu0 0.0
    %1741 = vmatpush1.msra.mxu0 0.0
    %1742 = vmatprep.subr.mxu0 0.0
    %1743 = vmatpush1.msra.mxu0 0.0
    %1744 = vmatprep.subr.mxu0 0.0
    %1745 = vmatpush1.msra.mxu0 0.0
    %1746 = vmatprep.subr.mxu0 0.0
    %1747 = vmatpush1.msra.mxu0 0.0
    %1748 = vmatprep.subr.mxu0 0.0
    %1749 = vmatpush1.msra.mxu0 0.0
    %1750 = vmatprep.subr.mxu0 0.0
    %1751 = vmatpush1.msra.mxu0 0.0
    %1752 = vmatprep.mubr.f32.mxu0 0.0
    %1753 = vmatmul.mubr.f32.gmra.mrb[0].mxu0 %v1686
    %v1754 = vpop.f32.mrb[0].mxu0
    %v1755 = vadd.f32 %v637, %v1754
    %v1756 = vpop.f32.mrb[0].mxu0
    %1757 = vdwg.mxu0
    %v1758 = vadd.f32 %v520, %v1755
    %v1759 = vxor.u32 %v1758, 2147483648
    %v1760 = vmul.f32 %v1759, 1.442695
    %v1761 = vpow.pop %v1760
    %v1762 = vadd.f32 %v1761, 1.0
    %v1763 = vrcp.pop %v1762
    %v1764 = vmul.f32 1.0, %v1763
    %1766 = vrot.lane.b32.xlu0 %v1755, 64
    %v1767 = vpop.permute.xlu0 %1766
    %v1769 = vmul.f32 %v1764, %v1767
    %1771 = vrot.lane.b32.xlu0 %v1769, 64
    %v1772 = vpop.permute.xlu0 %1771
    %v1774 = vadd.f32 %v520, %v1772
    %v1775 = vtanh.pop %v1774
    %v1776 = vsub.f32 1.0, %v1764
    %1778 = vrot.lane.b32.xlu0 %v1775, 96
    %v1779 = vpop.permute.xlu0 %1778
    %v1781 = vmul.f32 %v1776, %v1779
    %v1783 = vmul.f32 %v1764, %v1683
    %v1784 = vadd.f32 %v1781, %v1783
    %v1785 = vadd.f32 %v632, %v1784
    %v1786 = vadd.f32 %v841, %v1576
    %v1787 = vadd.f32 %v1050, %v1367
    %v1788 = vadd.f32 %v1261, %v1155
    %v1789 = vadd.f32 %v1470, %v944
    %v1790 = vadd.f32 %v1681, %v736
    %v1791 = vld [vmem:[%s5] sm:$0xff]
    %v1792 = vld [vmem:[%s5 + $0x8] sm:$0x3]
    %v1793 = vld [vmem:[%s23] sm:$0xff]
    %v1794 = vld [vmem:[%s23 + $0x8] sm:$0xff]
    %v1795 = vld [vmem:[%s23 + $0x10] sm:$0xff]
    %v1796 = vld [vmem:[%s23 + $0x18] sm:$0xff]
    %v1797 = vld [vmem:[%s27] sm:$0x1]
    %v1799 = vlaneseq
    %v1800 = vshrl.u32 %v1799, 7
    %v1801 = vsub.s32 0, %v1800
    %v1802 = vrot.slane %v1797, %v1801
    %v1805 = vsel %vm362, %v1791, 0
    %v1808 = vsel %vm362, %v1792, 0
    %1810 = vmatprep.subr.mxu0 0.0
    %1811 = vmatpush1.msra.mxu0 %v1793
    %1812 = vmatprep.subr.mxu0 0.0
    %1813 = vmatpush1.msra.mxu0 %v1794
    %1814 = vmatprep.subr.mxu0 0.0
    %1815 = vmatpush1.msra.mxu0 %v1795
    %1816 = vmatprep.subr.mxu0 0.0
    %1817 = vmatpush1.msra.mxu0 %v1796
    %1818 = vmatprep.subr.mxu0 0.0
    %1819 = vmatpush1.msra.mxu0 0.0
    %1820 = vmatprep.subr.mxu0 0.0
    %1821 = vmatpush1.msra.mxu0 0.0
    %1822 = vmatprep.subr.mxu0 0.0
    %1823 = vmatpush1.msra.mxu0 0.0
    %1824 = vmatprep.subr.mxu0 0.0
    %1825 = vmatpush1.msra.mxu0 0.0
    %1826 = vmatprep.subr.mxu0 0.0
    %1827 = vmatpush1.msra.mxu0 0.0
    %1828 = vmatprep.subr.mxu0 0.0
    %1829 = vmatpush1.msra.mxu0 0.0
    %1830 = vmatprep.subr.mxu0 0.0
    %1831 = vmatpush1.msra.mxu0 0.0
    %1832 = vmatprep.subr.mxu0 0.0
    %1833 = vmatpush1.msra.mxu0 0.0
    %1834 = vmatprep.subr.mxu0 0.0
    %1835 = vmatpush1.msra.mxu0 0.0
    %1836 = vmatprep.subr.mxu0 0.0
    %1837 = vmatpush1.msra.mxu0 0.0
    %1838 = vmatprep.subr.mxu0 0.0
    %1839 = vmatpush1.msra.mxu0 0.0
    %1840 = vmatprep.subr.mxu0 0.0
    %1841 = vmatpush1.msra.mxu0 0.0
    %1842 = vmatprep.subr.mxu0 0.0
    %1843 = vmatpush1.msra.mxu0 0.0
    %1844 = vmatprep.subr.mxu0 0.0
    %1845 = vmatpush1.msra.mxu0 0.0
    %1846 = vmatprep.subr.mxu0 0.0
    %1847 = vmatpush1.msra.mxu0 0.0
    %1848 = vmatprep.subr.mxu0 0.0
    %1849 = vmatpush1.msra.mxu0 0.0
    %1850 = vmatprep.subr.mxu0 0.0
    %1851 = vmatpush1.msra.mxu0 0.0
    %1852 = vmatprep.subr.mxu0 0.0
    %1853 = vmatpush1.msra.mxu0 0.0
    %1854 = vmatprep.subr.mxu0 0.0
    %1855 = vmatpush1.msra.mxu0 0.0
    %1856 = vmatprep.subr.mxu0 0.0
    %1857 = vmatpush1.msra.mxu0 0.0
    %1858 = vmatprep.subr.mxu0 0.0
    %1859 = vmatpush1.msra.mxu0 0.0
    %1860 = vmatprep.subr.mxu0 0.0
    %1861 = vmatpush1.msra.mxu0 0.0
    %1862 = vmatprep.subr.mxu0 0.0
    %1863 = vmatpush1.msra.mxu0 0.0
    %1864 = vmatprep.subr.mxu0 0.0
    %1865 = vmatpush1.msra.mxu0 0.0
    %1866 = vmatprep.subr.mxu0 0.0
    %1867 = vmatpush1.msra.mxu0 0.0
    %1868 = vmatprep.subr.mxu0 0.0
    %1869 = vmatpush1.msra.mxu0 0.0
    %1870 = vmatprep.subr.mxu0 0.0
    %1871 = vmatpush1.msra.mxu0 0.0
    %1872 = vmatprep.subr.mxu0 0.0
    %1873 = vmatpush1.msra.mxu0 0.0
    %1874 = vmatprep.mubr.f32.mxu0 0.0
    %1875 = vmatmul.mubr.f32.gmra.mrb[0].mxu0 %v1805
    %v1876 = vpop.f32.mrb[0].mxu0
    %v1877 = vadd.f32 %v1802, %v1876
    %v1878 = vpop.f32.mrb[0].mxu0
    %1879 = vmatprep.mubr.f32.mxu0 0.0
    %1880 = vmatmul.mubr.f32.gmra.mrb[0].mxu0 %v1808
    %v1881 = vpop.f32.mrb[0].mxu0
    %v1882 = vadd.f32 %v1802, %v1881
    %v1883 = vpop.f32.mrb[0].mxu0
    %1884 = vdwg.mxu0
    %v1886 = vlaneseq
    %v1887 = vshrl.u32 %v1886, 7
    %v1888 = vsub.s32 0, %v1887
    %v1889 = vrot.slane %v147, %v1888
    %1891 = vmatprep.subr.mxu0 0.0
    %1892 = vmatpush1.msra.mxu0 %v143
    %1893 = vmatprep.subr.mxu0 0.0
    %1894 = vmatpush1.msra.mxu0 %v144
    %1895 = vmatprep.subr.mxu0 0.0
    %1896 = vmatpush1.msra.mxu0 %v145
    %1897 = vmatprep.subr.mxu0 0.0
    %1898 = vmatpush1.msra.mxu0 %v146
    %1899 = vmatprep.subr.mxu0 0.0
    %1900 = vmatpush1.msra.mxu0 0.0
    %1901 = vmatprep.subr.mxu0 0.0
    %1902 = vmatpush1.msra.mxu0 0.0
    %1903 = vmatprep.subr.mxu0 0.0
    %1904 = vmatpush1.msra.mxu0 0.0
    %1905 = vmatprep.subr.mxu0 0.0
    %1906 = vmatpush1.msra.mxu0 0.0
    %1907 = vmatprep.subr.mxu0 0.0
    %1908 = vmatpush1.msra.mxu0 0.0
    %1909 = vmatprep.subr.mxu0 0.0
    %1910 = vmatpush1.msra.mxu0 0.0
    %1911 = vmatprep.subr.mxu0 0.0
    %1912 = vmatpush1.msra.mxu0 0.0
    %1913 = vmatprep.subr.mxu0 0.0
    %1914 = vmatpush1.msra.mxu0 0.0
    %1915 = vmatprep.subr.mxu0 0.0
    %1916 = vmatpush1.msra.mxu0 0.0
    %1917 = vmatprep.subr.mxu0 0.0
    %1918 = vmatpush1.msra.mxu0 0.0
    %1919 = vmatprep.subr.mxu0 0.0
    %1920 = vmatpush1.msra.mxu0 0.0
    %1921 = vmatprep.subr.mxu0 0.0
    %1922 = vmatpush1.msra.mxu0 0.0
    %1923 = vmatprep.subr.mxu0 0.0
    %1924 = vmatpush1.msra.mxu0 0.0
    %1925 = vmatprep.subr.mxu0 0.0
    %1926 = vmatpush1.msra.mxu0 0.0
    %1927 = vmatprep.subr.mxu0 0.0
    %1928 = vmatpush1.msra.mxu0 0.0
    %1929 = vmatprep.subr.mxu0 0.0
    %1930 = vmatpush1.msra.mxu0 0.0
    %1931 = vmatprep.subr.mxu0 0.0
    %1932 = vmatpush1.msra.mxu0 0.0
    %1933 = vmatprep.subr.mxu0 0.0
    %1934 = vmatpush1.msra.mxu0 0.0
    %1935 = vmatprep.subr.mxu0 0.0
    %1936 = vmatpush1.msra.mxu0 0.0
    %1937 = vmatprep.subr.mxu0 0.0
    %1938 = vmatpush1.msra.mxu0 0.0
    %1939 = vmatprep.subr.mxu0 0.0
    %1940 = vmatpush1.msra.mxu0 0.0
    %1941 = vmatprep.subr.mxu0 0.0
    %1942 = vmatpush1.msra.mxu0 0.0
    %1943 = vmatprep.subr.mxu0 0.0
    %1944 = vmatpush1.msra.mxu0 0.0
    %1945 = vmatprep.subr.mxu0 0.0
    %1946 = vmatpush1.msra.mxu0 0.0
    %1947 = vmatprep.subr.mxu0 0.0
    %1948 = vmatpush1.msra.mxu0 0.0
    %1949 = vmatprep.subr.mxu0 0.0
    %1950 = vmatpush1.msra.mxu0 0.0
    %1951 = vmatprep.subr.mxu0 0.0
    %1952 = vmatpush1.msra.mxu0 0.0
    %1953 = vmatprep.subr.mxu0 0.0
    %1954 = vmatpush1.msra.mxu0 0.0
    %1955 = vmatprep.mubr.f32.mxu0 0.0
    %1956 = vmatmul.mubr.f32.gmra.mrb[0].mxu0 %v535
    %v1957 = vpop.f32.mrb[0].mxu0
    %v1958 = vadd.f32 %v1889, %v1957
    %v1959 = vpop.f32.mrb[0].mxu0
    %1960 = vdwg.mxu0
    %v1961 = vadd.f32 %v1877, %v1958
    %v1962 = vxor.u32 %v1961, 2147483648
    %v1963 = vmul.f32 %v1962, 1.442695
    %v1964 = vpow.pop %v1963
    %v1965 = vadd.f32 %v1964, 1.0
    %v1966 = vrcp.pop %v1965
    %v1967 = vmul.f32 1.0, %v1966
    %1969 = vrot.lane.b32.xlu0 %v1958, 64
    %v1970 = vpop.permute.xlu0 %1969
    %v1972 = vmul.f32 %v1967, %v1970
    %1974 = vrot.lane.b32.xlu0 %v1972, 64
    %v1975 = vpop.permute.xlu0 %1974
    %v1977 = vadd.f32 %v1877, %v1975
    %v1978 = vtanh.pop %v1977
    %v1979 = vsub.f32 1.0, %v1967
    %1981 = vrot.lane.b32.xlu0 %v1978, 96
    %v1982 = vpop.permute.xlu0 %1981
    %v1984 = vmul.f32 %v1979, %v1982
    %v1985 = vmul.f32 %v1967, 0.0
    %v1986 = vadd.f32 %v1984, %v1985
    %1988 = vrot.lane.b32.xlu0 %v1986, 96
    %v1989 = vpop.permute.xlu0 %1988
    %v1990 = vsel %vm362, %v1989, 0
    %1992 = vmatprep.subr.mxu0 0.0
    %1993 = vmatpush1.msra.mxu0 %v143
    %1994 = vmatprep.subr.mxu0 0.0
    %1995 = vmatpush1.msra.mxu0 %v144
    %1996 = vmatprep.subr.mxu0 0.0
    %1997 = vmatpush1.msra.mxu0 %v145
    %1998 = vmatprep.subr.mxu0 0.0
    %1999 = vmatpush1.msra.mxu0 %v146
    %2000 = vmatprep.subr.mxu0 0.0
    %2001 = vmatpush1.msra.mxu0 0.0
    %2002 = vmatprep.subr.mxu0 0.0
    %2003 = vmatpush1.msra.mxu0 0.0
    %2004 = vmatprep.subr.mxu0 0.0
    %2005 = vmatpush1.msra.mxu0 0.0
    %2006 = vmatprep.subr.mxu0 0.0
    %2007 = vmatpush1.msra.mxu0 0.0
    %2008 = vmatprep.subr.mxu0 0.0
    %2009 = vmatpush1.msra.mxu0 0.0
    %2010 = vmatprep.subr.mxu0 0.0
    %2011 = vmatpush1.msra.mxu0 0.0
    %2012 = vmatprep.subr.mxu0 0.0
    %2013 = vmatpush1.msra.mxu0 0.0
    %2014 = vmatprep.subr.mxu0 0.0
    %2015 = vmatpush1.msra.mxu0 0.0
    %2016 = vmatprep.subr.mxu0 0.0
    %2017 = vmatpush1.msra.mxu0 0.0
    %2018 = vmatprep.subr.mxu0 0.0
    %2019 = vmatpush1.msra.mxu0 0.0
    %2020 = vmatprep.subr.mxu0 0.0
    %2021 = vmatpush1.msra.mxu0 0.0
    %2022 = vmatprep.subr.mxu0 0.0
    %2023 = vmatpush1.msra.mxu0 0.0
    %2024 = vmatprep.subr.mxu0 0.0
    %2025 = vmatpush1.msra.mxu0 0.0
    %2026 = vmatprep.subr.mxu0 0.0
    %2027 = vmatpush1.msra.mxu0 0.0
    %2028 = vmatprep.subr.mxu0 0.0
    %2029 = vmatpush1.msra.mxu0 0.0
    %2030 = vmatprep.subr.mxu0 0.0
    %2031 = vmatpush1.msra.mxu0 0.0
    %2032 = vmatprep.subr.mxu0 0.0
    %2033 = vmatpush1.msra.mxu0 0.0
    %2034 = vmatprep.subr.mxu0 0.0
    %2035 = vmatpush1.msra.mxu0 0.0
    %2036 = vmatprep.subr.mxu0 0.0
    %2037 = vmatpush1.msra.mxu0 0.0
    %2038 = vmatprep.subr.mxu0 0.0
    %2039 = vmatpush1.msra.mxu0 0.0
    %2040 = vmatprep.subr.mxu0 0.0
    %2041 = vmatpush1.msra.mxu0 0.0
    %2042 = vmatprep.subr.mxu0 0.0
    %2043 = vmatpush1.msra.mxu0 0.0
    %2044 = vmatprep.subr.mxu0 0.0
    %2045 = vmatpush1.msra.mxu0 0.0
    %2046 = vmatprep.subr.mxu0 0.0
    %2047 = vmatpush1.msra.mxu0 0.0
    %2048 = vmatprep.subr.mxu0 0.0
    %2049 = vmatpush1.msra.mxu0 0.0
    %2050 = vmatprep.subr.mxu0 0.0
    %2051 = vmatpush1.msra.mxu0 0.0
    %2052 = vmatprep.subr.mxu0 0.0
    %2053 = vmatpush1.msra.mxu0 0.0
    %2054 = vmatprep.subr.mxu0 0.0
    %2055 = vmatpush1.msra.mxu0 0.0
    %2056 = vmatprep.mubr.f32.mxu0 0.0
    %2057 = vmatmul.mubr.f32.gmra.mrb[0].mxu0 %v1990
    %v2058 = vpop.f32.mrb[0].mxu0
    %v2059 = vadd.f32 %v1889, %v2058
    %v2060 = vpop.f32.mrb[0].mxu0
    %2061 = vdwg.mxu0
    %v2063 = vrot.slane %v2059, 6
    %v2065 = vadd.f32 %v1877, %v2063
    %v2066 = vxor.u32 %v2065, 2147483648
    %v2067 = vmul.f32 %v2066, 1.442695
    %v2068 = vpow.pop %v2067
    %v2069 = vadd.f32 %v2068, 1.0
    %v2070 = vrcp.pop %v2069
    %v2071 = vmul.f32 1.0, %v2070
    %2072 = vrot.lane.b32.xlu0 %v2063, 64
    %v2073 = vpop.permute.xlu0 %2072
    %v2075 = vmul.f32 %v2071, %v2073
    %2077 = vrot.lane.b32.xlu0 %v2075, 64
    %v2078 = vpop.permute.xlu0 %2077
    %v2080 = vadd.f32 %v1877, %v2078
    %v2081 = vtanh.pop %v2080
    %v2082 = vsub.f32 1.0, %v2071
    %2084 = vrot.lane.b32.xlu0 %v2081, 96
    %v2085 = vpop.permute.xlu0 %2084
    %v2087 = vmul.f32 %v2082, %v2085
    %v2088 = vrot.slane %v1986, 6
    %v2090 = vmul.f32 %v2071, %v2088
    %v2091 = vadd.f32 %v2087, %v2090
    %v2093 = vrot.slane %v2091, 2
    %2094 = vrot.lane.b32.xlu0 %v2093, 96
    %v2095 = vpop.permute.xlu0 %2094
    %v2096 = vsel %vm362, %v2095, 0
    %2098 = vmatprep.subr.mxu0 0.0
    %2099 = vmatpush1.msra.mxu0 %v143
    %2100 = vmatprep.subr.mxu0 0.0
    %2101 = vmatpush1.msra.mxu0 %v144
    %2102 = vmatprep.subr.mxu0 0.0
    %2103 = vmatpush1.msra.mxu0 %v145
    %2104 = vmatprep.subr.mxu0 0.0
    %2105 = vmatpush1.msra.mxu0 %v146
    %2106 = vmatprep.subr.mxu0 0.0
    %2107 = vmatpush1.msra.mxu0 0.0
    %2108 = vmatprep.subr.mxu0 0.0
    %2109 = vmatpush1.msra.mxu0 0.0
    %2110 = vmatprep.subr.mxu0 0.0
    %2111 = vmatpush1.msra.mxu0 0.0
    %2112 = vmatprep.subr.mxu0 0.0
    %2113 = vmatpush1.msra.mxu0 0.0
    %2114 = vmatprep.subr.mxu0 0.0
    %2115 = vmatpush1.msra.mxu0 0.0
    %2116 = vmatprep.subr.mxu0 0.0
    %2117 = vmatpush1.msra.mxu0 0.0
    %2118 = vmatprep.subr.mxu0 0.0
    %2119 = vmatpush1.msra.mxu0 0.0
    %2120 = vmatprep.subr.mxu0 0.0
    %2121 = vmatpush1.msra.mxu0 0.0
    %2122 = vmatprep.subr.mxu0 0.0
    %2123 = vmatpush1.msra.mxu0 0.0
    %2124 = vmatprep.subr.mxu0 0.0
    %2125 = vmatpush1.msra.mxu0 0.0
    %2126 = vmatprep.subr.mxu0 0.0
    %2127 = vmatpush1.msra.mxu0 0.0
    %2128 = vmatprep.subr.mxu0 0.0
    %2129 = vmatpush1.msra.mxu0 0.0
    %2130 = vmatprep.subr.mxu0 0.0
    %2131 = vmatpush1.msra.mxu0 0.0
    %2132 = vmatprep.subr.mxu0 0.0
    %2133 = vmatpush1.msra.mxu0 0.0
    %2134 = vmatprep.subr.mxu0 0.0
    %2135 = vmatpush1.msra.mxu0 0.0
    %2136 = vmatprep.subr.mxu0 0.0
    %2137 = vmatpush1.msra.mxu0 0.0
    %2138 = vmatprep.subr.mxu0 0.0
    %2139 = vmatpush1.msra.mxu0 0.0
    %2140 = vmatprep.subr.mxu0 0.0
    %2141 = vmatpush1.msra.mxu0 0.0
    %2142 = vmatprep.subr.mxu0 0.0
    %2143 = vmatpush1.msra.mxu0 0.0
    %2144 = vmatprep.subr.mxu0 0.0
    %2145 = vmatpush1.msra.mxu0 0.0
    %2146 = vmatprep.subr.mxu0 0.0
    %2147 = vmatpush1.msra.mxu0 0.0
    %2148 = vmatprep.subr.mxu0 0.0
    %2149 = vmatpush1.msra.mxu0 0.0
    %2150 = vmatprep.subr.mxu0 0.0
    %2151 = vmatpush1.msra.mxu0 0.0
    %2152 = vmatprep.subr.mxu0 0.0
    %2153 = vmatpush1.msra.mxu0 0.0
    %2154 = vmatprep.subr.mxu0 0.0
    %2155 = vmatpush1.msra.mxu0 0.0
    %2156 = vmatprep.subr.mxu0 0.0
    %2157 = vmatpush1.msra.mxu0 0.0
    %2158 = vmatprep.subr.mxu0 0.0
    %2159 = vmatpush1.msra.mxu0 0.0
    %2160 = vmatprep.subr.mxu0 0.0
    %2161 = vmatpush1.msra.mxu0 0.0
    %2162 = vmatprep.mubr.f32.mxu0 0.0
    %2163 = vmatmul.mubr.f32.gmra.mrb[0].mxu0 %v2096
    %v2164 = vpop.f32.mrb[0].mxu0
    %v2165 = vadd.f32 %v1889, %v2164
    %v2166 = vpop.f32.mrb[0].mxu0
    %2167 = vdwg.mxu0
    %v2169 = vrot.slane %v2165, 4
    %v2171 = vadd.f32 %v1877, %v2169
    %v2172 = vxor.u32 %v2171, 2147483648
    %v2173 = vmul.f32 %v2172, 1.442695
    %v2174 = vpow.pop %v2173
    %v2175 = vadd.f32 %v2174, 1.0
    %v2176 = vrcp.pop %v2175
    %v2177 = vmul.f32 1.0, %v2176
    %2178 = vrot.lane.b32.xlu0 %v2169, 64
    %v2179 = vpop.permute.xlu0 %2178
    %v2181 = vmul.f32 %v2177, %v2179
    %2183 = vrot.lane.b32.xlu0 %v2181, 64
    %v2184 = vpop.permute.xlu0 %2183
    %v2186 = vadd.f32 %v1877, %v2184
    %v2187 = vtanh.pop %v2186
    %v2188 = vsub.f32 1.0, %v2177
    %2190 = vrot.lane.b32.xlu0 %v2187, 96
    %v2191 = vpop.permute.xlu0 %2190
    %v2193 = vmul.f32 %v2188, %v2191
    %v2194 = vrot.slane %v2091, 6
    %v2196 = vmul.f32 %v2177, %v2194
    %v2197 = vadd.f32 %v2193, %v2196
    %v2199 = vrot.slane %v2197, 4
    %2200 = vrot.lane.b32.xlu0 %v2199, 96
    %v2201 = vpop.permute.xlu0 %2200
    %v2202 = vsel %vm362, %v2201, 0
    %2204 = vmatprep.subr.mxu0 0.0
    %2205 = vmatpush1.msra.mxu0 %v143
    %2206 = vmatprep.subr.mxu0 0.0
    %2207 = vmatpush1.msra.mxu0 %v144
    %2208 = vmatprep.subr.mxu0 0.0
    %2209 = vmatpush1.msra.mxu0 %v145
    %2210 = vmatprep.subr.mxu0 0.0
    %2211 = vmatpush1.msra.mxu0 %v146
    %2212 = vmatprep.subr.mxu0 0.0
    %2213 = vmatpush1.msra.mxu0 0.0
    %2214 = vmatprep.subr.mxu0 0.0
    %2215 = vmatpush1.msra.mxu0 0.0
    %2216 = vmatprep.subr.mxu0 0.0
    %2217 = vmatpush1.msra.mxu0 0.0
    %2218 = vmatprep.subr.mxu0 0.0
    %2219 = vmatpush1.msra.mxu0 0.0
    %2220 = vmatprep.subr.mxu0 0.0
    %2221 = vmatpush1.msra.mxu0 0.0
    %2222 = vmatprep.subr.mxu0 0.0
    %2223 = vmatpush1.msra.mxu0 0.0
    %2224 = vmatprep.subr.mxu0 0.0
    %2225 = vmatpush1.msra.mxu0 0.0
    %2226 = vmatprep.subr.mxu0 0.0
    %2227 = vmatpush1.msra.mxu0 0.0
    %2228 = vmatprep.subr.mxu0 0.0
    %2229 = vmatpush1.msra.mxu0 0.0
    %2230 = vmatprep.subr.mxu0 0.0
    %2231 = vmatpush1.msra.mxu0 0.0
    %2232 = vmatprep.subr.mxu0 0.0
    %2233 = vmatpush1.msra.mxu0 0.0
    %2234 = vmatprep.subr.mxu0 0.0
    %2235 = vmatpush1.msra.mxu0 0.0
    %2236 = vmatprep.subr.mxu0 0.0
    %2237 = vmatpush1.msra.mxu0 0.0
    %2238 = vmatprep.subr.mxu0 0.0
    %2239 = vmatpush1.msra.mxu0 0.0
    %2240 = vmatprep.subr.mxu0 0.0
    %2241 = vmatpush1.msra.mxu0 0.0
    %2242 = vmatprep.subr.mxu0 0.0
    %2243 = vmatpush1.msra.mxu0 0.0
    %2244 = vmatprep.subr.mxu0 0.0
    %2245 = vmatpush1.msra.mxu0 0.0
    %2246 = vmatprep.subr.mxu0 0.0
    %2247 = vmatpush1.msra.mxu0 0.0
    %2248 = vmatprep.subr.mxu0 0.0
    %2249 = vmatpush1.msra.mxu0 0.0
    %2250 = vmatprep.subr.mxu0 0.0
    %2251 = vmatpush1.msra.mxu0 0.0
    %2252 = vmatprep.subr.mxu0 0.0
    %2253 = vmatpush1.msra.mxu0 0.0
    %2254 = vmatprep.subr.mxu0 0.0
    %2255 = vmatpush1.msra.mxu0 0.0
    %2256 = vmatprep.subr.mxu0 0.0
    %2257 = vmatpush1.msra.mxu0 0.0
    %2258 = vmatprep.subr.mxu0 0.0
    %2259 = vmatpush1.msra.mxu0 0.0
    %2260 = vmatprep.subr.mxu0 0.0
    %2261 = vmatpush1.msra.mxu0 0.0
    %2262 = vmatprep.subr.mxu0 0.0
    %2263 = vmatpush1.msra.mxu0 0.0
    %2264 = vmatprep.subr.mxu0 0.0
    %2265 = vmatpush1.msra.mxu0 0.0
    %2266 = vmatprep.subr.mxu0 0.0
    %2267 = vmatpush1.msra.mxu0 0.0
    %2268 = vmatprep.mubr.f32.mxu0 0.0
    %2269 = vmatmul.mubr.f32.gmra.mrb[0].mxu0 %v2202
    %v2270 = vpop.f32.mrb[0].mxu0
    %v2271 = vadd.f32 %v1889, %v2270
    %v2272 = vpop.f32.mrb[0].mxu0
    %2273 = vdwg.mxu0
    %v2275 = vrot.slane %v2271, 2
    %v2277 = vadd.f32 %v1877, %v2275
    %v2278 = vxor.u32 %v2277, 2147483648
    %v2279 = vmul.f32 %v2278, 1.442695
    %v2280 = vpow.pop %v2279
    %v2281 = vadd.f32 %v2280, 1.0
    %v2282 = vrcp.pop %v2281
    %v2283 = vmul.f32 1.0, %v2282
    %2284 = vrot.lane.b32.xlu0 %v2275, 64
    %v2285 = vpop.permute.xlu0 %2284
    %v2287 = vmul.f32 %v2283, %v2285
    %2289 = vrot.lane.b32.xlu0 %v2287, 64
    %v2290 = vpop.permute.xlu0 %2289
    %v2292 = vadd.f32 %v1877, %v2290
    %v2293 = vtanh.pop %v2292
    %v2294 = vsub.f32 1.0, %v2283
    %2296 = vrot.lane.b32.xlu0 %v2293, 96
    %v2297 = vpop.permute.xlu0 %2296
    %v2299 = vmul.f32 %v2294, %v2297
    %v2300 = vrot.slane %v2197, 6
    %v2302 = vmul.f32 %v2283, %v2300
    %v2303 = vadd.f32 %v2299, %v2302
    %v2305 = vrot.slane %v2303, 6
    %2306 = vrot.lane.b32.xlu0 %v2305, 96
    %v2307 = vpop.permute.xlu0 %2306
    %v2308 = vsel %vm362, %v2307, 0
    %2310 = vmatprep.subr.mxu0 0.0
    %2311 = vmatpush1.msra.mxu0 %v143
    %2312 = vmatprep.subr.mxu0 0.0
    %2313 = vmatpush1.msra.mxu0 %v144
    %2314 = vmatprep.subr.mxu0 0.0
    %2315 = vmatpush1.msra.mxu0 %v145
    %2316 = vmatprep.subr.mxu0 0.0
    %2317 = vmatpush1.msra.mxu0 %v146
    %2318 = vmatprep.subr.mxu0 0.0
    %2319 = vmatpush1.msra.mxu0 0.0
    %2320 = vmatprep.subr.mxu0 0.0
    %2321 = vmatpush1.msra.mxu0 0.0
    %2322 = vmatprep.subr.mxu0 0.0
    %2323 = vmatpush1.msra.mxu0 0.0
    %2324 = vmatprep.subr.mxu0 0.0
    %2325 = vmatpush1.msra.mxu0 0.0
    %2326 = vmatprep.subr.mxu0 0.0
    %2327 = vmatpush1.msra.mxu0 0.0
    %2328 = vmatprep.subr.mxu0 0.0
    %2329 = vmatpush1.msra.mxu0 0.0
    %2330 = vmatprep.subr.mxu0 0.0
    %2331 = vmatpush1.msra.mxu0 0.0
    %2332 = vmatprep.subr.mxu0 0.0
    %2333 = vmatpush1.msra.mxu0 0.0
    %2334 = vmatprep.subr.mxu0 0.0
    %2335 = vmatpush1.msra.mxu0 0.0
    %2336 = vmatprep.subr.mxu0 0.0
    %2337 = vmatpush1.msra.mxu0 0.0
    %2338 = vmatprep.subr.mxu0 0.0
    %2339 = vmatpush1.msra.mxu0 0.0
    %2340 = vmatprep.subr.mxu0 0.0
    %2341 = vmatpush1.msra.mxu0 0.0
    %2342 = vmatprep.subr.mxu0 0.0
    %2343 = vmatpush1.msra.mxu0 0.0
    %2344 = vmatprep.subr.mxu0 0.0
    %2345 = vmatpush1.msra.mxu0 0.0
    %2346 = vmatprep.subr.mxu0 0.0
    %2347 = vmatpush1.msra.mxu0 0.0
    %2348 = vmatprep.subr.mxu0 0.0
    %2349 = vmatpush1.msra.mxu0 0.0
    %2350 = vmatprep.subr.mxu0 0.0
    %2351 = vmatpush1.msra.mxu0 0.0
    %2352 = vmatprep.subr.mxu0 0.0
    %2353 = vmatpush1.msra.mxu0 0.0
    %2354 = vmatprep.subr.mxu0 0.0
    %2355 = vmatpush1.msra.mxu0 0.0
    %2356 = vmatprep.subr.mxu0 0.0
    %2357 = vmatpush1.msra.mxu0 0.0
    %2358 = vmatprep.subr.mxu0 0.0
    %2359 = vmatpush1.msra.mxu0 0.0
    %2360 = vmatprep.subr.mxu0 0.0
    %2361 = vmatpush1.msra.mxu0 0.0
    %2362 = vmatprep.subr.mxu0 0.0
    %2363 = vmatpush1.msra.mxu0 0.0
    %2364 = vmatprep.subr.mxu0 0.0
    %2365 = vmatpush1.msra.mxu0 0.0
    %2366 = vmatprep.subr.mxu0 0.0
    %2367 = vmatpush1.msra.mxu0 0.0
    %2368 = vmatprep.subr.mxu0 0.0
    %2369 = vmatpush1.msra.mxu0 0.0
    %2370 = vmatprep.subr.mxu0 0.0
    %2371 = vmatpush1.msra.mxu0 0.0
    %2372 = vmatprep.subr.mxu0 0.0
    %2373 = vmatpush1.msra.mxu0 0.0
    %2374 = vmatprep.mubr.f32.mxu0 0.0
    %2375 = vmatmul.mubr.f32.gmra.mrb[0].mxu0 %v2308
    %v2376 = vpop.f32.mrb[0].mxu0
    %v2377 = vadd.f32 %v1889, %v2376
    %v2378 = vpop.f32.mrb[0].mxu0
    %2379 = vdwg.mxu0
    %v2380 = vadd.f32 %v1882, %v2377
    %v2381 = vxor.u32 %v2380, 2147483648
    %v2382 = vmul.f32 %v2381, 1.442695
    %v2383 = vpow.pop %v2382
    %v2384 = vadd.f32 %v2383, 1.0
    %v2385 = vrcp.pop %v2384
    %v2386 = vmul.f32 1.0, %v2385
    %2388 = vrot.lane.b32.xlu0 %v2377, 64
    %v2389 = vpop.permute.xlu0 %2388
    %v2391 = vmul.f32 %v2386, %v2389
    %2393 = vrot.lane.b32.xlu0 %v2391, 64
    %v2394 = vpop.permute.xlu0 %2393
    %v2396 = vadd.f32 %v1882, %v2394
    %v2397 = vtanh.pop %v2396
    %v2398 = vsub.f32 1.0, %v2386
    %2400 = vrot.lane.b32.xlu0 %v2397, 96
    %v2401 = vpop.permute.xlu0 %2400
    %v2403 = vmul.f32 %v2398, %v2401
    %v2405 = vmul.f32 %v2386, %v2305
    %v2406 = vadd.f32 %v2403, %v2405
    %v2408 = vlaneseq
    %v2409 = vshrl.u32 %v2408, 7
    %v2410 = vsub.s32 0, %v2409
    %v2411 = vrot.slane %v184, %v2410
    %2414 = vrot.lane.b32.xlu0 %v1785, 96
    %v2415 = vpop.permute.xlu0 %2414
    %v2416 = vsel %vm362, %v2415, 0
    %2418 = vmatprep.subr.mxu0 0.0
    %2419 = vmatpush1.msra.mxu0 %v180
    %2420 = vmatprep.subr.mxu0 0.0
    %2421 = vmatpush1.msra.mxu0 %v181
    %2422 = vmatprep.subr.mxu0 0.0
    %2423 = vmatpush1.msra.mxu0 %v182
    %2424 = vmatprep.subr.mxu0 0.0
    %2425 = vmatpush1.msra.mxu0 %v183
    %2426 = vmatprep.subr.mxu0 0.0
    %2427 = vmatpush1.msra.mxu0 0.0
    %2428 = vmatprep.subr.mxu0 0.0
    %2429 = vmatpush1.msra.mxu0 0.0
    %2430 = vmatprep.subr.mxu0 0.0
    %2431 = vmatpush1.msra.mxu0 0.0
    %2432 = vmatprep.subr.mxu0 0.0
    %2433 = vmatpush1.msra.mxu0 0.0
    %2434 = vmatprep.subr.mxu0 0.0
    %2435 = vmatpush1.msra.mxu0 0.0
    %2436 = vmatprep.subr.mxu0 0.0
    %2437 = vmatpush1.msra.mxu0 0.0
    %2438 = vmatprep.subr.mxu0 0.0
    %2439 = vmatpush1.msra.mxu0 0.0
    %2440 = vmatprep.subr.mxu0 0.0
    %2441 = vmatpush1.msra.mxu0 0.0
    %2442 = vmatprep.subr.mxu0 0.0
    %2443 = vmatpush1.msra.mxu0 0.0
    %2444 = vmatprep.subr.mxu0 0.0
    %2445 = vmatpush1.msra.mxu0 0.0
    %2446 = vmatprep.subr.mxu0 0.0
    %2447 = vmatpush1.msra.mxu0 0.0
    %2448 = vmatprep.subr.mxu0 0.0
    %2449 = vmatpush1.msra.mxu0 0.0
    %2450 = vmatprep.subr.mxu0 0.0
    %2451 = vmatpush1.msra.mxu0 0.0
    %2452 = vmatprep.subr.mxu0 0.0
    %2453 = vmatpush1.msra.mxu0 0.0
    %2454 = vmatprep.subr.mxu0 0.0
    %2455 = vmatpush1.msra.mxu0 0.0
    %2456 = vmatprep.subr.mxu0 0.0
    %2457 = vmatpush1.msra.mxu0 0.0
    %2458 = vmatprep.subr.mxu0 0.0
    %2459 = vmatpush1.msra.mxu0 0.0
    %2460 = vmatprep.subr.mxu0 0.0
    %2461 = vmatpush1.msra.mxu0 0.0
    %2462 = vmatprep.subr.mxu0 0.0
    %2463 = vmatpush1.msra.mxu0 0.0
    %2464 = vmatprep.subr.mxu0 0.0
    %2465 = vmatpush1.msra.mxu0 0.0
    %2466 = vmatprep.subr.mxu0 0.0
    %2467 = vmatpush1.msra.mxu0 0.0
    %2468 = vmatprep.subr.mxu0 0.0
    %2469 = vmatpush1.msra.mxu0 0.0
    %2470 = vmatprep.subr.mxu0 0.0
    %2471 = vmatpush1.msra.mxu0 0.0
    %2472 = vmatprep.subr.mxu0 0.0
    %2473 = vmatpush1.msra.mxu0 0.0
    %2474 = vmatprep.subr.mxu0 0.0
    %2475 = vmatpush1.msra.mxu0 0.0
    %2476 = vmatprep.subr.mxu0 0.0
    %2477 = vmatpush1.msra.mxu0 0.0
    %2478 = vmatprep.subr.mxu0 0.0
    %2479 = vmatpush1.msra.mxu0 0.0
    %2480 = vmatprep.subr.mxu0 0.0
    %2481 = vmatpush1.msra.mxu0 0.0
    %2482 = vmatprep.mubr.f32.mxu0 0.0
    %2483 = vmatmul.mubr.f32.gmra.mrb[0].mxu0 %v2416
    %v2484 = vpop.f32.mrb[0].mxu0
    %v2485 = vadd.f32 %v2411, %v2484
    %v2486 = vpop.f32.mrb[0].mxu0
    %2487 = vdwg.mxu0
    %v2489 = vrot.slane %v1786, 2
    %2490 = vrot.lane.b32.xlu0 %v2489, 96
    %v2491 = vpop.permute.xlu0 %2490
    %v2492 = vsel %vm362, %v2491, 0
    %2494 = vmatprep.subr.mxu0 0.0
    %2495 = vmatpush1.msra.mxu0 %v180
    %2496 = vmatprep.subr.mxu0 0.0
    %2497 = vmatpush1.msra.mxu0 %v181
    %2498 = vmatprep.subr.mxu0 0.0
    %2499 = vmatpush1.msra.mxu0 %v182
    %2500 = vmatprep.subr.mxu0 0.0
    %2501 = vmatpush1.msra.mxu0 %v183
    %2502 = vmatprep.subr.mxu0 0.0
    %2503 = vmatpush1.msra.mxu0 0.0
    %2504 = vmatprep.subr.mxu0 0.0
    %2505 = vmatpush1.msra.mxu0 0.0
    %2506 = vmatprep.subr.mxu0 0.0
    %2507 = vmatpush1.msra.mxu0 0.0
    %2508 = vmatprep.subr.mxu0 0.0
    %2509 = vmatpush1.msra.mxu0 0.0
    %2510 = vmatprep.subr.mxu0 0.0
    %2511 = vmatpush1.msra.mxu0 0.0
    %2512 = vmatprep.subr.mxu0 0.0
    %2513 = vmatpush1.msra.mxu0 0.0
    %2514 = vmatprep.subr.mxu0 0.0
    %2515 = vmatpush1.msra.mxu0 0.0
    %2516 = vmatprep.subr.mxu0 0.0
    %2517 = vmatpush1.msra.mxu0 0.0
    %2518 = vmatprep.subr.mxu0 0.0
    %2519 = vmatpush1.msra.mxu0 0.0
    %2520 = vmatprep.subr.mxu0 0.0
    %2521 = vmatpush1.msra.mxu0 0.0
    %2522 = vmatprep.subr.mxu0 0.0
    %2523 = vmatpush1.msra.mxu0 0.0
    %2524 = vmatprep.subr.mxu0 0.0
    %2525 = vmatpush1.msra.mxu0 0.0
    %2526 = vmatprep.subr.mxu0 0.0
    %2527 = vmatpush1.msra.mxu0 0.0
    %2528 = vmatprep.subr.mxu0 0.0
    %2529 = vmatpush1.msra.mxu0 0.0
    %2530 = vmatprep.subr.mxu0 0.0
    %2531 = vmatpush1.msra.mxu0 0.0
    %2532 = vmatprep.subr.mxu0 0.0
    %2533 = vmatpush1.msra.mxu0 0.0
    %2534 = vmatprep.subr.mxu0 0.0
    %2535 = vmatpush1.msra.mxu0 0.0
    %2536 = vmatprep.subr.mxu0 0.0
    %2537 = vmatpush1.msra.mxu0 0.0
    %2538 = vmatprep.subr.mxu0 0.0
    %2539 = vmatpush1.msra.mxu0 0.0
    %2540 = vmatprep.subr.mxu0 0.0
    %2541 = vmatpush1.msra.mxu0 0.0
    %2542 = vmatprep.subr.mxu0 0.0
    %2543 = vmatpush1.msra.mxu0 0.0
    %2544 = vmatprep.subr.mxu0 0.0
    %2545 = vmatpush1.msra.mxu0 0.0
    %2546 = vmatprep.subr.mxu0 0.0
    %2547 = vmatpush1.msra.mxu0 0.0
    %2548 = vmatprep.subr.mxu0 0.0
    %2549 = vmatpush1.msra.mxu0 0.0
    %2550 = vmatprep.subr.mxu0 0.0
    %2551 = vmatpush1.msra.mxu0 0.0
    %2552 = vmatprep.subr.mxu0 0.0
    %2553 = vmatpush1.msra.mxu0 0.0
    %2554 = vmatprep.subr.mxu0 0.0
    %2555 = vmatpush1.msra.mxu0 0.0
    %2556 = vmatprep.subr.mxu0 0.0
    %2557 = vmatpush1.msra.mxu0 0.0
    %2558 = vmatprep.mubr.f32.mxu0 0.0
    %2559 = vmatmul.mubr.f32.gmra.mrb[0].mxu0 %v2492
    %v2560 = vpop.f32.mrb[0].mxu0
    %v2561 = vadd.f32 %v2411, %v2560
    %v2562 = vpop.f32.mrb[0].mxu0
    %2563 = vdwg.mxu0
    %v2565 = vrot.slane %v1787, 4
    %2566 = vrot.lane.b32.xlu0 %v2565, 96
    %v2567 = vpop.permute.xlu0 %2566
    %v2568 = vsel %vm362, %v2567, 0
    %2570 = vmatprep.subr.mxu0 0.0
    %2571 = vmatpush1.msra.mxu0 %v180
    %2572 = vmatprep.subr.mxu0 0.0
    %2573 = vmatpush1.msra.mxu0 %v181
    %2574 = vmatprep.subr.mxu0 0.0
    %2575 = vmatpush1.msra.mxu0 %v182
    %2576 = vmatprep.subr.mxu0 0.0
    %2577 = vmatpush1.msra.mxu0 %v183
    %2578 = vmatprep.subr.mxu0 0.0
    %2579 = vmatpush1.msra.mxu0 0.0
    %2580 = vmatprep.subr.mxu0 0.0
    %2581 = vmatpush1.msra.mxu0 0.0
    %2582 = vmatprep.subr.mxu0 0.0
    %2583 = vmatpush1.msra.mxu0 0.0
    %2584 = vmatprep.subr.mxu0 0.0
    %2585 = vmatpush1.msra.mxu0 0.0
    %2586 = vmatprep.subr.mxu0 0.0
    %2587 = vmatpush1.msra.mxu0 0.0
    %2588 = vmatprep.subr.mxu0 0.0
    %2589 = vmatpush1.msra.mxu0 0.0
    %2590 = vmatprep.subr.mxu0 0.0
    %2591 = vmatpush1.msra.mxu0 0.0
    %2592 = vmatprep.subr.mxu0 0.0
    %2593 = vmatpush1.msra.mxu0 0.0
    %2594 = vmatprep.subr.mxu0 0.0
    %2595 = vmatpush1.msra.mxu0 0.0
    %2596 = vmatprep.subr.mxu0 0.0
    %2597 = vmatpush1.msra.mxu0 0.0
    %2598 = vmatprep.subr.mxu0 0.0
    %2599 = vmatpush1.msra.mxu0 0.0
    %2600 = vmatprep.subr.mxu0 0.0
    %2601 = vmatpush1.msra.mxu0 0.0
    %2602 = vmatprep.subr.mxu0 0.0
    %2603 = vmatpush1.msra.mxu0 0.0
    %2604 = vmatprep.subr.mxu0 0.0
    %2605 = vmatpush1.msra.mxu0 0.0
    %2606 = vmatprep.subr.mxu0 0.0
    %2607 = vmatpush1.msra.mxu0 0.0
    %2608 = vmatprep.subr.mxu0 0.0
    %2609 = vmatpush1.msra.mxu0 0.0
    %2610 = vmatprep.subr.mxu0 0.0
    %2611 = vmatpush1.msra.mxu0 0.0
    %2612 = vmatprep.subr.mxu0 0.0
    %2613 = vmatpush1.msra.mxu0 0.0
    %2614 = vmatprep.subr.mxu0 0.0
    %2615 = vmatpush1.msra.mxu0 0.0
    %2616 = vmatprep.subr.mxu0 0.0
    %2617 = vmatpush1.msra.mxu0 0.0
    %2618 = vmatprep.subr.mxu0 0.0
    %2619 = vmatpush1.msra.mxu0 0.0
    %2620 = vmatprep.subr.mxu0 0.0
    %2621 = vmatpush1.msra.mxu0 0.0
    %2622 = vmatprep.subr.mxu0 0.0
    %2623 = vmatpush1.msra.mxu0 0.0
    %2624 = vmatprep.subr.mxu0 0.0
    %2625 = vmatpush1.msra.mxu0 0.0
    %2626 = vmatprep.subr.mxu0 0.0
    %2627 = vmatpush1.msra.mxu0 0.0
    %2628 = vmatprep.subr.mxu0 0.0
    %2629 = vmatpush1.msra.mxu0 0.0
    %2630 = vmatprep.subr.mxu0 0.0
    %2631 = vmatpush1.msra.mxu0 0.0
    %2632 = vmatprep.subr.mxu0 0.0
    %2633 = vmatpush1.msra.mxu0 0.0
    %2634 = vmatprep.mubr.f32.mxu0 0.0
    %2635 = vmatmul.mubr.f32.gmra.mrb[0].mxu0 %v2568
    %v2636 = vpop.f32.mrb[0].mxu0
    %v2637 = vadd.f32 %v2411, %v2636
    %v2638 = vpop.f32.mrb[0].mxu0
    %2639 = vdwg.mxu0
    %v2641 = vrot.slane %v1788, 6
    %2642 = vrot.lane.b32.xlu0 %v2641, 96
    %v2643 = vpop.permute.xlu0 %2642
    %v2644 = vsel %vm362, %v2643, 0
    %2646 = vmatprep.subr.mxu0 0.0
    %2647 = vmatpush1.msra.mxu0 %v180
    %2648 = vmatprep.subr.mxu0 0.0
    %2649 = vmatpush1.msra.mxu0 %v181
    %2650 = vmatprep.subr.mxu0 0.0
    %2651 = vmatpush1.msra.mxu0 %v182
    %2652 = vmatprep.subr.mxu0 0.0
    %2653 = vmatpush1.msra.mxu0 %v183
    %2654 = vmatprep.subr.mxu0 0.0
    %2655 = vmatpush1.msra.mxu0 0.0
    %2656 = vmatprep.subr.mxu0 0.0
    %2657 = vmatpush1.msra.mxu0 0.0
    %2658 = vmatprep.subr.mxu0 0.0
    %2659 = vmatpush1.msra.mxu0 0.0
    %2660 = vmatprep.subr.mxu0 0.0
    %2661 = vmatpush1.msra.mxu0 0.0
    %2662 = vmatprep.subr.mxu0 0.0
    %2663 = vmatpush1.msra.mxu0 0.0
    %2664 = vmatprep.subr.mxu0 0.0
    %2665 = vmatpush1.msra.mxu0 0.0
    %2666 = vmatprep.subr.mxu0 0.0
    %2667 = vmatpush1.msra.mxu0 0.0
    %2668 = vmatprep.subr.mxu0 0.0
    %2669 = vmatpush1.msra.mxu0 0.0
    %2670 = vmatprep.subr.mxu0 0.0
    %2671 = vmatpush1.msra.mxu0 0.0
    %2672 = vmatprep.subr.mxu0 0.0
    %2673 = vmatpush1.msra.mxu0 0.0
    %2674 = vmatprep.subr.mxu0 0.0
    %2675 = vmatpush1.msra.mxu0 0.0
    %2676 = vmatprep.subr.mxu0 0.0
    %2677 = vmatpush1.msra.mxu0 0.0
    %2678 = vmatprep.subr.mxu0 0.0
    %2679 = vmatpush1.msra.mxu0 0.0
    %2680 = vmatprep.subr.mxu0 0.0
    %2681 = vmatpush1.msra.mxu0 0.0
    %2682 = vmatprep.subr.mxu0 0.0
    %2683 = vmatpush1.msra.mxu0 0.0
    %2684 = vmatprep.subr.mxu0 0.0
    %2685 = vmatpush1.msra.mxu0 0.0
    %2686 = vmatprep.subr.mxu0 0.0
    %2687 = vmatpush1.msra.mxu0 0.0
    %2688 = vmatprep.subr.mxu0 0.0
    %2689 = vmatpush1.msra.mxu0 0.0
    %2690 = vmatprep.subr.mxu0 0.0
    %2691 = vmatpush1.msra.mxu0 0.0
    %2692 = vmatprep.subr.mxu0 0.0
    %2693 = vmatpush1.msra.mxu0 0.0
    %2694 = vmatprep.subr.mxu0 0.0
    %2695 = vmatpush1.msra.mxu0 0.0
    %2696 = vmatprep.subr.mxu0 0.0
    %2697 = vmatpush1.msra.mxu0 0.0
    %2698 = vmatprep.subr.mxu0 0.0
    %2699 = vmatpush1.msra.mxu0 0.0
    %2700 = vmatprep.subr.mxu0 0.0
    %2701 = vmatpush1.msra.mxu0 0.0
    %2702 = vmatprep.subr.mxu0 0.0
    %2703 = vmatpush1.msra.mxu0 0.0
    %2704 = vmatprep.subr.mxu0 0.0
    %2705 = vmatpush1.msra.mxu0 0.0
    %2706 = vmatprep.subr.mxu0 0.0
    %2707 = vmatpush1.msra.mxu0 0.0
    %2708 = vmatprep.subr.mxu0 0.0
    %2709 = vmatpush1.msra.mxu0 0.0
    %2710 = vmatprep.mubr.f32.mxu0 0.0
    %2711 = vmatmul.mubr.f32.gmra.mrb[0].mxu0 %v2644
    %v2712 = vpop.f32.mrb[0].mxu0
    %v2713 = vadd.f32 %v2411, %v2712
    %v2714 = vpop.f32.mrb[0].mxu0
    %2715 = vdwg.mxu0
    %2717 = vrot.lane.b32.xlu0 %v1789, 96
    %v2718 = vpop.permute.xlu0 %2717
    %v2719 = vsel %vm362, %v2718, 0
    %2721 = vmatprep.subr.mxu0 0.0
    %2722 = vmatpush1.msra.mxu0 %v180
    %2723 = vmatprep.subr.mxu0 0.0
    %2724 = vmatpush1.msra.mxu0 %v181
    %2725 = vmatprep.subr.mxu0 0.0
    %2726 = vmatpush1.msra.mxu0 %v182
    %2727 = vmatprep.subr.mxu0 0.0
    %2728 = vmatpush1.msra.mxu0 %v183
    %2729 = vmatprep.subr.mxu0 0.0
    %2730 = vmatpush1.msra.mxu0 0.0
    %2731 = vmatprep.subr.mxu0 0.0
    %2732 = vmatpush1.msra.mxu0 0.0
    %2733 = vmatprep.subr.mxu0 0.0
    %2734 = vmatpush1.msra.mxu0 0.0
    %2735 = vmatprep.subr.mxu0 0.0
    %2736 = vmatpush1.msra.mxu0 0.0
    %2737 = vmatprep.subr.mxu0 0.0
    %2738 = vmatpush1.msra.mxu0 0.0
    %2739 = vmatprep.subr.mxu0 0.0
    %2740 = vmatpush1.msra.mxu0 0.0
    %2741 = vmatprep.subr.mxu0 0.0
    %2742 = vmatpush1.msra.mxu0 0.0
    %2743 = vmatprep.subr.mxu0 0.0
    %2744 = vmatpush1.msra.mxu0 0.0
    %2745 = vmatprep.subr.mxu0 0.0
    %2746 = vmatpush1.msra.mxu0 0.0
    %2747 = vmatprep.subr.mxu0 0.0
    %2748 = vmatpush1.msra.mxu0 0.0
    %2749 = vmatprep.subr.mxu0 0.0
    %2750 = vmatpush1.msra.mxu0 0.0
    %2751 = vmatprep.subr.mxu0 0.0
    %2752 = vmatpush1.msra.mxu0 0.0
    %2753 = vmatprep.subr.mxu0 0.0
    %2754 = vmatpush1.msra.mxu0 0.0
    %2755 = vmatprep.subr.mxu0 0.0
    %2756 = vmatpush1.msra.mxu0 0.0
    %2757 = vmatprep.subr.mxu0 0.0
    %2758 = vmatpush1.msra.mxu0 0.0
    %2759 = vmatprep.subr.mxu0 0.0
    %2760 = vmatpush1.msra.mxu0 0.0
    %2761 = vmatprep.subr.mxu0 0.0
    %2762 = vmatpush1.msra.mxu0 0.0
    %2763 = vmatprep.subr.mxu0 0.0
    %2764 = vmatpush1.msra.mxu0 0.0
    %2765 = vmatprep.subr.mxu0 0.0
    %2766 = vmatpush1.msra.mxu0 0.0
    %2767 = vmatprep.subr.mxu0 0.0
    %2768 = vmatpush1.msra.mxu0 0.0
    %2769 = vmatprep.subr.mxu0 0.0
    %2770 = vmatpush1.msra.mxu0 0.0
    %2771 = vmatprep.subr.mxu0 0.0
    %2772 = vmatpush1.msra.mxu0 0.0
    %2773 = vmatprep.subr.mxu0 0.0
    %2774 = vmatpush1.msra.mxu0 0.0
    %2775 = vmatprep.subr.mxu0 0.0
    %2776 = vmatpush1.msra.mxu0 0.0
    %2777 = vmatprep.subr.mxu0 0.0
    %2778 = vmatpush1.msra.mxu0 0.0
    %2779 = vmatprep.subr.mxu0 0.0
    %2780 = vmatpush1.msra.mxu0 0.0
    %2781 = vmatprep.subr.mxu0 0.0
    %2782 = vmatpush1.msra.mxu0 0.0
    %2783 = vmatprep.subr.mxu0 0.0
    %2784 = vmatpush1.msra.mxu0 0.0
    %2785 = vmatprep.mubr.f32.mxu0 0.0
    %2786 = vmatmul.mubr.f32.gmra.mrb[0].mxu0 %v2719
    %v2787 = vpop.f32.mrb[0].mxu0
    %v2788 = vadd.f32 %v2411, %v2787
    %v2789 = vpop.f32.mrb[0].mxu0
    %2790 = vdwg.mxu0
    %v2792 = vrot.slane %v1790, 2
    %2793 = vrot.lane.b32.xlu0 %v2792, 96
    %v2794 = vpop.permute.xlu0 %2793
    %v2795 = vsel %vm362, %v2794, 0
    %2797 = vmatprep.subr.mxu0 0.0
    %2798 = vmatpush1.msra.mxu0 %v180
    %2799 = vmatprep.subr.mxu0 0.0
    %2800 = vmatpush1.msra.mxu0 %v181
    %2801 = vmatprep.subr.mxu0 0.0
    %2802 = vmatpush1.msra.mxu0 %v182
    %2803 = vmatprep.subr.mxu0 0.0
    %2804 = vmatpush1.msra.mxu0 %v183
    %2805 = vmatprep.subr.mxu0 0.0
    %2806 = vmatpush1.msra.mxu0 0.0
    %2807 = vmatprep.subr.mxu0 0.0
    %2808 = vmatpush1.msra.mxu0 0.0
    %2809 = vmatprep.subr.mxu0 0.0
    %2810 = vmatpush1.msra.mxu0 0.0
    %2811 = vmatprep.subr.mxu0 0.0
    %2812 = vmatpush1.msra.mxu0 0.0
    %2813 = vmatprep.subr.mxu0 0.0
    %2814 = vmatpush1.msra.mxu0 0.0
    %2815 = vmatprep.subr.mxu0 0.0
    %2816 = vmatpush1.msra.mxu0 0.0
    %2817 = vmatprep.subr.mxu0 0.0
    %2818 = vmatpush1.msra.mxu0 0.0
    %2819 = vmatprep.subr.mxu0 0.0
    %2820 = vmatpush1.msra.mxu0 0.0
    %2821 = vmatprep.subr.mxu0 0.0
    %2822 = vmatpush1.msra.mxu0 0.0
    %2823 = vmatprep.subr.mxu0 0.0
    %2824 = vmatpush1.msra.mxu0 0.0
    %2825 = vmatprep.subr.mxu0 0.0
    %2826 = vmatpush1.msra.mxu0 0.0
    %2827 = vmatprep.subr.mxu0 0.0
    %2828 = vmatpush1.msra.mxu0 0.0
    %2829 = vmatprep.subr.mxu0 0.0
    %2830 = vmatpush1.msra.mxu0 0.0
    %2831 = vmatprep.subr.mxu0 0.0
    %2832 = vmatpush1.msra.mxu0 0.0
    %2833 = vmatprep.subr.mxu0 0.0
    %2834 = vmatpush1.msra.mxu0 0.0
    %2835 = vmatprep.subr.mxu0 0.0
    %2836 = vmatpush1.msra.mxu0 0.0
    %2837 = vmatprep.subr.mxu0 0.0
    %2838 = vmatpush1.msra.mxu0 0.0
    %2839 = vmatprep.subr.mxu0 0.0
    %2840 = vmatpush1.msra.mxu0 0.0
    %2841 = vmatprep.subr.mxu0 0.0
    %2842 = vmatpush1.msra.mxu0 0.0
    %2843 = vmatprep.subr.mxu0 0.0
    %2844 = vmatpush1.msra.mxu0 0.0
    %2845 = vmatprep.subr.mxu0 0.0
    %2846 = vmatpush1.msra.mxu0 0.0
    %2847 = vmatprep.subr.mxu0 0.0
    %2848 = vmatpush1.msra.mxu0 0.0
    %2849 = vmatprep.subr.mxu0 0.0
    %2850 = vmatpush1.msra.mxu0 0.0
    %2851 = vmatprep.subr.mxu0 0.0
    %2852 = vmatpush1.msra.mxu0 0.0
    %2853 = vmatprep.subr.mxu0 0.0
    %2854 = vmatpush1.msra.mxu0 0.0
    %2855 = vmatprep.subr.mxu0 0.0
    %2856 = vmatpush1.msra.mxu0 0.0
    %2857 = vmatprep.subr.mxu0 0.0
    %2858 = vmatpush1.msra.mxu0 0.0
    %2859 = vmatprep.subr.mxu0 0.0
    %2860 = vmatpush1.msra.mxu0 0.0
    %2861 = vmatprep.mubr.f32.mxu0 0.0
    %2862 = vmatmul.mubr.f32.gmra.mrb[0].mxu0 %v2795
    %v2863 = vpop.f32.mrb[0].mxu0
    %v2864 = vadd.f32 %v2411, %v2863
    %v2865 = vpop.f32.mrb[0].mxu0
    %2866 = vdwg.mxu0
    %v2867 = vmul.f32 %v1785, %v2406
    %v2869 = vrot.slane %v2406, 6
    %v2871 = vmul.f32 %v1786, %v2869
    %v2872 = vrot.slane %v2406, 4
    %v2874 = vmul.f32 %v1787, %v2872
    %v2875 = vrot.slane %v2406, 2
    %v2877 = vmul.f32 %v1788, %v2875
    %v2878 = vmul.f32 %v1789, %v2406
    %v2879 = vmul.f32 %v1790, %v2869
    %v2880 = vsub.f32 %v1785, %v2406
    %v2881 = vand.u32 2147483647, %v2880
    %v2882 = vsub.f32 %v1786, %v2869
    %v2883 = vand.u32 2147483647, %v2882
    %v2884 = vsub.f32 %v1787, %v2872
    %v2885 = vand.u32 2147483647, %v2884
    %v2886 = vsub.f32 %v1788, %v2875
    %v2887 = vand.u32 2147483647, %v2886
    %v2888 = vsub.f32 %v1789, %v2406
    %v2889 = vand.u32 2147483647, %v2888
    %v2890 = vsub.f32 %v1790, %v2869
    %v2891 = vand.u32 2147483647, %v2890
    %2893 = vrot.lane.b32.xlu0 %v2867, 96
    %v2894 = vpop.permute.xlu0 %2893
    %2897 = vrot.lane.b32.xlu0 %v2881, 32
    %v2898 = vpop.permute.xlu0 %2897
    %2900 = vrot.lane.b32.xlu0 %v2881, 64
    %v2901 = vpop.permute.xlu0 %2900
    %v2903 = vsel %vm362, %v2894, %v2867
    %vm2904 = vcmask 523264
    %v2905 = vsel %vm2904, %v2903, %v2898
    %vm2906 = vcmask 785408
    %v2907 = vsel %vm2906, %v2905, %v2901
    %v2909 = vlaneseq
    %v2910 = vshrl.u32 %v2909, 7
    %v2911 = vsub.s32 0, %v2910
    %v2912 = vrot.slane %v174, %v2911
    %2914 = vmatprep.subr.mxu0 0.0
    %2915 = vmatpush1.msra.mxu0 %v158
    %2916 = vmatprep.subr.mxu0 0.0
    %2917 = vmatpush1.msra.mxu0 %v159
    %2918 = vmatprep.subr.mxu0 0.0
    %2919 = vmatpush1.msra.mxu0 %v160
    %2920 = vmatprep.subr.mxu0 0.0
    %2921 = vmatpush1.msra.mxu0 %v161
    %2922 = vmatprep.subr.mxu0 0.0
    %2923 = vmatpush1.msra.mxu0 %v162
    %2924 = vmatprep.subr.mxu0 0.0
    %2925 = vmatpush1.msra.mxu0 %v163
    %2926 = vmatprep.subr.mxu0 0.0
    %2927 = vmatpush1.msra.mxu0 %v164
    %2928 = vmatprep.subr.mxu0 0.0
    %2929 = vmatpush1.msra.mxu0 %v165
    %2930 = vmatprep.subr.mxu0 0.0
    %2931 = vmatpush1.msra.mxu0 %v166
    %2932 = vmatprep.subr.mxu0 0.0
    %2933 = vmatpush1.msra.mxu0 %v167
    %2934 = vmatprep.subr.mxu0 0.0
    %2935 = vmatpush1.msra.mxu0 %v168
    %2936 = vmatprep.subr.mxu0 0.0
    %2937 = vmatpush1.msra.mxu0 %v169
    %2938 = vmatprep.subr.mxu0 0.0
    %2939 = vmatpush1.msra.mxu0 %v170
    %2940 = vmatprep.subr.mxu0 0.0
    %2941 = vmatpush1.msra.mxu0 %v171
    %2942 = vmatprep.subr.mxu0 0.0
    %2943 = vmatpush1.msra.mxu0 %v172
    %2944 = vmatprep.subr.mxu0 0.0
    %2945 = vmatpush1.msra.mxu0 %v173
    %2946 = vmatprep.subr.mxu0 0.0
    %2947 = vmatpush1.msra.mxu0 0.0
    %2948 = vmatprep.subr.mxu0 0.0
    %2949 = vmatpush1.msra.mxu0 0.0
    %2950 = vmatprep.subr.mxu0 0.0
    %2951 = vmatpush1.msra.mxu0 0.0
    %2952 = vmatprep.subr.mxu0 0.0
    %2953 = vmatpush1.msra.mxu0 0.0
    %2954 = vmatprep.subr.mxu0 0.0
    %2955 = vmatpush1.msra.mxu0 0.0
    %2956 = vmatprep.subr.mxu0 0.0
    %2957 = vmatpush1.msra.mxu0 0.0
    %2958 = vmatprep.subr.mxu0 0.0
    %2959 = vmatpush1.msra.mxu0 0.0
    %2960 = vmatprep.subr.mxu0 0.0
    %2961 = vmatpush1.msra.mxu0 0.0
    %2962 = vmatprep.subr.mxu0 0.0
    %2963 = vmatpush1.msra.mxu0 0.0
    %2964 = vmatprep.subr.mxu0 0.0
    %2965 = vmatpush1.msra.mxu0 0.0
    %2966 = vmatprep.subr.mxu0 0.0
    %2967 = vmatpush1.msra.mxu0 0.0
    %2968 = vmatprep.subr.mxu0 0.0
    %2969 = vmatpush1.msra.mxu0 0.0
    %2970 = vmatprep.subr.mxu0 0.0
    %2971 = vmatpush1.msra.mxu0 0.0
    %2972 = vmatprep.subr.mxu0 0.0
    %2973 = vmatpush1.msra.mxu0 0.0
    %2974 = vmatprep.subr.mxu0 0.0
    %2975 = vmatpush1.msra.mxu0 0.0
    %2976 = vmatprep.subr.mxu0 0.0
    %2977 = vmatpush1.msra.mxu0 0.0
    %2978 = vmatprep.mubr.f32.mxu0 0.0
    %2979 = vmatmul.mubr.f32.gmra.mrb[0].mxu0 %v2907
    %v2980 = vpop.f32.mrb[0].mxu0
    %v2981 = vadd.f32 %v2912, %v2980
    %v2982 = vpop.f32.mrb[0].mxu0
    %2983 = vdwg.mxu0
    %v2984 = vtanh.pop %v2981
    %v2986 = vsel %vm362, %v2984, 0
    %2988 = vmatprep.subr.mxu0 0.0
    %2989 = vmatpush1.msra.mxu0 %v175
    %2990 = vmatprep.subr.mxu0 0.0
    %2991 = vmatpush1.msra.mxu0 %v176
    %2992 = vmatprep.subr.mxu0 0.0
    %2993 = vmatpush1.msra.mxu0 %v177
    %2994 = vmatprep.subr.mxu0 0.0
    %2995 = vmatpush1.msra.mxu0 %v178
    %2996 = vmatprep.subr.mxu0 0.0
    %2997 = vmatpush1.msra.mxu0 0.0
    %2998 = vmatprep.subr.mxu0 0.0
    %2999 = vmatpush1.msra.mxu0 0.0
    %3000 = vmatprep.subr.mxu0 0.0
    %3001 = vmatpush1.msra.mxu0 0.0
    %3002 = vmatprep.subr.mxu0 0.0
    %3003 = vmatpush1.msra.mxu0 0.0
    %3004 = vmatprep.subr.mxu0 0.0
    %3005 = vmatpush1.msra.mxu0 0.0
    %3006 = vmatprep.subr.mxu0 0.0
    %3007 = vmatpush1.msra.mxu0 0.0
    %3008 = vmatprep.subr.mxu0 0.0
    %3009 = vmatpush1.msra.mxu0 0.0
    %3010 = vmatprep.subr.mxu0 0.0
    %3011 = vmatpush1.msra.mxu0 0.0
    %3012 = vmatprep.subr.mxu0 0.0
    %3013 = vmatpush1.msra.mxu0 0.0
    %3014 = vmatprep.subr.mxu0 0.0
    %3015 = vmatpush1.msra.mxu0 0.0
    %3016 = vmatprep.subr.mxu0 0.0
    %3017 = vmatpush1.msra.mxu0 0.0
    %3018 = vmatprep.subr.mxu0 0.0
    %3019 = vmatpush1.msra.mxu0 0.0
    %3020 = vmatprep.subr.mxu0 0.0
    %3021 = vmatpush1.msra.mxu0 0.0
    %3022 = vmatprep.subr.mxu0 0.0
    %3023 = vmatpush1.msra.mxu0 0.0
    %3024 = vmatprep.subr.mxu0 0.0
    %3025 = vmatpush1.msra.mxu0 0.0
    %3026 = vmatprep.subr.mxu0 0.0
    %3027 = vmatpush1.msra.mxu0 0.0
    %3028 = vmatprep.subr.mxu0 0.0
    %3029 = vmatpush1.msra.mxu0 0.0
    %3030 = vmatprep.subr.mxu0 0.0
    %3031 = vmatpush1.msra.mxu0 0.0
    %3032 = vmatprep.subr.mxu0 0.0
    %3033 = vmatpush1.msra.mxu0 0.0
    %3034 = vmatprep.subr.mxu0 0.0
    %3035 = vmatpush1.msra.mxu0 0.0
    %3036 = vmatprep.subr.mxu0 0.0
    %3037 = vmatpush1.msra.mxu0 0.0
    %3038 = vmatprep.subr.mxu0 0.0
    %3039 = vmatpush1.msra.mxu0 0.0
    %3040 = vmatprep.subr.mxu0 0.0
    %3041 = vmatpush1.msra.mxu0 0.0
    %3042 = vmatprep.subr.mxu0 0.0
    %3043 = vmatpush1.msra.mxu0 0.0
    %3044 = vmatprep.subr.mxu0 0.0
    %3045 = vmatpush1.msra.mxu0 0.0
    %3046 = vmatprep.subr.mxu0 0.0
    %3047 = vmatpush1.msra.mxu0 0.0
    %3048 = vmatprep.subr.mxu0 0.0
    %3049 = vmatpush1.msra.mxu0 0.0
    %3050 = vmatprep.subr.mxu0 0.0
    %3051 = vmatpush1.msra.mxu0 0.0
    %3052 = vmatprep.mubr.f32.mxu0 0.0
    %3053 = vmatmul.mubr.f32.gmra.mrb[0].mxu0 %v2986
    %v3054 = vpop.f32.mrb[0].mxu0
    %v3055 = vadd.f32 0.0, %v3054
    %v3056 = vpop.f32.mrb[0].mxu0
    %3057 = vdwg.mxu0
    %3059 = vrot.lane.b32.xlu0 %v2871, 96
    %v3060 = vpop.permute.xlu0 %3059
    %3063 = vrot.lane.b32.xlu0 %v2883, 32
    %v3064 = vpop.permute.xlu0 %3063
    %3066 = vrot.lane.b32.xlu0 %v2883, 64
    %v3067 = vpop.permute.xlu0 %3066
    %v3069 = vsel %vm362, %v3060, %v2871
    %v3070 = vsel %vm2904, %v3069, %v3064
    %v3071 = vsel %vm2906, %v3070, %v3067
    %v3073 = vrot.slane %v3071, 2
    %3075 = vmatprep.subr.mxu0 0.0
    %3076 = vmatpush1.msra.mxu0 %v158
    %3077 = vmatprep.subr.mxu0 0.0
    %3078 = vmatpush1.msra.mxu0 %v159
    %3079 = vmatprep.subr.mxu0 0.0
    %3080 = vmatpush1.msra.mxu0 %v160
    %3081 = vmatprep.subr.mxu0 0.0
    %3082 = vmatpush1.msra.mxu0 %v161
    %3083 = vmatprep.subr.mxu0 0.0
    %3084 = vmatpush1.msra.mxu0 %v162
    %3085 = vmatprep.subr.mxu0 0.0
    %3086 = vmatpush1.msra.mxu0 %v163
    %3087 = vmatprep.subr.mxu0 0.0
    %3088 = vmatpush1.msra.mxu0 %v164
    %3089 = vmatprep.subr.mxu0 0.0
    %3090 = vmatpush1.msra.mxu0 %v165
    %3091 = vmatprep.subr.mxu0 0.0
    %3092 = vmatpush1.msra.mxu0 %v166
    %3093 = vmatprep.subr.mxu0 0.0
    %3094 = vmatpush1.msra.mxu0 %v167
    %3095 = vmatprep.subr.mxu0 0.0
    %3096 = vmatpush1.msra.mxu0 %v168
    %3097 = vmatprep.subr.mxu0 0.0
    %3098 = vmatpush1.msra.mxu0 %v169
    %3099 = vmatprep.subr.mxu0 0.0
    %3100 = vmatpush1.msra.mxu0 %v170
    %3101 = vmatprep.subr.mxu0 0.0
    %3102 = vmatpush1.msra.mxu0 %v171
    %3103 = vmatprep.subr.mxu0 0.0
    %3104 = vmatpush1.msra.mxu0 %v172
    %3105 = vmatprep.subr.mxu0 0.0
    %3106 = vmatpush1.msra.mxu0 %v173
    %3107 = vmatprep.subr.mxu0 0.0
    %3108 = vmatpush1.msra.mxu0 0.0
    %3109 = vmatprep.subr.mxu0 0.0
    %3110 = vmatpush1.msra.mxu0 0.0
    %3111 = vmatprep.subr.mxu0 0.0
    %3112 = vmatpush1.msra.mxu0 0.0
    %3113 = vmatprep.subr.mxu0 0.0
    %3114 = vmatpush1.msra.mxu0 0.0
    %3115 = vmatprep.subr.mxu0 0.0
    %3116 = vmatpush1.msra.mxu0 0.0
    %3117 = vmatprep.subr.mxu0 0.0
    %3118 = vmatpush1.msra.mxu0 0.0
    %3119 = vmatprep.subr.mxu0 0.0
    %3120 = vmatpush1.msra.mxu0 0.0
    %3121 = vmatprep.subr.mxu0 0.0
    %3122 = vmatpush1.msra.mxu0 0.0
    %3123 = vmatprep.subr.mxu0 0.0
    %3124 = vmatpush1.msra.mxu0 0.0
    %3125 = vmatprep.subr.mxu0 0.0
    %3126 = vmatpush1.msra.mxu0 0.0
    %3127 = vmatprep.subr.mxu0 0.0
    %3128 = vmatpush1.msra.mxu0 0.0
    %3129 = vmatprep.subr.mxu0 0.0
    %3130 = vmatpush1.msra.mxu0 0.0
    %3131 = vmatprep.subr.mxu0 0.0
    %3132 = vmatpush1.msra.mxu0 0.0
    %3133 = vmatprep.subr.mxu0 0.0
    %3134 = vmatpush1.msra.mxu0 0.0
    %3135 = vmatprep.subr.mxu0 0.0
    %3136 = vmatpush1.msra.mxu0 0.0
    %3137 = vmatprep.subr.mxu0 0.0
    %3138 = vmatpush1.msra.mxu0 0.0
    %3139 = vmatprep.mubr.f32.mxu0 0.0
    %3140 = vmatmul.mubr.f32.gmra.mrb[0].mxu0 %v3073
    %v3141 = vpop.f32.mrb[0].mxu0
    %v3142 = vadd.f32 %v2912, %v3141
    %v3143 = vpop.f32.mrb[0].mxu0
    %3144 = vdwg.mxu0
    %v3145 = vtanh.pop %v3142
    %v3147 = vsel %vm362, %v3145, 0
    %3149 = vmatprep.subr.mxu0 0.0
    %3150 = vmatpush1.msra.mxu0 %v175
    %3151 = vmatprep.subr.mxu0 0.0
    %3152 = vmatpush1.msra.mxu0 %v176
    %3153 = vmatprep.subr.mxu0 0.0
    %3154 = vmatpush1.msra.mxu0 %v177
    %3155 = vmatprep.subr.mxu0 0.0
    %3156 = vmatpush1.msra.mxu0 %v178
    %3157 = vmatprep.subr.mxu0 0.0
    %3158 = vmatpush1.msra.mxu0 0.0
    %3159 = vmatprep.subr.mxu0 0.0
    %3160 = vmatpush1.msra.mxu0 0.0
    %3161 = vmatprep.subr.mxu0 0.0
    %3162 = vmatpush1.msra.mxu0 0.0
    %3163 = vmatprep.subr.mxu0 0.0
    %3164 = vmatpush1.msra.mxu0 0.0
    %3165 = vmatprep.subr.mxu0 0.0
    %3166 = vmatpush1.msra.mxu0 0.0
    %3167 = vmatprep.subr.mxu0 0.0
    %3168 = vmatpush1.msra.mxu0 0.0
    %3169 = vmatprep.subr.mxu0 0.0
    %3170 = vmatpush1.msra.mxu0 0.0
    %3171 = vmatprep.subr.mxu0 0.0
    %3172 = vmatpush1.msra.mxu0 0.0
    %3173 = vmatprep.subr.mxu0 0.0
    %3174 = vmatpush1.msra.mxu0 0.0
    %3175 = vmatprep.subr.mxu0 0.0
    %3176 = vmatpush1.msra.mxu0 0.0
    %3177 = vmatprep.subr.mxu0 0.0
    %3178 = vmatpush1.msra.mxu0 0.0
    %3179 = vmatprep.subr.mxu0 0.0
    %3180 = vmatpush1.msra.mxu0 0.0
    %3181 = vmatprep.subr.mxu0 0.0
    %3182 = vmatpush1.msra.mxu0 0.0
    %3183 = vmatprep.subr.mxu0 0.0
    %3184 = vmatpush1.msra.mxu0 0.0
    %3185 = vmatprep.subr.mxu0 0.0
    %3186 = vmatpush1.msra.mxu0 0.0
    %3187 = vmatprep.subr.mxu0 0.0
    %3188 = vmatpush1.msra.mxu0 0.0
    %3189 = vmatprep.subr.mxu0 0.0
    %3190 = vmatpush1.msra.mxu0 0.0
    %3191 = vmatprep.subr.mxu0 0.0
    %3192 = vmatpush1.msra.mxu0 0.0
    %3193 = vmatprep.subr.mxu0 0.0
    %3194 = vmatpush1.msra.mxu0 0.0
    %3195 = vmatprep.subr.mxu0 0.0
    %3196 = vmatpush1.msra.mxu0 0.0
    %3197 = vmatprep.subr.mxu0 0.0
    %3198 = vmatpush1.msra.mxu0 0.0
    %3199 = vmatprep.subr.mxu0 0.0
    %3200 = vmatpush1.msra.mxu0 0.0
    %3201 = vmatprep.subr.mxu0 0.0
    %3202 = vmatpush1.msra.mxu0 0.0
    %3203 = vmatprep.subr.mxu0 0.0
    %3204 = vmatpush1.msra.mxu0 0.0
    %3205 = vmatprep.subr.mxu0 0.0
    %3206 = vmatpush1.msra.mxu0 0.0
    %3207 = vmatprep.subr.mxu0 0.0
    %3208 = vmatpush1.msra.mxu0 0.0
    %3209 = vmatprep.subr.mxu0 0.0
    %3210 = vmatpush1.msra.mxu0 0.0
    %3211 = vmatprep.subr.mxu0 0.0
    %3212 = vmatpush1.msra.mxu0 0.0
    %3213 = vmatprep.mubr.f32.mxu0 0.0
    %3214 = vmatmul.mubr.f32.gmra.mrb[0].mxu0 %v3147
    %v3215 = vpop.f32.mrb[0].mxu0
    %v3216 = vadd.f32 0.0, %v3215
    %v3217 = vpop.f32.mrb[0].mxu0
    %3218 = vdwg.mxu0
    %3220 = vrot.lane.b32.xlu0 %v2874, 96
    %v3221 = vpop.permute.xlu0 %3220
    %3224 = vrot.lane.b32.xlu0 %v2885, 32
    %v3225 = vpop.permute.xlu0 %3224
    %3227 = vrot.lane.b32.xlu0 %v2885, 64
    %v3228 = vpop.permute.xlu0 %3227
    %v3230 = vsel %vm362, %v3221, %v2874
    %v3231 = vsel %vm2904, %v3230, %v3225
    %v3232 = vsel %vm2906, %v3231, %v3228
    %v3234 = vrot.slane %v3232, 4
    %3236 = vmatprep.subr.mxu0 0.0
    %3237 = vmatpush1.msra.mxu0 %v158
    %3238 = vmatprep.subr.mxu0 0.0
    %3239 = vmatpush1.msra.mxu0 %v159
    %3240 = vmatprep.subr.mxu0 0.0
    %3241 = vmatpush1.msra.mxu0 %v160
    %3242 = vmatprep.subr.mxu0 0.0
    %3243 = vmatpush1.msra.mxu0 %v161
    %3244 = vmatprep.subr.mxu0 0.0
    %3245 = vmatpush1.msra.mxu0 %v162
    %3246 = vmatprep.subr.mxu0 0.0
    %3247 = vmatpush1.msra.mxu0 %v163
    %3248 = vmatprep.subr.mxu0 0.0
    %3249 = vmatpush1.msra.mxu0 %v164
    %3250 = vmatprep.subr.mxu0 0.0
    %3251 = vmatpush1.msra.mxu0 %v165
    %3252 = vmatprep.subr.mxu0 0.0
    %3253 = vmatpush1.msra.mxu0 %v166
    %3254 = vmatprep.subr.mxu0 0.0
    %3255 = vmatpush1.msra.mxu0 %v167
    %3256 = vmatprep.subr.mxu0 0.0
    %3257 = vmatpush1.msra.mxu0 %v168
    %3258 = vmatprep.subr.mxu0 0.0
    %3259 = vmatpush1.msra.mxu0 %v169
    %3260 = vmatprep.subr.mxu0 0.0
    %3261 = vmatpush1.msra.mxu0 %v170
    %3262 = vmatprep.subr.mxu0 0.0
    %3263 = vmatpush1.msra.mxu0 %v171
    %3264 = vmatprep.subr.mxu0 0.0
    %3265 = vmatpush1.msra.mxu0 %v172
    %3266 = vmatprep.subr.mxu0 0.0
    %3267 = vmatpush1.msra.mxu0 %v173
    %3268 = vmatprep.subr.mxu0 0.0
    %3269 = vmatpush1.msra.mxu0 0.0
    %3270 = vmatprep.subr.mxu0 0.0
    %3271 = vmatpush1.msra.mxu0 0.0
    %3272 = vmatprep.subr.mxu0 0.0
    %3273 = vmatpush1.msra.mxu0 0.0
    %3274 = vmatprep.subr.mxu0 0.0
    %3275 = vmatpush1.msra.mxu0 0.0
    %3276 = vmatprep.subr.mxu0 0.0
    %3277 = vmatpush1.msra.mxu0 0.0
    %3278 = vmatprep.subr.mxu0 0.0
    %3279 = vmatpush1.msra.mxu0 0.0
    %3280 = vmatprep.subr.mxu0 0.0
    %3281 = vmatpush1.msra.mxu0 0.0
    %3282 = vmatprep.subr.mxu0 0.0
    %3283 = vmatpush1.msra.mxu0 0.0
    %3284 = vmatprep.subr.mxu0 0.0
    %3285 = vmatpush1.msra.mxu0 0.0
    %3286 = vmatprep.subr.mxu0 0.0
    %3287 = vmatpush1.msra.mxu0 0.0
    %3288 = vmatprep.subr.mxu0 0.0
    %3289 = vmatpush1.msra.mxu0 0.0
    %3290 = vmatprep.subr.mxu0 0.0
    %3291 = vmatpush1.msra.mxu0 0.0
    %3292 = vmatprep.subr.mxu0 0.0
    %3293 = vmatpush1.msra.mxu0 0.0
    %3294 = vmatprep.subr.mxu0 0.0
    %3295 = vmatpush1.msra.mxu0 0.0
    %3296 = vmatprep.subr.mxu0 0.0
    %3297 = vmatpush1.msra.mxu0 0.0
    %3298 = vmatprep.subr.mxu0 0.0
    %3299 = vmatpush1.msra.mxu0 0.0
    %3300 = vmatprep.mubr.f32.mxu0 0.0
    %3301 = vmatmul.mubr.f32.gmra.mrb[0].mxu0 %v3234
    %v3302 = vpop.f32.mrb[0].mxu0
    %v3303 = vadd.f32 %v2912, %v3302
    %v3304 = vpop.f32.mrb[0].mxu0
    %3305 = vdwg.mxu0
    %v3306 = vtanh.pop %v3303
    %v3308 = vsel %vm362, %v3306, 0
    %3310 = vmatprep.subr.mxu0 0.0
    %3311 = vmatpush1.msra.mxu0 %v175
    %3312 = vmatprep.subr.mxu0 0.0
    %3313 = vmatpush1.msra.mxu0 %v176
    %3314 = vmatprep.subr.mxu0 0.0
    %3315 = vmatpush1.msra.mxu0 %v177
    %3316 = vmatprep.subr.mxu0 0.0
    %3317 = vmatpush1.msra.mxu0 %v178
    %3318 = vmatprep.subr.mxu0 0.0
    %3319 = vmatpush1.msra.mxu0 0.0
    %3320 = vmatprep.subr.mxu0 0.0
    %3321 = vmatpush1.msra.mxu0 0.0
    %3322 = vmatprep.subr.mxu0 0.0
    %3323 = vmatpush1.msra.mxu0 0.0
    %3324 = vmatprep.subr.mxu0 0.0
    %3325 = vmatpush1.msra.mxu0 0.0
    %3326 = vmatprep.subr.mxu0 0.0
    %3327 = vmatpush1.msra.mxu0 0.0
    %3328 = vmatprep.subr.mxu0 0.0
    %3329 = vmatpush1.msra.mxu0 0.0
    %3330 = vmatprep.subr.mxu0 0.0
    %3331 = vmatpush1.msra.mxu0 0.0
    %3332 = vmatprep.subr.mxu0 0.0
    %3333 = vmatpush1.msra.mxu0 0.0
    %3334 = vmatprep.subr.mxu0 0.0
    %3335 = vmatpush1.msra.mxu0 0.0
    %3336 = vmatprep.subr.mxu0 0.0
    %3337 = vmatpush1.msra.mxu0 0.0
    %3338 = vmatprep.subr.mxu0 0.0
    %3339 = vmatpush1.msra.mxu0 0.0
    %3340 = vmatprep.subr.mxu0 0.0
    %3341 = vmatpush1.msra.mxu0 0.0
    %3342 = vmatprep.subr.mxu0 0.0
    %3343 = vmatpush1.msra.mxu0 0.0
    %3344 = vmatprep.subr.mxu0 0.0
    %3345 = vmatpush1.msra.mxu0 0.0
    %3346 = vmatprep.subr.mxu0 0.0
    %3347 = vmatpush1.msra.mxu0 0.0
    %3348 = vmatprep.subr.mxu0 0.0
    %3349 = vmatpush1.msra.mxu0 0.0
    %3350 = vmatprep.subr.mxu0 0.0
    %3351 = vmatpush1.msra.mxu0 0.0
    %3352 = vmatprep.subr.mxu0 0.0
    %3353 = vmatpush1.msra.mxu0 0.0
    %3354 = vmatprep.subr.mxu0 0.0
    %3355 = vmatpush1.msra.mxu0 0.0
    %3356 = vmatprep.subr.mxu0 0.0
    %3357 = vmatpush1.msra.mxu0 0.0
    %3358 = vmatprep.subr.mxu0 0.0
    %3359 = vmatpush1.msra.mxu0 0.0
    %3360 = vmatprep.subr.mxu0 0.0
    %3361 = vmatpush1.msra.mxu0 0.0
    %3362 = vmatprep.subr.mxu0 0.0
    %3363 = vmatpush1.msra.mxu0 0.0
    %3364 = vmatprep.subr.mxu0 0.0
    %3365 = vmatpush1.msra.mxu0 0.0
    %3366 = vmatprep.subr.mxu0 0.0
    %3367 = vmatpush1.msra.mxu0 0.0
    %3368 = vmatprep.subr.mxu0 0.0
    %3369 = vmatpush1.msra.mxu0 0.0
    %3370 = vmatprep.subr.mxu0 0.0
    %3371 = vmatpush1.msra.mxu0 0.0
    %3372 = vmatprep.subr.mxu0 0.0
    %3373 = vmatpush1.msra.mxu0 0.0
    %3374 = vmatprep.mubr.f32.mxu0 0.0
    %3375 = vmatmul.mubr.f32.gmra.mrb[0].mxu0 %v3308
    %v3376 = vpop.f32.mrb[0].mxu0
    %v3377 = vadd.f32 0.0, %v3376
    %v3378 = vpop.f32.mrb[0].mxu0
    %3379 = vdwg.mxu0
    %3381 = vrot.lane.b32.xlu0 %v2877, 96
    %v3382 = vpop.permute.xlu0 %3381
    %3385 = vrot.lane.b32.xlu0 %v2887, 32
    %v3386 = vpop.permute.xlu0 %3385
    %3388 = vrot.lane.b32.xlu0 %v2887, 64
    %v3389 = vpop.permute.xlu0 %3388
    %v3391 = vsel %vm362, %v3382, %v2877
    %v3392 = vsel %vm2904, %v3391, %v3386
    %v3393 = vsel %vm2906, %v3392, %v3389
    %v3395 = vrot.slane %v3393, 6
    %3397 = vmatprep.subr.mxu0 0.0
    %3398 = vmatpush1.msra.mxu0 %v158
    %3399 = vmatprep.subr.mxu0 0.0
    %3400 = vmatpush1.msra.mxu0 %v159
    %3401 = vmatprep.subr.mxu0 0.0
    %3402 = vmatpush1.msra.mxu0 %v160
    %3403 = vmatprep.subr.mxu0 0.0
    %3404 = vmatpush1.msra.mxu0 %v161
    %3405 = vmatprep.subr.mxu0 0.0
    %3406 = vmatpush1.msra.mxu0 %v162
    %3407 = vmatprep.subr.mxu0 0.0
    %3408 = vmatpush1.msra.mxu0 %v163
    %3409 = vmatprep.subr.mxu0 0.0
    %3410 = vmatpush1.msra.mxu0 %v164
    %3411 = vmatprep.subr.mxu0 0.0
    %3412 = vmatpush1.msra.mxu0 %v165
    %3413 = vmatprep.subr.mxu0 0.0
    %3414 = vmatpush1.msra.mxu0 %v166
    %3415 = vmatprep.subr.mxu0 0.0
    %3416 = vmatpush1.msra.mxu0 %v167
    %3417 = vmatprep.subr.mxu0 0.0
    %3418 = vmatpush1.msra.mxu0 %v168
    %3419 = vmatprep.subr.mxu0 0.0
    %3420 = vmatpush1.msra.mxu0 %v169
    %3421 = vmatprep.subr.mxu0 0.0
    %3422 = vmatpush1.msra.mxu0 %v170
    %3423 = vmatprep.subr.mxu0 0.0
    %3424 = vmatpush1.msra.mxu0 %v171
    %3425 = vmatprep.subr.mxu0 0.0
    %3426 = vmatpush1.msra.mxu0 %v172
    %3427 = vmatprep.subr.mxu0 0.0
    %3428 = vmatpush1.msra.mxu0 %v173
    %3429 = vmatprep.subr.mxu0 0.0
    %3430 = vmatpush1.msra.mxu0 0.0
    %3431 = vmatprep.subr.mxu0 0.0
    %3432 = vmatpush1.msra.mxu0 0.0
    %3433 = vmatprep.subr.mxu0 0.0
    %3434 = vmatpush1.msra.mxu0 0.0
    %3435 = vmatprep.subr.mxu0 0.0
    %3436 = vmatpush1.msra.mxu0 0.0
    %3437 = vmatprep.subr.mxu0 0.0
    %3438 = vmatpush1.msra.mxu0 0.0
    %3439 = vmatprep.subr.mxu0 0.0
    %3440 = vmatpush1.msra.mxu0 0.0
    %3441 = vmatprep.subr.mxu0 0.0
    %3442 = vmatpush1.msra.mxu0 0.0
    %3443 = vmatprep.subr.mxu0 0.0
    %3444 = vmatpush1.msra.mxu0 0.0
    %3445 = vmatprep.subr.mxu0 0.0
    %3446 = vmatpush1.msra.mxu0 0.0
    %3447 = vmatprep.subr.mxu0 0.0
    %3448 = vmatpush1.msra.mxu0 0.0
    %3449 = vmatprep.subr.mxu0 0.0
    %3450 = vmatpush1.msra.mxu0 0.0
    %3451 = vmatprep.subr.mxu0 0.0
    %3452 = vmatpush1.msra.mxu0 0.0
    %3453 = vmatprep.subr.mxu0 0.0
    %3454 = vmatpush1.msra.mxu0 0.0
    %3455 = vmatprep.subr.mxu0 0.0
    %3456 = vmatpush1.msra.mxu0 0.0
    %3457 = vmatprep.subr.mxu0 0.0
    %3458 = vmatpush1.msra.mxu0 0.0
    %3459 = vmatprep.subr.mxu0 0.0
    %3460 = vmatpush1.msra.mxu0 0.0
    %3461 = vmatprep.mubr.f32.mxu0 0.0
    %3462 = vmatmul.mubr.f32.gmra.mrb[0].mxu0 %v3395
    %v3463 = vpop.f32.mrb[0].mxu0
    %v3464 = vadd.f32 %v2912, %v3463
    %v3465 = vpop.f32.mrb[0].mxu0
    %3466 = vdwg.mxu0
    %v3467 = vtanh.pop %v3464
    %v3469 = vsel %vm362, %v3467, 0
    %3471 = vmatprep.subr.mxu0 0.0
    %3472 = vmatpush1.msra.mxu0 %v175
    %3473 = vmatprep.subr.mxu0 0.0
    %3474 = vmatpush1.msra.mxu0 %v176
    %3475 = vmatprep.subr.mxu0 0.0
    %3476 = vmatpush1.msra.mxu0 %v177
    %3477 = vmatprep.subr.mxu0 0.0
    %3478 = vmatpush1.msra.mxu0 %v178
    %3479 = vmatprep.subr.mxu0 0.0
    %3480 = vmatpush1.msra.mxu0 0.0
    %3481 = vmatprep.subr.mxu0 0.0
    %3482 = vmatpush1.msra.mxu0 0.0
    %3483 = vmatprep.subr.mxu0 0.0
    %3484 = vmatpush1.msra.mxu0 0.0
    %3485 = vmatprep.subr.mxu0 0.0
    %3486 = vmatpush1.msra.mxu0 0.0
    %3487 = vmatprep.subr.mxu0 0.0
    %3488 = vmatpush1.msra.mxu0 0.0
    %3489 = vmatprep.subr.mxu0 0.0
    %3490 = vmatpush1.msra.mxu0 0.0
    %3491 = vmatprep.subr.mxu0 0.0
    %3492 = vmatpush1.msra.mxu0 0.0
    %3493 = vmatprep.subr.mxu0 0.0
    %3494 = vmatpush1.msra.mxu0 0.0
    %3495 = vmatprep.subr.mxu0 0.0
    %3496 = vmatpush1.msra.mxu0 0.0
    %3497 = vmatprep.subr.mxu0 0.0
    %3498 = vmatpush1.msra.mxu0 0.0
    %3499 = vmatprep.subr.mxu0 0.0
    %3500 = vmatpush1.msra.mxu0 0.0
    %3501 = vmatprep.subr.mxu0 0.0
    %3502 = vmatpush1.msra.mxu0 0.0
    %3503 = vmatprep.subr.mxu0 0.0
    %3504 = vmatpush1.msra.mxu0 0.0
    %3505 = vmatprep.subr.mxu0 0.0
    %3506 = vmatpush1.msra.mxu0 0.0
    %3507 = vmatprep.subr.mxu0 0.0
    %3508 = vmatpush1.msra.mxu0 0.0
    %3509 = vmatprep.subr.mxu0 0.0
    %3510 = vmatpush1.msra.mxu0 0.0
    %3511 = vmatprep.subr.mxu0 0.0
    %3512 = vmatpush1.msra.mxu0 0.0
    %3513 = vmatprep.subr.mxu0 0.0
    %3514 = vmatpush1.msra.mxu0 0.0
    %3515 = vmatprep.subr.mxu0 0.0
    %3516 = vmatpush1.msra.mxu0 0.0
    %3517 = vmatprep.subr.mxu0 0.0
    %3518 = vmatpush1.msra.mxu0 0.0
    %3519 = vmatprep.subr.mxu0 0.0
    %3520 = vmatpush1.msra.mxu0 0.0
    %3521 = vmatprep.subr.mxu0 0.0
    %3522 = vmatpush1.msra.mxu0 0.0
    %3523 = vmatprep.subr.mxu0 0.0
    %3524 = vmatpush1.msra.mxu0 0.0
    %3525 = vmatprep.subr.mxu0 0.0
    %3526 = vmatpush1.msra.mxu0 0.0
    %3527 = vmatprep.subr.mxu0 0.0
    %3528 = vmatpush1.msra.mxu0 0.0
    %3529 = vmatprep.subr.mxu0 0.0
    %3530 = vmatpush1.msra.mxu0 0.0
    %3531 = vmatprep.subr.mxu0 0.0
    %3532 = vmatpush1.msra.mxu0 0.0
    %3533 = vmatprep.subr.mxu0 0.0
    %3534 = vmatpush1.msra.mxu0 0.0
    %3535 = vmatprep.mubr.f32.mxu0 0.0
    %3536 = vmatmul.mubr.f32.gmra.mrb[0].mxu0 %v3469
    %v3537 = vpop.f32.mrb[0].mxu0
    %v3538 = vadd.f32 0.0, %v3537
    %v3539 = vpop.f32.mrb[0].mxu0
    %3540 = vdwg.mxu0
    %3542 = vrot.lane.b32.xlu0 %v2878, 96
    %v3543 = vpop.permute.xlu0 %3542
    %3546 = vrot.lane.b32.xlu0 %v2889, 32
    %v3547 = vpop.permute.xlu0 %3546
    %3549 = vrot.lane.b32.xlu0 %v2889, 64
    %v3550 = vpop.permute.xlu0 %3549
    %v3552 = vsel %vm362, %v3543, %v2878
    %v3553 = vsel %vm2904, %v3552, %v3547
    %v3554 = vsel %vm2906, %v3553, %v3550
    %3555 = vmatprep.subr.mxu0 0.0
    %3556 = vmatpush1.msra.mxu0 %v158
    %3557 = vmatprep.subr.mxu0 0.0
    %3558 = vmatpush1.msra.mxu0 %v159
    %3559 = vmatprep.subr.mxu0 0.0
    %3560 = vmatpush1.msra.mxu0 %v160
    %3561 = vmatprep.subr.mxu0 0.0
    %3562 = vmatpush1.msra.mxu0 %v161
    %3563 = vmatprep.subr.mxu0 0.0
    %3564 = vmatpush1.msra.mxu0 %v162
    %3565 = vmatprep.subr.mxu0 0.0
    %3566 = vmatpush1.msra.mxu0 %v163
    %3567 = vmatprep.subr.mxu0 0.0
    %3568 = vmatpush1.msra.mxu0 %v164
    %3569 = vmatprep.subr.mxu0 0.0
    %3570 = vmatpush1.msra.mxu0 %v165
    %3571 = vmatprep.subr.mxu0 0.0
    %3572 = vmatpush1.msra.mxu0 %v166
    %3573 = vmatprep.subr.mxu0 0.0
    %3574 = vmatpush1.msra.mxu0 %v167
    %3575 = vmatprep.subr.mxu0 0.0
    %3576 = vmatpush1.msra.mxu0 %v168
    %3577 = vmatprep.subr.mxu0 0.0
    %3578 = vmatpush1.msra.mxu0 %v169
    %3579 = vmatprep.subr.mxu0 0.0
    %3580 = vmatpush1.msra.mxu0 %v170
    %3581 = vmatprep.subr.mxu0 0.0
    %3582 = vmatpush1.msra.mxu0 %v171
    %3583 = vmatprep.subr.mxu0 0.0
    %3584 = vmatpush1.msra.mxu0 %v172
    %3585 = vmatprep.subr.mxu0 0.0
    %3586 = vmatpush1.msra.mxu0 %v173
    %3587 = vmatprep.subr.mxu0 0.0
    %3588 = vmatpush1.msra.mxu0 0.0
    %3589 = vmatprep.subr.mxu0 0.0
    %3590 = vmatpush1.msra.mxu0 0.0
    %3591 = vmatprep.subr.mxu0 0.0
    %3592 = vmatpush1.msra.mxu0 0.0
    %3593 = vmatprep.subr.mxu0 0.0
    %3594 = vmatpush1.msra.mxu0 0.0
    %3595 = vmatprep.subr.mxu0 0.0
    %3596 = vmatpush1.msra.mxu0 0.0
    %3597 = vmatprep.subr.mxu0 0.0
    %3598 = vmatpush1.msra.mxu0 0.0
    %3599 = vmatprep.subr.mxu0 0.0
    %3600 = vmatpush1.msra.mxu0 0.0
    %3601 = vmatprep.subr.mxu0 0.0
    %3602 = vmatpush1.msra.mxu0 0.0
    %3603 = vmatprep.subr.mxu0 0.0
    %3604 = vmatpush1.msra.mxu0 0.0
    %3605 = vmatprep.subr.mxu0 0.0
    %3606 = vmatpush1.msra.mxu0 0.0
    %3607 = vmatprep.subr.mxu0 0.0
    %3608 = vmatpush1.msra.mxu0 0.0
    %3609 = vmatprep.subr.mxu0 0.0
    %3610 = vmatpush1.msra.mxu0 0.0
    %3611 = vmatprep.subr.mxu0 0.0
    %3612 = vmatpush1.msra.mxu0 0.0
    %3613 = vmatprep.subr.mxu0 0.0
    %3614 = vmatpush1.msra.mxu0 0.0
    %3615 = vmatprep.subr.mxu0 0.0
    %3616 = vmatpush1.msra.mxu0 0.0
    %3617 = vmatprep.subr.mxu0 0.0
    %3618 = vmatpush1.msra.mxu0 0.0
    %3619 = vmatprep.mubr.f32.mxu0 0.0
    %3620 = vmatmul.mubr.f32.gmra.mrb[0].mxu0 %v3554
    %v3621 = vpop.f32.mrb[0].mxu0
    %v3622 = vadd.f32 %v2912, %v3621
    %v3623 = vpop.f32.mrb[0].mxu0
    %3624 = vdwg.mxu0
    %v3625 = vtanh.pop %v3622
    %v3627 = vsel %vm362, %v3625, 0
    %3629 = vmatprep.subr.mxu0 0.0
    %3630 = vmatpush1.msra.mxu0 %v175
    %3631 = vmatprep.subr.mxu0 0.0
    %3632 = vmatpush1.msra.mxu0 %v176
    %3633 = vmatprep.subr.mxu0 0.0
    %3634 = vmatpush1.msra.mxu0 %v177
    %3635 = vmatprep.subr.mxu0 0.0
    %3636 = vmatpush1.msra.mxu0 %v178
    %3637 = vmatprep.subr.mxu0 0.0
    %3638 = vmatpush1.msra.mxu0 0.0
    %3639 = vmatprep.subr.mxu0 0.0
    %3640 = vmatpush1.msra.mxu0 0.0
    %3641 = vmatprep.subr.mxu0 0.0
    %3642 = vmatpush1.msra.mxu0 0.0
    %3643 = vmatprep.subr.mxu0 0.0
    %3644 = vmatpush1.msra.mxu0 0.0
    %3645 = vmatprep.subr.mxu0 0.0
    %3646 = vmatpush1.msra.mxu0 0.0
    %3647 = vmatprep.subr.mxu0 0.0
    %3648 = vmatpush1.msra.mxu0 0.0
    %3649 = vmatprep.subr.mxu0 0.0
    %3650 = vmatpush1.msra.mxu0 0.0
    %3651 = vmatprep.subr.mxu0 0.0
    %3652 = vmatpush1.msra.mxu0 0.0
    %3653 = vmatprep.subr.mxu0 0.0
    %3654 = vmatpush1.msra.mxu0 0.0
    %3655 = vmatprep.subr.mxu0 0.0
    %3656 = vmatpush1.msra.mxu0 0.0
    %3657 = vmatprep.subr.mxu0 0.0
    %3658 = vmatpush1.msra.mxu0 0.0
    %3659 = vmatprep.subr.mxu0 0.0
    %3660 = vmatpush1.msra.mxu0 0.0
    %3661 = vmatprep.subr.mxu0 0.0
    %3662 = vmatpush1.msra.mxu0 0.0
    %3663 = vmatprep.subr.mxu0 0.0
    %3664 = vmatpush1.msra.mxu0 0.0
    %3665 = vmatprep.subr.mxu0 0.0
    %3666 = vmatpush1.msra.mxu0 0.0
    %3667 = vmatprep.subr.mxu0 0.0
    %3668 = vmatpush1.msra.mxu0 0.0
    %3669 = vmatprep.subr.mxu0 0.0
    %3670 = vmatpush1.msra.mxu0 0.0
    %3671 = vmatprep.subr.mxu0 0.0
    %3672 = vmatpush1.msra.mxu0 0.0
    %3673 = vmatprep.subr.mxu0 0.0
    %3674 = vmatpush1.msra.mxu0 0.0
    %3675 = vmatprep.subr.mxu0 0.0
    %3676 = vmatpush1.msra.mxu0 0.0
    %3677 = vmatprep.subr.mxu0 0.0
    %3678 = vmatpush1.msra.mxu0 0.0
    %3679 = vmatprep.subr.mxu0 0.0
    %3680 = vmatpush1.msra.mxu0 0.0
    %3681 = vmatprep.subr.mxu0 0.0
    %3682 = vmatpush1.msra.mxu0 0.0
    %3683 = vmatprep.subr.mxu0 0.0
    %3684 = vmatpush1.msra.mxu0 0.0
    %3685 = vmatprep.subr.mxu0 0.0
    %3686 = vmatpush1.msra.mxu0 0.0
    %3687 = vmatprep.subr.mxu0 0.0
    %3688 = vmatpush1.msra.mxu0 0.0
    %3689 = vmatprep.subr.mxu0 0.0
    %3690 = vmatpush1.msra.mxu0 0.0
    %3691 = vmatprep.subr.mxu0 0.0
    %3692 = vmatpush1.msra.mxu0 0.0
    %3693 = vmatprep.mubr.f32.mxu0 0.0
    %3694 = vmatmul.mubr.f32.gmra.mrb[0].mxu0 %v3627
    %v3695 = vpop.f32.mrb[0].mxu0
    %v3696 = vadd.f32 0.0, %v3695
    %v3697 = vpop.f32.mrb[0].mxu0
    %3698 = vdwg.mxu0
    %3700 = vrot.lane.b32.xlu0 %v2879, 96
    %v3701 = vpop.permute.xlu0 %3700
    %3704 = vrot.lane.b32.xlu0 %v2891, 32
    %v3705 = vpop.permute.xlu0 %3704
    %3707 = vrot.lane.b32.xlu0 %v2891, 64
    %v3708 = vpop.permute.xlu0 %3707
    %v3710 = vsel %vm362, %v3701, %v2879
    %v3711 = vsel %vm2904, %v3710, %v3705
    %v3712 = vsel %vm2906, %v3711, %v3708
    %v3714 = vrot.slane %v3712, 2
    %3716 = vmatprep.subr.mxu0 0.0
    %3717 = vmatpush1.msra.mxu0 %v158
    %3718 = vmatprep.subr.mxu0 0.0
    %3719 = vmatpush1.msra.mxu0 %v159
    %3720 = vmatprep.subr.mxu0 0.0
    %3721 = vmatpush1.msra.mxu0 %v160
    %3722 = vmatprep.subr.mxu0 0.0
    %3723 = vmatpush1.msra.mxu0 %v161
    %3724 = vmatprep.subr.mxu0 0.0
    %3725 = vmatpush1.msra.mxu0 %v162
    %3726 = vmatprep.subr.mxu0 0.0
    %3727 = vmatpush1.msra.mxu0 %v163
    %3728 = vmatprep.subr.mxu0 0.0
    %3729 = vmatpush1.msra.mxu0 %v164
    %3730 = vmatprep.subr.mxu0 0.0
    %3731 = vmatpush1.msra.mxu0 %v165
    %3732 = vmatprep.subr.mxu0 0.0
    %3733 = vmatpush1.msra.mxu0 %v166
    %3734 = vmatprep.subr.mxu0 0.0
    %3735 = vmatpush1.msra.mxu0 %v167
    %3736 = vmatprep.subr.mxu0 0.0
    %3737 = vmatpush1.msra.mxu0 %v168
    %3738 = vmatprep.subr.mxu0 0.0
    %3739 = vmatpush1.msra.mxu0 %v169
    %3740 = vmatprep.subr.mxu0 0.0
    %3741 = vmatpush1.msra.mxu0 %v170
    %3742 = vmatprep.subr.mxu0 0.0
    %3743 = vmatpush1.msra.mxu0 %v171
    %3744 = vmatprep.subr.mxu0 0.0
    %3745 = vmatpush1.msra.mxu0 %v172
    %3746 = vmatprep.subr.mxu0 0.0
    %3747 = vmatpush1.msra.mxu0 %v173
    %3748 = vmatprep.subr.mxu0 0.0
    %3749 = vmatpush1.msra.mxu0 0.0
    %3750 = vmatprep.subr.mxu0 0.0
    %3751 = vmatpush1.msra.mxu0 0.0
    %3752 = vmatprep.subr.mxu0 0.0
    %3753 = vmatpush1.msra.mxu0 0.0
    %3754 = vmatprep.subr.mxu0 0.0
    %3755 = vmatpush1.msra.mxu0 0.0
    %3756 = vmatprep.subr.mxu0 0.0
    %3757 = vmatpush1.msra.mxu0 0.0
    %3758 = vmatprep.subr.mxu0 0.0
    %3759 = vmatpush1.msra.mxu0 0.0
    %3760 = vmatprep.subr.mxu0 0.0
    %3761 = vmatpush1.msra.mxu0 0.0
    %3762 = vmatprep.subr.mxu0 0.0
    %3763 = vmatpush1.msra.mxu0 0.0
    %3764 = vmatprep.subr.mxu0 0.0
    %3765 = vmatpush1.msra.mxu0 0.0
    %3766 = vmatprep.subr.mxu0 0.0
    %3767 = vmatpush1.msra.mxu0 0.0
    %3768 = vmatprep.subr.mxu0 0.0
    %3769 = vmatpush1.msra.mxu0 0.0
    %3770 = vmatprep.subr.mxu0 0.0
    %3771 = vmatpush1.msra.mxu0 0.0
    %3772 = vmatprep.subr.mxu0 0.0
    %3773 = vmatpush1.msra.mxu0 0.0
    %3774 = vmatprep.subr.mxu0 0.0
    %3775 = vmatpush1.msra.mxu0 0.0
    %3776 = vmatprep.subr.mxu0 0.0
    %3777 = vmatpush1.msra.mxu0 0.0
    %3778 = vmatprep.subr.mxu0 0.0
    %3779 = vmatpush1.msra.mxu0 0.0
    %3780 = vmatprep.mubr.f32.mxu0 0.0
    %3781 = vmatmul.mubr.f32.gmra.mrb[0].mxu0 %v3714
    %v3782 = vpop.f32.mrb[0].mxu0
    %v3783 = vadd.f32 %v2912, %v3782
    %v3784 = vpop.f32.mrb[0].mxu0
    %3785 = vdwg.mxu0
    %v3786 = vtanh.pop %v3783
    %v3788 = vsel %vm362, %v3786, 0
    %3790 = vmatprep.subr.mxu0 0.0
    %3791 = vmatpush1.msra.mxu0 %v175
    %3792 = vmatprep.subr.mxu0 0.0
    %3793 = vmatpush1.msra.mxu0 %v176
    %3794 = vmatprep.subr.mxu0 0.0
    %3795 = vmatpush1.msra.mxu0 %v177
    %3796 = vmatprep.subr.mxu0 0.0
    %3797 = vmatpush1.msra.mxu0 %v178
    %3798 = vmatprep.subr.mxu0 0.0
    %3799 = vmatpush1.msra.mxu0 0.0
    %3800 = vmatprep.subr.mxu0 0.0
    %3801 = vmatpush1.msra.mxu0 0.0
    %3802 = vmatprep.subr.mxu0 0.0
    %3803 = vmatpush1.msra.mxu0 0.0
    %3804 = vmatprep.subr.mxu0 0.0
    %3805 = vmatpush1.msra.mxu0 0.0
    %3806 = vmatprep.subr.mxu0 0.0
    %3807 = vmatpush1.msra.mxu0 0.0
    %3808 = vmatprep.subr.mxu0 0.0
    %3809 = vmatpush1.msra.mxu0 0.0
    %3810 = vmatprep.subr.mxu0 0.0
    %3811 = vmatpush1.msra.mxu0 0.0
    %3812 = vmatprep.subr.mxu0 0.0
    %3813 = vmatpush1.msra.mxu0 0.0
    %3814 = vmatprep.subr.mxu0 0.0
    %3815 = vmatpush1.msra.mxu0 0.0
    %3816 = vmatprep.subr.mxu0 0.0
    %3817 = vmatpush1.msra.mxu0 0.0
    %3818 = vmatprep.subr.mxu0 0.0
    %3819 = vmatpush1.msra.mxu0 0.0
    %3820 = vmatprep.subr.mxu0 0.0
    %3821 = vmatpush1.msra.mxu0 0.0
    %3822 = vmatprep.subr.mxu0 0.0
    %3823 = vmatpush1.msra.mxu0 0.0
    %3824 = vmatprep.subr.mxu0 0.0
    %3825 = vmatpush1.msra.mxu0 0.0
    %3826 = vmatprep.subr.mxu0 0.0
    %3827 = vmatpush1.msra.mxu0 0.0
    %3828 = vmatprep.subr.mxu0 0.0
    %3829 = vmatpush1.msra.mxu0 0.0
    %3830 = vmatprep.subr.mxu0 0.0
    %3831 = vmatpush1.msra.mxu0 0.0
    %3832 = vmatprep.subr.mxu0 0.0
    %3833 = vmatpush1.msra.mxu0 0.0
    %3834 = vmatprep.subr.mxu0 0.0
    %3835 = vmatpush1.msra.mxu0 0.0
    %3836 = vmatprep.subr.mxu0 0.0
    %3837 = vmatpush1.msra.mxu0 0.0
    %3838 = vmatprep.subr.mxu0 0.0
    %3839 = vmatpush1.msra.mxu0 0.0
    %3840 = vmatprep.subr.mxu0 0.0
    %3841 = vmatpush1.msra.mxu0 0.0
    %3842 = vmatprep.subr.mxu0 0.0
    %3843 = vmatpush1.msra.mxu0 0.0
    %3844 = vmatprep.subr.mxu0 0.0
    %3845 = vmatpush1.msra.mxu0 0.0
    %3846 = vmatprep.subr.mxu0 0.0
    %3847 = vmatpush1.msra.mxu0 0.0
    %3848 = vmatprep.subr.mxu0 0.0
    %3849 = vmatpush1.msra.mxu0 0.0
    %3850 = vmatprep.subr.mxu0 0.0
    %3851 = vmatpush1.msra.mxu0 0.0
    %3852 = vmatprep.subr.mxu0 0.0
    %3853 = vmatpush1.msra.mxu0 0.0
    %3854 = vmatprep.mubr.f32.mxu0 0.0
    %3855 = vmatmul.mubr.f32.gmra.mrb[0].mxu0 %v3788
    %v3856 = vpop.f32.mrb[0].mxu0
    %v3857 = vadd.f32 0.0, %v3856
    %v3858 = vpop.f32.mrb[0].mxu0
    %3859 = vdwg.mxu0
    %3861 = vrot.lane.b32.xlu0 %v3216, 1
    %v3862 = vpop.permute.xlu0 %3861
    %3865 = vrot.lane.b32.xlu0 %v3377, 2
    %v3866 = vpop.permute.xlu0 %3865
    %3869 = vrot.lane.b32.xlu0 %v3538, 3
    %v3870 = vpop.permute.xlu0 %3869
    %3873 = vrot.lane.b32.xlu0 %v3696, 4
    %v3874 = vpop.permute.xlu0 %3873
    %3877 = vrot.lane.b32.xlu0 %v3857, 5
    %v3878 = vpop.permute.xlu0 %3877
    %vm3880 = vcmask 7168
    %v3881 = vsel %vm3880, %v3055, %v3862
    %vm3882 = vcmask 15360
    %v3883 = vsel %vm3882, %v3881, %v3866
    %vm3884 = vcmask 23552
    %v3885 = vsel %vm3884, %v3883, %v3870
    %vm3886 = vcmask 31744
    %v3887 = vsel %vm3886, %v3885, %v3874
    %vm3888 = vcmask 39936
    %v3889 = vsel %vm3888, %v3887, %v3878
    %v3891 = vlaneseq
    %v3892 = vshrl.u32 %v3891, 7
    %v3893 = vsub.s32 0, %v3892
    %v3894 = vrot.slane %v179, %v3893
    %3895 = vset.pattern.permute.xlu0 0
    %3896 = vperm.xlu0 %3895, %v3894
    %v3897 = vpop.permute.xlu0 %3896
    %v3899 = vadd.f32 %v3889, %v3897
    %vm3900 = vcmask 41984
    %v3901 = vsel %vm3900, %v3899, -inf
    %3902 = vmax.xlane.f32.xlu0 %v3901
    %v3903 = vpop.xlane.xlu0 %3902
    %v3904 = vsub.f32 %v3899, %v3903
    %v3905 = vmul.f32 %v3904, 1.442695
    %v3906 = vpow.pop %v3905
    %v3907 = vsel %vm3900, %v3906, 0.0
    %3908 = vadd.xlane.f32.xlu0 %v3907
    %v3909 = vpop.xlane.xlu0 %3908
    %v3910 = vrcp.pop %v3909
    %v3911 = vmul.f32 %v3906, %v3910
    %v3913 = vlaneseq
    %v3914 = vshrl.u32 %v3913, 7
    %v3915 = vsub.s32 0, %v3914
    %v3916 = vrot.slane %v189, %v3915
    %3918 = vmatprep.subr.mxu0 0.0
    %3919 = vmatpush1.msra.mxu0 %v185
    %3920 = vmatprep.subr.mxu0 0.0
    %3921 = vmatpush1.msra.mxu0 %v186
    %3922 = vmatprep.subr.mxu0 0.0
    %3923 = vmatpush1.msra.mxu0 %v187
    %3924 = vmatprep.subr.mxu0 0.0
    %3925 = vmatpush1.msra.mxu0 %v188
    %3926 = vmatprep.subr.mxu0 0.0
    %3927 = vmatpush1.msra.mxu0 0.0
    %3928 = vmatprep.subr.mxu0 0.0
    %3929 = vmatpush1.msra.mxu0 0.0
    %3930 = vmatprep.subr.mxu0 0.0
    %3931 = vmatpush1.msra.mxu0 0.0
    %3932 = vmatprep.subr.mxu0 0.0
    %3933 = vmatpush1.msra.mxu0 0.0
    %3934 = vmatprep.subr.mxu0 0.0
    %3935 = vmatpush1.msra.mxu0 0.0
    %3936 = vmatprep.subr.mxu0 0.0
    %3937 = vmatpush1.msra.mxu0 0.0
    %3938 = vmatprep.subr.mxu0 0.0
    %3939 = vmatpush1.msra.mxu0 0.0
    %3940 = vmatprep.subr.mxu0 0.0
    %3941 = vmatpush1.msra.mxu0 0.0
    %3942 = vmatprep.subr.mxu0 0.0
    %3943 = vmatpush1.msra.mxu0 0.0
    %3944 = vmatprep.subr.mxu0 0.0
    %3945 = vmatpush1.msra.mxu0 0.0
    %3946 = vmatprep.subr.mxu0 0.0
    %3947 = vmatpush1.msra.mxu0 0.0
    %3948 = vmatprep.subr.mxu0 0.0
    %3949 = vmatpush1.msra.mxu0 0.0
    %3950 = vmatprep.subr.mxu0 0.0
    %3951 = vmatpush1.msra.mxu0 0.0
    %3952 = vmatprep.subr.mxu0 0.0
    %3953 = vmatpush1.msra.mxu0 0.0
    %3954 = vmatprep.subr.mxu0 0.0
    %3955 = vmatpush1.msra.mxu0 0.0
    %3956 = vmatprep.subr.mxu0 0.0
    %3957 = vmatpush1.msra.mxu0 0.0
    %3958 = vmatprep.subr.mxu0 0.0
    %3959 = vmatpush1.msra.mxu0 0.0
    %3960 = vmatprep.subr.mxu0 0.0
    %3961 = vmatpush1.msra.mxu0 0.0
    %3962 = vmatprep.subr.mxu0 0.0
    %3963 = vmatpush1.msra.mxu0 0.0
    %3964 = vmatprep.subr.mxu0 0.0
    %3965 = vmatpush1.msra.mxu0 0.0
    %3966 = vmatprep.subr.mxu0 0.0
    %3967 = vmatpush1.msra.mxu0 0.0
    %3968 = vmatprep.subr.mxu0 0.0
    %3969 = vmatpush1.msra.mxu0 0.0
    %3970 = vmatprep.subr.mxu0 0.0
    %3971 = vmatpush1.msra.mxu0 0.0
    %3972 = vmatprep.subr.mxu0 0.0
    %3973 = vmatpush1.msra.mxu0 0.0
    %3974 = vmatprep.subr.mxu0 0.0
    %3975 = vmatpush1.msra.mxu0 0.0
    %3976 = vmatprep.subr.mxu0 0.0
    %3977 = vmatpush1.msra.mxu0 0.0
    %3978 = vmatprep.subr.mxu0 0.0
    %3979 = vmatpush1.msra.mxu0 0.0
    %3980 = vmatprep.subr.mxu0 0.0
    %3981 = vmatpush1.msra.mxu0 0.0
    %3982 = vmatprep.mubr.f32.mxu0 0.0
    %3983 = vmatmul.mubr.f32.gmra.mrb[0].mxu0 %v535
    %v3984 = vpop.f32.mrb[0].mxu0
    %v3985 = vadd.f32 %v3916, %v3984
    %v3986 = vpop.f32.mrb[0].mxu0
    %3987 = vdwg.mxu0
    %v3988 = vadd.f32 %v2485, %v3985
    %v3989 = vxor.u32 %v3988, 2147483648
    %v3990 = vmul.f32 %v3989, 1.442695
    %v3991 = vpow.pop %v3990
    %v3992 = vadd.f32 %v3991, 1.0
    %v3993 = vrcp.pop %v3992
    %v3994 = vmul.f32 1.0, %v3993
    %3996 = vrot.lane.b32.xlu0 %v3985, 96
    %v3997 = vpop.permute.xlu0 %3996
    %v3999 = vmul.f32 %v3994, %v3997
    %4001 = vrot.lane.b32.xlu0 %v3999, 32
    %v4002 = vpop.permute.xlu0 %4001
    %v4004 = vadd.f32 %v2485, %v4002
    %v4005 = vtanh.pop %v4004
    %4007 = vset.pattern.permute.xlu0 0
    %4008 = vperm.xlu0 %4007, %v3911
    %v4009 = vpop.permute.xlu0 %4008
    %v4011 = vmul.f32 %v4009, %v4005
    %v4012 = vsub.f32 1.0, %v3911
    %4014 = vset.pattern.permute.xlu0 0
    %4015 = vperm.xlu0 %4014, %v4012
    %v4016 = vpop.permute.xlu0 %4015
    %v4018 = vmul.f32 %v4016, 0.0
    %v4019 = vadd.f32 %v4011, %v4018
    %4021 = vrot.lane.b32.xlu0 %v4019, 96
    %v4022 = vpop.permute.xlu0 %4021
    %v4023 = vsel %vm362, %v4022, 0
    %4025 = vmatprep.subr.mxu0 0.0
    %4026 = vmatpush1.msra.mxu0 %v185
    %4027 = vmatprep.subr.mxu0 0.0
    %4028 = vmatpush1.msra.mxu0 %v186
    %4029 = vmatprep.subr.mxu0 0.0
    %4030 = vmatpush1.msra.mxu0 %v187
    %4031 = vmatprep.subr.mxu0 0.0
    %4032 = vmatpush1.msra.mxu0 %v188
    %4033 = vmatprep.subr.mxu0 0.0
    %4034 = vmatpush1.msra.mxu0 0.0
    %4035 = vmatprep.subr.mxu0 0.0
    %4036 = vmatpush1.msra.mxu0 0.0
    %4037 = vmatprep.subr.mxu0 0.0
    %4038 = vmatpush1.msra.mxu0 0.0
    %4039 = vmatprep.subr.mxu0 0.0
    %4040 = vmatpush1.msra.mxu0 0.0
    %4041 = vmatprep.subr.mxu0 0.0
    %4042 = vmatpush1.msra.mxu0 0.0
    %4043 = vmatprep.subr.mxu0 0.0
    %4044 = vmatpush1.msra.mxu0 0.0
    %4045 = vmatprep.subr.mxu0 0.0
    %4046 = vmatpush1.msra.mxu0 0.0
    %4047 = vmatprep.subr.mxu0 0.0
    %4048 = vmatpush1.msra.mxu0 0.0
    %4049 = vmatprep.subr.mxu0 0.0
    %4050 = vmatpush1.msra.mxu0 0.0
    %4051 = vmatprep.subr.mxu0 0.0
    %4052 = vmatpush1.msra.mxu0 0.0
    %4053 = vmatprep.subr.mxu0 0.0
    %4054 = vmatpush1.msra.mxu0 0.0
    %4055 = vmatprep.subr.mxu0 0.0
    %4056 = vmatpush1.msra.mxu0 0.0
    %4057 = vmatprep.subr.mxu0 0.0
    %4058 = vmatpush1.msra.mxu0 0.0
    %4059 = vmatprep.subr.mxu0 0.0
    %4060 = vmatpush1.msra.mxu0 0.0
    %4061 = vmatprep.subr.mxu0 0.0
    %4062 = vmatpush1.msra.mxu0 0.0
    %4063 = vmatprep.subr.mxu0 0.0
    %4064 = vmatpush1.msra.mxu0 0.0
    %4065 = vmatprep.subr.mxu0 0.0
    %4066 = vmatpush1.msra.mxu0 0.0
    %4067 = vmatprep.subr.mxu0 0.0
    %4068 = vmatpush1.msra.mxu0 0.0
    %4069 = vmatprep.subr.mxu0 0.0
    %4070 = vmatpush1.msra.mxu0 0.0
    %4071 = vmatprep.subr.mxu0 0.0
    %4072 = vmatpush1.msra.mxu0 0.0
    %4073 = vmatprep.subr.mxu0 0.0
    %4074 = vmatpush1.msra.mxu0 0.0
    %4075 = vmatprep.subr.mxu0 0.0
    %4076 = vmatpush1.msra.mxu0 0.0
    %4077 = vmatprep.subr.mxu0 0.0
    %4078 = vmatpush1.msra.mxu0 0.0
    %4079 = vmatprep.subr.mxu0 0.0
    %4080 = vmatpush1.msra.mxu0 0.0
    %4081 = vmatprep.subr.mxu0 0.0
    %4082 = vmatpush1.msra.mxu0 0.0
    %4083 = vmatprep.subr.mxu0 0.0
    %4084 = vmatpush1.msra.mxu0 0.0
    %4085 = vmatprep.subr.mxu0 0.0
    %4086 = vmatpush1.msra.mxu0 0.0
    %4087 = vmatprep.subr.mxu0 0.0
    %4088 = vmatpush1.msra.mxu0 0.0
    %4089 = vmatprep.mubr.f32.mxu0 0.0
    %4090 = vmatmul.mubr.f32.gmra.mrb[0].mxu0 %v4023
    %v4091 = vpop.f32.mrb[0].mxu0
    %v4092 = vadd.f32 %v3916, %v4091
    %v4093 = vpop.f32.mrb[0].mxu0
    %4094 = vdwg.mxu0
    %v4095 = vadd.f32 %v2561, %v4092
    %v4096 = vxor.u32 %v4095, 2147483648
    %v4097 = vmul.f32 %v4096, 1.442695
    %v4098 = vpow.pop %v4097
    %v4099 = vadd.f32 %v4098, 1.0
    %v4100 = vrcp.pop %v4099
    %v4101 = vmul.f32 1.0, %v4100
    %4103 = vrot.lane.b32.xlu0 %v4092, 96
    %v4104 = vpop.permute.xlu0 %4103
    %v4106 = vmul.f32 %v4101, %v4104
    %4108 = vrot.lane.b32.xlu0 %v4106, 32
    %v4109 = vpop.permute.xlu0 %4108
    %v4111 = vadd.f32 %v2561, %v4109
    %v4112 = vtanh.pop %v4111
    %4113 = vset.pattern.permute.xlu0 1
    %4114 = vperm.xlu0 %4113, %v3911
    %v4115 = vpop.permute.xlu0 %4114
    %v4117 = vmul.f32 %v4115, %v4112
    %4118 = vset.pattern.permute.xlu0 1
    %4119 = vperm.xlu0 %4118, %v4012
    %v4120 = vpop.permute.xlu0 %4119
    %v4122 = vmul.f32 %v4120, %v4019
    %v4123 = vadd.f32 %v4117, %v4122
    %4125 = vrot.lane.b32.xlu0 %v4123, 96
    %v4126 = vpop.permute.xlu0 %4125
    %v4127 = vsel %vm362, %v4126, 0
    %4129 = vmatprep.subr.mxu0 0.0
    %4130 = vmatpush1.msra.mxu0 %v185
    %4131 = vmatprep.subr.mxu0 0.0
    %4132 = vmatpush1.msra.mxu0 %v186
    %4133 = vmatprep.subr.mxu0 0.0
    %4134 = vmatpush1.msra.mxu0 %v187
    %4135 = vmatprep.subr.mxu0 0.0
    %4136 = vmatpush1.msra.mxu0 %v188
    %4137 = vmatprep.subr.mxu0 0.0
    %4138 = vmatpush1.msra.mxu0 0.0
    %4139 = vmatprep.subr.mxu0 0.0
    %4140 = vmatpush1.msra.mxu0 0.0
    %4141 = vmatprep.subr.mxu0 0.0
    %4142 = vmatpush1.msra.mxu0 0.0
    %4143 = vmatprep.subr.mxu0 0.0
    %4144 = vmatpush1.msra.mxu0 0.0
    %4145 = vmatprep.subr.mxu0 0.0
    %4146 = vmatpush1.msra.mxu0 0.0
    %4147 = vmatprep.subr.mxu0 0.0
    %4148 = vmatpush1.msra.mxu0 0.0
    %4149 = vmatprep.subr.mxu0 0.0
    %4150 = vmatpush1.msra.mxu0 0.0
    %4151 = vmatprep.subr.mxu0 0.0
    %4152 = vmatpush1.msra.mxu0 0.0
    %4153 = vmatprep.subr.mxu0 0.0
    %4154 = vmatpush1.msra.mxu0 0.0
    %4155 = vmatprep.subr.mxu0 0.0
    %4156 = vmatpush1.msra.mxu0 0.0
    %4157 = vmatprep.subr.mxu0 0.0
    %4158 = vmatpush1.msra.mxu0 0.0
    %4159 = vmatprep.subr.mxu0 0.0
    %4160 = vmatpush1.msra.mxu0 0.0
    %4161 = vmatprep.subr.mxu0 0.0
    %4162 = vmatpush1.msra.mxu0 0.0
    %4163 = vmatprep.subr.mxu0 0.0
    %4164 = vmatpush1.msra.mxu0 0.0
    %4165 = vmatprep.subr.mxu0 0.0
    %4166 = vmatpush1.msra.mxu0 0.0
    %4167 = vmatprep.subr.mxu0 0.0
    %4168 = vmatpush1.msra.mxu0 0.0
    %4169 = vmatprep.subr.mxu0 0.0
    %4170 = vmatpush1.msra.mxu0 0.0
    %4171 = vmatprep.subr.mxu0 0.0
    %4172 = vmatpush1.msra.mxu0 0.0
    %4173 = vmatprep.subr.mxu0 0.0
    %4174 = vmatpush1.msra.mxu0 0.0
    %4175 = vmatprep.subr.mxu0 0.0
    %4176 = vmatpush1.msra.mxu0 0.0
    %4177 = vmatprep.subr.mxu0 0.0
    %4178 = vmatpush1.msra.mxu0 0.0
    %4179 = vmatprep.subr.mxu0 0.0
    %4180 = vmatpush1.msra.mxu0 0.0
    %4181 = vmatprep.subr.mxu0 0.0
    %4182 = vmatpush1.msra.mxu0 0.0
    %4183 = vmatprep.subr.mxu0 0.0
    %4184 = vmatpush1.msra.mxu0 0.0
    %4185 = vmatprep.subr.mxu0 0.0
    %4186 = vmatpush1.msra.mxu0 0.0
    %4187 = vmatprep.subr.mxu0 0.0
    %4188 = vmatpush1.msra.mxu0 0.0
    %4189 = vmatprep.subr.mxu0 0.0
    %4190 = vmatpush1.msra.mxu0 0.0
    %4191 = vmatprep.subr.mxu0 0.0
    %4192 = vmatpush1.msra.mxu0 0.0
    %4193 = vmatprep.mubr.f32.mxu0 0.0
    %4194 = vmatmul.mubr.f32.gmra.mrb[0].mxu0 %v4127
    %v4195 = vpop.f32.mrb[0].mxu0
    %v4196 = vadd.f32 %v3916, %v4195
    %v4197 = vpop.f32.mrb[0].mxu0
    %4198 = vdwg.mxu0
    %v4199 = vadd.f32 %v2637, %v4196
    %v4200 = vxor.u32 %v4199, 2147483648
    %v4201 = vmul.f32 %v4200, 1.442695
    %v4202 = vpow.pop %v4201
    %v4203 = vadd.f32 %v4202, 1.0
    %v4204 = vrcp.pop %v4203
    %v4205 = vmul.f32 1.0, %v4204
    %4207 = vrot.lane.b32.xlu0 %v4196, 96
    %v4208 = vpop.permute.xlu0 %4207
    %v4210 = vmul.f32 %v4205, %v4208
    %4212 = vrot.lane.b32.xlu0 %v4210, 32
    %v4213 = vpop.permute.xlu0 %4212
    %v4215 = vadd.f32 %v2637, %v4213
    %v4216 = vtanh.pop %v4215
    %4217 = vset.pattern.permute.xlu0 2
    %4218 = vperm.xlu0 %4217, %v3911
    %v4219 = vpop.permute.xlu0 %4218
    %v4221 = vmul.f32 %v4219, %v4216
    %4222 = vset.pattern.permute.xlu0 2
    %4223 = vperm.xlu0 %4222, %v4012
    %v4224 = vpop.permute.xlu0 %4223
    %v4226 = vmul.f32 %v4224, %v4123
    %v4227 = vadd.f32 %v4221, %v4226
    %4229 = vrot.lane.b32.xlu0 %v4227, 96
    %v4230 = vpop.permute.xlu0 %4229
    %v4231 = vsel %vm362, %v4230, 0
    %4233 = vmatprep.subr.mxu0 0.0
    %4234 = vmatpush1.msra.mxu0 %v185
    %4235 = vmatprep.subr.mxu0 0.0
    %4236 = vmatpush1.msra.mxu0 %v186
    %4237 = vmatprep.subr.mxu0 0.0
    %4238 = vmatpush1.msra.mxu0 %v187
    %4239 = vmatprep.subr.mxu0 0.0
    %4240 = vmatpush1.msra.mxu0 %v188
    %4241 = vmatprep.subr.mxu0 0.0
    %4242 = vmatpush1.msra.mxu0 0.0
    %4243 = vmatprep.subr.mxu0 0.0
    %4244 = vmatpush1.msra.mxu0 0.0
    %4245 = vmatprep.subr.mxu0 0.0
    %4246 = vmatpush1.msra.mxu0 0.0
    %4247 = vmatprep.subr.mxu0 0.0
    %4248 = vmatpush1.msra.mxu0 0.0
    %4249 = vmatprep.subr.mxu0 0.0
    %4250 = vmatpush1.msra.mxu0 0.0
    %4251 = vmatprep.subr.mxu0 0.0
    %4252 = vmatpush1.msra.mxu0 0.0
    %4253 = vmatprep.subr.mxu0 0.0
    %4254 = vmatpush1.msra.mxu0 0.0
    %4255 = vmatprep.subr.mxu0 0.0
    %4256 = vmatpush1.msra.mxu0 0.0
    %4257 = vmatprep.subr.mxu0 0.0
    %4258 = vmatpush1.msra.mxu0 0.0
    %4259 = vmatprep.subr.mxu0 0.0
    %4260 = vmatpush1.msra.mxu0 0.0
    %4261 = vmatprep.subr.mxu0 0.0
    %4262 = vmatpush1.msra.mxu0 0.0
    %4263 = vmatprep.subr.mxu0 0.0
    %4264 = vmatpush1.msra.mxu0 0.0
    %4265 = vmatprep.subr.mxu0 0.0
    %4266 = vmatpush1.msra.mxu0 0.0
    %4267 = vmatprep.subr.mxu0 0.0
    %4268 = vmatpush1.msra.mxu0 0.0
    %4269 = vmatprep.subr.mxu0 0.0
    %4270 = vmatpush1.msra.mxu0 0.0
    %4271 = vmatprep.subr.mxu0 0.0
    %4272 = vmatpush1.msra.mxu0 0.0
    %4273 = vmatprep.subr.mxu0 0.0
    %4274 = vmatpush1.msra.mxu0 0.0
    %4275 = vmatprep.subr.mxu0 0.0
    %4276 = vmatpush1.msra.mxu0 0.0
    %4277 = vmatprep.subr.mxu0 0.0
    %4278 = vmatpush1.msra.mxu0 0.0
    %4279 = vmatprep.subr.mxu0 0.0
    %4280 = vmatpush1.msra.mxu0 0.0
    %4281 = vmatprep.subr.mxu0 0.0
    %4282 = vmatpush1.msra.mxu0 0.0
    %4283 = vmatprep.subr.mxu0 0.0
    %4284 = vmatpush1.msra.mxu0 0.0
    %4285 = vmatprep.subr.mxu0 0.0
    %4286 = vmatpush1.msra.mxu0 0.0
    %4287 = vmatprep.subr.mxu0 0.0
    %4288 = vmatpush1.msra.mxu0 0.0
    %4289 = vmatprep.subr.mxu0 0.0
    %4290 = vmatpush1.msra.mxu0 0.0
    %4291 = vmatprep.subr.mxu0 0.0
    %4292 = vmatpush1.msra.mxu0 0.0
    %4293 = vmatprep.subr.mxu0 0.0
    %4294 = vmatpush1.msra.mxu0 0.0
    %4295 = vmatprep.subr.mxu0 0.0
    %4296 = vmatpush1.msra.mxu0 0.0
    %4297 = vmatprep.mubr.f32.mxu0 0.0
    %4298 = vmatmul.mubr.f32.gmra.mrb[0].mxu0 %v4231
    %v4299 = vpop.f32.mrb[0].mxu0
    %v4300 = vadd.f32 %v3916, %v4299
    %v4301 = vpop.f32.mrb[0].mxu0
    %4302 = vdwg.mxu0
    %v4303 = vadd.f32 %v2713, %v4300
    %v4304 = vxor.u32 %v4303, 2147483648
    %v4305 = vmul.f32 %v4304, 1.442695
    %v4306 = vpow.pop %v4305
    %v4307 = vadd.f32 %v4306, 1.0
    %v4308 = vrcp.pop %v4307
    %v4309 = vmul.f32 1.0, %v4308
    %4311 = vrot.lane.b32.xlu0 %v4300, 96
    %v4312 = vpop.permute.xlu0 %4311
    %v4314 = vmul.f32 %v4309, %v4312
    %4316 = vrot.lane.b32.xlu0 %v4314, 32
    %v4317 = vpop.permute.xlu0 %4316
    %v4319 = vadd.f32 %v2713, %v4317
    %v4320 = vtanh.pop %v4319
    %4321 = vset.pattern.permute.xlu0 3
    %4322 = vperm.xlu0 %4321, %v3911
    %v4323 = vpop.permute.xlu0 %4322
    %v4325 = vmul.f32 %v4323, %v4320
    %4326 = vset.pattern.permute.xlu0 3
    %4327 = vperm.xlu0 %4326, %v4012
    %v4328 = vpop.permute.xlu0 %4327
    %v4330 = vmul.f32 %v4328, %v4227
    %v4331 = vadd.f32 %v4325, %v4330
    %4333 = vrot.lane.b32.xlu0 %v4331, 96
    %v4334 = vpop.permute.xlu0 %4333
    %v4335 = vsel %vm362, %v4334, 0
    %4337 = vmatprep.subr.mxu0 0.0
    %4338 = vmatpush1.msra.mxu0 %v185
    %4339 = vmatprep.subr.mxu0 0.0
    %4340 = vmatpush1.msra.mxu0 %v186
    %4341 = vmatprep.subr.mxu0 0.0
    %4342 = vmatpush1.msra.mxu0 %v187
    %4343 = vmatprep.subr.mxu0 0.0
    %4344 = vmatpush1.msra.mxu0 %v188
    %4345 = vmatprep.subr.mxu0 0.0
    %4346 = vmatpush1.msra.mxu0 0.0
    %4347 = vmatprep.subr.mxu0 0.0
    %4348 = vmatpush1.msra.mxu0 0.0
    %4349 = vmatprep.subr.mxu0 0.0
    %4350 = vmatpush1.msra.mxu0 0.0
    %4351 = vmatprep.subr.mxu0 0.0
    %4352 = vmatpush1.msra.mxu0 0.0
    %4353 = vmatprep.subr.mxu0 0.0
    %4354 = vmatpush1.msra.mxu0 0.0
    %4355 = vmatprep.subr.mxu0 0.0
    %4356 = vmatpush1.msra.mxu0 0.0
    %4357 = vmatprep.subr.mxu0 0.0
    %4358 = vmatpush1.msra.mxu0 0.0
    %4359 = vmatprep.subr.mxu0 0.0
    %4360 = vmatpush1.msra.mxu0 0.0
    %4361 = vmatprep.subr.mxu0 0.0
    %4362 = vmatpush1.msra.mxu0 0.0
    %4363 = vmatprep.subr.mxu0 0.0
    %4364 = vmatpush1.msra.mxu0 0.0
    %4365 = vmatprep.subr.mxu0 0.0
    %4366 = vmatpush1.msra.mxu0 0.0
    %4367 = vmatprep.subr.mxu0 0.0
    %4368 = vmatpush1.msra.mxu0 0.0
    %4369 = vmatprep.subr.mxu0 0.0
    %4370 = vmatpush1.msra.mxu0 0.0
    %4371 = vmatprep.subr.mxu0 0.0
    %4372 = vmatpush1.msra.mxu0 0.0
    %4373 = vmatprep.subr.mxu0 0.0
    %4374 = vmatpush1.msra.mxu0 0.0
    %4375 = vmatprep.subr.mxu0 0.0
    %4376 = vmatpush1.msra.mxu0 0.0
    %4377 = vmatprep.subr.mxu0 0.0
    %4378 = vmatpush1.msra.mxu0 0.0
    %4379 = vmatprep.subr.mxu0 0.0
    %4380 = vmatpush1.msra.mxu0 0.0
    %4381 = vmatprep.subr.mxu0 0.0
    %4382 = vmatpush1.msra.mxu0 0.0
    %4383 = vmatprep.subr.mxu0 0.0
    %4384 = vmatpush1.msra.mxu0 0.0
    %4385 = vmatprep.subr.mxu0 0.0
    %4386 = vmatpush1.msra.mxu0 0.0
    %4387 = vmatprep.subr.mxu0 0.0
    %4388 = vmatpush1.msra.mxu0 0.0
    %4389 = vmatprep.subr.mxu0 0.0
    %4390 = vmatpush1.msra.mxu0 0.0
    %4391 = vmatprep.subr.mxu0 0.0
    %4392 = vmatpush1.msra.mxu0 0.0
    %4393 = vmatprep.subr.mxu0 0.0
    %4394 = vmatpush1.msra.mxu0 0.0
    %4395 = vmatprep.subr.mxu0 0.0
    %4396 = vmatpush1.msra.mxu0 0.0
    %4397 = vmatprep.subr.mxu0 0.0
    %4398 = vmatpush1.msra.mxu0 0.0
    %4399 = vmatprep.subr.mxu0 0.0
    %4400 = vmatpush1.msra.mxu0 0.0
    %4401 = vmatprep.mubr.f32.mxu0 0.0
    %4402 = vmatmul.mubr.f32.gmra.mrb[0].mxu0 %v4335
    %v4403 = vpop.f32.mrb[0].mxu0
    %v4404 = vadd.f32 %v3916, %v4403
    %v4405 = vpop.f32.mrb[0].mxu0
    %4406 = vdwg.mxu0
    %v4407 = vadd.f32 %v2788, %v4404
    %v4408 = vxor.u32 %v4407, 2147483648
    %v4409 = vmul.f32 %v4408, 1.442695
    %v4410 = vpow.pop %v4409
    %v4411 = vadd.f32 %v4410, 1.0
    %v4412 = vrcp.pop %v4411
    %v4413 = vmul.f32 1.0, %v4412
    %4415 = vrot.lane.b32.xlu0 %v4404, 96
    %v4416 = vpop.permute.xlu0 %4415
    %v4418 = vmul.f32 %v4413, %v4416
    %4420 = vrot.lane.b32.xlu0 %v4418, 32
    %v4421 = vpop.permute.xlu0 %4420
    %v4423 = vadd.f32 %v2788, %v4421
    %v4424 = vtanh.pop %v4423
    %4425 = vset.pattern.permute.xlu0 4
    %4426 = vperm.xlu0 %4425, %v3911
    %v4427 = vpop.permute.xlu0 %4426
    %v4429 = vmul.f32 %v4427, %v4424
    %4430 = vset.pattern.permute.xlu0 4
    %4431 = vperm.xlu0 %4430, %v4012
    %v4432 = vpop.permute.xlu0 %4431
    %v4434 = vmul.f32 %v4432, %v4331
    %v4435 = vadd.f32 %v4429, %v4434
    %4437 = vrot.lane.b32.xlu0 %v4435, 96
    %v4438 = vpop.permute.xlu0 %4437
    %v4439 = vsel %vm362, %v4438, 0
    %4441 = vmatprep.subr.mxu0 0.0
    %4442 = vmatpush1.msra.mxu0 %v185
    %4443 = vmatprep.subr.mxu0 0.0
    %4444 = vmatpush1.msra.mxu0 %v186
    %4445 = vmatprep.subr.mxu0 0.0
    %4446 = vmatpush1.msra.mxu0 %v187
    %4447 = vmatprep.subr.mxu0 0.0
    %4448 = vmatpush1.msra.mxu0 %v188
    %4449 = vmatprep.subr.mxu0 0.0
    %4450 = vmatpush1.msra.mxu0 0.0
    %4451 = vmatprep.subr.mxu0 0.0
    %4452 = vmatpush1.msra.mxu0 0.0
    %4453 = vmatprep.subr.mxu0 0.0
    %4454 = vmatpush1.msra.mxu0 0.0
    %4455 = vmatprep.subr.mxu0 0.0
    %4456 = vmatpush1.msra.mxu0 0.0
    %4457 = vmatprep.subr.mxu0 0.0
    %4458 = vmatpush1.msra.mxu0 0.0
    %4459 = vmatprep.subr.mxu0 0.0
    %4460 = vmatpush1.msra.mxu0 0.0
    %4461 = vmatprep.subr.mxu0 0.0
    %4462 = vmatpush1.msra.mxu0 0.0
    %4463 = vmatprep.subr.mxu0 0.0
    %4464 = vmatpush1.msra.mxu0 0.0
    %4465 = vmatprep.subr.mxu0 0.0
    %4466 = vmatpush1.msra.mxu0 0.0
    %4467 = vmatprep.subr.mxu0 0.0
    %4468 = vmatpush1.msra.mxu0 0.0
    %4469 = vmatprep.subr.mxu0 0.0
    %4470 = vmatpush1.msra.mxu0 0.0
    %4471 = vmatprep.subr.mxu0 0.0
    %4472 = vmatpush1.msra.mxu0 0.0
    %4473 = vmatprep.subr.mxu0 0.0
    %4474 = vmatpush1.msra.mxu0 0.0
    %4475 = vmatprep.subr.mxu0 0.0
    %4476 = vmatpush1.msra.mxu0 0.0
    %4477 = vmatprep.subr.mxu0 0.0
    %4478 = vmatpush1.msra.mxu0 0.0
    %4479 = vmatprep.subr.mxu0 0.0
    %4480 = vmatpush1.msra.mxu0 0.0
    %4481 = vmatprep.subr.mxu0 0.0
    %4482 = vmatpush1.msra.mxu0 0.0
    %4483 = vmatprep.subr.mxu0 0.0
    %4484 = vmatpush1.msra.mxu0 0.0
    %4485 = vmatprep.subr.mxu0 0.0
    %4486 = vmatpush1.msra.mxu0 0.0
    %4487 = vmatprep.subr.mxu0 0.0
    %4488 = vmatpush1.msra.mxu0 0.0
    %4489 = vmatprep.subr.mxu0 0.0
    %4490 = vmatpush1.msra.mxu0 0.0
    %4491 = vmatprep.subr.mxu0 0.0
    %4492 = vmatpush1.msra.mxu0 0.0
    %4493 = vmatprep.subr.mxu0 0.0
    %4494 = vmatpush1.msra.mxu0 0.0
    %4495 = vmatprep.subr.mxu0 0.0
    %4496 = vmatpush1.msra.mxu0 0.0
    %4497 = vmatprep.subr.mxu0 0.0
    %4498 = vmatpush1.msra.mxu0 0.0
    %4499 = vmatprep.subr.mxu0 0.0
    %4500 = vmatpush1.msra.mxu0 0.0
    %4501 = vmatprep.subr.mxu0 0.0
    %4502 = vmatpush1.msra.mxu0 0.0
    %4503 = vmatprep.subr.mxu0 0.0
    %4504 = vmatpush1.msra.mxu0 0.0
    %4505 = vmatprep.mubr.f32.mxu0 0.0
    %4506 = vmatmul.mubr.f32.gmra.mrb[0].mxu0 %v4439
    %v4507 = vpop.f32.mrb[0].mxu0
    %v4508 = vadd.f32 %v3916, %v4507
    %v4509 = vpop.f32.mrb[0].mxu0
    %4510 = vdwg.mxu0
    %v4511 = vadd.f32 %v2864, %v4508
    %v4512 = vxor.u32 %v4511, 2147483648
    %v4513 = vmul.f32 %v4512, 1.442695
    %v4514 = vpow.pop %v4513
    %v4515 = vadd.f32 %v4514, 1.0
    %v4516 = vrcp.pop %v4515
    %v4517 = vmul.f32 1.0, %v4516
    %4519 = vrot.lane.b32.xlu0 %v4508, 96
    %v4520 = vpop.permute.xlu0 %4519
    %v4522 = vmul.f32 %v4517, %v4520
    %4524 = vrot.lane.b32.xlu0 %v4522, 32
    %v4525 = vpop.permute.xlu0 %4524
    %v4527 = vadd.f32 %v2864, %v4525
    %v4528 = vtanh.pop %v4527
    %4529 = vset.pattern.permute.xlu0 5
    %4530 = vperm.xlu0 %4529, %v3911
    %v4531 = vpop.permute.xlu0 %4530
    %v4533 = vmul.f32 %v4531, %v4528
    %4534 = vset.pattern.permute.xlu0 5
    %4535 = vperm.xlu0 %4534, %v4012
    %v4536 = vpop.permute.xlu0 %4535
    %v4538 = vmul.f32 %v4536, %v4435
    %v4539 = vadd.f32 %v4533, %v4538
    %4540 = vrot.lane.b32.xlu0 %v2406, 96
    %v4541 = vpop.permute.xlu0 %4540
    %4543 = vrot.lane.b32.xlu0 %v2406, 32
    %v4544 = vpop.permute.xlu0 %4543
    %v4546 = vsel %vm362, %v4541, %v4539
    %v4547 = vsel %vm2904, %v4546, %v4544
    %v4549 = vlaneseq
    %v4550 = vshrl.u32 %v4549, 7
    %v4551 = vsub.s32 0, %v4550
    %v4552 = vrot.slane %v202, %v4551
    %v4555 = vsel %vm2906, %v4547, 0
    %4557 = vmatprep.subr.mxu0 0.0
    %4558 = vmatpush1.msra.mxu0 %v190
    %4559 = vmatprep.subr.mxu0 0.0
    %4560 = vmatpush1.msra.mxu0 %v191
    %4561 = vmatprep.subr.mxu0 0.0
    %4562 = vmatpush1.msra.mxu0 %v192
    %4563 = vmatprep.subr.mxu0 0.0
    %4564 = vmatpush1.msra.mxu0 %v193
    %4565 = vmatprep.subr.mxu0 0.0
    %4566 = vmatpush1.msra.mxu0 %v194
    %4567 = vmatprep.subr.mxu0 0.0
    %4568 = vmatpush1.msra.mxu0 %v195
    %4569 = vmatprep.subr.mxu0 0.0
    %4570 = vmatpush1.msra.mxu0 %v196
    %4571 = vmatprep.subr.mxu0 0.0
    %4572 = vmatpush1.msra.mxu0 %v197
    %4573 = vmatprep.subr.mxu0 0.0
    %4574 = vmatpush1.msra.mxu0 %v198
    %4575 = vmatprep.subr.mxu0 0.0
    %4576 = vmatpush1.msra.mxu0 %v199
    %4577 = vmatprep.subr.mxu0 0.0
    %4578 = vmatpush1.msra.mxu0 %v200
    %4579 = vmatprep.subr.mxu0 0.0
    %4580 = vmatpush1.msra.mxu0 %v201
    %4581 = vmatprep.subr.mxu0 0.0
    %4582 = vmatpush1.msra.mxu0 0.0
    %4583 = vmatprep.subr.mxu0 0.0
    %4584 = vmatpush1.msra.mxu0 0.0
    %4585 = vmatprep.subr.mxu0 0.0
    %4586 = vmatpush1.msra.mxu0 0.0
    %4587 = vmatprep.subr.mxu0 0.0
    %4588 = vmatpush1.msra.mxu0 0.0
    %4589 = vmatprep.subr.mxu0 0.0
    %4590 = vmatpush1.msra.mxu0 0.0
    %4591 = vmatprep.subr.mxu0 0.0
    %4592 = vmatpush1.msra.mxu0 0.0
    %4593 = vmatprep.subr.mxu0 0.0
    %4594 = vmatpush1.msra.mxu0 0.0
    %4595 = vmatprep.subr.mxu0 0.0
    %4596 = vmatpush1.msra.mxu0 0.0
    %4597 = vmatprep.subr.mxu0 0.0
    %4598 = vmatpush1.msra.mxu0 0.0
    %4599 = vmatprep.subr.mxu0 0.0
    %4600 = vmatpush1.msra.mxu0 0.0
    %4601 = vmatprep.subr.mxu0 0.0
    %4602 = vmatpush1.msra.mxu0 0.0
    %4603 = vmatprep.subr.mxu0 0.0
    %4604 = vmatpush1.msra.mxu0 0.0
    %4605 = vmatprep.subr.mxu0 0.0
    %4606 = vmatpush1.msra.mxu0 0.0
    %4607 = vmatprep.subr.mxu0 0.0
    %4608 = vmatpush1.msra.mxu0 0.0
    %4609 = vmatprep.subr.mxu0 0.0
    %4610 = vmatpush1.msra.mxu0 0.0
    %4611 = vmatprep.subr.mxu0 0.0
    %4612 = vmatpush1.msra.mxu0 0.0
    %4613 = vmatprep.subr.mxu0 0.0
    %4614 = vmatpush1.msra.mxu0 0.0
    %4615 = vmatprep.subr.mxu0 0.0
    %4616 = vmatpush1.msra.mxu0 0.0
    %4617 = vmatprep.subr.mxu0 0.0
    %4618 = vmatpush1.msra.mxu0 0.0
    %4619 = vmatprep.subr.mxu0 0.0
    %4620 = vmatpush1.msra.mxu0 0.0
    %4621 = vmatprep.mubr.f32.mxu0 0.0
    %4622 = vmatmul.mubr.f32.gmra.mrb[0].mxu0 %v4555
    %v4623 = vpop.f32.mrb[0].mxu0
    %v4624 = vadd.f32 %v4552, %v4623
    %v4625 = vpop.f32.mrb[0].mxu0
    %4626 = vdwg.mxu0
    %v4627 = vmax.f32 %v4624, 0.0
    %v4629 = vlaneseq
    %v4630 = vshrl.u32 %v4629, 7
    %v4631 = vsub.s32 0, %v4630
    %v4632 = vrot.slane %v157, %v4631
    %v4635 = vsel %vm362, %v4627, 0
    %4637 = vmatprep.subr.mxu0 0.0
    %4638 = vmatpush1.msra.mxu0 %v153
    %4639 = vmatprep.subr.mxu0 0.0
    %4640 = vmatpush1.msra.mxu0 %v154
    %4641 = vmatprep.subr.mxu0 0.0
    %4642 = vmatpush1.msra.mxu0 %v155
    %4643 = vmatprep.subr.mxu0 0.0
    %4644 = vmatpush1.msra.mxu0 %v156
    %4645 = vmatprep.subr.mxu0 0.0
    %4646 = vmatpush1.msra.mxu0 0.0
    %4647 = vmatprep.subr.mxu0 0.0
    %4648 = vmatpush1.msra.mxu0 0.0
    %4649 = vmatprep.subr.mxu0 0.0
    %4650 = vmatpush1.msra.mxu0 0.0
    %4651 = vmatprep.subr.mxu0 0.0
    %4652 = vmatpush1.msra.mxu0 0.0
    %4653 = vmatprep.subr.mxu0 0.0
    %4654 = vmatpush1.msra.mxu0 0.0
    %4655 = vmatprep.subr.mxu0 0.0
    %4656 = vmatpush1.msra.mxu0 0.0
    %4657 = vmatprep.subr.mxu0 0.0
    %4658 = vmatpush1.msra.mxu0 0.0
    %4659 = vmatprep.subr.mxu0 0.0
    %4660 = vmatpush1.msra.mxu0 0.0
    %4661 = vmatprep.subr.mxu0 0.0
    %4662 = vmatpush1.msra.mxu0 0.0
    %4663 = vmatprep.subr.mxu0 0.0
    %4664 = vmatpush1.msra.mxu0 0.0
    %4665 = vmatprep.subr.mxu0 0.0
    %4666 = vmatpush1.msra.mxu0 0.0
    %4667 = vmatprep.subr.mxu0 0.0
    %4668 = vmatpush1.msra.mxu0 0.0
    %4669 = vmatprep.subr.mxu0 0.0
    %4670 = vmatpush1.msra.mxu0 0.0
    %4671 = vmatprep.subr.mxu0 0.0
    %4672 = vmatpush1.msra.mxu0 0.0
    %4673 = vmatprep.subr.mxu0 0.0
    %4674 = vmatpush1.msra.mxu0 0.0
    %4675 = vmatprep.subr.mxu0 0.0
    %4676 = vmatpush1.msra.mxu0 0.0
    %4677 = vmatprep.subr.mxu0 0.0
    %4678 = vmatpush1.msra.mxu0 0.0
    %4679 = vmatprep.subr.mxu0 0.0
    %4680 = vmatpush1.msra.mxu0 0.0
    %4681 = vmatprep.subr.mxu0 0.0
    %4682 = vmatpush1.msra.mxu0 0.0
    %4683 = vmatprep.subr.mxu0 0.0
    %4684 = vmatpush1.msra.mxu0 0.0
    %4685 = vmatprep.subr.mxu0 0.0
    %4686 = vmatpush1.msra.mxu0 0.0
    %4687 = vmatprep.subr.mxu0 0.0
    %4688 = vmatpush1.msra.mxu0 0.0
    %4689 = vmatprep.subr.mxu0 0.0
    %4690 = vmatpush1.msra.mxu0 0.0
    %4691 = vmatprep.subr.mxu0 0.0
    %4692 = vmatpush1.msra.mxu0 0.0
    %4693 = vmatprep.subr.mxu0 0.0
    %4694 = vmatpush1.msra.mxu0 0.0
    %4695 = vmatprep.subr.mxu0 0.0
    %4696 = vmatpush1.msra.mxu0 0.0
    %4697 = vmatprep.subr.mxu0 0.0
    %4698 = vmatpush1.msra.mxu0 0.0
    %4699 = vmatprep.subr.mxu0 0.0
    %4700 = vmatpush1.msra.mxu0 0.0
    %4701 = vmatprep.mubr.f32.mxu0 0.0
    %4702 = vmatmul.mubr.f32.gmra.mrb[0].mxu0 %v4635
    %v4703 = vpop.f32.mrb[0].mxu0
    %v4704 = vadd.f32 %v4632, %v4703
    %v4705 = vpop.f32.mrb[0].mxu0
    %4706 = vdwg.mxu0
    %v4708 = vlaneseq
    %v4709 = vshrl.u32 %v4708, 7
    %v4710 = vsub.s32 0, %v4709
    %v4711 = vrot.slane %v152, %v4710
    %v4713 = vsel %vm362, %v4541, 0
    %4715 = vmatprep.subr.mxu0 0.0
    %4716 = vmatpush1.msra.mxu0 %v148
    %4717 = vmatprep.subr.mxu0 0.0
    %4718 = vmatpush1.msra.mxu0 %v149
    %4719 = vmatprep.subr.mxu0 0.0
    %4720 = vmatpush1.msra.mxu0 %v150
    %4721 = vmatprep.subr.mxu0 0.0
    %4722 = vmatpush1.msra.mxu0 %v151
    %4723 = vmatprep.subr.mxu0 0.0
    %4724 = vmatpush1.msra.mxu0 0.0
    %4725 = vmatprep.subr.mxu0 0.0
    %4726 = vmatpush1.msra.mxu0 0.0
    %4727 = vmatprep.subr.mxu0 0.0
    %4728 = vmatpush1.msra.mxu0 0.0
    %4729 = vmatprep.subr.mxu0 0.0
    %4730 = vmatpush1.msra.mxu0 0.0
    %4731 = vmatprep.subr.mxu0 0.0
    %4732 = vmatpush1.msra.mxu0 0.0
    %4733 = vmatprep.subr.mxu0 0.0
    %4734 = vmatpush1.msra.mxu0 0.0
    %4735 = vmatprep.subr.mxu0 0.0
    %4736 = vmatpush1.msra.mxu0 0.0
    %4737 = vmatprep.subr.mxu0 0.0
    %4738 = vmatpush1.msra.mxu0 0.0
    %4739 = vmatprep.subr.mxu0 0.0
    %4740 = vmatpush1.msra.mxu0 0.0
    %4741 = vmatprep.subr.mxu0 0.0
    %4742 = vmatpush1.msra.mxu0 0.0
    %4743 = vmatprep.subr.mxu0 0.0
    %4744 = vmatpush1.msra.mxu0 0.0
    %4745 = vmatprep.subr.mxu0 0.0
    %4746 = vmatpush1.msra.mxu0 0.0
    %4747 = vmatprep.subr.mxu0 0.0
    %4748 = vmatpush1.msra.mxu0 0.0
    %4749 = vmatprep.subr.mxu0 0.0
    %4750 = vmatpush1.msra.mxu0 0.0
    %4751 = vmatprep.subr.mxu0 0.0
    %4752 = vmatpush1.msra.mxu0 0.0
    %4753 = vmatprep.subr.mxu0 0.0
    %4754 = vmatpush1.msra.mxu0 0.0
    %4755 = vmatprep.subr.mxu0 0.0
    %4756 = vmatpush1.msra.mxu0 0.0
    %4757 = vmatprep.subr.mxu0 0.0
    %4758 = vmatpush1.msra.mxu0 0.0
    %4759 = vmatprep.subr.mxu0 0.0
    %4760 = vmatpush1.msra.mxu0 0.0
    %4761 = vmatprep.subr.mxu0 0.0
    %4762 = vmatpush1.msra.mxu0 0.0
    %4763 = vmatprep.subr.mxu0 0.0
    %4764 = vmatpush1.msra.mxu0 0.0
    %4765 = vmatprep.subr.mxu0 0.0
    %4766 = vmatpush1.msra.mxu0 0.0
    %4767 = vmatprep.subr.mxu0 0.0
    %4768 = vmatpush1.msra.mxu0 0.0
    %4769 = vmatprep.subr.mxu0 0.0
    %4770 = vmatpush1.msra.mxu0 0.0
    %4771 = vmatprep.subr.mxu0 0.0
    %4772 = vmatpush1.msra.mxu0 0.0
    %4773 = vmatprep.subr.mxu0 0.0
    %4774 = vmatpush1.msra.mxu0 0.0
    %4775 = vmatprep.subr.mxu0 0.0
    %4776 = vmatpush1.msra.mxu0 0.0
    %4777 = vmatprep.subr.mxu0 0.0
    %4778 = vmatpush1.msra.mxu0 0.0
    %4779 = vmatprep.mubr.f32.mxu0 0.0
    %4780 = vmatmul.mubr.f32.gmra.mrb[0].mxu0 %v4713
    %v4781 = vpop.f32.mrb[0].mxu0
    %v4782 = vadd.f32 %v4711, %v4781
    %v4783 = vpop.f32.mrb[0].mxu0
    %4784 = vdwg.mxu0
    %v4785 = vadd.f32 %v4704, %v4782
    %v4786 = vxor.u32 %v4785, 2147483648
    %v4787 = vmul.f32 %v4786, 1.442695
    %v4788 = vpow.pop %v4787
    %v4789 = vadd.f32 %v4788, 1.0
    %v4790 = vrcp.pop %v4789
    %v4791 = vmul.f32 1.0, %v4790
    %4793 = vrot.lane.b32.xlu0 %v4782, 64
    %v4794 = vpop.permute.xlu0 %4793
    %v4796 = vmul.f32 %v4791, %v4794
    %4798 = vrot.lane.b32.xlu0 %v4796, 64
    %v4799 = vpop.permute.xlu0 %4798
    %v4801 = vadd.f32 %v4704, %v4799
    %v4802 = vtanh.pop %v4801
    %v4803 = vsub.f32 1.0, %v4791
    %4805 = vrot.lane.b32.xlu0 %v4802, 96
    %v4806 = vpop.permute.xlu0 %4805
    %v4808 = vmul.f32 %v4803, %v4806
    %v4809 = vmul.f32 %v4791, %v2406
    %v4810 = vadd.f32 %v4808, %v4809
    %v4811 = vmul.f32 %v1785, %v4810
    %v4812 = vsub.f32 %v1785, %v4810
    %v4813 = vand.u32 2147483647, %v4812
    %4815 = vrot.lane.b32.xlu0 %v4813, 64
    %v4816 = vpop.permute.xlu0 %4815
    %v4818 = vsel %vm362, %v2894, %v4811
    %v4819 = vsel %vm2904, %v4818, %v2898
    %v4820 = vsel %vm2906, %v4819, %v4816
    %4821 = vmatprep.subr.mxu0 0.0
    %4822 = vmatpush1.msra.mxu0 %v158
    %4823 = vmatprep.subr.mxu0 0.0
    %4824 = vmatpush1.msra.mxu0 %v159
    %4825 = vmatprep.subr.mxu0 0.0
    %4826 = vmatpush1.msra.mxu0 %v160
    %4827 = vmatprep.subr.mxu0 0.0
    %4828 = vmatpush1.msra.mxu0 %v161
    %4829 = vmatprep.subr.mxu0 0.0
    %4830 = vmatpush1.msra.mxu0 %v162
    %4831 = vmatprep.subr.mxu0 0.0
    %4832 = vmatpush1.msra.mxu0 %v163
    %4833 = vmatprep.subr.mxu0 0.0
    %4834 = vmatpush1.msra.mxu0 %v164
    %4835 = vmatprep.subr.mxu0 0.0
    %4836 = vmatpush1.msra.mxu0 %v165
    %4837 = vmatprep.subr.mxu0 0.0
    %4838 = vmatpush1.msra.mxu0 %v166
    %4839 = vmatprep.subr.mxu0 0.0
    %4840 = vmatpush1.msra.mxu0 %v167
    %4841 = vmatprep.subr.mxu0 0.0
    %4842 = vmatpush1.msra.mxu0 %v168
    %4843 = vmatprep.subr.mxu0 0.0
    %4844 = vmatpush1.msra.mxu0 %v169
    %4845 = vmatprep.subr.mxu0 0.0
    %4846 = vmatpush1.msra.mxu0 %v170
    %4847 = vmatprep.subr.mxu0 0.0
    %4848 = vmatpush1.msra.mxu0 %v171
    %4849 = vmatprep.subr.mxu0 0.0
    %4850 = vmatpush1.msra.mxu0 %v172
    %4851 = vmatprep.subr.mxu0 0.0
    %4852 = vmatpush1.msra.mxu0 %v173
    %4853 = vmatprep.subr.mxu0 0.0
    %4854 = vmatpush1.msra.mxu0 0.0
    %4855 = vmatprep.subr.mxu0 0.0
    %4856 = vmatpush1.msra.mxu0 0.0
    %4857 = vmatprep.subr.mxu0 0.0
    %4858 = vmatpush1.msra.mxu0 0.0
    %4859 = vmatprep.subr.mxu0 0.0
    %4860 = vmatpush1.msra.mxu0 0.0
    %4861 = vmatprep.subr.mxu0 0.0
    %4862 = vmatpush1.msra.mxu0 0.0
    %4863 = vmatprep.subr.mxu0 0.0
    %4864 = vmatpush1.msra.mxu0 0.0
    %4865 = vmatprep.subr.mxu0 0.0
    %4866 = vmatpush1.msra.mxu0 0.0
    %4867 = vmatprep.subr.mxu0 0.0
    %4868 = vmatpush1.msra.mxu0 0.0
    %4869 = vmatprep.subr.mxu0 0.0
    %4870 = vmatpush1.msra.mxu0 0.0
    %4871 = vmatprep.subr.mxu0 0.0
    %4872 = vmatpush1.msra.mxu0 0.0
    %4873 = vmatprep.subr.mxu0 0.0
    %4874 = vmatpush1.msra.mxu0 0.0
    %4875 = vmatprep.subr.mxu0 0.0
    %4876 = vmatpush1.msra.mxu0 0.0
    %4877 = vmatprep.subr.mxu0 0.0
    %4878 = vmatpush1.msra.mxu0 0.0
    %4879 = vmatprep.subr.mxu0 0.0
    %4880 = vmatpush1.msra.mxu0 0.0
    %4881 = vmatprep.subr.mxu0 0.0
    %4882 = vmatpush1.msra.mxu0 0.0
    %4883 = vmatprep.subr.mxu0 0.0
    %4884 = vmatpush1.msra.mxu0 0.0
    %4885 = vmatprep.mubr.f32.mxu0 0.0
    %4886 = vmatmul.mubr.f32.gmra.mrb[0].mxu0 %v4820
    %v4887 = vpop.f32.mrb[0].mxu0
    %v4888 = vadd.f32 %v2912, %v4887
    %v4889 = vpop.f32.mrb[0].mxu0
    %4890 = vdwg.mxu0
    %v4891 = vtanh.pop %v4888
    %v4893 = vsel %vm362, %v4891, 0
    %4895 = vmatprep.subr.mxu0 0.0
    %4896 = vmatpush1.msra.mxu0 %v175
    %4897 = vmatprep.subr.mxu0 0.0
    %4898 = vmatpush1.msra.mxu0 %v176
    %4899 = vmatprep.subr.mxu0 0.0
    %4900 = vmatpush1.msra.mxu0 %v177
    %4901 = vmatprep.subr.mxu0 0.0
    %4902 = vmatpush1.msra.mxu0 %v178
    %4903 = vmatprep.subr.mxu0 0.0
    %4904 = vmatpush1.msra.mxu0 0.0
    %4905 = vmatprep.subr.mxu0 0.0
    %4906 = vmatpush1.msra.mxu0 0.0
    %4907 = vmatprep.subr.mxu0 0.0
    %4908 = vmatpush1.msra.mxu0 0.0
    %4909 = vmatprep.subr.mxu0 0.0
    %4910 = vmatpush1.msra.mxu0 0.0
    %4911 = vmatprep.subr.mxu0 0.0
    %4912 = vmatpush1.msra.mxu0 0.0
    %4913 = vmatprep.subr.mxu0 0.0
    %4914 = vmatpush1.msra.mxu0 0.0
    %4915 = vmatprep.subr.mxu0 0.0
    %4916 = vmatpush1.msra.mxu0 0.0
    %4917 = vmatprep.subr.mxu0 0.0
    %4918 = vmatpush1.msra.mxu0 0.0
    %4919 = vmatprep.subr.mxu0 0.0
    %4920 = vmatpush1.msra.mxu0 0.0
    %4921 = vmatprep.subr.mxu0 0.0
    %4922 = vmatpush1.msra.mxu0 0.0
    %4923 = vmatprep.subr.mxu0 0.0
    %4924 = vmatpush1.msra.mxu0 0.0
    %4925 = vmatprep.subr.mxu0 0.0
    %4926 = vmatpush1.msra.mxu0 0.0
    %4927 = vmatprep.subr.mxu0 0.0
    %4928 = vmatpush1.msra.mxu0 0.0
    %4929 = vmatprep.subr.mxu0 0.0
    %4930 = vmatpush1.msra.mxu0 0.0
    %4931 = vmatprep.subr.mxu0 0.0
    %4932 = vmatpush1.msra.mxu0 0.0
    %4933 = vmatprep.subr.mxu0 0.0
    %4934 = vmatpush1.msra.mxu0 0.0
    %4935 = vmatprep.subr.mxu0 0.0
    %4936 = vmatpush1.msra.mxu0 0.0
    %4937 = vmatprep.subr.mxu0 0.0
    %4938 = vmatpush1.msra.mxu0 0.0
    %4939 = vmatprep.subr.mxu0 0.0
    %4940 = vmatpush1.msra.mxu0 0.0
    %4941 = vmatprep.subr.mxu0 0.0
    %4942 = vmatpush1.msra.mxu0 0.0
    %4943 = vmatprep.subr.mxu0 0.0
    %4944 = vmatpush1.msra.mxu0 0.0
    %4945 = vmatprep.subr.mxu0 0.0
    %4946 = vmatpush1.msra.mxu0 0.0
    %4947 = vmatprep.subr.mxu0 0.0
    %4948 = vmatpush1.msra.mxu0 0.0
    %4949 = vmatprep.subr.mxu0 0.0
    %4950 = vmatpush1.msra.mxu0 0.0
    %4951 = vmatprep.subr.mxu0 0.0
    %4952 = vmatpush1.msra.mxu0 0.0
    %4953 = vmatprep.subr.mxu0 0.0
    %4954 = vmatpush1.msra.mxu0 0.0
    %4955 = vmatprep.subr.mxu0 0.0
    %4956 = vmatpush1.msra.mxu0 0.0
    %4957 = vmatprep.subr.mxu0 0.0
    %4958 = vmatpush1.msra.mxu0 0.0
    %4959 = vmatprep.mubr.f32.mxu0 0.0
    %4960 = vmatmul.mubr.f32.gmra.mrb[0].mxu0 %v4893
    %v4961 = vpop.f32.mrb[0].mxu0
    %v4962 = vadd.f32 0.0, %v4961
    %v4963 = vpop.f32.mrb[0].mxu0
    %4964 = vdwg.mxu0
    %v4966 = vrot.slane %v4810, 6
    %v4968 = vmul.f32 %v1786, %v4966
    %v4969 = vsub.f32 %v1786, %v4966
    %v4970 = vand.u32 2147483647, %v4969
    %4972 = vrot.lane.b32.xlu0 %v4970, 64
    %v4973 = vpop.permute.xlu0 %4972
    %v4975 = vsel %vm362, %v3060, %v4968
    %v4976 = vsel %vm2904, %v4975, %v3064
    %v4977 = vsel %vm2906, %v4976, %v4973
    %v4979 = vrot.slane %v4977, 2
    %4981 = vmatprep.subr.mxu0 0.0
    %4982 = vmatpush1.msra.mxu0 %v158
    %4983 = vmatprep.subr.mxu0 0.0
    %4984 = vmatpush1.msra.mxu0 %v159
    %4985 = vmatprep.subr.mxu0 0.0
    %4986 = vmatpush1.msra.mxu0 %v160
    %4987 = vmatprep.subr.mxu0 0.0
    %4988 = vmatpush1.msra.mxu0 %v161
    %4989 = vmatprep.subr.mxu0 0.0
    %4990 = vmatpush1.msra.mxu0 %v162
    %4991 = vmatprep.subr.mxu0 0.0
    %4992 = vmatpush1.msra.mxu0 %v163
    %4993 = vmatprep.subr.mxu0 0.0
    %4994 = vmatpush1.msra.mxu0 %v164
    %4995 = vmatprep.subr.mxu0 0.0
    %4996 = vmatpush1.msra.mxu0 %v165
    %4997 = vmatprep.subr.mxu0 0.0
    %4998 = vmatpush1.msra.mxu0 %v166
    %4999 = vmatprep.subr.mxu0 0.0
    %5000 = vmatpush1.msra.mxu0 %v167
    %5001 = vmatprep.subr.mxu0 0.0
    %5002 = vmatpush1.msra.mxu0 %v168
    %5003 = vmatprep.subr.mxu0 0.0
    %5004 = vmatpush1.msra.mxu0 %v169
    %5005 = vmatprep.subr.mxu0 0.0
    %5006 = vmatpush1.msra.mxu0 %v170
    %5007 = vmatprep.subr.mxu0 0.0
    %5008 = vmatpush1.msra.mxu0 %v171
    %5009 = vmatprep.subr.mxu0 0.0
    %5010 = vmatpush1.msra.mxu0 %v172
    %5011 = vmatprep.subr.mxu0 0.0
    %5012 = vmatpush1.msra.mxu0 %v173
    %5013 = vmatprep.subr.mxu0 0.0
    %5014 = vmatpush1.msra.mxu0 0.0
    %5015 = vmatprep.subr.mxu0 0.0
    %5016 = vmatpush1.msra.mxu0 0.0
    %5017 = vmatprep.subr.mxu0 0.0
    %5018 = vmatpush1.msra.mxu0 0.0
    %5019 = vmatprep.subr.mxu0 0.0
    %5020 = vmatpush1.msra.mxu0 0.0
    %5021 = vmatprep.subr.mxu0 0.0
    %5022 = vmatpush1.msra.mxu0 0.0
    %5023 = vmatprep.subr.mxu0 0.0
    %5024 = vmatpush1.msra.mxu0 0.0
    %5025 = vmatprep.subr.mxu0 0.0
    %5026 = vmatpush1.msra.mxu0 0.0
    %5027 = vmatprep.subr.mxu0 0.0
    %5028 = vmatpush1.msra.mxu0 0.0
    %5029 = vmatprep.subr.mxu0 0.0
    %5030 = vmatpush1.msra.mxu0 0.0
    %5031 = vmatprep.subr.mxu0 0.0
    %5032 = vmatpush1.msra.mxu0 0.0
    %5033 = vmatprep.subr.mxu0 0.0
    %5034 = vmatpush1.msra.mxu0 0.0
    %5035 = vmatprep.subr.mxu0 0.0
    %5036 = vmatpush1.msra.mxu0 0.0
    %5037 = vmatprep.subr.mxu0 0.0
    %5038 = vmatpush1.msra.mxu0 0.0
    %5039 = vmatprep.subr.mxu0 0.0
    %5040 = vmatpush1.msra.mxu0 0.0
    %5041 = vmatprep.subr.mxu0 0.0
    %5042 = vmatpush1.msra.mxu0 0.0
    %5043 = vmatprep.subr.mxu0 0.0
    %5044 = vmatpush1.msra.mxu0 0.0
    %5045 = vmatprep.mubr.f32.mxu0 0.0
    %5046 = vmatmul.mubr.f32.gmra.mrb[0].mxu0 %v4979
    %v5047 = vpop.f32.mrb[0].mxu0
    %v5048 = vadd.f32 %v2912, %v5047
    %v5049 = vpop.f32.mrb[0].mxu0
    %5050 = vdwg.mxu0
    %v5051 = vtanh.pop %v5048
    %v5053 = vsel %vm362, %v5051, 0
    %5055 = vmatprep.subr.mxu0 0.0
    %5056 = vmatpush1.msra.mxu0 %v175
    %5057 = vmatprep.subr.mxu0 0.0
    %5058 = vmatpush1.msra.mxu0 %v176
    %5059 = vmatprep.subr.mxu0 0.0
    %5060 = vmatpush1.msra.mxu0 %v177
    %5061 = vmatprep.subr.mxu0 0.0
    %5062 = vmatpush1.msra.mxu0 %v178
    %5063 = vmatprep.subr.mxu0 0.0
    %5064 = vmatpush1.msra.mxu0 0.0
    %5065 = vmatprep.subr.mxu0 0.0
    %5066 = vmatpush1.msra.mxu0 0.0
    %5067 = vmatprep.subr.mxu0 0.0
    %5068 = vmatpush1.msra.mxu0 0.0
    %5069 = vmatprep.subr.mxu0 0.0
    %5070 = vmatpush1.msra.mxu0 0.0
    %5071 = vmatprep.subr.mxu0 0.0
    %5072 = vmatpush1.msra.mxu0 0.0
    %5073 = vmatprep.subr.mxu0 0.0
    %5074 = vmatpush1.msra.mxu0 0.0
    %5075 = vmatprep.subr.mxu0 0.0
    %5076 = vmatpush1.msra.mxu0 0.0
    %5077 = vmatprep.subr.mxu0 0.0
    %5078 = vmatpush1.msra.mxu0 0.0
    %5079 = vmatprep.subr.mxu0 0.0
    %5080 = vmatpush1.msra.mxu0 0.0
    %5081 = vmatprep.subr.mxu0 0.0
    %5082 = vmatpush1.msra.mxu0 0.0
    %5083 = vmatprep.subr.mxu0 0.0
    %5084 = vmatpush1.msra.mxu0 0.0
    %5085 = vmatprep.subr.mxu0 0.0
    %5086 = vmatpush1.msra.mxu0 0.0
    %5087 = vmatprep.subr.mxu0 0.0
    %5088 = vmatpush1.msra.mxu0 0.0
    %5089 = vmatprep.subr.mxu0 0.0
    %5090 = vmatpush1.msra.mxu0 0.0
    %5091 = vmatprep.subr.mxu0 0.0
    %5092 = vmatpush1.msra.mxu0 0.0
    %5093 = vmatprep.subr.mxu0 0.0
    %5094 = vmatpush1.msra.mxu0 0.0
    %5095 = vmatprep.subr.mxu0 0.0
    %5096 = vmatpush1.msra.mxu0 0.0
    %5097 = vmatprep.subr.mxu0 0.0
    %5098 = vmatpush1.msra.mxu0 0.0
    %5099 = vmatprep.subr.mxu0 0.0
    %5100 = vmatpush1.msra.mxu0 0.0
    %5101 = vmatprep.subr.mxu0 0.0
    %5102 = vmatpush1.msra.mxu0 0.0
    %5103 = vmatprep.subr.mxu0 0.0
    %5104 = vmatpush1.msra.mxu0 0.0
    %5105 = vmatprep.subr.mxu0 0.0
    %5106 = vmatpush1.msra.mxu0 0.0
    %5107 = vmatprep.subr.mxu0 0.0
    %5108 = vmatpush1.msra.mxu0 0.0
    %5109 = vmatprep.subr.mxu0 0.0
    %5110 = vmatpush1.msra.mxu0 0.0
    %5111 = vmatprep.subr.mxu0 0.0
    %5112 = vmatpush1.msra.mxu0 0.0
    %5113 = vmatprep.subr.mxu0 0.0
    %5114 = vmatpush1.msra.mxu0 0.0
    %5115 = vmatprep.subr.mxu0 0.0
    %5116 = vmatpush1.msra.mxu0 0.0
    %5117 = vmatprep.subr.mxu0 0.0
    %5118 = vmatpush1.msra.mxu0 0.0
    %5119 = vmatprep.mubr.f32.mxu0 0.0
    %5120 = vmatmul.mubr.f32.gmra.mrb[0].mxu0 %v5053
    %v5121 = vpop.f32.mrb[0].mxu0
    %v5122 = vadd.f32 0.0, %v5121
    %v5123 = vpop.f32.mrb[0].mxu0
    %5124 = vdwg.mxu0
    %v5125 = vrot.slane %v4810, 4
    %v5127 = vmul.f32 %v1787, %v5125
    %v5128 = vsub.f32 %v1787, %v5125
    %v5129 = vand.u32 2147483647, %v5128
    %5131 = vrot.lane.b32.xlu0 %v5129, 64
    %v5132 = vpop.permute.xlu0 %5131
    %v5134 = vsel %vm362, %v3221, %v5127
    %v5135 = vsel %vm2904, %v5134, %v3225
    %v5136 = vsel %vm2906, %v5135, %v5132
    %v5138 = vrot.slane %v5136, 4
    %5140 = vmatprep.subr.mxu0 0.0
    %5141 = vmatpush1.msra.mxu0 %v158
    %5142 = vmatprep.subr.mxu0 0.0
    %5143 = vmatpush1.msra.mxu0 %v159
    %5144 = vmatprep.subr.mxu0 0.0
    %5145 = vmatpush1.msra.mxu0 %v160
    %5146 = vmatprep.subr.mxu0 0.0
    %5147 = vmatpush1.msra.mxu0 %v161
    %5148 = vmatprep.subr.mxu0 0.0
    %5149 = vmatpush1.msra.mxu0 %v162
    %5150 = vmatprep.subr.mxu0 0.0
    %5151 = vmatpush1.msra.mxu0 %v163
    %5152 = vmatprep.subr.mxu0 0.0
    %5153 = vmatpush1.msra.mxu0 %v164
    %5154 = vmatprep.subr.mxu0 0.0
    %5155 = vmatpush1.msra.mxu0 %v165
    %5156 = vmatprep.subr.mxu0 0.0
    %5157 = vmatpush1.msra.mxu0 %v166
    %5158 = vmatprep.subr.mxu0 0.0
    %5159 = vmatpush1.msra.mxu0 %v167
    %5160 = vmatprep.subr.mxu0 0.0
    %5161 = vmatpush1.msra.mxu0 %v168
    %5162 = vmatprep.subr.mxu0 0.0
    %5163 = vmatpush1.msra.mxu0 %v169
    %5164 = vmatprep.subr.mxu0 0.0
    %5165 = vmatpush1.msra.mxu0 %v170
    %5166 = vmatprep.subr.mxu0 0.0
    %5167 = vmatpush1.msra.mxu0 %v171
    %5168 = vmatprep.subr.mxu0 0.0
    %5169 = vmatpush1.msra.mxu0 %v172
    %5170 = vmatprep.subr.mxu0 0.0
    %5171 = vmatpush1.msra.mxu0 %v173
    %5172 = vmatprep.subr.mxu0 0.0
    %5173 = vmatpush1.msra.mxu0 0.0
    %5174 = vmatprep.subr.mxu0 0.0
    %5175 = vmatpush1.msra.mxu0 0.0
    %5176 = vmatprep.subr.mxu0 0.0
    %5177 = vmatpush1.msra.mxu0 0.0
    %5178 = vmatprep.subr.mxu0 0.0
    %5179 = vmatpush1.msra.mxu0 0.0
    %5180 = vmatprep.subr.mxu0 0.0
    %5181 = vmatpush1.msra.mxu0 0.0
    %5182 = vmatprep.subr.mxu0 0.0
    %5183 = vmatpush1.msra.mxu0 0.0
    %5184 = vmatprep.subr.mxu0 0.0
    %5185 = vmatpush1.msra.mxu0 0.0
    %5186 = vmatprep.subr.mxu0 0.0
    %5187 = vmatpush1.msra.mxu0 0.0
    %5188 = vmatprep.subr.mxu0 0.0
    %5189 = vmatpush1.msra.mxu0 0.0
    %5190 = vmatprep.subr.mxu0 0.0
    %5191 = vmatpush1.msra.mxu0 0.0
    %5192 = vmatprep.subr.mxu0 0.0
    %5193 = vmatpush1.msra.mxu0 0.0
    %5194 = vmatprep.subr.mxu0 0.0
    %5195 = vmatpush1.msra.mxu0 0.0
    %5196 = vmatprep.subr.mxu0 0.0
    %5197 = vmatpush1.msra.mxu0 0.0
    %5198 = vmatprep.subr.mxu0 0.0
    %5199 = vmatpush1.msra.mxu0 0.0
    %5200 = vmatprep.subr.mxu0 0.0
    %5201 = vmatpush1.msra.mxu0 0.0
    %5202 = vmatprep.subr.mxu0 0.0
    %5203 = vmatpush1.msra.mxu0 0.0
    %5204 = vmatprep.mubr.f32.mxu0 0.0
    %5205 = vmatmul.mubr.f32.gmra.mrb[0].mxu0 %v5138
    %v5206 = vpop.f32.mrb[0].mxu0
    %v5207 = vadd.f32 %v2912, %v5206
    %v5208 = vpop.f32.mrb[0].mxu0
    %5209 = vdwg.mxu0
    %v5210 = vtanh.pop %v5207
    %v5212 = vsel %vm362, %v5210, 0
    %5214 = vmatprep.subr.mxu0 0.0
    %5215 = vmatpush1.msra.mxu0 %v175
    %5216 = vmatprep.subr.mxu0 0.0
    %5217 = vmatpush1.msra.mxu0 %v176
    %5218 = vmatprep.subr.mxu0 0.0
    %5219 = vmatpush1.msra.mxu0 %v177
    %5220 = vmatprep.subr.mxu0 0.0
    %5221 = vmatpush1.msra.mxu0 %v178
    %5222 = vmatprep.subr.mxu0 0.0
    %5223 = vmatpush1.msra.mxu0 0.0
    %5224 = vmatprep.subr.mxu0 0.0
    %5225 = vmatpush1.msra.mxu0 0.0
    %5226 = vmatprep.subr.mxu0 0.0
    %5227 = vmatpush1.msra.mxu0 0.0
    %5228 = vmatprep.subr.mxu0 0.0
    %5229 = vmatpush1.msra.mxu0 0.0
    %5230 = vmatprep.subr.mxu0 0.0
    %5231 = vmatpush1.msra.mxu0 0.0
    %5232 = vmatprep.subr.mxu0 0.0
    %5233 = vmatpush1.msra.mxu0 0.0
    %5234 = vmatprep.subr.mxu0 0.0
    %5235 = vmatpush1.msra.mxu0 0.0
    %5236 = vmatprep.subr.mxu0 0.0
    %5237 = vmatpush1.msra.mxu0 0.0
    %5238 = vmatprep.subr.mxu0 0.0
    %5239 = vmatpush1.msra.mxu0 0.0
    %5240 = vmatprep.subr.mxu0 0.0
    %5241 = vmatpush1.msra.mxu0 0.0
    %5242 = vmatprep.subr.mxu0 0.0
    %5243 = vmatpush1.msra.mxu0 0.0
    %5244 = vmatprep.subr.mxu0 0.0
    %5245 = vmatpush1.msra.mxu0 0.0
    %5246 = vmatprep.subr.mxu0 0.0
    %5247 = vmatpush1.msra.mxu0 0.0
    %5248 = vmatprep.subr.mxu0 0.0
    %5249 = vmatpush1.msra.mxu0 0.0
    %5250 = vmatprep.subr.mxu0 0.0
    %5251 = vmatpush1.msra.mxu0 0.0
    %5252 = vmatprep.subr.mxu0 0.0
    %5253 = vmatpush1.msra.mxu0 0.0
    %5254 = vmatprep.subr.mxu0 0.0
    %5255 = vmatpush1.msra.mxu0 0.0
    %5256 = vmatprep.subr.mxu0 0.0
    %5257 = vmatpush1.msra.mxu0 0.0
    %5258 = vmatprep.subr.mxu0 0.0
    %5259 = vmatpush1.msra.mxu0 0.0
    %5260 = vmatprep.subr.mxu0 0.0
    %5261 = vmatpush1.msra.mxu0 0.0
    %5262 = vmatprep.subr.mxu0 0.0
    %5263 = vmatpush1.msra.mxu0 0.0
    %5264 = vmatprep.subr.mxu0 0.0
    %5265 = vmatpush1.msra.mxu0 0.0
    %5266 = vmatprep.subr.mxu0 0.0
    %5267 = vmatpush1.msra.mxu0 0.0
    %5268 = vmatprep.subr.mxu0 0.0
    %5269 = vmatpush1.msra.mxu0 0.0
    %5270 = vmatprep.subr.mxu0 0.0
    %5271 = vmatpush1.msra.mxu0 0.0
    %5272 = vmatprep.subr.mxu0 0.0
    %5273 = vmatpush1.msra.mxu0 0.0
    %5274 = vmatprep.subr.mxu0 0.0
    %5275 = vmatpush1.msra.mxu0 0.0
    %5276 = vmatprep.subr.mxu0 0.0
    %5277 = vmatpush1.msra.mxu0 0.0
    %5278 = vmatprep.mubr.f32.mxu0 0.0
    %5279 = vmatmul.mubr.f32.gmra.mrb[0].mxu0 %v5212
    %v5280 = vpop.f32.mrb[0].mxu0
    %v5281 = vadd.f32 0.0, %v5280
    %v5282 = vpop.f32.mrb[0].mxu0
    %5283 = vdwg.mxu0
    %v5284 = vrot.slane %v4810, 2
    %v5286 = vmul.f32 %v1788, %v5284
    %v5287 = vsub.f32 %v1788, %v5284
    %v5288 = vand.u32 2147483647, %v5287
    %5290 = vrot.lane.b32.xlu0 %v5288, 64
    %v5291 = vpop.permute.xlu0 %5290
    %v5293 = vsel %vm362, %v3382, %v5286
    %v5294 = vsel %vm2904, %v5293, %v3386
    %v5295 = vsel %vm2906, %v5294, %v5291
    %v5297 = vrot.slane %v5295, 6
    %5299 = vmatprep.subr.mxu0 0.0
    %5300 = vmatpush1.msra.mxu0 %v158
    %5301 = vmatprep.subr.mxu0 0.0
    %5302 = vmatpush1.msra.mxu0 %v159
    %5303 = vmatprep.subr.mxu0 0.0
    %5304 = vmatpush1.msra.mxu0 %v160
    %5305 = vmatprep.subr.mxu0 0.0
    %5306 = vmatpush1.msra.mxu0 %v161
    %5307 = vmatprep.subr.mxu0 0.0
    %5308 = vmatpush1.msra.mxu0 %v162
    %5309 = vmatprep.subr.mxu0 0.0
    %5310 = vmatpush1.msra.mxu0 %v163
    %5311 = vmatprep.subr.mxu0 0.0
    %5312 = vmatpush1.msra.mxu0 %v164
    %5313 = vmatprep.subr.mxu0 0.0
    %5314 = vmatpush1.msra.mxu0 %v165
    %5315 = vmatprep.subr.mxu0 0.0
    %5316 = vmatpush1.msra.mxu0 %v166
    %5317 = vmatprep.subr.mxu0 0.0
    %5318 = vmatpush1.msra.mxu0 %v167
    %5319 = vmatprep.subr.mxu0 0.0
    %5320 = vmatpush1.msra.mxu0 %v168
    %5321 = vmatprep.subr.mxu0 0.0
    %5322 = vmatpush1.msra.mxu0 %v169
    %5323 = vmatprep.subr.mxu0 0.0
    %5324 = vmatpush1.msra.mxu0 %v170
    %5325 = vmatprep.subr.mxu0 0.0
    %5326 = vmatpush1.msra.mxu0 %v171
    %5327 = vmatprep.subr.mxu0 0.0
    %5328 = vmatpush1.msra.mxu0 %v172
    %5329 = vmatprep.subr.mxu0 0.0
    %5330 = vmatpush1.msra.mxu0 %v173
    %5331 = vmatprep.subr.mxu0 0.0
    %5332 = vmatpush1.msra.mxu0 0.0
    %5333 = vmatprep.subr.mxu0 0.0
    %5334 = vmatpush1.msra.mxu0 0.0
    %5335 = vmatprep.subr.mxu0 0.0
    %5336 = vmatpush1.msra.mxu0 0.0
    %5337 = vmatprep.subr.mxu0 0.0
    %5338 = vmatpush1.msra.mxu0 0.0
    %5339 = vmatprep.subr.mxu0 0.0
    %5340 = vmatpush1.msra.mxu0 0.0
    %5341 = vmatprep.subr.mxu0 0.0
    %5342 = vmatpush1.msra.mxu0 0.0
    %5343 = vmatprep.subr.mxu0 0.0
    %5344 = vmatpush1.msra.mxu0 0.0
    %5345 = vmatprep.subr.mxu0 0.0
    %5346 = vmatpush1.msra.mxu0 0.0
    %5347 = vmatprep.subr.mxu0 0.0
    %5348 = vmatpush1.msra.mxu0 0.0
    %5349 = vmatprep.subr.mxu0 0.0
    %5350 = vmatpush1.msra.mxu0 0.0
    %5351 = vmatprep.subr.mxu0 0.0
    %5352 = vmatpush1.msra.mxu0 0.0
    %5353 = vmatprep.subr.mxu0 0.0
    %5354 = vmatpush1.msra.mxu0 0.0
    %5355 = vmatprep.subr.mxu0 0.0
    %5356 = vmatpush1.msra.mxu0 0.0
    %5357 = vmatprep.subr.mxu0 0.0
    %5358 = vmatpush1.msra.mxu0 0.0
    %5359 = vmatprep.subr.mxu0 0.0
    %5360 = vmatpush1.msra.mxu0 0.0
    %5361 = vmatprep.subr.mxu0 0.0
    %5362 = vmatpush1.msra.mxu0 0.0
    %5363 = vmatprep.mubr.f32.mxu0 0.0
    %5364 = vmatmul.mubr.f32.gmra.mrb[0].mxu0 %v5297
    %v5365 = vpop.f32.mrb[0].mxu0
    %v5366 = vadd.f32 %v2912, %v5365
    %v5367 = vpop.f32.mrb[0].mxu0
    %5368 = vdwg.mxu0
    %v5369 = vtanh.pop %v5366
    %v5371 = vsel %vm362, %v5369, 0
    %5373 = vmatprep.subr.mxu0 0.0
    %5374 = vmatpush1.msra.mxu0 %v175
    %5375 = vmatprep.subr.mxu0 0.0
    %5376 = vmatpush1.msra.mxu0 %v176
    %5377 = vmatprep.subr.mxu0 0.0
    %5378 = vmatpush1.msra.mxu0 %v177
    %5379 = vmatprep.subr.mxu0 0.0
    %5380 = vmatpush1.msra.mxu0 %v178
    %5381 = vmatprep.subr.mxu0 0.0
    %5382 = vmatpush1.msra.mxu0 0.0
    %5383 = vmatprep.subr.mxu0 0.0
    %5384 = vmatpush1.msra.mxu0 0.0
    %5385 = vmatprep.subr.mxu0 0.0
    %5386 = vmatpush1.msra.mxu0 0.0
    %5387 = vmatprep.subr.mxu0 0.0
    %5388 = vmatpush1.msra.mxu0 0.0
    %5389 = vmatprep.subr.mxu0 0.0
    %5390 = vmatpush1.msra.mxu0 0.0
    %5391 = vmatprep.subr.mxu0 0.0
    %5392 = vmatpush1.msra.mxu0 0.0
    %5393 = vmatprep.subr.mxu0 0.0
    %5394 = vmatpush1.msra.mxu0 0.0
    %5395 = vmatprep.subr.mxu0 0.0
    %5396 = vmatpush1.msra.mxu0 0.0
    %5397 = vmatprep.subr.mxu0 0.0
    %5398 = vmatpush1.msra.mxu0 0.0
    %5399 = vmatprep.subr.mxu0 0.0
    %5400 = vmatpush1.msra.mxu0 0.0
    %5401 = vmatprep.subr.mxu0 0.0
    %5402 = vmatpush1.msra.mxu0 0.0
    %5403 = vmatprep.subr.mxu0 0.0
    %5404 = vmatpush1.msra.mxu0 0.0
    %5405 = vmatprep.subr.mxu0 0.0
    %5406 = vmatpush1.msra.mxu0 0.0
    %5407 = vmatprep.subr.mxu0 0.0
    %5408 = vmatpush1.msra.mxu0 0.0
    %5409 = vmatprep.subr.mxu0 0.0
    %5410 = vmatpush1.msra.mxu0 0.0
    %5411 = vmatprep.subr.mxu0 0.0
    %5412 = vmatpush1.msra.mxu0 0.0
    %5413 = vmatprep.subr.mxu0 0.0
    %5414 = vmatpush1.msra.mxu0 0.0
    %5415 = vmatprep.subr.mxu0 0.0
    %5416 = vmatpush1.msra.mxu0 0.0
    %5417 = vmatprep.subr.mxu0 0.0
    %5418 = vmatpush1.msra.mxu0 0.0
    %5419 = vmatprep.subr.mxu0 0.0
    %5420 = vmatpush1.msra.mxu0 0.0
    %5421 = vmatprep.subr.mxu0 0.0
    %5422 = vmatpush1.msra.mxu0 0.0
    %5423 = vmatprep.subr.mxu0 0.0
    %5424 = vmatpush1.msra.mxu0 0.0
    %5425 = vmatprep.subr.mxu0 0.0
    %5426 = vmatpush1.msra.mxu0 0.0
    %5427 = vmatprep.subr.mxu0 0.0
    %5428 = vmatpush1.msra.mxu0 0.0
    %5429 = vmatprep.subr.mxu0 0.0
    %5430 = vmatpush1.msra.mxu0 0.0
    %5431 = vmatprep.subr.mxu0 0.0
    %5432 = vmatpush1.msra.mxu0 0.0
    %5433 = vmatprep.subr.mxu0 0.0
    %5434 = vmatpush1.msra.mxu0 0.0
    %5435 = vmatprep.subr.mxu0 0.0
    %5436 = vmatpush1.msra.mxu0 0.0
    %5437 = vmatprep.mubr.f32.mxu0 0.0
    %5438 = vmatmul.mubr.f32.gmra.mrb[0].mxu0 %v5371
    %v5439 = vpop.f32.mrb[0].mxu0
    %v5440 = vadd.f32 0.0, %v5439
    %v5441 = vpop.f32.mrb[0].mxu0
    %5442 = vdwg.mxu0
    %v5443 = vmul.f32 %v1789, %v4810
    %v5444 = vsub.f32 %v1789, %v4810
    %v5445 = vand.u32 2147483647, %v5444
    %5447 = vrot.lane.b32.xlu0 %v5445, 64
    %v5448 = vpop.permute.xlu0 %5447
    %v5450 = vsel %vm362, %v3543, %v5443
    %v5451 = vsel %vm2904, %v5450, %v3547
    %v5452 = vsel %vm2906, %v5451, %v5448
    %5453 = vmatprep.subr.mxu0 0.0
    %5454 = vmatpush1.msra.mxu0 %v158
    %5455 = vmatprep.subr.mxu0 0.0
    %5456 = vmatpush1.msra.mxu0 %v159
    %5457 = vmatprep.subr.mxu0 0.0
    %5458 = vmatpush1.msra.mxu0 %v160
    %5459 = vmatprep.subr.mxu0 0.0
    %5460 = vmatpush1.msra.mxu0 %v161
    %5461 = vmatprep.subr.mxu0 0.0
    %5462 = vmatpush1.msra.mxu0 %v162
    %5463 = vmatprep.subr.mxu0 0.0
    %5464 = vmatpush1.msra.mxu0 %v163
    %5465 = vmatprep.subr.mxu0 0.0
    %5466 = vmatpush1.msra.mxu0 %v164
    %5467 = vmatprep.subr.mxu0 0.0
    %5468 = vmatpush1.msra.mxu0 %v165
    %5469 = vmatprep.subr.mxu0 0.0
    %5470 = vmatpush1.msra.mxu0 %v166
    %5471 = vmatprep.subr.mxu0 0.0
    %5472 = vmatpush1.msra.mxu0 %v167
    %5473 = vmatprep.subr.mxu0 0.0
    %5474 = vmatpush1.msra.mxu0 %v168
    %5475 = vmatprep.subr.mxu0 0.0
    %5476 = vmatpush1.msra.mxu0 %v169
    %5477 = vmatprep.subr.mxu0 0.0
    %5478 = vmatpush1.msra.mxu0 %v170
    %5479 = vmatprep.subr.mxu0 0.0
    %5480 = vmatpush1.msra.mxu0 %v171
    %5481 = vmatprep.subr.mxu0 0.0
    %5482 = vmatpush1.msra.mxu0 %v172
    %5483 = vmatprep.subr.mxu0 0.0
    %5484 = vmatpush1.msra.mxu0 %v173
    %5485 = vmatprep.subr.mxu0 0.0
    %5486 = vmatpush1.msra.mxu0 0.0
    %5487 = vmatprep.subr.mxu0 0.0
    %5488 = vmatpush1.msra.mxu0 0.0
    %5489 = vmatprep.subr.mxu0 0.0
    %5490 = vmatpush1.msra.mxu0 0.0
    %5491 = vmatprep.subr.mxu0 0.0
    %5492 = vmatpush1.msra.mxu0 0.0
    %5493 = vmatprep.subr.mxu0 0.0
    %5494 = vmatpush1.msra.mxu0 0.0
    %5495 = vmatprep.subr.mxu0 0.0
    %5496 = vmatpush1.msra.mxu0 0.0
    %5497 = vmatprep.subr.mxu0 0.0
    %5498 = vmatpush1.msra.mxu0 0.0
    %5499 = vmatprep.subr.mxu0 0.0
    %5500 = vmatpush1.msra.mxu0 0.0
    %5501 = vmatprep.subr.mxu0 0.0
    %5502 = vmatpush1.msra.mxu0 0.0
    %5503 = vmatprep.subr.mxu0 0.0
    %5504 = vmatpush1.msra.mxu0 0.0
    %5505 = vmatprep.subr.mxu0 0.0
    %5506 = vmatpush1.msra.mxu0 0.0
    %5507 = vmatprep.subr.mxu0 0.0
    %5508 = vmatpush1.msra.mxu0 0.0
    %5509 = vmatprep.subr.mxu0 0.0
    %5510 = vmatpush1.msra.mxu0 0.0
    %5511 = vmatprep.subr.mxu0 0.0
    %5512 = vmatpush1.msra.mxu0 0.0
    %5513 = vmatprep.subr.mxu0 0.0
    %5514 = vmatpush1.msra.mxu0 0.0
    %5515 = vmatprep.subr.mxu0 0.0
    %5516 = vmatpush1.msra.mxu0 0.0
    %5517 = vmatprep.mubr.f32.mxu0 0.0
    %5518 = vmatmul.mubr.f32.gmra.mrb[0].mxu0 %v5452
    %v5519 = vpop.f32.mrb[0].mxu0
    %v5520 = vadd.f32 %v2912, %v5519
    %v5521 = vpop.f32.mrb[0].mxu0
    %5522 = vdwg.mxu0
    %v5523 = vtanh.pop %v5520
    %v5525 = vsel %vm362, %v5523, 0
    %5527 = vmatprep.subr.mxu0 0.0
    %5528 = vmatpush1.msra.mxu0 %v175
    %5529 = vmatprep.subr.mxu0 0.0
    %5530 = vmatpush1.msra.mxu0 %v176
    %5531 = vmatprep.subr.mxu0 0.0
    %5532 = vmatpush1.msra.mxu0 %v177
    %5533 = vmatprep.subr.mxu0 0.0
    %5534 = vmatpush1.msra.mxu0 %v178
    %5535 = vmatprep.subr.mxu0 0.0
    %5536 = vmatpush1.msra.mxu0 0.0
    %5537 = vmatprep.subr.mxu0 0.0
    %5538 = vmatpush1.msra.mxu0 0.0
    %5539 = vmatprep.subr.mxu0 0.0
    %5540 = vmatpush1.msra.mxu0 0.0
    %5541 = vmatprep.subr.mxu0 0.0
    %5542 = vmatpush1.msra.mxu0 0.0
    %5543 = vmatprep.subr.mxu0 0.0
    %5544 = vmatpush1.msra.mxu0 0.0
    %5545 = vmatprep.subr.mxu0 0.0
    %5546 = vmatpush1.msra.mxu0 0.0
    %5547 = vmatprep.subr.mxu0 0.0
    %5548 = vmatpush1.msra.mxu0 0.0
    %5549 = vmatprep.subr.mxu0 0.0
    %5550 = vmatpush1.msra.mxu0 0.0
    %5551 = vmatprep.subr.mxu0 0.0
    %5552 = vmatpush1.msra.mxu0 0.0
    %5553 = vmatprep.subr.mxu0 0.0
    %5554 = vmatpush1.msra.mxu0 0.0
    %5555 = vmatprep.subr.mxu0 0.0
    %5556 = vmatpush1.msra.mxu0 0.0
    %5557 = vmatprep.subr.mxu0 0.0
    %5558 = vmatpush1.msra.mxu0 0.0
    %5559 = vmatprep.subr.mxu0 0.0
    %5560 = vmatpush1.msra.mxu0 0.0
    %5561 = vmatprep.subr.mxu0 0.0
    %5562 = vmatpush1.msra.mxu0 0.0
    %5563 = vmatprep.subr.mxu0 0.0
    %5564 = vmatpush1.msra.mxu0 0.0
    %5565 = vmatprep.subr.mxu0 0.0
    %5566 = vmatpush1.msra.mxu0 0.0
    %5567 = vmatprep.subr.mxu0 0.0
    %5568 = vmatpush1.msra.mxu0 0.0
    %5569 = vmatprep.subr.mxu0 0.0
    %5570 = vmatpush1.msra.mxu0 0.0
    %5571 = vmatprep.subr.mxu0 0.0
    %5572 = vmatpush1.msra.mxu0 0.0
    %5573 = vmatprep.subr.mxu0 0.0
    %5574 = vmatpush1.msra.mxu0 0.0
    %5575 = vmatprep.subr.mxu0 0.0
    %5576 = vmatpush1.msra.mxu0 0.0
    %5577 = vmatprep.subr.mxu0 0.0
    %5578 = vmatpush1.msra.mxu0 0.0
    %5579 = vmatprep.subr.mxu0 0.0
    %5580 = vmatpush1.msra.mxu0 0.0
    %5581 = vmatprep.subr.mxu0 0.0
    %5582 = vmatpush1.msra.mxu0 0.0
    %5583 = vmatprep.subr.mxu0 0.0
    %5584 = vmatpush1.msra.mxu0 0.0
    %5585 = vmatprep.subr.mxu0 0.0
    %5586 = vmatpush1.msra.mxu0 0.0
    %5587 = vmatprep.subr.mxu0 0.0
    %5588 = vmatpush1.msra.mxu0 0.0
    %5589 = vmatprep.subr.mxu0 0.0
    %5590 = vmatpush1.msra.mxu0 0.0
    %5591 = vmatprep.mubr.f32.mxu0 0.0
    %5592 = vmatmul.mubr.f32.gmra.mrb[0].mxu0 %v5525
    %v5593 = vpop.f32.mrb[0].mxu0
    %v5594 = vadd.f32 0.0, %v5593
    %v5595 = vpop.f32.mrb[0].mxu0
    %5596 = vdwg.mxu0
    %v5597 = vmul.f32 %v1790, %v4966
    %v5598 = vsub.f32 %v1790, %v4966
    %v5599 = vand.u32 2147483647, %v5598
    %5601 = vrot.lane.b32.xlu0 %v5599, 64
    %v5602 = vpop.permute.xlu0 %5601
    %v5604 = vsel %vm362, %v3701, %v5597
    %v5605 = vsel %vm2904, %v5604, %v3705
    %v5606 = vsel %vm2906, %v5605, %v5602
    %v5608 = vrot.slane %v5606, 2
    %5610 = vmatprep.subr.mxu0 0.0
    %5611 = vmatpush1.msra.mxu0 %v158
    %5612 = vmatprep.subr.mxu0 0.0
    %5613 = vmatpush1.msra.mxu0 %v159
    %5614 = vmatprep.subr.mxu0 0.0
    %5615 = vmatpush1.msra.mxu0 %v160
    %5616 = vmatprep.subr.mxu0 0.0
    %5617 = vmatpush1.msra.mxu0 %v161
    %5618 = vmatprep.subr.mxu0 0.0
    %5619 = vmatpush1.msra.mxu0 %v162
    %5620 = vmatprep.subr.mxu0 0.0
    %5621 = vmatpush1.msra.mxu0 %v163
    %5622 = vmatprep.subr.mxu0 0.0
    %5623 = vmatpush1.msra.mxu0 %v164
    %5624 = vmatprep.subr.mxu0 0.0
    %5625 = vmatpush1.msra.mxu0 %v165
    %5626 = vmatprep.subr.mxu0 0.0
    %5627 = vmatpush1.msra.mxu0 %v166
    %5628 = vmatprep.subr.mxu0 0.0
    %5629 = vmatpush1.msra.mxu0 %v167
    %5630 = vmatprep.subr.mxu0 0.0
    %5631 = vmatpush1.msra.mxu0 %v168
    %5632 = vmatprep.subr.mxu0 0.0
    %5633 = vmatpush1.msra.mxu0 %v169
    %5634 = vmatprep.subr.mxu0 0.0
    %5635 = vmatpush1.msra.mxu0 %v170
    %5636 = vmatprep.subr.mxu0 0.0
    %5637 = vmatpush1.msra.mxu0 %v171
    %5638 = vmatprep.subr.mxu0 0.0
    %5639 = vmatpush1.msra.mxu0 %v172
    %5640 = vmatprep.subr.mxu0 0.0
    %5641 = vmatpush1.msra.mxu0 %v173
    %5642 = vmatprep.subr.mxu0 0.0
    %5643 = vmatpush1.msra.mxu0 0.0
    %5644 = vmatprep.subr.mxu0 0.0
    %5645 = vmatpush1.msra.mxu0 0.0
    %5646 = vmatprep.subr.mxu0 0.0
    %5647 = vmatpush1.msra.mxu0 0.0
    %5648 = vmatprep.subr.mxu0 0.0
    %5649 = vmatpush1.msra.mxu0 0.0
    %5650 = vmatprep.subr.mxu0 0.0
    %5651 = vmatpush1.msra.mxu0 0.0
    %5652 = vmatprep.subr.mxu0 0.0
    %5653 = vmatpush1.msra.mxu0 0.0
    %5654 = vmatprep.subr.mxu0 0.0
    %5655 = vmatpush1.msra.mxu0 0.0
    %5656 = vmatprep.subr.mxu0 0.0
    %5657 = vmatpush1.msra.mxu0 0.0
    %5658 = vmatprep.subr.mxu0 0.0
    %5659 = vmatpush1.msra.mxu0 0.0
    %5660 = vmatprep.subr.mxu0 0.0
    %5661 = vmatpush1.msra.mxu0 0.0
    %5662 = vmatprep.subr.mxu0 0.0
    %5663 = vmatpush1.msra.mxu0 0.0
    %5664 = vmatprep.subr.mxu0 0.0
    %5665 = vmatpush1.msra.mxu0 0.0
    %5666 = vmatprep.subr.mxu0 0.0
    %5667 = vmatpush1.msra.mxu0 0.0
    %5668 = vmatprep.subr.mxu0 0.0
    %5669 = vmatpush1.msra.mxu0 0.0
    %5670 = vmatprep.subr.mxu0 0.0
    %5671 = vmatpush1.msra.mxu0 0.0
    %5672 = vmatprep.subr.mxu0 0.0
    %5673 = vmatpush1.msra.mxu0 0.0
    %5674 = vmatprep.mubr.f32.mxu0 0.0
    %5675 = vmatmul.mubr.f32.gmra.mrb[0].mxu0 %v5608
    %v5676 = vpop.f32.mrb[0].mxu0
    %v5677 = vadd.f32 %v2912, %v5676
    %v5678 = vpop.f32.mrb[0].mxu0
    %5679 = vdwg.mxu0
    %v5680 = vtanh.pop %v5677
    %v5682 = vsel %vm362, %v5680, 0
    %5684 = vmatprep.subr.mxu0 0.0
    %5685 = vmatpush1.msra.mxu0 %v175
    %5686 = vmatprep.subr.mxu0 0.0
    %5687 = vmatpush1.msra.mxu0 %v176
    %5688 = vmatprep.subr.mxu0 0.0
    %5689 = vmatpush1.msra.mxu0 %v177
    %5690 = vmatprep.subr.mxu0 0.0
    %5691 = vmatpush1.msra.mxu0 %v178
    %5692 = vmatprep.subr.mxu0 0.0
    %5693 = vmatpush1.msra.mxu0 0.0
    %5694 = vmatprep.subr.mxu0 0.0
    %5695 = vmatpush1.msra.mxu0 0.0
    %5696 = vmatprep.subr.mxu0 0.0
    %5697 = vmatpush1.msra.mxu0 0.0
    %5698 = vmatprep.subr.mxu0 0.0
    %5699 = vmatpush1.msra.mxu0 0.0
    %5700 = vmatprep.subr.mxu0 0.0
    %5701 = vmatpush1.msra.mxu0 0.0
    %5702 = vmatprep.subr.mxu0 0.0
    %5703 = vmatpush1.msra.mxu0 0.0
    %5704 = vmatprep.subr.mxu0 0.0
    %5705 = vmatpush1.msra.mxu0 0.0
    %5706 = vmatprep.subr.mxu0 0.0
    %5707 = vmatpush1.msra.mxu0 0.0
    %5708 = vmatprep.subr.mxu0 0.0
    %5709 = vmatpush1.msra.mxu0 0.0
    %5710 = vmatprep.subr.mxu0 0.0
    %5711 = vmatpush1.msra.mxu0 0.0
    %5712 = vmatprep.subr.mxu0 0.0
    %5713 = vmatpush1.msra.mxu0 0.0
    %5714 = vmatprep.subr.mxu0 0.0
    %5715 = vmatpush1.msra.mxu0 0.0
    %5716 = vmatprep.subr.mxu0 0.0
    %5717 = vmatpush1.msra.mxu0 0.0
    %5718 = vmatprep.subr.mxu0 0.0
    %5719 = vmatpush1.msra.mxu0 0.0
    %5720 = vmatprep.subr.mxu0 0.0
    %5721 = vmatpush1.msra.mxu0 0.0
    %5722 = vmatprep.subr.mxu0 0.0
    %5723 = vmatpush1.msra.mxu0 0.0
    %5724 = vmatprep.subr.mxu0 0.0
    %5725 = vmatpush1.msra.mxu0 0.0
    %5726 = vmatprep.subr.mxu0 0.0
    %5727 = vmatpush1.msra.mxu0 0.0
    %5728 = vmatprep.subr.mxu0 0.0
    %5729 = vmatpush1.msra.mxu0 0.0
    %5730 = vmatprep.subr.mxu0 0.0
    %5731 = vmatpush1.msra.mxu0 0.0
    %5732 = vmatprep.subr.mxu0 0.0
    %5733 = vmatpush1.msra.mxu0 0.0
    %5734 = vmatprep.subr.mxu0 0.0
    %5735 = vmatpush1.msra.mxu0 0.0
    %5736 = vmatprep.subr.mxu0 0.0
    %5737 = vmatpush1.msra.mxu0 0.0
    %5738 = vmatprep.subr.mxu0 0.0
    %5739 = vmatpush1.msra.mxu0 0.0
    %5740 = vmatprep.subr.mxu0 0.0
    %5741 = vmatpush1.msra.mxu0 0.0
    %5742 = vmatprep.subr.mxu0 0.0
    %5743 = vmatpush1.msra.mxu0 0.0
    %5744 = vmatprep.subr.mxu0 0.0
    %5745 = vmatpush1.msra.mxu0 0.0
    %5746 = vmatprep.subr.mxu0 0.0
    %5747 = vmatpush1.msra.mxu0 0.0
    %5748 = vmatprep.mubr.f32.mxu0 0.0
    %5749 = vmatmul.mubr.f32.gmra.mrb[0].mxu0 %v5682
    %v5750 = vpop.f32.mrb[0].mxu0
    %v5751 = vadd.f32 0.0, %v5750
    %v5752 = vpop.f32.mrb[0].mxu0
    %5753 = vdwg.mxu0
    %5755 = vrot.lane.b32.xlu0 %v5122, 1
    %v5756 = vpop.permute.xlu0 %5755
    %5759 = vrot.lane.b32.xlu0 %v5281, 2
    %v5760 = vpop.permute.xlu0 %5759
    %5763 = vrot.lane.b32.xlu0 %v5440, 3
    %v5764 = vpop.permute.xlu0 %5763
    %5767 = vrot.lane.b32.xlu0 %v5594, 4
    %v5768 = vpop.permute.xlu0 %5767
    %5771 = vrot.lane.b32.xlu0 %v5751, 5
    %v5772 = vpop.permute.xlu0 %5771
    %v5774 = vsel %vm3880, %v4962, %v5756
    %v5775 = vsel %vm3882, %v5774, %v5760
    %v5776 = vsel %vm3884, %v5775, %v5764
    %v5777 = vsel %vm3886, %v5776, %v5768
    %v5778 = vsel %vm3888, %v5777, %v5772
    %v5779 = vadd.f32 %v5778, %v3897
    %v5780 = vsel %vm3900, %v5779, -inf
    %5781 = vmax.xlane.f32.xlu0 %v5780
    %v5782 = vpop.xlane.xlu0 %5781
    %v5783 = vsub.f32 %v5779, %v5782
    %v5784 = vmul.f32 %v5783, 1.442695
    %v5785 = vpow.pop %v5784
    %v5786 = vsel %vm3900, %v5785, 0.0
    %5787 = vadd.xlane.f32.xlu0 %v5786
    %v5788 = vpop.xlane.xlu0 %5787
    %v5789 = vrcp.pop %v5788
    %v5790 = vmul.f32 %v5785, %v5789
    %5792 = vset.pattern.permute.xlu0 0
    %5793 = vperm.xlu0 %5792, %v5790
    %v5794 = vpop.permute.xlu0 %5793
    %v5796 = vmul.f32 %v5794, %v4005
    %v5797 = vsub.f32 1.0, %v5790
    %5799 = vset.pattern.permute.xlu0 0
    %5800 = vperm.xlu0 %5799, %v5797
    %v5801 = vpop.permute.xlu0 %5800
    %v5803 = vmul.f32 %v5801, 0.0
    %v5804 = vadd.f32 %v5796, %v5803
    %5806 = vrot.lane.b32.xlu0 %v5804, 96
    %v5807 = vpop.permute.xlu0 %5806
    %v5808 = vsel %vm362, %v5807, 0
    %5810 = vmatprep.subr.mxu0 0.0
    %5811 = vmatpush1.msra.mxu0 %v185
    %5812 = vmatprep.subr.mxu0 0.0
    %5813 = vmatpush1.msra.mxu0 %v186
    %5814 = vmatprep.subr.mxu0 0.0
    %5815 = vmatpush1.msra.mxu0 %v187
    %5816 = vmatprep.subr.mxu0 0.0
    %5817 = vmatpush1.msra.mxu0 %v188
    %5818 = vmatprep.subr.mxu0 0.0
    %5819 = vmatpush1.msra.mxu0 0.0
    %5820 = vmatprep.subr.mxu0 0.0
    %5821 = vmatpush1.msra.mxu0 0.0
    %5822 = vmatprep.subr.mxu0 0.0
    %5823 = vmatpush1.msra.mxu0 0.0
    %5824 = vmatprep.subr.mxu0 0.0
    %5825 = vmatpush1.msra.mxu0 0.0
    %5826 = vmatprep.subr.mxu0 0.0
    %5827 = vmatpush1.msra.mxu0 0.0
    %5828 = vmatprep.subr.mxu0 0.0
    %5829 = vmatpush1.msra.mxu0 0.0
    %5830 = vmatprep.subr.mxu0 0.0
    %5831 = vmatpush1.msra.mxu0 0.0
    %5832 = vmatprep.subr.mxu0 0.0
    %5833 = vmatpush1.msra.mxu0 0.0
    %5834 = vmatprep.subr.mxu0 0.0
    %5835 = vmatpush1.msra.mxu0 0.0
    %5836 = vmatprep.subr.mxu0 0.0
    %5837 = vmatpush1.msra.mxu0 0.0
    %5838 = vmatprep.subr.mxu0 0.0
    %5839 = vmatpush1.msra.mxu0 0.0
    %5840 = vmatprep.subr.mxu0 0.0
    %5841 = vmatpush1.msra.mxu0 0.0
    %5842 = vmatprep.subr.mxu0 0.0
    %5843 = vmatpush1.msra.mxu0 0.0
    %5844 = vmatprep.subr.mxu0 0.0
    %5845 = vmatpush1.msra.mxu0 0.0
    %5846 = vmatprep.subr.mxu0 0.0
    %5847 = vmatpush1.msra.mxu0 0.0
    %5848 = vmatprep.subr.mxu0 0.0
    %5849 = vmatpush1.msra.mxu0 0.0
    %5850 = vmatprep.subr.mxu0 0.0
    %5851 = vmatpush1.msra.mxu0 0.0
    %5852 = vmatprep.subr.mxu0 0.0
    %5853 = vmatpush1.msra.mxu0 0.0
    %5854 = vmatprep.subr.mxu0 0.0
    %5855 = vmatpush1.msra.mxu0 0.0
    %5856 = vmatprep.subr.mxu0 0.0
    %5857 = vmatpush1.msra.mxu0 0.0
    %5858 = vmatprep.subr.mxu0 0.0
    %5859 = vmatpush1.msra.mxu0 0.0
    %5860 = vmatprep.subr.mxu0 0.0
    %5861 = vmatpush1.msra.mxu0 0.0
    %5862 = vmatprep.subr.mxu0 0.0
    %5863 = vmatpush1.msra.mxu0 0.0
    %5864 = vmatprep.subr.mxu0 0.0
    %5865 = vmatpush1.msra.mxu0 0.0
    %5866 = vmatprep.subr.mxu0 0.0
    %5867 = vmatpush1.msra.mxu0 0.0
    %5868 = vmatprep.subr.mxu0 0.0
    %5869 = vmatpush1.msra.mxu0 0.0
    %5870 = vmatprep.subr.mxu0 0.0
    %5871 = vmatpush1.msra.mxu0 0.0
    %5872 = vmatprep.subr.mxu0 0.0
    %5873 = vmatpush1.msra.mxu0 0.0
    %5874 = vmatprep.mubr.f32.mxu0 0.0
    %5875 = vmatmul.mubr.f32.gmra.mrb[0].mxu0 %v5808
    %v5876 = vpop.f32.mrb[0].mxu0
    %v5877 = vadd.f32 %v3916, %v5876
    %v5878 = vpop.f32.mrb[0].mxu0
    %5879 = vdwg.mxu0
    %v5880 = vadd.f32 %v2561, %v5877
    %v5881 = vxor.u32 %v5880, 2147483648
    %v5882 = vmul.f32 %v5881, 1.442695
    %v5883 = vpow.pop %v5882
    %v5884 = vadd.f32 %v5883, 1.0
    %v5885 = vrcp.pop %v5884
    %v5886 = vmul.f32 1.0, %v5885
    %5888 = vrot.lane.b32.xlu0 %v5877, 96
    %v5889 = vpop.permute.xlu0 %5888
    %v5891 = vmul.f32 %v5886, %v5889
    %5893 = vrot.lane.b32.xlu0 %v5891, 32
    %v5894 = vpop.permute.xlu0 %5893
    %v5896 = vadd.f32 %v2561, %v5894
    %v5897 = vtanh.pop %v5896
    %5898 = vset.pattern.permute.xlu0 1
    %5899 = vperm.xlu0 %5898, %v5790
    %v5900 = vpop.permute.xlu0 %5899
    %v5902 = vmul.f32 %v5900, %v5897
    %5903 = vset.pattern.permute.xlu0 1
    %5904 = vperm.xlu0 %5903, %v5797
    %v5905 = vpop.permute.xlu0 %5904
    %v5907 = vmul.f32 %v5905, %v5804
    %v5908 = vadd.f32 %v5902, %v5907
    %5910 = vrot.lane.b32.xlu0 %v5908, 96
    %v5911 = vpop.permute.xlu0 %5910
    %v5912 = vsel %vm362, %v5911, 0
    %5914 = vmatprep.subr.mxu0 0.0
    %5915 = vmatpush1.msra.mxu0 %v185
    %5916 = vmatprep.subr.mxu0 0.0
    %5917 = vmatpush1.msra.mxu0 %v186
    %5918 = vmatprep.subr.mxu0 0.0
    %5919 = vmatpush1.msra.mxu0 %v187
    %5920 = vmatprep.subr.mxu0 0.0
    %5921 = vmatpush1.msra.mxu0 %v188
    %5922 = vmatprep.subr.mxu0 0.0
    %5923 = vmatpush1.msra.mxu0 0.0
    %5924 = vmatprep.subr.mxu0 0.0
    %5925 = vmatpush1.msra.mxu0 0.0
    %5926 = vmatprep.subr.mxu0 0.0
    %5927 = vmatpush1.msra.mxu0 0.0
    %5928 = vmatprep.subr.mxu0 0.0
    %5929 = vmatpush1.msra.mxu0 0.0
    %5930 = vmatprep.subr.mxu0 0.0
    %5931 = vmatpush1.msra.mxu0 0.0
    %5932 = vmatprep.subr.mxu0 0.0
    %5933 = vmatpush1.msra.mxu0 0.0
    %5934 = vmatprep.subr.mxu0 0.0
    %5935 = vmatpush1.msra.mxu0 0.0
    %5936 = vmatprep.subr.mxu0 0.0
    %5937 = vmatpush1.msra.mxu0 0.0
    %5938 = vmatprep.subr.mxu0 0.0
    %5939 = vmatpush1.msra.mxu0 0.0
    %5940 = vmatprep.subr.mxu0 0.0
    %5941 = vmatpush1.msra.mxu0 0.0
    %5942 = vmatprep.subr.mxu0 0.0
    %5943 = vmatpush1.msra.mxu0 0.0
    %5944 = vmatprep.subr.mxu0 0.0
    %5945 = vmatpush1.msra.mxu0 0.0
    %5946 = vmatprep.subr.mxu0 0.0
    %5947 = vmatpush1.msra.mxu0 0.0
    %5948 = vmatprep.subr.mxu0 0.0
    %5949 = vmatpush1.msra.mxu0 0.0
    %5950 = vmatprep.subr.mxu0 0.0
    %5951 = vmatpush1.msra.mxu0 0.0
    %5952 = vmatprep.subr.mxu0 0.0
    %5953 = vmatpush1.msra.mxu0 0.0
    %5954 = vmatprep.subr.mxu0 0.0
    %5955 = vmatpush1.msra.mxu0 0.0
    %5956 = vmatprep.subr.mxu0 0.0
    %5957 = vmatpush1.msra.mxu0 0.0
    %5958 = vmatprep.subr.mxu0 0.0
    %5959 = vmatpush1.msra.mxu0 0.0
    %5960 = vmatprep.subr.mxu0 0.0
    %5961 = vmatpush1.msra.mxu0 0.0
    %5962 = vmatprep.subr.mxu0 0.0
    %5963 = vmatpush1.msra.mxu0 0.0
    %5964 = vmatprep.subr.mxu0 0.0
    %5965 = vmatpush1.msra.mxu0 0.0
    %5966 = vmatprep.subr.mxu0 0.0
    %5967 = vmatpush1.msra.mxu0 0.0
    %5968 = vmatprep.subr.mxu0 0.0
    %5969 = vmatpush1.msra.mxu0 0.0
    %5970 = vmatprep.subr.mxu0 0.0
    %5971 = vmatpush1.msra.mxu0 0.0
    %5972 = vmatprep.subr.mxu0 0.0
    %5973 = vmatpush1.msra.mxu0 0.0
    %5974 = vmatprep.subr.mxu0 0.0
    %5975 = vmatpush1.msra.mxu0 0.0
    %5976 = vmatprep.subr.mxu0 0.0
    %5977 = vmatpush1.msra.mxu0 0.0
    %5978 = vmatprep.mubr.f32.mxu0 0.0
    %5979 = vmatmul.mubr.f32.gmra.mrb[0].mxu0 %v5912
    %v5980 = vpop.f32.mrb[0].mxu0
    %v5981 = vadd.f32 %v3916, %v5980
    %v5982 = vpop.f32.mrb[0].mxu0
    %5983 = vdwg.mxu0
    %v5984 = vadd.f32 %v2637, %v5981
    %v5985 = vxor.u32 %v5984, 2147483648
    %v5986 = vmul.f32 %v5985, 1.442695
    %v5987 = vpow.pop %v5986
    %v5988 = vadd.f32 %v5987, 1.0
    %v5989 = vrcp.pop %v5988
    %v5990 = vmul.f32 1.0, %v5989
    %5992 = vrot.lane.b32.xlu0 %v5981, 96
    %v5993 = vpop.permute.xlu0 %5992
    %v5995 = vmul.f32 %v5990, %v5993
    %5997 = vrot.lane.b32.xlu0 %v5995, 32
    %v5998 = vpop.permute.xlu0 %5997
    %v6000 = vadd.f32 %v2637, %v5998
    %v6001 = vtanh.pop %v6000
    %6002 = vset.pattern.permute.xlu0 2
    %6003 = vperm.xlu0 %6002, %v5790
    %v6004 = vpop.permute.xlu0 %6003
    %v6006 = vmul.f32 %v6004, %v6001
    %6007 = vset.pattern.permute.xlu0 2
    %6008 = vperm.xlu0 %6007, %v5797
    %v6009 = vpop.permute.xlu0 %6008
    %v6011 = vmul.f32 %v6009, %v5908
    %v6012 = vadd.f32 %v6006, %v6011
    %6014 = vrot.lane.b32.xlu0 %v6012, 96
    %v6015 = vpop.permute.xlu0 %6014
    %v6016 = vsel %vm362, %v6015, 0
    %6018 = vmatprep.subr.mxu0 0.0
    %6019 = vmatpush1.msra.mxu0 %v185
    %6020 = vmatprep.subr.mxu0 0.0
    %6021 = vmatpush1.msra.mxu0 %v186
    %6022 = vmatprep.subr.mxu0 0.0
    %6023 = vmatpush1.msra.mxu0 %v187
    %6024 = vmatprep.subr.mxu0 0.0
    %6025 = vmatpush1.msra.mxu0 %v188
    %6026 = vmatprep.subr.mxu0 0.0
    %6027 = vmatpush1.msra.mxu0 0.0
    %6028 = vmatprep.subr.mxu0 0.0
    %6029 = vmatpush1.msra.mxu0 0.0
    %6030 = vmatprep.subr.mxu0 0.0
    %6031 = vmatpush1.msra.mxu0 0.0
    %6032 = vmatprep.subr.mxu0 0.0
    %6033 = vmatpush1.msra.mxu0 0.0
    %6034 = vmatprep.subr.mxu0 0.0
    %6035 = vmatpush1.msra.mxu0 0.0
    %6036 = vmatprep.subr.mxu0 0.0
    %6037 = vmatpush1.msra.mxu0 0.0
    %6038 = vmatprep.subr.mxu0 0.0
    %6039 = vmatpush1.msra.mxu0 0.0
    %6040 = vmatprep.subr.mxu0 0.0
    %6041 = vmatpush1.msra.mxu0 0.0
    %6042 = vmatprep.subr.mxu0 0.0
    %6043 = vmatpush1.msra.mxu0 0.0
    %6044 = vmatprep.subr.mxu0 0.0
    %6045 = vmatpush1.msra.mxu0 0.0
    %6046 = vmatprep.subr.mxu0 0.0
    %6047 = vmatpush1.msra.mxu0 0.0
    %6048 = vmatprep.subr.mxu0 0.0
    %6049 = vmatpush1.msra.mxu0 0.0
    %6050 = vmatprep.subr.mxu0 0.0
    %6051 = vmatpush1.msra.mxu0 0.0
    %6052 = vmatprep.subr.mxu0 0.0
    %6053 = vmatpush1.msra.mxu0 0.0
    %6054 = vmatprep.subr.mxu0 0.0
    %6055 = vmatpush1.msra.mxu0 0.0
    %6056 = vmatprep.subr.mxu0 0.0
    %6057 = vmatpush1.msra.mxu0 0.0
    %6058 = vmatprep.subr.mxu0 0.0
    %6059 = vmatpush1.msra.mxu0 0.0
    %6060 = vmatprep.subr.mxu0 0.0
    %6061 = vmatpush1.msra.mxu0 0.0
    %6062 = vmatprep.subr.mxu0 0.0
    %6063 = vmatpush1.msra.mxu0 0.0
    %6064 = vmatprep.subr.mxu0 0.0
    %6065 = vmatpush1.msra.mxu0 0.0
    %6066 = vmatprep.subr.mxu0 0.0
    %6067 = vmatpush1.msra.mxu0 0.0
    %6068 = vmatprep.subr.mxu0 0.0
    %6069 = vmatpush1.msra.mxu0 0.0
    %6070 = vmatprep.subr.mxu0 0.0
    %6071 = vmatpush1.msra.mxu0 0.0
    %6072 = vmatprep.subr.mxu0 0.0
    %6073 = vmatpush1.msra.mxu0 0.0
    %6074 = vmatprep.subr.mxu0 0.0
    %6075 = vmatpush1.msra.mxu0 0.0
    %6076 = vmatprep.subr.mxu0 0.0
    %6077 = vmatpush1.msra.mxu0 0.0
    %6078 = vmatprep.subr.mxu0 0.0
    %6079 = vmatpush1.msra.mxu0 0.0
    %6080 = vmatprep.subr.mxu0 0.0
    %6081 = vmatpush1.msra.mxu0 0.0
    %6082 = vmatprep.mubr.f32.mxu0 0.0
    %6083 = vmatmul.mubr.f32.gmra.mrb[0].mxu0 %v6016
    %v6084 = vpop.f32.mrb[0].mxu0
    %v6085 = vadd.f32 %v3916, %v6084
    %v6086 = vpop.f32.mrb[0].mxu0
    %6087 = vdwg.mxu0
    %v6088 = vadd.f32 %v2713, %v6085
    %v6089 = vxor.u32 %v6088, 2147483648
    %v6090 = vmul.f32 %v6089, 1.442695
    %v6091 = vpow.pop %v6090
    %v6092 = vadd.f32 %v6091, 1.0
    %v6093 = vrcp.pop %v6092
    %v6094 = vmul.f32 1.0, %v6093
    %6096 = vrot.lane.b32.xlu0 %v6085, 96
    %v6097 = vpop.permute.xlu0 %6096
    %v6099 = vmul.f32 %v6094, %v6097
    %6101 = vrot.lane.b32.xlu0 %v6099, 32
    %v6102 = vpop.permute.xlu0 %6101
    %v6104 = vadd.f32 %v2713, %v6102
    %v6105 = vtanh.pop %v6104
    %6106 = vset.pattern.permute.xlu0 3
    %6107 = vperm.xlu0 %6106, %v5790
    %v6108 = vpop.permute.xlu0 %6107
    %v6110 = vmul.f32 %v6108, %v6105
    %6111 = vset.pattern.permute.xlu0 3
    %6112 = vperm.xlu0 %6111, %v5797
    %v6113 = vpop.permute.xlu0 %6112
    %v6115 = vmul.f32 %v6113, %v6012
    %v6116 = vadd.f32 %v6110, %v6115
    %6118 = vrot.lane.b32.xlu0 %v6116, 96
    %v6119 = vpop.permute.xlu0 %6118
    %v6120 = vsel %vm362, %v6119, 0
    %6122 = vmatprep.subr.mxu0 0.0
    %6123 = vmatpush1.msra.mxu0 %v185
    %6124 = vmatprep.subr.mxu0 0.0
    %6125 = vmatpush1.msra.mxu0 %v186
    %6126 = vmatprep.subr.mxu0 0.0
    %6127 = vmatpush1.msra.mxu0 %v187
    %6128 = vmatprep.subr.mxu0 0.0
    %6129 = vmatpush1.msra.mxu0 %v188
    %6130 = vmatprep.subr.mxu0 0.0
    %6131 = vmatpush1.msra.mxu0 0.0
    %6132 = vmatprep.subr.mxu0 0.0
    %6133 = vmatpush1.msra.mxu0 0.0
    %6134 = vmatprep.subr.mxu0 0.0
    %6135 = vmatpush1.msra.mxu0 0.0
    %6136 = vmatprep.subr.mxu0 0.0
    %6137 = vmatpush1.msra.mxu0 0.0
    %6138 = vmatprep.subr.mxu0 0.0
    %6139 = vmatpush1.msra.mxu0 0.0
    %6140 = vmatprep.subr.mxu0 0.0
    %6141 = vmatpush1.msra.mxu0 0.0
    %6142 = vmatprep.subr.mxu0 0.0
    %6143 = vmatpush1.msra.mxu0 0.0
    %6144 = vmatprep.subr.mxu0 0.0
    %6145 = vmatpush1.msra.mxu0 0.0
    %6146 = vmatprep.subr.mxu0 0.0
    %6147 = vmatpush1.msra.mxu0 0.0
    %6148 = vmatprep.subr.mxu0 0.0
    %6149 = vmatpush1.msra.mxu0 0.0
    %6150 = vmatprep.subr.mxu0 0.0
    %6151 = vmatpush1.msra.mxu0 0.0
    %6152 = vmatprep.subr.mxu0 0.0
    %6153 = vmatpush1.msra.mxu0 0.0
    %6154 = vmatprep.subr.mxu0 0.0
    %6155 = vmatpush1.msra.mxu0 0.0
    %6156 = vmatprep.subr.mxu0 0.0
    %6157 = vmatpush1.msra.mxu0 0.0
    %6158 = vmatprep.subr.mxu0 0.0
    %6159 = vmatpush1.msra.mxu0 0.0
    %6160 = vmatprep.subr.mxu0 0.0
    %6161 = vmatpush1.msra.mxu0 0.0
    %6162 = vmatprep.subr.mxu0 0.0
    %6163 = vmatpush1.msra.mxu0 0.0
    %6164 = vmatprep.subr.mxu0 0.0
    %6165 = vmatpush1.msra.mxu0 0.0
    %6166 = vmatprep.subr.mxu0 0.0
    %6167 = vmatpush1.msra.mxu0 0.0
    %6168 = vmatprep.subr.mxu0 0.0
    %6169 = vmatpush1.msra.mxu0 0.0
    %6170 = vmatprep.subr.mxu0 0.0
    %6171 = vmatpush1.msra.mxu0 0.0
    %6172 = vmatprep.subr.mxu0 0.0
    %6173 = vmatpush1.msra.mxu0 0.0
    %6174 = vmatprep.subr.mxu0 0.0
    %6175 = vmatpush1.msra.mxu0 0.0
    %6176 = vmatprep.subr.mxu0 0.0
    %6177 = vmatpush1.msra.mxu0 0.0
    %6178 = vmatprep.subr.mxu0 0.0
    %6179 = vmatpush1.msra.mxu0 0.0
    %6180 = vmatprep.subr.mxu0 0.0
    %6181 = vmatpush1.msra.mxu0 0.0
    %6182 = vmatprep.subr.mxu0 0.0
    %6183 = vmatpush1.msra.mxu0 0.0
    %6184 = vmatprep.subr.mxu0 0.0
    %6185 = vmatpush1.msra.mxu0 0.0
    %6186 = vmatprep.mubr.f32.mxu0 0.0
    %6187 = vmatmul.mubr.f32.gmra.mrb[0].mxu0 %v6120
    %v6188 = vpop.f32.mrb[0].mxu0
    %v6189 = vadd.f32 %v3916, %v6188
    %v6190 = vpop.f32.mrb[0].mxu0
    %6191 = vdwg.mxu0
    %v6192 = vadd.f32 %v2788, %v6189
    %v6193 = vxor.u32 %v6192, 2147483648
    %v6194 = vmul.f32 %v6193, 1.442695
    %v6195 = vpow.pop %v6194
    %v6196 = vadd.f32 %v6195, 1.0
    %v6197 = vrcp.pop %v6196
    %v6198 = vmul.f32 1.0, %v6197
    %6200 = vrot.lane.b32.xlu0 %v6189, 96
    %v6201 = vpop.permute.xlu0 %6200
    %v6203 = vmul.f32 %v6198, %v6201
    %6205 = vrot.lane.b32.xlu0 %v6203, 32
    %v6206 = vpop.permute.xlu0 %6205
    %v6208 = vadd.f32 %v2788, %v6206
    %v6209 = vtanh.pop %v6208
    %6210 = vset.pattern.permute.xlu0 4
    %6211 = vperm.xlu0 %6210, %v5790
    %v6212 = vpop.permute.xlu0 %6211
    %v6214 = vmul.f32 %v6212, %v6209
    %6215 = vset.pattern.permute.xlu0 4
    %6216 = vperm.xlu0 %6215, %v5797
    %v6217 = vpop.permute.xlu0 %6216
    %v6219 = vmul.f32 %v6217, %v6116
    %v6220 = vadd.f32 %v6214, %v6219
    %6222 = vrot.lane.b32.xlu0 %v6220, 96
    %v6223 = vpop.permute.xlu0 %6222
    %v6224 = vsel %vm362, %v6223, 0
    %6226 = vmatprep.subr.mxu0 0.0
    %6227 = vmatpush1.msra.mxu0 %v185
    %6228 = vmatprep.subr.mxu0 0.0
    %6229 = vmatpush1.msra.mxu0 %v186
    %6230 = vmatprep.subr.mxu0 0.0
    %6231 = vmatpush1.msra.mxu0 %v187
    %6232 = vmatprep.subr.mxu0 0.0
    %6233 = vmatpush1.msra.mxu0 %v188
    %6234 = vmatprep.subr.mxu0 0.0
    %6235 = vmatpush1.msra.mxu0 0.0
    %6236 = vmatprep.subr.mxu0 0.0
    %6237 = vmatpush1.msra.mxu0 0.0
    %6238 = vmatprep.subr.mxu0 0.0
    %6239 = vmatpush1.msra.mxu0 0.0
    %6240 = vmatprep.subr.mxu0 0.0
    %6241 = vmatpush1.msra.mxu0 0.0
    %6242 = vmatprep.subr.mxu0 0.0
    %6243 = vmatpush1.msra.mxu0 0.0
    %6244 = vmatprep.subr.mxu0 0.0
    %6245 = vmatpush1.msra.mxu0 0.0
    %6246 = vmatprep.subr.mxu0 0.0
    %6247 = vmatpush1.msra.mxu0 0.0
    %6248 = vmatprep.subr.mxu0 0.0
    %6249 = vmatpush1.msra.mxu0 0.0
    %6250 = vmatprep.subr.mxu0 0.0
    %6251 = vmatpush1.msra.mxu0 0.0
    %6252 = vmatprep.subr.mxu0 0.0
    %6253 = vmatpush1.msra.mxu0 0.0
    %6254 = vmatprep.subr.mxu0 0.0
    %6255 = vmatpush1.msra.mxu0 0.0
    %6256 = vmatprep.subr.mxu0 0.0
    %6257 = vmatpush1.msra.mxu0 0.0
    %6258 = vmatprep.subr.mxu0 0.0
    %6259 = vmatpush1.msra.mxu0 0.0
    %6260 = vmatprep.subr.mxu0 0.0
    %6261 = vmatpush1.msra.mxu0 0.0
    %6262 = vmatprep.subr.mxu0 0.0
    %6263 = vmatpush1.msra.mxu0 0.0
    %6264 = vmatprep.subr.mxu0 0.0
    %6265 = vmatpush1.msra.mxu0 0.0
    %6266 = vmatprep.subr.mxu0 0.0
    %6267 = vmatpush1.msra.mxu0 0.0
    %6268 = vmatprep.subr.mxu0 0.0
    %6269 = vmatpush1.msra.mxu0 0.0
    %6270 = vmatprep.subr.mxu0 0.0
    %6271 = vmatpush1.msra.mxu0 0.0
    %6272 = vmatprep.subr.mxu0 0.0
    %6273 = vmatpush1.msra.mxu0 0.0
    %6274 = vmatprep.subr.mxu0 0.0
    %6275 = vmatpush1.msra.mxu0 0.0
    %6276 = vmatprep.subr.mxu0 0.0
    %6277 = vmatpush1.msra.mxu0 0.0
    %6278 = vmatprep.subr.mxu0 0.0
    %6279 = vmatpush1.msra.mxu0 0.0
    %6280 = vmatprep.subr.mxu0 0.0
    %6281 = vmatpush1.msra.mxu0 0.0
    %6282 = vmatprep.subr.mxu0 0.0
    %6283 = vmatpush1.msra.mxu0 0.0
    %6284 = vmatprep.subr.mxu0 0.0
    %6285 = vmatpush1.msra.mxu0 0.0
    %6286 = vmatprep.subr.mxu0 0.0
    %6287 = vmatpush1.msra.mxu0 0.0
    %6288 = vmatprep.subr.mxu0 0.0
    %6289 = vmatpush1.msra.mxu0 0.0
    %6290 = vmatprep.mubr.f32.mxu0 0.0
    %6291 = vmatmul.mubr.f32.gmra.mrb[0].mxu0 %v6224
    %v6292 = vpop.f32.mrb[0].mxu0
    %v6293 = vadd.f32 %v3916, %v6292
    %v6294 = vpop.f32.mrb[0].mxu0
    %6295 = vdwg.mxu0
    %v6296 = vadd.f32 %v2864, %v6293
    %v6297 = vxor.u32 %v6296, 2147483648
    %v6298 = vmul.f32 %v6297, 1.442695
    %v6299 = vpow.pop %v6298
    %v6300 = vadd.f32 %v6299, 1.0
    %v6301 = vrcp.pop %v6300
    %v6302 = vmul.f32 1.0, %v6301
    %6304 = vrot.lane.b32.xlu0 %v6293, 96
    %v6305 = vpop.permute.xlu0 %6304
    %v6307 = vmul.f32 %v6302, %v6305
    %6309 = vrot.lane.b32.xlu0 %v6307, 32
    %v6310 = vpop.permute.xlu0 %6309
    %v6312 = vadd.f32 %v2864, %v6310
    %v6313 = vtanh.pop %v6312
    %6314 = vset.pattern.permute.xlu0 5
    %6315 = vperm.xlu0 %6314, %v5790
    %v6316 = vpop.permute.xlu0 %6315
    %v6318 = vmul.f32 %v6316, %v6313
    %6319 = vset.pattern.permute.xlu0 5
    %6320 = vperm.xlu0 %6319, %v5797
    %v6321 = vpop.permute.xlu0 %6320
    %v6323 = vmul.f32 %v6321, %v6220
    %v6324 = vadd.f32 %v6318, %v6323
    %6325 = vrot.lane.b32.xlu0 %v4810, 96
    %v6326 = vpop.permute.xlu0 %6325
    %v6328 = vsel %vm362, %v6326, %v6324
    %v6329 = vsel %vm2904, %v6328, %v4544
    %v6331 = vsel %vm2906, %v6329, 0
    %6333 = vmatprep.subr.mxu0 0.0
    %6334 = vmatpush1.msra.mxu0 %v190
    %6335 = vmatprep.subr.mxu0 0.0
    %6336 = vmatpush1.msra.mxu0 %v191
    %6337 = vmatprep.subr.mxu0 0.0
    %6338 = vmatpush1.msra.mxu0 %v192
    %6339 = vmatprep.subr.mxu0 0.0
    %6340 = vmatpush1.msra.mxu0 %v193
    %6341 = vmatprep.subr.mxu0 0.0
    %6342 = vmatpush1.msra.mxu0 %v194
    %6343 = vmatprep.subr.mxu0 0.0
    %6344 = vmatpush1.msra.mxu0 %v195
    %6345 = vmatprep.subr.mxu0 0.0
    %6346 = vmatpush1.msra.mxu0 %v196
    %6347 = vmatprep.subr.mxu0 0.0
    %6348 = vmatpush1.msra.mxu0 %v197
    %6349 = vmatprep.subr.mxu0 0.0
    %6350 = vmatpush1.msra.mxu0 %v198
    %6351 = vmatprep.subr.mxu0 0.0
    %6352 = vmatpush1.msra.mxu0 %v199
    %6353 = vmatprep.subr.mxu0 0.0
    %6354 = vmatpush1.msra.mxu0 %v200
    %6355 = vmatprep.subr.mxu0 0.0
    %6356 = vmatpush1.msra.mxu0 %v201
    %6357 = vmatprep.subr.mxu0 0.0
    %6358 = vmatpush1.msra.mxu0 0.0
    %6359 = vmatprep.subr.mxu0 0.0
    %6360 = vmatpush1.msra.mxu0 0.0
    %6361 = vmatprep.subr.mxu0 0.0
    %6362 = vmatpush1.msra.mxu0 0.0
    %6363 = vmatprep.subr.mxu0 0.0
    %6364 = vmatpush1.msra.mxu0 0.0
    %6365 = vmatprep.subr.mxu0 0.0
    %6366 = vmatpush1.msra.mxu0 0.0
    %6367 = vmatprep.subr.mxu0 0.0
    %6368 = vmatpush1.msra.mxu0 0.0
    %6369 = vmatprep.subr.mxu0 0.0
    %6370 = vmatpush1.msra.mxu0 0.0
    %6371 = vmatprep.subr.mxu0 0.0
    %6372 = vmatpush1.msra.mxu0 0.0
    %6373 = vmatprep.subr.mxu0 0.0
    %6374 = vmatpush1.msra.mxu0 0.0
    %6375 = vmatprep.subr.mxu0 0.0
    %6376 = vmatpush1.msra.mxu0 0.0
    %6377 = vmatprep.subr.mxu0 0.0
    %6378 = vmatpush1.msra.mxu0 0.0
    %6379 = vmatprep.subr.mxu0 0.0
    %6380 = vmatpush1.msra.mxu0 0.0
    %6381 = vmatprep.subr.mxu0 0.0
    %6382 = vmatpush1.msra.mxu0 0.0
    %6383 = vmatprep.subr.mxu0 0.0
    %6384 = vmatpush1.msra.mxu0 0.0
    %6385 = vmatprep.subr.mxu0 0.0
    %6386 = vmatpush1.msra.mxu0 0.0
    %6387 = vmatprep.subr.mxu0 0.0
    %6388 = vmatpush1.msra.mxu0 0.0
    %6389 = vmatprep.subr.mxu0 0.0
    %6390 = vmatpush1.msra.mxu0 0.0
    %6391 = vmatprep.subr.mxu0 0.0
    %6392 = vmatpush1.msra.mxu0 0.0
    %6393 = vmatprep.subr.mxu0 0.0
    %6394 = vmatpush1.msra.mxu0 0.0
    %6395 = vmatprep.subr.mxu0 0.0
    %6396 = vmatpush1.msra.mxu0 0.0
    %6397 = vmatprep.mubr.f32.mxu0 0.0
    %6398 = vmatmul.mubr.f32.gmra.mrb[0].mxu0 %v6331
    %v6399 = vpop.f32.mrb[0].mxu0
    %v6400 = vadd.f32 %v4552, %v6399
    %v6401 = vpop.f32.mrb[0].mxu0
    %6402 = vdwg.mxu0
    %v6403 = vmax.f32 %v6400, 0.0
    %v6405 = vsel %vm362, %v6403, 0
    %6407 = vmatprep.subr.mxu0 0.0
    %6408 = vmatpush1.msra.mxu0 %v153
    %6409 = vmatprep.subr.mxu0 0.0
    %6410 = vmatpush1.msra.mxu0 %v154
    %6411 = vmatprep.subr.mxu0 0.0
    %6412 = vmatpush1.msra.mxu0 %v155
    %6413 = vmatprep.subr.mxu0 0.0
    %6414 = vmatpush1.msra.mxu0 %v156
    %6415 = vmatprep.subr.mxu0 0.0
    %6416 = vmatpush1.msra.mxu0 0.0
    %6417 = vmatprep.subr.mxu0 0.0
    %6418 = vmatpush1.msra.mxu0 0.0
    %6419 = vmatprep.subr.mxu0 0.0
    %6420 = vmatpush1.msra.mxu0 0.0
    %6421 = vmatprep.subr.mxu0 0.0
    %6422 = vmatpush1.msra.mxu0 0.0
    %6423 = vmatprep.subr.mxu0 0.0
    %6424 = vmatpush1.msra.mxu0 0.0
    %6425 = vmatprep.subr.mxu0 0.0
    %6426 = vmatpush1.msra.mxu0 0.0
    %6427 = vmatprep.subr.mxu0 0.0
    %6428 = vmatpush1.msra.mxu0 0.0
    %6429 = vmatprep.subr.mxu0 0.0
    %6430 = vmatpush1.msra.mxu0 0.0
    %6431 = vmatprep.subr.mxu0 0.0
    %6432 = vmatpush1.msra.mxu0 0.0
    %6433 = vmatprep.subr.mxu0 0.0
    %6434 = vmatpush1.msra.mxu0 0.0
    %6435 = vmatprep.subr.mxu0 0.0
    %6436 = vmatpush1.msra.mxu0 0.0
    %6437 = vmatprep.subr.mxu0 0.0
    %6438 = vmatpush1.msra.mxu0 0.0
    %6439 = vmatprep.subr.mxu0 0.0
    %6440 = vmatpush1.msra.mxu0 0.0
    %6441 = vmatprep.subr.mxu0 0.0
    %6442 = vmatpush1.msra.mxu0 0.0
    %6443 = vmatprep.subr.mxu0 0.0
    %6444 = vmatpush1.msra.mxu0 0.0
    %6445 = vmatprep.subr.mxu0 0.0
    %6446 = vmatpush1.msra.mxu0 0.0
    %6447 = vmatprep.subr.mxu0 0.0
    %6448 = vmatpush1.msra.mxu0 0.0
    %6449 = vmatprep.subr.mxu0 0.0
    %6450 = vmatpush1.msra.mxu0 0.0
    %6451 = vmatprep.subr.mxu0 0.0
    %6452 = vmatpush1.msra.mxu0 0.0
    %6453 = vmatprep.subr.mxu0 0.0
    %6454 = vmatpush1.msra.mxu0 0.0
    %6455 = vmatprep.subr.mxu0 0.0
    %6456 = vmatpush1.msra.mxu0 0.0
    %6457 = vmatprep.subr.mxu0 0.0
    %6458 = vmatpush1.msra.mxu0 0.0
    %6459 = vmatprep.subr.mxu0 0.0
    %6460 = vmatpush1.msra.mxu0 0.0
    %6461 = vmatprep.subr.mxu0 0.0
    %6462 = vmatpush1.msra.mxu0 0.0
    %6463 = vmatprep.subr.mxu0 0.0
    %6464 = vmatpush1.msra.mxu0 0.0
    %6465 = vmatprep.subr.mxu0 0.0
    %6466 = vmatpush1.msra.mxu0 0.0
    %6467 = vmatprep.subr.mxu0 0.0
    %6468 = vmatpush1.msra.mxu0 0.0
    %6469 = vmatprep.subr.mxu0 0.0
    %6470 = vmatpush1.msra.mxu0 0.0
    %6471 = vmatprep.mubr.f32.mxu0 0.0
    %6472 = vmatmul.mubr.f32.gmra.mrb[0].mxu0 %v6405
    %v6473 = vpop.f32.mrb[0].mxu0
    %v6474 = vadd.f32 %v4632, %v6473
    %v6475 = vpop.f32.mrb[0].mxu0
    %6476 = vdwg.mxu0
    %v6477 = vsel %vm362, %v6326, 0
    %6479 = vmatprep.subr.mxu0 0.0
    %6480 = vmatpush1.msra.mxu0 %v148
    %6481 = vmatprep.subr.mxu0 0.0
    %6482 = vmatpush1.msra.mxu0 %v149
    %6483 = vmatprep.subr.mxu0 0.0
    %6484 = vmatpush1.msra.mxu0 %v150
    %6485 = vmatprep.subr.mxu0 0.0
    %6486 = vmatpush1.msra.mxu0 %v151
    %6487 = vmatprep.subr.mxu0 0.0
    %6488 = vmatpush1.msra.mxu0 0.0
    %6489 = vmatprep.subr.mxu0 0.0
    %6490 = vmatpush1.msra.mxu0 0.0
    %6491 = vmatprep.subr.mxu0 0.0
    %6492 = vmatpush1.msra.mxu0 0.0
    %6493 = vmatprep.subr.mxu0 0.0
    %6494 = vmatpush1.msra.mxu0 0.0
    %6495 = vmatprep.subr.mxu0 0.0
    %6496 = vmatpush1.msra.mxu0 0.0
    %6497 = vmatprep.subr.mxu0 0.0
    %6498 = vmatpush1.msra.mxu0 0.0
    %6499 = vmatprep.subr.mxu0 0.0
    %6500 = vmatpush1.msra.mxu0 0.0
    %6501 = vmatprep.subr.mxu0 0.0
    %6502 = vmatpush1.msra.mxu0 0.0
    %6503 = vmatprep.subr.mxu0 0.0
    %6504 = vmatpush1.msra.mxu0 0.0
    %6505 = vmatprep.subr.mxu0 0.0
    %6506 = vmatpush1.msra.mxu0 0.0
    %6507 = vmatprep.subr.mxu0 0.0
    %6508 = vmatpush1.msra.mxu0 0.0
    %6509 = vmatprep.subr.mxu0 0.0
    %6510 = vmatpush1.msra.mxu0 0.0
    %6511 = vmatprep.subr.mxu0 0.0
    %6512 = vmatpush1.msra.mxu0 0.0
    %6513 = vmatprep.subr.mxu0 0.0
    %6514 = vmatpush1.msra.mxu0 0.0
    %6515 = vmatprep.subr.mxu0 0.0
    %6516 = vmatpush1.msra.mxu0 0.0
    %6517 = vmatprep.subr.mxu0 0.0
    %6518 = vmatpush1.msra.mxu0 0.0
    %6519 = vmatprep.subr.mxu0 0.0
    %6520 = vmatpush1.msra.mxu0 0.0
    %6521 = vmatprep.subr.mxu0 0.0
    %6522 = vmatpush1.msra.mxu0 0.0
    %6523 = vmatprep.subr.mxu0 0.0
    %6524 = vmatpush1.msra.mxu0 0.0
    %6525 = vmatprep.subr.mxu0 0.0
    %6526 = vmatpush1.msra.mxu0 0.0
    %6527 = vmatprep.subr.mxu0 0.0
    %6528 = vmatpush1.msra.mxu0 0.0
    %6529 = vmatprep.subr.mxu0 0.0
    %6530 = vmatpush1.msra.mxu0 0.0
    %6531 = vmatprep.subr.mxu0 0.0
    %6532 = vmatpush1.msra.mxu0 0.0
    %6533 = vmatprep.subr.mxu0 0.0
    %6534 = vmatpush1.msra.mxu0 0.0
    %6535 = vmatprep.subr.mxu0 0.0
    %6536 = vmatpush1.msra.mxu0 0.0
    %6537 = vmatprep.subr.mxu0 0.0
    %6538 = vmatpush1.msra.mxu0 0.0
    %6539 = vmatprep.subr.mxu0 0.0
    %6540 = vmatpush1.msra.mxu0 0.0
    %6541 = vmatprep.subr.mxu0 0.0
    %6542 = vmatpush1.msra.mxu0 0.0
    %6543 = vmatprep.mubr.f32.mxu0 0.0
    %6544 = vmatmul.mubr.f32.gmra.mrb[0].mxu0 %v6477
    %v6545 = vpop.f32.mrb[0].mxu0
    %v6546 = vadd.f32 %v4711, %v6545
    %v6547 = vpop.f32.mrb[0].mxu0
    %6548 = vdwg.mxu0
    %v6549 = vadd.f32 %v6474, %v6546
    %v6550 = vxor.u32 %v6549, 2147483648
    %v6551 = vmul.f32 %v6550, 1.442695
    %v6552 = vpow.pop %v6551
    %v6553 = vadd.f32 %v6552, 1.0
    %v6554 = vrcp.pop %v6553
    %v6555 = vmul.f32 1.0, %v6554
    %6557 = vrot.lane.b32.xlu0 %v6546, 64
    %v6558 = vpop.permute.xlu0 %6557
    %v6560 = vmul.f32 %v6555, %v6558
    %6562 = vrot.lane.b32.xlu0 %v6560, 64
    %v6563 = vpop.permute.xlu0 %6562
    %v6565 = vadd.f32 %v6474, %v6563
    %v6566 = vtanh.pop %v6565
    %v6567 = vsub.f32 1.0, %v6555
    %6569 = vrot.lane.b32.xlu0 %v6566, 96
    %v6570 = vpop.permute.xlu0 %6569
    %v6572 = vmul.f32 %v6567, %v6570
    %v6573 = vmul.f32 %v6555, %v4810
    %v6574 = vadd.f32 %v6572, %v6573
    %v6575 = vmul.f32 %v1785, %v6574
    %v6576 = vsub.f32 %v1785, %v6574
    %v6577 = vand.u32 2147483647, %v6576
    %6579 = vrot.lane.b32.xlu0 %v6577, 64
    %v6580 = vpop.permute.xlu0 %6579
    %v6582 = vsel %vm362, %v2894, %v6575
    %v6583 = vsel %vm2904, %v6582, %v2898
    %v6584 = vsel %vm2906, %v6583, %v6580
    %6585 = vmatprep.subr.mxu0 0.0
    %6586 = vmatpush1.msra.mxu0 %v158
    %6587 = vmatprep.subr.mxu0 0.0
    %6588 = vmatpush1.msra.mxu0 %v159
    %6589 = vmatprep.subr.mxu0 0.0
    %6590 = vmatpush1.msra.mxu0 %v160
    %6591 = vmatprep.subr.mxu0 0.0
    %6592 = vmatpush1.msra.mxu0 %v161
    %6593 = vmatprep.subr.mxu0 0.0
    %6594 = vmatpush1.msra.mxu0 %v162
    %6595 = vmatprep.subr.mxu0 0.0
    %6596 = vmatpush1.msra.mxu0 %v163
    %6597 = vmatprep.subr.mxu0 0.0
    %6598 = vmatpush1.msra.mxu0 %v164
    %6599 = vmatprep.subr.mxu0 0.0
    %6600 = vmatpush1.msra.mxu0 %v165
    %6601 = vmatprep.subr.mxu0 0.0
    %6602 = vmatpush1.msra.mxu0 %v166
    %6603 = vmatprep.subr.mxu0 0.0
    %6604 = vmatpush1.msra.mxu0 %v167
    %6605 = vmatprep.subr.mxu0 0.0
    %6606 = vmatpush1.msra.mxu0 %v168
    %6607 = vmatprep.subr.mxu0 0.0
    %6608 = vmatpush1.msra.mxu0 %v169
    %6609 = vmatprep.subr.mxu0 0.0
    %6610 = vmatpush1.msra.mxu0 %v170
    %6611 = vmatprep.subr.mxu0 0.0
    %6612 = vmatpush1.msra.mxu0 %v171
    %6613 = vmatprep.subr.mxu0 0.0
    %6614 = vmatpush1.msra.mxu0 %v172
    %6615 = vmatprep.subr.mxu0 0.0
    %6616 = vmatpush1.msra.mxu0 %v173
    %6617 = vmatprep.subr.mxu0 0.0
    %6618 = vmatpush1.msra.mxu0 0.0
    %6619 = vmatprep.subr.mxu0 0.0
    %6620 = vmatpush1.msra.mxu0 0.0
    %6621 = vmatprep.subr.mxu0 0.0
    %6622 = vmatpush1.msra.mxu0 0.0
    %6623 = vmatprep.subr.mxu0 0.0
    %6624 = vmatpush1.msra.mxu0 0.0
    %6625 = vmatprep.subr.mxu0 0.0
    %6626 = vmatpush1.msra.mxu0 0.0
    %6627 = vmatprep.subr.mxu0 0.0
    %6628 = vmatpush1.msra.mxu0 0.0
    %6629 = vmatprep.subr.mxu0 0.0
    %6630 = vmatpush1.msra.mxu0 0.0
    %6631 = vmatprep.subr.mxu0 0.0
    %6632 = vmatpush1.msra.mxu0 0.0
    %6633 = vmatprep.subr.mxu0 0.0
    %6634 = vmatpush1.msra.mxu0 0.0
    %6635 = vmatprep.subr.mxu0 0.0
    %6636 = vmatpush1.msra.mxu0 0.0
    %6637 = vmatprep.subr.mxu0 0.0
    %6638 = vmatpush1.msra.mxu0 0.0
    %6639 = vmatprep.subr.mxu0 0.0
    %6640 = vmatpush1.msra.mxu0 0.0
    %6641 = vmatprep.subr.mxu0 0.0
    %6642 = vmatpush1.msra.mxu0 0.0
    %6643 = vmatprep.subr.mxu0 0.0
    %6644 = vmatpush1.msra.mxu0 0.0
    %6645 = vmatprep.subr.mxu0 0.0
    %6646 = vmatpush1.msra.mxu0 0.0
    %6647 = vmatprep.subr.mxu0 0.0
    %6648 = vmatpush1.msra.mxu0 0.0
    %6649 = vmatprep.mubr.f32.mxu0 0.0
    %6650 = vmatmul.mubr.f32.gmra.mrb[0].mxu0 %v6584
    %v6651 = vpop.f32.mrb[0].mxu0
    %v6652 = vadd.f32 %v2912, %v6651
    %v6653 = vpop.f32.mrb[0].mxu0
    %6654 = vdwg.mxu0
    %v6655 = vtanh.pop %v6652
    %v6657 = vsel %vm362, %v6655, 0
    %6659 = vmatprep.subr.mxu0 0.0
    %6660 = vmatpush1.msra.mxu0 %v175
    %6661 = vmatprep.subr.mxu0 0.0
    %6662 = vmatpush1.msra.mxu0 %v176
    %6663 = vmatprep.subr.mxu0 0.0
    %6664 = vmatpush1.msra.mxu0 %v177
    %6665 = vmatprep.subr.mxu0 0.0
    %6666 = vmatpush1.msra.mxu0 %v178
    %6667 = vmatprep.subr.mxu0 0.0
    %6668 = vmatpush1.msra.mxu0 0.0
    %6669 = vmatprep.subr.mxu0 0.0
    %6670 = vmatpush1.msra.mxu0 0.0
    %6671 = vmatprep.subr.mxu0 0.0
    %6672 = vmatpush1.msra.mxu0 0.0
    %6673 = vmatprep.subr.mxu0 0.0
    %6674 = vmatpush1.msra.mxu0 0.0
    %6675 = vmatprep.subr.mxu0 0.0
    %6676 = vmatpush1.msra.mxu0 0.0
    %6677 = vmatprep.subr.mxu0 0.0
    %6678 = vmatpush1.msra.mxu0 0.0
    %6679 = vmatprep.subr.mxu0 0.0
    %6680 = vmatpush1.msra.mxu0 0.0
    %6681 = vmatprep.subr.mxu0 0.0
    %6682 = vmatpush1.msra.mxu0 0.0
    %6683 = vmatprep.subr.mxu0 0.0
    %6684 = vmatpush1.msra.mxu0 0.0
    %6685 = vmatprep.subr.mxu0 0.0
    %6686 = vmatpush1.msra.mxu0 0.0
    %6687 = vmatprep.subr.mxu0 0.0
    %6688 = vmatpush1.msra.mxu0 0.0
    %6689 = vmatprep.subr.mxu0 0.0
    %6690 = vmatpush1.msra.mxu0 0.0
    %6691 = vmatprep.subr.mxu0 0.0
    %6692 = vmatpush1.msra.mxu0 0.0
    %6693 = vmatprep.subr.mxu0 0.0
    %6694 = vmatpush1.msra.mxu0 0.0
    %6695 = vmatprep.subr.mxu0 0.0
    %6696 = vmatpush1.msra.mxu0 0.0
    %6697 = vmatprep.subr.mxu0 0.0
    %6698 = vmatpush1.msra.mxu0 0.0
    %6699 = vmatprep.subr.mxu0 0.0
    %6700 = vmatpush1.msra.mxu0 0.0
    %6701 = vmatprep.subr.mxu0 0.0
    %6702 = vmatpush1.msra.mxu0 0.0
    %6703 = vmatprep.subr.mxu0 0.0
    %6704 = vmatpush1.msra.mxu0 0.0
    %6705 = vmatprep.subr.mxu0 0.0
    %6706 = vmatpush1.msra.mxu0 0.0
    %6707 = vmatprep.subr.mxu0 0.0
    %6708 = vmatpush1.msra.mxu0 0.0
    %6709 = vmatprep.subr.mxu0 0.0
    %6710 = vmatpush1.msra.mxu0 0.0
    %6711 = vmatprep.subr.mxu0 0.0
    %6712 = vmatpush1.msra.mxu0 0.0
    %6713 = vmatprep.subr.mxu0 0.0
    %6714 = vmatpush1.msra.mxu0 0.0
    %6715 = vmatprep.subr.mxu0 0.0
    %6716 = vmatpush1.msra.mxu0 0.0
    %6717 = vmatprep.subr.mxu0 0.0
    %6718 = vmatpush1.msra.mxu0 0.0
    %6719 = vmatprep.subr.mxu0 0.0
    %6720 = vmatpush1.msra.mxu0 0.0
    %6721 = vmatprep.subr.mxu0 0.0
    %6722 = vmatpush1.msra.mxu0 0.0
    %6723 = vmatprep.mubr.f32.mxu0 0.0
    %6724 = vmatmul.mubr.f32.gmra.mrb[0].mxu0 %v6657
    %v6725 = vpop.f32.mrb[0].mxu0
    %v6726 = vadd.f32 0.0, %v6725
    %v6727 = vpop.f32.mrb[0].mxu0
    %6728 = vdwg.mxu0
    %v6730 = vrot.slane %v6574, 6
    %v6732 = vmul.f32 %v1786, %v6730
    %v6733 = vsub.f32 %v1786, %v6730
    %v6734 = vand.u32 2147483647, %v6733
    %6736 = vrot.lane.b32.xlu0 %v6734, 64
    %v6737 = vpop.permute.xlu0 %6736
    %v6739 = vsel %vm362, %v3060, %v6732
    %v6740 = vsel %vm2904, %v6739, %v3064
    %v6741 = vsel %vm2906, %v6740, %v6737
    %v6743 = vrot.slane %v6741, 2
    %6745 = vmatprep.subr.mxu0 0.0
    %6746 = vmatpush1.msra.mxu0 %v158
    %6747 = vmatprep.subr.mxu0 0.0
    %6748 = vmatpush1.msra.mxu0 %v159
    %6749 = vmatprep.subr.mxu0 0.0
    %6750 = vmatpush1.msra.mxu0 %v160
    %6751 = vmatprep.subr.mxu0 0.0
    %6752 = vmatpush1.msra.mxu0 %v161
    %6753 = vmatprep.subr.mxu0 0.0
    %6754 = vmatpush1.msra.mxu0 %v162
    %6755 = vmatprep.subr.mxu0 0.0
    %6756 = vmatpush1.msra.mxu0 %v163
    %6757 = vmatprep.subr.mxu0 0.0
    %6758 = vmatpush1.msra.mxu0 %v164
    %6759 = vmatprep.subr.mxu0 0.0
    %6760 = vmatpush1.msra.mxu0 %v165
    %6761 = vmatprep.subr.mxu0 0.0
    %6762 = vmatpush1.msra.mxu0 %v166
    %6763 = vmatprep.subr.mxu0 0.0
    %6764 = vmatpush1.msra.mxu0 %v167
    %6765 = vmatprep.subr.mxu0 0.0
    %6766 = vmatpush1.msra.mxu0 %v168
    %6767 = vmatprep.subr.mxu0 0.0
    %6768 = vmatpush1.msra.mxu0 %v169
    %6769 = vmatprep.subr.mxu0 0.0
    %6770 = vmatpush1.msra.mxu0 %v170
    %6771 = vmatprep.subr.mxu0 0.0
    %6772 = vmatpush1.msra.mxu0 %v171
    %6773 = vmatprep.subr.mxu0 0.0
    %6774 = vmatpush1.msra.mxu0 %v172
    %6775 = vmatprep.subr.mxu0 0.0
    %6776 = vmatpush1.msra.mxu0 %v173
    %6777 = vmatprep.subr.mxu0 0.0
    %6778 = vmatpush1.msra.mxu0 0.0
    %6779 = vmatprep.subr.mxu0 0.0
    %6780 = vmatpush1.msra.mxu0 0.0
    %6781 = vmatprep.subr.mxu0 0.0
    %6782 = vmatpush1.msra.mxu0 0.0
    %6783 = vmatprep.subr.mxu0 0.0
    %6784 = vmatpush1.msra.mxu0 0.0
    %6785 = vmatprep.subr.mxu0 0.0
    %6786 = vmatpush1.msra.mxu0 0.0
    %6787 = vmatprep.subr.mxu0 0.0
    %6788 = vmatpush1.msra.mxu0 0.0
    %6789 = vmatprep.subr.mxu0 0.0
    %6790 = vmatpush1.msra.mxu0 0.0
    %6791 = vmatprep.subr.mxu0 0.0
    %6792 = vmatpush1.msra.mxu0 0.0
    %6793 = vmatprep.subr.mxu0 0.0
    %6794 = vmatpush1.msra.mxu0 0.0
    %6795 = vmatprep.subr.mxu0 0.0
    %6796 = vmatpush1.msra.mxu0 0.0
    %6797 = vmatprep.subr.mxu0 0.0
    %6798 = vmatpush1.msra.mxu0 0.0
    %6799 = vmatprep.subr.mxu0 0.0
    %6800 = vmatpush1.msra.mxu0 0.0
    %6801 = vmatprep.subr.mxu0 0.0
    %6802 = vmatpush1.msra.mxu0 0.0
    %6803 = vmatprep.subr.mxu0 0.0
    %6804 = vmatpush1.msra.mxu0 0.0
    %6805 = vmatprep.subr.mxu0 0.0
    %6806 = vmatpush1.msra.mxu0 0.0
    %6807 = vmatprep.subr.mxu0 0.0
    %6808 = vmatpush1.msra.mxu0 0.0
    %6809 = vmatprep.mubr.f32.mxu0 0.0
    %6810 = vmatmul.mubr.f32.gmra.mrb[0].mxu0 %v6743
    %v6811 = vpop.f32.mrb[0].mxu0
    %v6812 = vadd.f32 %v2912, %v6811
    %v6813 = vpop.f32.mrb[0].mxu0
    %6814 = vdwg.mxu0
    %v6815 = vtanh.pop %v6812
    %v6817 = vsel %vm362, %v6815, 0
    %6819 = vmatprep.subr.mxu0 0.0
    %6820 = vmatpush1.msra.mxu0 %v175
    %6821 = vmatprep.subr.mxu0 0.0
    %6822 = vmatpush1.msra.mxu0 %v176
    %6823 = vmatprep.subr.mxu0 0.0
    %6824 = vmatpush1.msra.mxu0 %v177
    %6825 = vmatprep.subr.mxu0 0.0
    %6826 = vmatpush1.msra.mxu0 %v178
    %6827 = vmatprep.subr.mxu0 0.0
    %6828 = vmatpush1.msra.mxu0 0.0
    %6829 = vmatprep.subr.mxu0 0.0
    %6830 = vmatpush1.msra.mxu0 0.0
    %6831 = vmatprep.subr.mxu0 0.0
    %6832 = vmatpush1.msra.mxu0 0.0
    %6833 = vmatprep.subr.mxu0 0.0
    %6834 = vmatpush1.msra.mxu0 0.0
    %6835 = vmatprep.subr.mxu0 0.0
    %6836 = vmatpush1.msra.mxu0 0.0
    %6837 = vmatprep.subr.mxu0 0.0
    %6838 = vmatpush1.msra.mxu0 0.0
    %6839 = vmatprep.subr.mxu0 0.0
    %6840 = vmatpush1.msra.mxu0 0.0
    %6841 = vmatprep.subr.mxu0 0.0
    %6842 = vmatpush1.msra.mxu0 0.0
    %6843 = vmatprep.subr.mxu0 0.0
    %6844 = vmatpush1.msra.mxu0 0.0
    %6845 = vmatprep.subr.mxu0 0.0
    %6846 = vmatpush1.msra.mxu0 0.0
    %6847 = vmatprep.subr.mxu0 0.0
    %6848 = vmatpush1.msra.mxu0 0.0
    %6849 = vmatprep.subr.mxu0 0.0
    %6850 = vmatpush1.msra.mxu0 0.0
    %6851 = vmatprep.subr.mxu0 0.0
    %6852 = vmatpush1.msra.mxu0 0.0
    %6853 = vmatprep.subr.mxu0 0.0
    %6854 = vmatpush1.msra.mxu0 0.0
    %6855 = vmatprep.subr.mxu0 0.0
    %6856 = vmatpush1.msra.mxu0 0.0
    %6857 = vmatprep.subr.mxu0 0.0
    %6858 = vmatpush1.msra.mxu0 0.0
    %6859 = vmatprep.subr.mxu0 0.0
    %6860 = vmatpush1.msra.mxu0 0.0
    %6861 = vmatprep.subr.mxu0 0.0
    %6862 = vmatpush1.msra.mxu0 0.0
    %6863 = vmatprep.subr.mxu0 0.0
    %6864 = vmatpush1.msra.mxu0 0.0
    %6865 = vmatprep.subr.mxu0 0.0
    %6866 = vmatpush1.msra.mxu0 0.0
    %6867 = vmatprep.subr.mxu0 0.0
    %6868 = vmatpush1.msra.mxu0 0.0
    %6869 = vmatprep.subr.mxu0 0.0
    %6870 = vmatpush1.msra.mxu0 0.0
    %6871 = vmatprep.subr.mxu0 0.0
    %6872 = vmatpush1.msra.mxu0 0.0
    %6873 = vmatprep.subr.mxu0 0.0
    %6874 = vmatpush1.msra.mxu0 0.0
    %6875 = vmatprep.subr.mxu0 0.0
    %6876 = vmatpush1.msra.mxu0 0.0
    %6877 = vmatprep.subr.mxu0 0.0
    %6878 = vmatpush1.msra.mxu0 0.0
    %6879 = vmatprep.subr.mxu0 0.0
    %6880 = vmatpush1.msra.mxu0 0.0
    %6881 = vmatprep.subr.mxu0 0.0
    %6882 = vmatpush1.msra.mxu0 0.0
    %6883 = vmatprep.mubr.f32.mxu0 0.0
    %6884 = vmatmul.mubr.f32.gmra.mrb[0].mxu0 %v6817
    %v6885 = vpop.f32.mrb[0].mxu0
    %v6886 = vadd.f32 0.0, %v6885
    %v6887 = vpop.f32.mrb[0].mxu0
    %6888 = vdwg.mxu0
    %v6889 = vrot.slane %v6574, 4
    %v6891 = vmul.f32 %v1787, %v6889
    %v6892 = vsub.f32 %v1787, %v6889
    %v6893 = vand.u32 2147483647, %v6892
    %6895 = vrot.lane.b32.xlu0 %v6893, 64
    %v6896 = vpop.permute.xlu0 %6895
    %v6898 = vsel %vm362, %v3221, %v6891
    %v6899 = vsel %vm2904, %v6898, %v3225
    %v6900 = vsel %vm2906, %v6899, %v6896
    %v6902 = vrot.slane %v6900, 4
    %6904 = vmatprep.subr.mxu0 0.0
    %6905 = vmatpush1.msra.mxu0 %v158
    %6906 = vmatprep.subr.mxu0 0.0
    %6907 = vmatpush1.msra.mxu0 %v159
    %6908 = vmatprep.subr.mxu0 0.0
    %6909 = vmatpush1.msra.mxu0 %v160
    %6910 = vmatprep.subr.mxu0 0.0
    %6911 = vmatpush1.msra.mxu0 %v161
    %6912 = vmatprep.subr.mxu0 0.0
    %6913 = vmatpush1.msra.mxu0 %v162
    %6914 = vmatprep.subr.mxu0 0.0
    %6915 = vmatpush1.msra.mxu0 %v163
    %6916 = vmatprep.subr.mxu0 0.0
    %6917 = vmatpush1.msra.mxu0 %v164
    %6918 = vmatprep.subr.mxu0 0.0
    %6919 = vmatpush1.msra.mxu0 %v165
    %6920 = vmatprep.subr.mxu0 0.0
    %6921 = vmatpush1.msra.mxu0 %v166
    %6922 = vmatprep.subr.mxu0 0.0
    %6923 = vmatpush1.msra.mxu0 %v167
    %6924 = vmatprep.subr.mxu0 0.0
    %6925 = vmatpush1.msra.mxu0 %v168
    %6926 = vmatprep.subr.mxu0 0.0
    %6927 = vmatpush1.msra.mxu0 %v169
    %6928 = vmatprep.subr.mxu0 0.0
    %6929 = vmatpush1.msra.mxu0 %v170
    %6930 = vmatprep.subr.mxu0 0.0
    %6931 = vmatpush1.msra.mxu0 %v171
    %6932 = vmatprep.subr.mxu0 0.0
    %6933 = vmatpush1.msra.mxu0 %v172
    %6934 = vmatprep.subr.mxu0 0.0
    %6935 = vmatpush1.msra.mxu0 %v173
    %6936 = vmatprep.subr.mxu0 0.0
    %6937 = vmatpush1.msra.mxu0 0.0
    %6938 = vmatprep.subr.mxu0 0.0
    %6939 = vmatpush1.msra.mxu0 0.0
    %6940 = vmatprep.subr.mxu0 0.0
    %6941 = vmatpush1.msra.mxu0 0.0
    %6942 = vmatprep.subr.mxu0 0.0
    %6943 = vmatpush1.msra.mxu0 0.0
    %6944 = vmatprep.subr.mxu0 0.0
    %6945 = vmatpush1.msra.mxu0 0.0
    %6946 = vmatprep.subr.mxu0 0.0
    %6947 = vmatpush1.msra.mxu0 0.0
    %6948 = vmatprep.subr.mxu0 0.0
    %6949 = vmatpush1.msra.mxu0 0.0
    %6950 = vmatprep.subr.mxu0 0.0
    %6951 = vmatpush1.msra.mxu0 0.0
    %6952 = vmatprep.subr.mxu0 0.0
    %6953 = vmatpush1.msra.mxu0 0.0
    %6954 = vmatprep.subr.mxu0 0.0
    %6955 = vmatpush1.msra.mxu0 0.0
    %6956 = vmatprep.subr.mxu0 0.0
    %6957 = vmatpush1.msra.mxu0 0.0
    %6958 = vmatprep.subr.mxu0 0.0
    %6959 = vmatpush1.msra.mxu0 0.0
    %6960 = vmatprep.subr.mxu0 0.0
    %6961 = vmatpush1.msra.mxu0 0.0
    %6962 = vmatprep.subr.mxu0 0.0
    %6963 = vmatpush1.msra.mxu0 0.0
    %6964 = vmatprep.subr.mxu0 0.0
    %6965 = vmatpush1.msra.mxu0 0.0
    %6966 = vmatprep.subr.mxu0 0.0
    %6967 = vmatpush1.msra.mxu0 0.0
    %6968 = vmatprep.mubr.f32.mxu0 0.0
    %6969 = vmatmul.mubr.f32.gmra.mrb[0].mxu0 %v6902
    %v6970 = vpop.f32.mrb[0].mxu0
    %v6971 = vadd.f32 %v2912, %v6970
    %v6972 = vpop.f32.mrb[0].mxu0
    %6973 = vdwg.mxu0
    %v6974 = vtanh.pop %v6971
    %v6976 = vsel %vm362, %v6974, 0
    %6978 = vmatprep.subr.mxu0 0.0
    %6979 = vmatpush1.msra.mxu0 %v175
    %6980 = vmatprep.subr.mxu0 0.0
    %6981 = vmatpush1.msra.mxu0 %v176
    %6982 = vmatprep.subr.mxu0 0.0
    %6983 = vmatpush1.msra.mxu0 %v177
    %6984 = vmatprep.subr.mxu0 0.0
    %6985 = vmatpush1.msra.mxu0 %v178
    %6986 = vmatprep.subr.mxu0 0.0
    %6987 = vmatpush1.msra.mxu0 0.0
    %6988 = vmatprep.subr.mxu0 0.0
    %6989 = vmatpush1.msra.mxu0 0.0
    %6990 = vmatprep.subr.mxu0 0.0
    %6991 = vmatpush1.msra.mxu0 0.0
    %6992 = vmatprep.subr.mxu0 0.0
    %6993 = vmatpush1.msra.mxu0 0.0
    %6994 = vmatprep.subr.mxu0 0.0
    %6995 = vmatpush1.msra.mxu0 0.0
    %6996 = vmatprep.subr.mxu0 0.0
    %6997 = vmatpush1.msra.mxu0 0.0
    %6998 = vmatprep.subr.mxu0 0.0
    %6999 = vmatpush1.msra.mxu0 0.0
    %7000 = vmatprep.subr.mxu0 0.0
    %7001 = vmatpush1.msra.mxu0 0.0
    %7002 = vmatprep.subr.mxu0 0.0
    %7003 = vmatpush1.msra.mxu0 0.0
    %7004 = vmatprep.subr.mxu0 0.0
    %7005 = vmatpush1.msra.mxu0 0.0
    %7006 = vmatprep.subr.mxu0 0.0
    %7007 = vmatpush1.msra.mxu0 0.0
    %7008 = vmatprep.subr.mxu0 0.0
    %7009 = vmatpush1.msra.mxu0 0.0
    %7010 = vmatprep.subr.mxu0 0.0
    %7011 = vmatpush1.msra.mxu0 0.0
    %7012 = vmatprep.subr.mxu0 0.0
    %7013 = vmatpush1.msra.mxu0 0.0
    %7014 = vmatprep.subr.mxu0 0.0
    %7015 = vmatpush1.msra.mxu0 0.0
    %7016 = vmatprep.subr.mxu0 0.0
    %7017 = vmatpush1.msra.mxu0 0.0
    %7018 = vmatprep.subr.mxu0 0.0
    %7019 = vmatpush1.msra.mxu0 0.0
    %7020 = vmatprep.subr.mxu0 0.0
    %7021 = vmatpush1.msra.mxu0 0.0
    %7022 = vmatprep.subr.mxu0 0.0
    %7023 = vmatpush1.msra.mxu0 0.0
    %7024 = vmatprep.subr.mxu0 0.0
    %7025 = vmatpush1.msra.mxu0 0.0
    %7026 = vmatprep.subr.mxu0 0.0
    %7027 = vmatpush1.msra.mxu0 0.0
    %7028 = vmatprep.subr.mxu0 0.0
    %7029 = vmatpush1.msra.mxu0 0.0
    %7030 = vmatprep.subr.mxu0 0.0
    %7031 = vmatpush1.msra.mxu0 0.0
    %7032 = vmatprep.subr.mxu0 0.0
    %7033 = vmatpush1.msra.mxu0 0.0
    %7034 = vmatprep.subr.mxu0 0.0
    %7035 = vmatpush1.msra.mxu0 0.0
    %7036 = vmatprep.subr.mxu0 0.0
    %7037 = vmatpush1.msra.mxu0 0.0
    %7038 = vmatprep.subr.mxu0 0.0
    %7039 = vmatpush1.msra.mxu0 0.0
    %7040 = vmatprep.subr.mxu0 0.0
    %7041 = vmatpush1.msra.mxu0 0.0
    %7042 = vmatprep.mubr.f32.mxu0 0.0
    %7043 = vmatmul.mubr.f32.gmra.mrb[0].mxu0 %v6976
    %v7044 = vpop.f32.mrb[0].mxu0
    %v7045 = vadd.f32 0.0, %v7044
    %v7046 = vpop.f32.mrb[0].mxu0
    %7047 = vdwg.mxu0
    %v7048 = vrot.slane %v6574, 2
    %v7050 = vmul.f32 %v1788, %v7048
    %v7051 = vsub.f32 %v1788, %v7048
    %v7052 = vand.u32 2147483647, %v7051
    %7054 = vrot.lane.b32.xlu0 %v7052, 64
    %v7055 = vpop.permute.xlu0 %7054
    %v7057 = vsel %vm362, %v3382, %v7050
    %v7058 = vsel %vm2904, %v7057, %v3386
    %v7059 = vsel %vm2906, %v7058, %v7055
    %v7061 = vrot.slane %v7059, 6
    %7063 = vmatprep.subr.mxu0 0.0
    %7064 = vmatpush1.msra.mxu0 %v158
    %7065 = vmatprep.subr.mxu0 0.0
    %7066 = vmatpush1.msra.mxu0 %v159
    %7067 = vmatprep.subr.mxu0 0.0
    %7068 = vmatpush1.msra.mxu0 %v160
    %7069 = vmatprep.subr.mxu0 0.0
    %7070 = vmatpush1.msra.mxu0 %v161
    %7071 = vmatprep.subr.mxu0 0.0
    %7072 = vmatpush1.msra.mxu0 %v162
    %7073 = vmatprep.subr.mxu0 0.0
    %7074 = vmatpush1.msra.mxu0 %v163
    %7075 = vmatprep.subr.mxu0 0.0
    %7076 = vmatpush1.msra.mxu0 %v164
    %7077 = vmatprep.subr.mxu0 0.0
    %7078 = vmatpush1.msra.mxu0 %v165
    %7079 = vmatprep.subr.mxu0 0.0
    %7080 = vmatpush1.msra.mxu0 %v166
    %7081 = vmatprep.subr.mxu0 0.0
    %7082 = vmatpush1.msra.mxu0 %v167
    %7083 = vmatprep.subr.mxu0 0.0
    %7084 = vmatpush1.msra.mxu0 %v168
    %7085 = vmatprep.subr.mxu0 0.0
    %7086 = vmatpush1.msra.mxu0 %v169
    %7087 = vmatprep.subr.mxu0 0.0
    %7088 = vmatpush1.msra.mxu0 %v170
    %7089 = vmatprep.subr.mxu0 0.0
    %7090 = vmatpush1.msra.mxu0 %v171
    %7091 = vmatprep.subr.mxu0 0.0
    %7092 = vmatpush1.msra.mxu0 %v172
    %7093 = vmatprep.subr.mxu0 0.0
    %7094 = vmatpush1.msra.mxu0 %v173
    %7095 = vmatprep.subr.mxu0 0.0
    %7096 = vmatpush1.msra.mxu0 0.0
    %7097 = vmatprep.subr.mxu0 0.0
    %7098 = vmatpush1.msra.mxu0 0.0
    %7099 = vmatprep.subr.mxu0 0.0
    %7100 = vmatpush1.msra.mxu0 0.0
    %7101 = vmatprep.subr.mxu0 0.0
    %7102 = vmatpush1.msra.mxu0 0.0
    %7103 = vmatprep.subr.mxu0 0.0
    %7104 = vmatpush1.msra.mxu0 0.0
    %7105 = vmatprep.subr.mxu0 0.0
    %7106 = vmatpush1.msra.mxu0 0.0
    %7107 = vmatprep.subr.mxu0 0.0
    %7108 = vmatpush1.msra.mxu0 0.0
    %7109 = vmatprep.subr.mxu0 0.0
    %7110 = vmatpush1.msra.mxu0 0.0
    %7111 = vmatprep.subr.mxu0 0.0
    %7112 = vmatpush1.msra.mxu0 0.0
    %7113 = vmatprep.subr.mxu0 0.0
    %7114 = vmatpush1.msra.mxu0 0.0
    %7115 = vmatprep.subr.mxu0 0.0
    %7116 = vmatpush1.msra.mxu0 0.0
    %7117 = vmatprep.subr.mxu0 0.0
    %7118 = vmatpush1.msra.mxu0 0.0
    %7119 = vmatprep.subr.mxu0 0.0
    %7120 = vmatpush1.msra.mxu0 0.0
    %7121 = vmatprep.subr.mxu0 0.0
    %7122 = vmatpush1.msra.mxu0 0.0
    %7123 = vmatprep.subr.mxu0 0.0
    %7124 = vmatpush1.msra.mxu0 0.0
    %7125 = vmatprep.subr.mxu0 0.0
    %7126 = vmatpush1.msra.mxu0 0.0
    %7127 = vmatprep.mubr.f32.mxu0 0.0
    %7128 = vmatmul.mubr.f32.gmra.mrb[0].mxu0 %v7061
    %v7129 = vpop.f32.mrb[0].mxu0
    %v7130 = vadd.f32 %v2912, %v7129
    %v7131 = vpop.f32.mrb[0].mxu0
    %7132 = vdwg.mxu0
    %v7133 = vtanh.pop %v7130
    %v7135 = vsel %vm362, %v7133, 0
    %7137 = vmatprep.subr.mxu0 0.0
    %7138 = vmatpush1.msra.mxu0 %v175
    %7139 = vmatprep.subr.mxu0 0.0
    %7140 = vmatpush1.msra.mxu0 %v176
    %7141 = vmatprep.subr.mxu0 0.0
    %7142 = vmatpush1.msra.mxu0 %v177
    %7143 = vmatprep.subr.mxu0 0.0
    %7144 = vmatpush1.msra.mxu0 %v178
    %7145 = vmatprep.subr.mxu0 0.0
    %7146 = vmatpush1.msra.mxu0 0.0
    %7147 = vmatprep.subr.mxu0 0.0
    %7148 = vmatpush1.msra.mxu0 0.0
    %7149 = vmatprep.subr.mxu0 0.0
    %7150 = vmatpush1.msra.mxu0 0.0
    %7151 = vmatprep.subr.mxu0 0.0
    %7152 = vmatpush1.msra.mxu0 0.0
    %7153 = vmatprep.subr.mxu0 0.0
    %7154 = vmatpush1.msra.mxu0 0.0
    %7155 = vmatprep.subr.mxu0 0.0
    %7156 = vmatpush1.msra.mxu0 0.0
    %7157 = vmatprep.subr.mxu0 0.0
    %7158 = vmatpush1.msra.mxu0 0.0
    %7159 = vmatprep.subr.mxu0 0.0
    %7160 = vmatpush1.msra.mxu0 0.0
    %7161 = vmatprep.subr.mxu0 0.0
    %7162 = vmatpush1.msra.mxu0 0.0
    %7163 = vmatprep.subr.mxu0 0.0
    %7164 = vmatpush1.msra.mxu0 0.0
    %7165 = vmatprep.subr.mxu0 0.0
    %7166 = vmatpush1.msra.mxu0 0.0
    %7167 = vmatprep.subr.mxu0 0.0
    %7168 = vmatpush1.msra.mxu0 0.0
    %7169 = vmatprep.subr.mxu0 0.0
    %7170 = vmatpush1.msra.mxu0 0.0
    %7171 = vmatprep.subr.mxu0 0.0
    %7172 = vmatpush1.msra.mxu0 0.0
    %7173 = vmatprep.subr.mxu0 0.0
    %7174 = vmatpush1.msra.mxu0 0.0
    %7175 = vmatprep.subr.mxu0 0.0
    %7176 = vmatpush1.msra.mxu0 0.0
    %7177 = vmatprep.subr.mxu0 0.0
    %7178 = vmatpush1.msra.mxu0 0.0
    %7179 = vmatprep.subr.mxu0 0.0
    %7180 = vmatpush1.msra.mxu0 0.0
    %7181 = vmatprep.subr.mxu0 0.0
    %7182 = vmatpush1.msra.mxu0 0.0
    %7183 = vmatprep.subr.mxu0 0.0
    %7184 = vmatpush1.msra.mxu0 0.0
    %7185 = vmatprep.subr.mxu0 0.0
    %7186 = vmatpush1.msra.mxu0 0.0
    %7187 = vmatprep.subr.mxu0 0.0
    %7188 = vmatpush1.msra.mxu0 0.0
    %7189 = vmatprep.subr.mxu0 0.0
    %7190 = vmatpush1.msra.mxu0 0.0
    %7191 = vmatprep.subr.mxu0 0.0
    %7192 = vmatpush1.msra.mxu0 0.0
    %7193 = vmatprep.subr.mxu0 0.0
    %7194 = vmatpush1.msra.mxu0 0.0
    %7195 = vmatprep.subr.mxu0 0.0
    %7196 = vmatpush1.msra.mxu0 0.0
    %7197 = vmatprep.subr.mxu0 0.0
    %7198 = vmatpush1.msra.mxu0 0.0
    %7199 = vmatprep.subr.mxu0 0.0
    %7200 = vmatpush1.msra.mxu0 0.0
    %7201 = vmatprep.mubr.f32.mxu0 0.0
    %7202 = vmatmul.mubr.f32.gmra.mrb[0].mxu0 %v7135
    %v7203 = vpop.f32.mrb[0].mxu0
    %v7204 = vadd.f32 0.0, %v7203
    %v7205 = vpop.f32.mrb[0].mxu0
    %7206 = vdwg.mxu0
    %v7207 = vmul.f32 %v1789, %v6574
    %v7208 = vsub.f32 %v1789, %v6574
    %v7209 = vand.u32 2147483647, %v7208
    %7211 = vrot.lane.b32.xlu0 %v7209, 64
    %v7212 = vpop.permute.xlu0 %7211
    %v7214 = vsel %vm362, %v3543, %v7207
    %v7215 = vsel %vm2904, %v7214, %v3547
    %v7216 = vsel %vm2906, %v7215, %v7212
    %7217 = vmatprep.subr.mxu0 0.0
    %7218 = vmatpush1.msra.mxu0 %v158
    %7219 = vmatprep.subr.mxu0 0.0
    %7220 = vmatpush1.msra.mxu0 %v159
    %7221 = vmatprep.subr.mxu0 0.0
    %7222 = vmatpush1.msra.mxu0 %v160
    %7223 = vmatprep.subr.mxu0 0.0
    %7224 = vmatpush1.msra.mxu0 %v161
    %7225 = vmatprep.subr.mxu0 0.0
    %7226 = vmatpush1.msra.mxu0 %v162
    %7227 = vmatprep.subr.mxu0 0.0
    %7228 = vmatpush1.msra.mxu0 %v163
    %7229 = vmatprep.subr.mxu0 0.0
    %7230 = vmatpush1.msra.mxu0 %v164
    %7231 = vmatprep.subr.mxu0 0.0
    %7232 = vmatpush1.msra.mxu0 %v165
    %7233 = vmatprep.subr.mxu0 0.0
    %7234 = vmatpush1.msra.mxu0 %v166
    %7235 = vmatprep.subr.mxu0 0.0
    %7236 = vmatpush1.msra.mxu0 %v167
    %7237 = vmatprep.subr.mxu0 0.0
    %7238 = vmatpush1.msra.mxu0 %v168
    %7239 = vmatprep.subr.mxu0 0.0
    %7240 = vmatpush1.msra.mxu0 %v169
    %7241 = vmatprep.subr.mxu0 0.0
    %7242 = vmatpush1.msra.mxu0 %v170
    %7243 = vmatprep.subr.mxu0 0.0
    %7244 = vmatpush1.msra.mxu0 %v171
    %7245 = vmatprep.subr.mxu0 0.0
    %7246 = vmatpush1.msra.mxu0 %v172
    %7247 = vmatprep.subr.mxu0 0.0
    %7248 = vmatpush1.msra.mxu0 %v173
    %7249 = vmatprep.subr.mxu0 0.0
    %7250 = vmatpush1.msra.mxu0 0.0
    %7251 = vmatprep.subr.mxu0 0.0
    %7252 = vmatpush1.msra.mxu0 0.0
    %7253 = vmatprep.subr.mxu0 0.0
    %7254 = vmatpush1.msra.mxu0 0.0
    %7255 = vmatprep.subr.mxu0 0.0
    %7256 = vmatpush1.msra.mxu0 0.0
    %7257 = vmatprep.subr.mxu0 0.0
    %7258 = vmatpush1.msra.mxu0 0.0
    %7259 = vmatprep.subr.mxu0 0.0
    %7260 = vmatpush1.msra.mxu0 0.0
    %7261 = vmatprep.subr.mxu0 0.0
    %7262 = vmatpush1.msra.mxu0 0.0
    %7263 = vmatprep.subr.mxu0 0.0
    %7264 = vmatpush1.msra.mxu0 0.0
    %7265 = vmatprep.subr.mxu0 0.0
    %7266 = vmatpush1.msra.mxu0 0.0
    %7267 = vmatprep.subr.mxu0 0.0
    %7268 = vmatpush1.msra.mxu0 0.0
    %7269 = vmatprep.subr.mxu0 0.0
    %7270 = vmatpush1.msra.mxu0 0.0
    %7271 = vmatprep.subr.mxu0 0.0
    %7272 = vmatpush1.msra.mxu0 0.0
    %7273 = vmatprep.subr.mxu0 0.0
    %7274 = vmatpush1.msra.mxu0 0.0
    %7275 = vmatprep.subr.mxu0 0.0
    %7276 = vmatpush1.msra.mxu0 0.0
    %7277 = vmatprep.subr.mxu0 0.0
    %7278 = vmatpush1.msra.mxu0 0.0
    %7279 = vmatprep.subr.mxu0 0.0
    %7280 = vmatpush1.msra.mxu0 0.0
    %7281 = vmatprep.mubr.f32.mxu0 0.0
    %7282 = vmatmul.mubr.f32.gmra.mrb[0].mxu0 %v7216
    %v7283 = vpop.f32.mrb[0].mxu0
    %v7284 = vadd.f32 %v2912, %v7283
    %v7285 = vpop.f32.mrb[0].mxu0
    %7286 = vdwg.mxu0
    %v7287 = vtanh.pop %v7284
    %v7289 = vsel %vm362, %v7287, 0
    %7291 = vmatprep.subr.mxu0 0.0
    %7292 = vmatpush1.msra.mxu0 %v175
    %7293 = vmatprep.subr.mxu0 0.0
    %7294 = vmatpush1.msra.mxu0 %v176
    %7295 = vmatprep.subr.mxu0 0.0
    %7296 = vmatpush1.msra.mxu0 %v177
    %7297 = vmatprep.subr.mxu0 0.0
    %7298 = vmatpush1.msra.mxu0 %v178
    %7299 = vmatprep.subr.mxu0 0.0
    %7300 = vmatpush1.msra.mxu0 0.0
    %7301 = vmatprep.subr.mxu0 0.0
    %7302 = vmatpush1.msra.mxu0 0.0
    %7303 = vmatprep.subr.mxu0 0.0
    %7304 = vmatpush1.msra.mxu0 0.0
    %7305 = vmatprep.subr.mxu0 0.0
    %7306 = vmatpush1.msra.mxu0 0.0
    %7307 = vmatprep.subr.mxu0 0.0
    %7308 = vmatpush1.msra.mxu0 0.0
    %7309 = vmatprep.subr.mxu0 0.0
    %7310 = vmatpush1.msra.mxu0 0.0
    %7311 = vmatprep.subr.mxu0 0.0
    %7312 = vmatpush1.msra.mxu0 0.0
    %7313 = vmatprep.subr.mxu0 0.0
    %7314 = vmatpush1.msra.mxu0 0.0
    %7315 = vmatprep.subr.mxu0 0.0
    %7316 = vmatpush1.msra.mxu0 0.0
    %7317 = vmatprep.subr.mxu0 0.0
    %7318 = vmatpush1.msra.mxu0 0.0
    %7319 = vmatprep.subr.mxu0 0.0
    %7320 = vmatpush1.msra.mxu0 0.0
    %7321 = vmatprep.subr.mxu0 0.0
    %7322 = vmatpush1.msra.mxu0 0.0
    %7323 = vmatprep.subr.mxu0 0.0
    %7324 = vmatpush1.msra.mxu0 0.0
    %7325 = vmatprep.subr.mxu0 0.0
    %7326 = vmatpush1.msra.mxu0 0.0
    %7327 = vmatprep.subr.mxu0 0.0
    %7328 = vmatpush1.msra.mxu0 0.0
    %7329 = vmatprep.subr.mxu0 0.0
    %7330 = vmatpush1.msra.mxu0 0.0
    %7331 = vmatprep.subr.mxu0 0.0
    %7332 = vmatpush1.msra.mxu0 0.0
    %7333 = vmatprep.subr.mxu0 0.0
    %7334 = vmatpush1.msra.mxu0 0.0
    %7335 = vmatprep.subr.mxu0 0.0
    %7336 = vmatpush1.msra.mxu0 0.0
    %7337 = vmatprep.subr.mxu0 0.0
    %7338 = vmatpush1.msra.mxu0 0.0
    %7339 = vmatprep.subr.mxu0 0.0
    %7340 = vmatpush1.msra.mxu0 0.0
    %7341 = vmatprep.subr.mxu0 0.0
    %7342 = vmatpush1.msra.mxu0 0.0
    %7343 = vmatprep.subr.mxu0 0.0
    %7344 = vmatpush1.msra.mxu0 0.0
    %7345 = vmatprep.subr.mxu0 0.0
    %7346 = vmatpush1.msra.mxu0 0.0
    %7347 = vmatprep.subr.mxu0 0.0
    %7348 = vmatpush1.msra.mxu0 0.0
    %7349 = vmatprep.subr.mxu0 0.0
    %7350 = vmatpush1.msra.mxu0 0.0
    %7351 = vmatprep.subr.mxu0 0.0
    %7352 = vmatpush1.msra.mxu0 0.0
    %7353 = vmatprep.subr.mxu0 0.0
    %7354 = vmatpush1.msra.mxu0 0.0
    %7355 = vmatprep.mubr.f32.mxu0 0.0
    %7356 = vmatmul.mubr.f32.gmra.mrb[0].mxu0 %v7289
    %v7357 = vpop.f32.mrb[0].mxu0
    %v7358 = vadd.f32 0.0, %v7357
    %v7359 = vpop.f32.mrb[0].mxu0
    %7360 = vdwg.mxu0
    %v7361 = vmul.f32 %v1790, %v6730
    %v7362 = vsub.f32 %v1790, %v6730
    %v7363 = vand.u32 2147483647, %v7362
    %7365 = vrot.lane.b32.xlu0 %v7363, 64
    %v7366 = vpop.permute.xlu0 %7365
    %v7368 = vsel %vm362, %v3701, %v7361
    %v7369 = vsel %vm2904, %v7368, %v3705
    %v7370 = vsel %vm2906, %v7369, %v7366
    %v7372 = vrot.slane %v7370, 2
    %7374 = vmatprep.subr.mxu0 0.0
    %7375 = vmatpush1.msra.mxu0 %v158
    %7376 = vmatprep.subr.mxu0 0.0
    %7377 = vmatpush1.msra.mxu0 %v159
    %7378 = vmatprep.subr.mxu0 0.0
    %7379 = vmatpush1.msra.mxu0 %v160
    %7380 = vmatprep.subr.mxu0 0.0
    %7381 = vmatpush1.msra.mxu0 %v161
    %7382 = vmatprep.subr.mxu0 0.0
    %7383 = vmatpush1.msra.mxu0 %v162
    %7384 = vmatprep.subr.mxu0 0.0
    %7385 = vmatpush1.msra.mxu0 %v163
    %7386 = vmatprep.subr.mxu0 0.0
    %7387 = vmatpush1.msra.mxu0 %v164
    %7388 = vmatprep.subr.mxu0 0.0
    %7389 = vmatpush1.msra.mxu0 %v165
    %7390 = vmatprep.subr.mxu0 0.0
    %7391 = vmatpush1.msra.mxu0 %v166
    %7392 = vmatprep.subr.mxu0 0.0
    %7393 = vmatpush1.msra.mxu0 %v167
    %7394 = vmatprep.subr.mxu0 0.0
    %7395 = vmatpush1.msra.mxu0 %v168
    %7396 = vmatprep.subr.mxu0 0.0
    %7397 = vmatpush1.msra.mxu0 %v169
    %7398 = vmatprep.subr.mxu0 0.0
    %7399 = vmatpush1.msra.mxu0 %v170
    %7400 = vmatprep.subr.mxu0 0.0
    %7401 = vmatpush1.msra.mxu0 %v171
    %7402 = vmatprep.subr.mxu0 0.0
    %7403 = vmatpush1.msra.mxu0 %v172
    %7404 = vmatprep.subr.mxu0 0.0
    %7405 = vmatpush1.msra.mxu0 %v173
    %7406 = vmatprep.subr.mxu0 0.0
    %7407 = vmatpush1.msra.mxu0 0.0
    %7408 = vmatprep.subr.mxu0 0.0
    %7409 = vmatpush1.msra.mxu0 0.0
    %7410 = vmatprep.subr.mxu0 0.0
    %7411 = vmatpush1.msra.mxu0 0.0
    %7412 = vmatprep.subr.mxu0 0.0
    %7413 = vmatpush1.msra.mxu0 0.0
    %7414 = vmatprep.subr.mxu0 0.0
    %7415 = vmatpush1.msra.mxu0 0.0
    %7416 = vmatprep.subr.mxu0 0.0
    %7417 = vmatpush1.msra.mxu0 0.0
    %7418 = vmatprep.subr.mxu0 0.0
    %7419 = vmatpush1.msra.mxu0 0.0
    %7420 = vmatprep.subr.mxu0 0.0
    %7421 = vmatpush1.msra.mxu0 0.0
    %7422 = vmatprep.subr.mxu0 0.0
    %7423 = vmatpush1.msra.mxu0 0.0
    %7424 = vmatprep.subr.mxu0 0.0
    %7425 = vmatpush1.msra.mxu0 0.0
    %7426 = vmatprep.subr.mxu0 0.0
    %7427 = vmatpush1.msra.mxu0 0.0
    %7428 = vmatprep.subr.mxu0 0.0
    %7429 = vmatpush1.msra.mxu0 0.0
    %7430 = vmatprep.subr.mxu0 0.0
    %7431 = vmatpush1.msra.mxu0 0.0
    %7432 = vmatprep.subr.mxu0 0.0
    %7433 = vmatpush1.msra.mxu0 0.0
    %7434 = vmatprep.subr.mxu0 0.0
    %7435 = vmatpush1.msra.mxu0 0.0
    %7436 = vmatprep.subr.mxu0 0.0
    %7437 = vmatpush1.msra.mxu0 0.0
    %7438 = vmatprep.mubr.f32.mxu0 0.0
    %7439 = vmatmul.mubr.f32.gmra.mrb[0].mxu0 %v7372
    %v7440 = vpop.f32.mrb[0].mxu0
    %v7441 = vadd.f32 %v2912, %v7440
    %v7442 = vpop.f32.mrb[0].mxu0
    %7443 = vdwg.mxu0
    %v7444 = vtanh.pop %v7441
    %v7446 = vsel %vm362, %v7444, 0
    %7448 = vmatprep.subr.mxu0 0.0
    %7449 = vmatpush1.msra.mxu0 %v175
    %7450 = vmatprep.subr.mxu0 0.0
    %7451 = vmatpush1.msra.mxu0 %v176
    %7452 = vmatprep.subr.mxu0 0.0
    %7453 = vmatpush1.msra.mxu0 %v177
    %7454 = vmatprep.subr.mxu0 0.0
    %7455 = vmatpush1.msra.mxu0 %v178
    %7456 = vmatprep.subr.mxu0 0.0
    %7457 = vmatpush1.msra.mxu0 0.0
    %7458 = vmatprep.subr.mxu0 0.0
    %7459 = vmatpush1.msra.mxu0 0.0
    %7460 = vmatprep.subr.mxu0 0.0
    %7461 = vmatpush1.msra.mxu0 0.0
    %7462 = vmatprep.subr.mxu0 0.0
    %7463 = vmatpush1.msra.mxu0 0.0
    %7464 = vmatprep.subr.mxu0 0.0
    %7465 = vmatpush1.msra.mxu0 0.0
    %7466 = vmatprep.subr.mxu0 0.0
    %7467 = vmatpush1.msra.mxu0 0.0
    %7468 = vmatprep.subr.mxu0 0.0
    %7469 = vmatpush1.msra.mxu0 0.0
    %7470 = vmatprep.subr.mxu0 0.0
    %7471 = vmatpush1.msra.mxu0 0.0
    %7472 = vmatprep.subr.mxu0 0.0
    %7473 = vmatpush1.msra.mxu0 0.0
    %7474 = vmatprep.subr.mxu0 0.0
    %7475 = vmatpush1.msra.mxu0 0.0
    %7476 = vmatprep.subr.mxu0 0.0
    %7477 = vmatpush1.msra.mxu0 0.0
    %7478 = vmatprep.subr.mxu0 0.0
    %7479 = vmatpush1.msra.mxu0 0.0
    %7480 = vmatprep.subr.mxu0 0.0
    %7481 = vmatpush1.msra.mxu0 0.0
    %7482 = vmatprep.subr.mxu0 0.0
    %7483 = vmatpush1.msra.mxu0 0.0
    %7484 = vmatprep.subr.mxu0 0.0
    %7485 = vmatpush1.msra.mxu0 0.0
    %7486 = vmatprep.subr.mxu0 0.0
    %7487 = vmatpush1.msra.mxu0 0.0
    %7488 = vmatprep.subr.mxu0 0.0
    %7489 = vmatpush1.msra.mxu0 0.0
    %7490 = vmatprep.subr.mxu0 0.0
    %7491 = vmatpush1.msra.mxu0 0.0
    %7492 = vmatprep.subr.mxu0 0.0
    %7493 = vmatpush1.msra.mxu0 0.0
    %7494 = vmatprep.subr.mxu0 0.0
    %7495 = vmatpush1.msra.mxu0 0.0
    %7496 = vmatprep.subr.mxu0 0.0
    %7497 = vmatpush1.msra.mxu0 0.0
    %7498 = vmatprep.subr.mxu0 0.0
    %7499 = vmatpush1.msra.mxu0 0.0
    %7500 = vmatprep.subr.mxu0 0.0
    %7501 = vmatpush1.msra.mxu0 0.0
    %7502 = vmatprep.subr.mxu0 0.0
    %7503 = vmatpush1.msra.mxu0 0.0
    %7504 = vmatprep.subr.mxu0 0.0
    %7505 = vmatpush1.msra.mxu0 0.0
    %7506 = vmatprep.subr.mxu0 0.0
    %7507 = vmatpush1.msra.mxu0 0.0
    %7508 = vmatprep.subr.mxu0 0.0
    %7509 = vmatpush1.msra.mxu0 0.0
    %7510 = vmatprep.subr.mxu0 0.0
    %7511 = vmatpush1.msra.mxu0 0.0
    %7512 = vmatprep.mubr.f32.mxu0 0.0
    %7513 = vmatmul.mubr.f32.gmra.mrb[0].mxu0 %v7446
    %v7514 = vpop.f32.mrb[0].mxu0
    %v7515 = vadd.f32 0.0, %v7514
    %v7516 = vpop.f32.mrb[0].mxu0
    %7517 = vdwg.mxu0
    %7519 = vrot.lane.b32.xlu0 %v6886, 1
    %v7520 = vpop.permute.xlu0 %7519
    %7523 = vrot.lane.b32.xlu0 %v7045, 2
    %v7524 = vpop.permute.xlu0 %7523
    %7527 = vrot.lane.b32.xlu0 %v7204, 3
    %v7528 = vpop.permute.xlu0 %7527
    %7531 = vrot.lane.b32.xlu0 %v7358, 4
    %v7532 = vpop.permute.xlu0 %7531
    %7535 = vrot.lane.b32.xlu0 %v7515, 5
    %v7536 = vpop.permute.xlu0 %7535
    %v7538 = vsel %vm3880, %v6726, %v7520
    %v7539 = vsel %vm3882, %v7538, %v7524
    %v7540 = vsel %vm3884, %v7539, %v7528
    %v7541 = vsel %vm3886, %v7540, %v7532
    %v7542 = vsel %vm3888, %v7541, %v7536
    %v7543 = vadd.f32 %v7542, %v3897
    %v7544 = vsel %vm3900, %v7543, -inf
    %7545 = vmax.xlane.f32.xlu0 %v7544
    %v7546 = vpop.xlane.xlu0 %7545
    %v7547 = vsub.f32 %v7543, %v7546
    %v7548 = vmul.f32 %v7547, 1.442695
    %v7549 = vpow.pop %v7548
    %v7550 = vsel %vm3900, %v7549, 0.0
    %7551 = vadd.xlane.f32.xlu0 %v7550
    %v7552 = vpop.xlane.xlu0 %7551
    %v7553 = vrcp.pop %v7552
    %v7554 = vmul.f32 %v7549, %v7553
    %7556 = vset.pattern.permute.xlu0 0
    %7557 = vperm.xlu0 %7556, %v7554
    %v7558 = vpop.permute.xlu0 %7557
    %v7560 = vmul.f32 %v7558, %v4005
    %v7561 = vsub.f32 1.0, %v7554
    %7563 = vset.pattern.permute.xlu0 0
    %7564 = vperm.xlu0 %7563, %v7561
    %v7565 = vpop.permute.xlu0 %7564
    %v7567 = vmul.f32 %v7565, 0.0
    %v7568 = vadd.f32 %v7560, %v7567
    %7570 = vrot.lane.b32.xlu0 %v7568, 96
    %v7571 = vpop.permute.xlu0 %7570
    %v7572 = vsel %vm362, %v7571, 0
    %7574 = vmatprep.subr.mxu0 0.0
    %7575 = vmatpush1.msra.mxu0 %v185
    %7576 = vmatprep.subr.mxu0 0.0
    %7577 = vmatpush1.msra.mxu0 %v186
    %7578 = vmatprep.subr.mxu0 0.0
    %7579 = vmatpush1.msra.mxu0 %v187
    %7580 = vmatprep.subr.mxu0 0.0
    %7581 = vmatpush1.msra.mxu0 %v188
    %7582 = vmatprep.subr.mxu0 0.0
    %7583 = vmatpush1.msra.mxu0 0.0
    %7584 = vmatprep.subr.mxu0 0.0
    %7585 = vmatpush1.msra.mxu0 0.0
    %7586 = vmatprep.subr.mxu0 0.0
    %7587 = vmatpush1.msra.mxu0 0.0
    %7588 = vmatprep.subr.mxu0 0.0
    %7589 = vmatpush1.msra.mxu0 0.0
    %7590 = vmatprep.subr.mxu0 0.0
    %7591 = vmatpush1.msra.mxu0 0.0
    %7592 = vmatprep.subr.mxu0 0.0
    %7593 = vmatpush1.msra.mxu0 0.0
    %7594 = vmatprep.subr.mxu0 0.0
    %7595 = vmatpush1.msra.mxu0 0.0
    %7596 = vmatprep.subr.mxu0 0.0
    %7597 = vmatpush1.msra.mxu0 0.0
    %7598 = vmatprep.subr.mxu0 0.0
    %7599 = vmatpush1.msra.mxu0 0.0
    %7600 = vmatprep.subr.mxu0 0.0
    %7601 = vmatpush1.msra.mxu0 0.0
    %7602 = vmatprep.subr.mxu0 0.0
    %7603 = vmatpush1.msra.mxu0 0.0
    %7604 = vmatprep.subr.mxu0 0.0
    %7605 = vmatpush1.msra.mxu0 0.0
    %7606 = vmatprep.subr.mxu0 0.0
    %7607 = vmatpush1.msra.mxu0 0.0
    %7608 = vmatprep.subr.mxu0 0.0
    %7609 = vmatpush1.msra.mxu0 0.0
    %7610 = vmatprep.subr.mxu0 0.0
    %7611 = vmatpush1.msra.mxu0 0.0
    %7612 = vmatprep.subr.mxu0 0.0
    %7613 = vmatpush1.msra.mxu0 0.0
    %7614 = vmatprep.subr.mxu0 0.0
    %7615 = vmatpush1.msra.mxu0 0.0
    %7616 = vmatprep.subr.mxu0 0.0
    %7617 = vmatpush1.msra.mxu0 0.0
    %7618 = vmatprep.subr.mxu0 0.0
    %7619 = vmatpush1.msra.mxu0 0.0
    %7620 = vmatprep.subr.mxu0 0.0
    %7621 = vmatpush1.msra.mxu0 0.0
    %7622 = vmatprep.subr.mxu0 0.0
    %7623 = vmatpush1.msra.mxu0 0.0
    %7624 = vmatprep.subr.mxu0 0.0
    %7625 = vmatpush1.msra.mxu0 0.0
    %7626 = vmatprep.subr.mxu0 0.0
    %7627 = vmatpush1.msra.mxu0 0.0
    %7628 = vmatprep.subr.mxu0 0.0
    %7629 = vmatpush1.msra.mxu0 0.0
    %7630 = vmatprep.subr.mxu0 0.0
    %7631 = vmatpush1.msra.mxu0 0.0
    %7632 = vmatprep.subr.mxu0 0.0
    %7633 = vmatpush1.msra.mxu0 0.0
    %7634 = vmatprep.subr.mxu0 0.0
    %7635 = vmatpush1.msra.mxu0 0.0
    %7636 = vmatprep.subr.mxu0 0.0
    %7637 = vmatpush1.msra.mxu0 0.0
    %7638 = vmatprep.mubr.f32.mxu0 0.0
    %7639 = vmatmul.mubr.f32.gmra.mrb[0].mxu0 %v7572
    %v7640 = vpop.f32.mrb[0].mxu0
    %v7641 = vadd.f32 %v3916, %v7640
    %v7642 = vpop.f32.mrb[0].mxu0
    %7643 = vdwg.mxu0
    %v7644 = vadd.f32 %v2561, %v7641
    %v7645 = vxor.u32 %v7644, 2147483648
    %v7646 = vmul.f32 %v7645, 1.442695
    %v7647 = vpow.pop %v7646
    %v7648 = vadd.f32 %v7647, 1.0
    %v7649 = vrcp.pop %v7648
    %v7650 = vmul.f32 1.0, %v7649
    %7652 = vrot.lane.b32.xlu0 %v7641, 96
    %v7653 = vpop.permute.xlu0 %7652
    %v7655 = vmul.f32 %v7650, %v7653
    %7657 = vrot.lane.b32.xlu0 %v7655, 32
    %v7658 = vpop.permute.xlu0 %7657
    %v7660 = vadd.f32 %v2561, %v7658
    %v7661 = vtanh.pop %v7660
    %7662 = vset.pattern.permute.xlu0 1
    %7663 = vperm.xlu0 %7662, %v7554
    %v7664 = vpop.permute.xlu0 %7663
    %v7666 = vmul.f32 %v7664, %v7661
    %7667 = vset.pattern.permute.xlu0 1
    %7668 = vperm.xlu0 %7667, %v7561
    %v7669 = vpop.permute.xlu0 %7668
    %v7671 = vmul.f32 %v7669, %v7568
    %v7672 = vadd.f32 %v7666, %v7671
    %7674 = vrot.lane.b32.xlu0 %v7672, 96
    %v7675 = vpop.permute.xlu0 %7674
    %v7676 = vsel %vm362, %v7675, 0
    %7678 = vmatprep.subr.mxu0 0.0
    %7679 = vmatpush1.msra.mxu0 %v185
    %7680 = vmatprep.subr.mxu0 0.0
    %7681 = vmatpush1.msra.mxu0 %v186
    %7682 = vmatprep.subr.mxu0 0.0
    %7683 = vmatpush1.msra.mxu0 %v187
    %7684 = vmatprep.subr.mxu0 0.0
    %7685 = vmatpush1.msra.mxu0 %v188
    %7686 = vmatprep.subr.mxu0 0.0
    %7687 = vmatpush1.msra.mxu0 0.0
    %7688 = vmatprep.subr.mxu0 0.0
    %7689 = vmatpush1.msra.mxu0 0.0
    %7690 = vmatprep.subr.mxu0 0.0
    %7691 = vmatpush1.msra.mxu0 0.0
    %7692 = vmatprep.subr.mxu0 0.0
    %7693 = vmatpush1.msra.mxu0 0.0
    %7694 = vmatprep.subr.mxu0 0.0
    %7695 = vmatpush1.msra.mxu0 0.0
    %7696 = vmatprep.subr.mxu0 0.0
    %7697 = vmatpush1.msra.mxu0 0.0
    %7698 = vmatprep.subr.mxu0 0.0
    %7699 = vmatpush1.msra.mxu0 0.0
    %7700 = vmatprep.subr.mxu0 0.0
    %7701 = vmatpush1.msra.mxu0 0.0
    %7702 = vmatprep.subr.mxu0 0.0
    %7703 = vmatpush1.msra.mxu0 0.0
    %7704 = vmatprep.subr.mxu0 0.0
    %7705 = vmatpush1.msra.mxu0 0.0
    %7706 = vmatprep.subr.mxu0 0.0
    %7707 = vmatpush1.msra.mxu0 0.0
    %7708 = vmatprep.subr.mxu0 0.0
    %7709 = vmatpush1.msra.mxu0 0.0
    %7710 = vmatprep.subr.mxu0 0.0
    %7711 = vmatpush1.msra.mxu0 0.0
    %7712 = vmatprep.subr.mxu0 0.0
    %7713 = vmatpush1.msra.mxu0 0.0
    %7714 = vmatprep.subr.mxu0 0.0
    %7715 = vmatpush1.msra.mxu0 0.0
    %7716 = vmatprep.subr.mxu0 0.0
    %7717 = vmatpush1.msra.mxu0 0.0
    %7718 = vmatprep.subr.mxu0 0.0
    %7719 = vmatpush1.msra.mxu0 0.0
    %7720 = vmatprep.subr.mxu0 0.0
    %7721 = vmatpush1.msra.mxu0 0.0
    %7722 = vmatprep.subr.mxu0 0.0
    %7723 = vmatpush1.msra.mxu0 0.0
    %7724 = vmatprep.subr.mxu0 0.0
    %7725 = vmatpush1.msra.mxu0 0.0
    %7726 = vmatprep.subr.mxu0 0.0
    %7727 = vmatpush1.msra.mxu0 0.0
    %7728 = vmatprep.subr.mxu0 0.0
    %7729 = vmatpush1.msra.mxu0 0.0
    %7730 = vmatprep.subr.mxu0 0.0
    %7731 = vmatpush1.msra.mxu0 0.0
    %7732 = vmatprep.subr.mxu0 0.0
    %7733 = vmatpush1.msra.mxu0 0.0
    %7734 = vmatprep.subr.mxu0 0.0
    %7735 = vmatpush1.msra.mxu0 0.0
    %7736 = vmatprep.subr.mxu0 0.0
    %7737 = vmatpush1.msra.mxu0 0.0
    %7738 = vmatprep.subr.mxu0 0.0
    %7739 = vmatpush1.msra.mxu0 0.0
    %7740 = vmatprep.subr.mxu0 0.0
    %7741 = vmatpush1.msra.mxu0 0.0
    %7742 = vmatprep.mubr.f32.mxu0 0.0
    %7743 = vmatmul.mubr.f32.gmra.mrb[0].mxu0 %v7676
    %v7744 = vpop.f32.mrb[0].mxu0
    %v7745 = vadd.f32 %v3916, %v7744
    %v7746 = vpop.f32.mrb[0].mxu0
    %7747 = vdwg.mxu0
    %v7748 = vadd.f32 %v2637, %v7745
    %v7749 = vxor.u32 %v7748, 2147483648
    %v7750 = vmul.f32 %v7749, 1.442695
    %v7751 = vpow.pop %v7750
    %v7752 = vadd.f32 %v7751, 1.0
    %v7753 = vrcp.pop %v7752
    %v7754 = vmul.f32 1.0, %v7753
    %7756 = vrot.lane.b32.xlu0 %v7745, 96
    %v7757 = vpop.permute.xlu0 %7756
    %v7759 = vmul.f32 %v7754, %v7757
    %7761 = vrot.lane.b32.xlu0 %v7759, 32
    %v7762 = vpop.permute.xlu0 %7761
    %v7764 = vadd.f32 %v2637, %v7762
    %v7765 = vtanh.pop %v7764
    %7766 = vset.pattern.permute.xlu0 2
    %7767 = vperm.xlu0 %7766, %v7554
    %v7768 = vpop.permute.xlu0 %7767
    %v7770 = vmul.f32 %v7768, %v7765
    %7771 = vset.pattern.permute.xlu0 2
    %7772 = vperm.xlu0 %7771, %v7561
    %v7773 = vpop.permute.xlu0 %7772
    %v7775 = vmul.f32 %v7773, %v7672
    %v7776 = vadd.f32 %v7770, %v7775
    %7778 = vrot.lane.b32.xlu0 %v7776, 96
    %v7779 = vpop.permute.xlu0 %7778
    %v7780 = vsel %vm362, %v7779, 0
    %7782 = vmatprep.subr.mxu0 0.0
    %7783 = vmatpush1.msra.mxu0 %v185
    %7784 = vmatprep.subr.mxu0 0.0
    %7785 = vmatpush1.msra.mxu0 %v186
    %7786 = vmatprep.subr.mxu0 0.0
    %7787 = vmatpush1.msra.mxu0 %v187
    %7788 = vmatprep.subr.mxu0 0.0
    %7789 = vmatpush1.msra.mxu0 %v188
    %7790 = vmatprep.subr.mxu0 0.0
    %7791 = vmatpush1.msra.mxu0 0.0
    %7792 = vmatprep.subr.mxu0 0.0
    %7793 = vmatpush1.msra.mxu0 0.0
    %7794 = vmatprep.subr.mxu0 0.0
    %7795 = vmatpush1.msra.mxu0 0.0
    %7796 = vmatprep.subr.mxu0 0.0
    %7797 = vmatpush1.msra.mxu0 0.0
    %7798 = vmatprep.subr.mxu0 0.0
    %7799 = vmatpush1.msra.mxu0 0.0
    %7800 = vmatprep.subr.mxu0 0.0
    %7801 = vmatpush1.msra.mxu0 0.0
    %7802 = vmatprep.subr.mxu0 0.0
    %7803 = vmatpush1.msra.mxu0 0.0
    %7804 = vmatprep.subr.mxu0 0.0
    %7805 = vmatpush1.msra.mxu0 0.0
    %7806 = vmatprep.subr.mxu0 0.0
    %7807 = vmatpush1.msra.mxu0 0.0
    %7808 = vmatprep.subr.mxu0 0.0
    %7809 = vmatpush1.msra.mxu0 0.0
    %7810 = vmatprep.subr.mxu0 0.0
    %7811 = vmatpush1.msra.mxu0 0.0
    %7812 = vmatprep.subr.mxu0 0.0
    %7813 = vmatpush1.msra.mxu0 0.0
    %7814 = vmatprep.subr.mxu0 0.0
    %7815 = vmatpush1.msra.mxu0 0.0
    %7816 = vmatprep.subr.mxu0 0.0
    %7817 = vmatpush1.msra.mxu0 0.0
    %7818 = vmatprep.subr.mxu0 0.0
    %7819 = vmatpush1.msra.mxu0 0.0
    %7820 = vmatprep.subr.mxu0 0.0
    %7821 = vmatpush1.msra.mxu0 0.0
    %7822 = vmatprep.subr.mxu0 0.0
    %7823 = vmatpush1.msra.mxu0 0.0
    %7824 = vmatprep.subr.mxu0 0.0
    %7825 = vmatpush1.msra.mxu0 0.0
    %7826 = vmatprep.subr.mxu0 0.0
    %7827 = vmatpush1.msra.mxu0 0.0
    %7828 = vmatprep.subr.mxu0 0.0
    %7829 = vmatpush1.msra.mxu0 0.0
    %7830 = vmatprep.subr.mxu0 0.0
    %7831 = vmatpush1.msra.mxu0 0.0
    %7832 = vmatprep.subr.mxu0 0.0
    %7833 = vmatpush1.msra.mxu0 0.0
    %7834 = vmatprep.subr.mxu0 0.0
    %7835 = vmatpush1.msra.mxu0 0.0
    %7836 = vmatprep.subr.mxu0 0.0
    %7837 = vmatpush1.msra.mxu0 0.0
    %7838 = vmatprep.subr.mxu0 0.0
    %7839 = vmatpush1.msra.mxu0 0.0
    %7840 = vmatprep.subr.mxu0 0.0
    %7841 = vmatpush1.msra.mxu0 0.0
    %7842 = vmatprep.subr.mxu0 0.0
    %7843 = vmatpush1.msra.mxu0 0.0
    %7844 = vmatprep.subr.mxu0 0.0
    %7845 = vmatpush1.msra.mxu0 0.0
    %7846 = vmatprep.mubr.f32.mxu0 0.0
    %7847 = vmatmul.mubr.f32.gmra.mrb[0].mxu0 %v7780
    %v7848 = vpop.f32.mrb[0].mxu0
    %v7849 = vadd.f32 %v3916, %v7848
    %v7850 = vpop.f32.mrb[0].mxu0
    %7851 = vdwg.mxu0
    %v7852 = vadd.f32 %v2713, %v7849
    %v7853 = vxor.u32 %v7852, 2147483648
    %v7854 = vmul.f32 %v7853, 1.442695
    %v7855 = vpow.pop %v7854
    %v7856 = vadd.f32 %v7855, 1.0
    %v7857 = vrcp.pop %v7856
    %v7858 = vmul.f32 1.0, %v7857
    %7860 = vrot.lane.b32.xlu0 %v7849, 96
    %v7861 = vpop.permute.xlu0 %7860
    %v7863 = vmul.f32 %v7858, %v7861
    %7865 = vrot.lane.b32.xlu0 %v7863, 32
    %v7866 = vpop.permute.xlu0 %7865
    %v7868 = vadd.f32 %v2713, %v7866
    %v7869 = vtanh.pop %v7868
    %7870 = vset.pattern.permute.xlu0 3
    %7871 = vperm.xlu0 %7870, %v7554
    %v7872 = vpop.permute.xlu0 %7871
    %v7874 = vmul.f32 %v7872, %v7869
    %7875 = vset.pattern.permute.xlu0 3
    %7876 = vperm.xlu0 %7875, %v7561
    %v7877 = vpop.permute.xlu0 %7876
    %v7879 = vmul.f32 %v7877, %v7776
    %v7880 = vadd.f32 %v7874, %v7879
    %7882 = vrot.lane.b32.xlu0 %v7880, 96
    %v7883 = vpop.permute.xlu0 %7882
    %v7884 = vsel %vm362, %v7883, 0
    %7886 = vmatprep.subr.mxu0 0.0
    %7887 = vmatpush1.msra.mxu0 %v185
    %7888 = vmatprep.subr.mxu0 0.0
    %7889 = vmatpush1.msra.mxu0 %v186
    %7890 = vmatprep.subr.mxu0 0.0
    %7891 = vmatpush1.msra.mxu0 %v187
    %7892 = vmatprep.subr.mxu0 0.0
    %7893 = vmatpush1.msra.mxu0 %v188
    %7894 = vmatprep.subr.mxu0 0.0
    %7895 = vmatpush1.msra.mxu0 0.0
    %7896 = vmatprep.subr.mxu0 0.0
    %7897 = vmatpush1.msra.mxu0 0.0
    %7898 = vmatprep.subr.mxu0 0.0
    %7899 = vmatpush1.msra.mxu0 0.0
    %7900 = vmatprep.subr.mxu0 0.0
    %7901 = vmatpush1.msra.mxu0 0.0
    %7902 = vmatprep.subr.mxu0 0.0
    %7903 = vmatpush1.msra.mxu0 0.0
    %7904 = vmatprep.subr.mxu0 0.0
    %7905 = vmatpush1.msra.mxu0 0.0
    %7906 = vmatprep.subr.mxu0 0.0
    %7907 = vmatpush1.msra.mxu0 0.0
    %7908 = vmatprep.subr.mxu0 0.0
    %7909 = vmatpush1.msra.mxu0 0.0
    %7910 = vmatprep.subr.mxu0 0.0
    %7911 = vmatpush1.msra.mxu0 0.0
    %7912 = vmatprep.subr.mxu0 0.0
    %7913 = vmatpush1.msra.mxu0 0.0
    %7914 = vmatprep.subr.mxu0 0.0
    %7915 = vmatpush1.msra.mxu0 0.0
    %7916 = vmatprep.subr.mxu0 0.0
    %7917 = vmatpush1.msra.mxu0 0.0
    %7918 = vmatprep.subr.mxu0 0.0
    %7919 = vmatpush1.msra.mxu0 0.0
    %7920 = vmatprep.subr.mxu0 0.0
    %7921 = vmatpush1.msra.mxu0 0.0
    %7922 = vmatprep.subr.mxu0 0.0
    %7923 = vmatpush1.msra.mxu0 0.0
    %7924 = vmatprep.subr.mxu0 0.0
    %7925 = vmatpush1.msra.mxu0 0.0
    %7926 = vmatprep.subr.mxu0 0.0
    %7927 = vmatpush1.msra.mxu0 0.0
    %7928 = vmatprep.subr.mxu0 0.0
    %7929 = vmatpush1.msra.mxu0 0.0
    %7930 = vmatprep.subr.mxu0 0.0
    %7931 = vmatpush1.msra.mxu0 0.0
    %7932 = vmatprep.subr.mxu0 0.0
    %7933 = vmatpush1.msra.mxu0 0.0
    %7934 = vmatprep.subr.mxu0 0.0
    %7935 = vmatpush1.msra.mxu0 0.0
    %7936 = vmatprep.subr.mxu0 0.0
    %7937 = vmatpush1.msra.mxu0 0.0
    %7938 = vmatprep.subr.mxu0 0.0
    %7939 = vmatpush1.msra.mxu0 0.0
    %7940 = vmatprep.subr.mxu0 0.0
    %7941 = vmatpush1.msra.mxu0 0.0
    %7942 = vmatprep.subr.mxu0 0.0
    %7943 = vmatpush1.msra.mxu0 0.0
    %7944 = vmatprep.subr.mxu0 0.0
    %7945 = vmatpush1.msra.mxu0 0.0
    %7946 = vmatprep.subr.mxu0 0.0
    %7947 = vmatpush1.msra.mxu0 0.0
    %7948 = vmatprep.subr.mxu0 0.0
    %7949 = vmatpush1.msra.mxu0 0.0
    %7950 = vmatprep.mubr.f32.mxu0 0.0
    %7951 = vmatmul.mubr.f32.gmra.mrb[0].mxu0 %v7884
    %v7952 = vpop.f32.mrb[0].mxu0
    %v7953 = vadd.f32 %v3916, %v7952
    %v7954 = vpop.f32.mrb[0].mxu0
    %7955 = vdwg.mxu0
    %v7956 = vadd.f32 %v2788, %v7953
    %v7957 = vxor.u32 %v7956, 2147483648
    %v7958 = vmul.f32 %v7957, 1.442695
    %v7959 = vpow.pop %v7958
    %v7960 = vadd.f32 %v7959, 1.0
    %v7961 = vrcp.pop %v7960
    %v7962 = vmul.f32 1.0, %v7961
    %7964 = vrot.lane.b32.xlu0 %v7953, 96
    %v7965 = vpop.permute.xlu0 %7964
    %v7967 = vmul.f32 %v7962, %v7965
    %7969 = vrot.lane.b32.xlu0 %v7967, 32
    %v7970 = vpop.permute.xlu0 %7969
    %v7972 = vadd.f32 %v2788, %v7970
    %v7973 = vtanh.pop %v7972
    %7974 = vset.pattern.permute.xlu0 4
    %7975 = vperm.xlu0 %7974, %v7554
    %v7976 = vpop.permute.xlu0 %7975
    %v7978 = vmul.f32 %v7976, %v7973
    %7979 = vset.pattern.permute.xlu0 4
    %7980 = vperm.xlu0 %7979, %v7561
    %v7981 = vpop.permute.xlu0 %7980
    %v7983 = vmul.f32 %v7981, %v7880
    %v7984 = vadd.f32 %v7978, %v7983
    %7986 = vrot.lane.b32.xlu0 %v7984, 96
    %v7987 = vpop.permute.xlu0 %7986
    %v7988 = vsel %vm362, %v7987, 0
    %7990 = vmatprep.subr.mxu0 0.0
    %7991 = vmatpush1.msra.mxu0 %v185
    %7992 = vmatprep.subr.mxu0 0.0
    %7993 = vmatpush1.msra.mxu0 %v186
    %7994 = vmatprep.subr.mxu0 0.0
    %7995 = vmatpush1.msra.mxu0 %v187
    %7996 = vmatprep.subr.mxu0 0.0
    %7997 = vmatpush1.msra.mxu0 %v188
    %7998 = vmatprep.subr.mxu0 0.0
    %7999 = vmatpush1.msra.mxu0 0.0
    %8000 = vmatprep.subr.mxu0 0.0
    %8001 = vmatpush1.msra.mxu0 0.0
    %8002 = vmatprep.subr.mxu0 0.0
    %8003 = vmatpush1.msra.mxu0 0.0
    %8004 = vmatprep.subr.mxu0 0.0
    %8005 = vmatpush1.msra.mxu0 0.0
    %8006 = vmatprep.subr.mxu0 0.0
    %8007 = vmatpush1.msra.mxu0 0.0
    %8008 = vmatprep.subr.mxu0 0.0
    %8009 = vmatpush1.msra.mxu0 0.0
    %8010 = vmatprep.subr.mxu0 0.0
    %8011 = vmatpush1.msra.mxu0 0.0
    %8012 = vmatprep.subr.mxu0 0.0
    %8013 = vmatpush1.msra.mxu0 0.0
    %8014 = vmatprep.subr.mxu0 0.0
    %8015 = vmatpush1.msra.mxu0 0.0
    %8016 = vmatprep.subr.mxu0 0.0
    %8017 = vmatpush1.msra.mxu0 0.0
    %8018 = vmatprep.subr.mxu0 0.0
    %8019 = vmatpush1.msra.mxu0 0.0
    %8020 = vmatprep.subr.mxu0 0.0
    %8021 = vmatpush1.msra.mxu0 0.0
    %8022 = vmatprep.subr.mxu0 0.0
    %8023 = vmatpush1.msra.mxu0 0.0
    %8024 = vmatprep.subr.mxu0 0.0
    %8025 = vmatpush1.msra.mxu0 0.0
    %8026 = vmatprep.subr.mxu0 0.0
    %8027 = vmatpush1.msra.mxu0 0.0
    %8028 = vmatprep.subr.mxu0 0.0
    %8029 = vmatpush1.msra.mxu0 0.0
    %8030 = vmatprep.subr.mxu0 0.0
    %8031 = vmatpush1.msra.mxu0 0.0
    %8032 = vmatprep.subr.mxu0 0.0
    %8033 = vmatpush1.msra.mxu0 0.0
    %8034 = vmatprep.subr.mxu0 0.0
    %8035 = vmatpush1.msra.mxu0 0.0
    %8036 = vmatprep.subr.mxu0 0.0
    %8037 = vmatpush1.msra.mxu0 0.0
    %8038 = vmatprep.subr.mxu0 0.0
    %8039 = vmatpush1.msra.mxu0 0.0
    %8040 = vmatprep.subr.mxu0 0.0
    %8041 = vmatpush1.msra.mxu0 0.0
    %8042 = vmatprep.subr.mxu0 0.0
    %8043 = vmatpush1.msra.mxu0 0.0
    %8044 = vmatprep.subr.mxu0 0.0
    %8045 = vmatpush1.msra.mxu0 0.0
    %8046 = vmatprep.subr.mxu0 0.0
    %8047 = vmatpush1.msra.mxu0 0.0
    %8048 = vmatprep.subr.mxu0 0.0
    %8049 = vmatpush1.msra.mxu0 0.0
    %8050 = vmatprep.subr.mxu0 0.0
    %8051 = vmatpush1.msra.mxu0 0.0
    %8052 = vmatprep.subr.mxu0 0.0
    %8053 = vmatpush1.msra.mxu0 0.0
    %8054 = vmatprep.mubr.f32.mxu0 0.0
    %8055 = vmatmul.mubr.f32.gmra.mrb[0].mxu0 %v7988
    %v8056 = vpop.f32.mrb[0].mxu0
    %v8057 = vadd.f32 %v3916, %v8056
    %v8058 = vpop.f32.mrb[0].mxu0
    %8059 = vdwg.mxu0
    %v8060 = vadd.f32 %v2864, %v8057
    %v8061 = vxor.u32 %v8060, 2147483648
    %v8062 = vmul.f32 %v8061, 1.442695
    %v8063 = vpow.pop %v8062
    %v8064 = vadd.f32 %v8063, 1.0
    %v8065 = vrcp.pop %v8064
    %v8066 = vmul.f32 1.0, %v8065
    %8068 = vrot.lane.b32.xlu0 %v8057, 96
    %v8069 = vpop.permute.xlu0 %8068
    %v8071 = vmul.f32 %v8066, %v8069
    %8073 = vrot.lane.b32.xlu0 %v8071, 32
    %v8074 = vpop.permute.xlu0 %8073
    %v8076 = vadd.f32 %v2864, %v8074
    %v8077 = vtanh.pop %v8076
    %8078 = vset.pattern.permute.xlu0 5
    %8079 = vperm.xlu0 %8078, %v7554
    %v8080 = vpop.permute.xlu0 %8079
    %v8082 = vmul.f32 %v8080, %v8077
    %8083 = vset.pattern.permute.xlu0 5
    %8084 = vperm.xlu0 %8083, %v7561
    %v8085 = vpop.permute.xlu0 %8084
    %v8087 = vmul.f32 %v8085, %v7984
    %v8088 = vadd.f32 %v8082, %v8087
    %8089 = vrot.lane.b32.xlu0 %v6574, 96
    %v8090 = vpop.permute.xlu0 %8089
    %v8092 = vsel %vm362, %v8090, %v8088
    %v8093 = vsel %vm2904, %v8092, %v4544
    %v8095 = vsel %vm2906, %v8093, 0
    %8097 = vmatprep.subr.mxu0 0.0
    %8098 = vmatpush1.msra.mxu0 %v190
    %8099 = vmatprep.subr.mxu0 0.0
    %8100 = vmatpush1.msra.mxu0 %v191
    %8101 = vmatprep.subr.mxu0 0.0
    %8102 = vmatpush1.msra.mxu0 %v192
    %8103 = vmatprep.subr.mxu0 0.0
    %8104 = vmatpush1.msra.mxu0 %v193
    %8105 = vmatprep.subr.mxu0 0.0
    %8106 = vmatpush1.msra.mxu0 %v194
    %8107 = vmatprep.subr.mxu0 0.0
    %8108 = vmatpush1.msra.mxu0 %v195
    %8109 = vmatprep.subr.mxu0 0.0
    %8110 = vmatpush1.msra.mxu0 %v196
    %8111 = vmatprep.subr.mxu0 0.0
    %8112 = vmatpush1.msra.mxu0 %v197
    %8113 = vmatprep.subr.mxu0 0.0
    %8114 = vmatpush1.msra.mxu0 %v198
    %8115 = vmatprep.subr.mxu0 0.0
    %8116 = vmatpush1.msra.mxu0 %v199
    %8117 = vmatprep.subr.mxu0 0.0
    %8118 = vmatpush1.msra.mxu0 %v200
    %8119 = vmatprep.subr.mxu0 0.0
    %8120 = vmatpush1.msra.mxu0 %v201
    %8121 = vmatprep.subr.mxu0 0.0
    %8122 = vmatpush1.msra.mxu0 0.0
    %8123 = vmatprep.subr.mxu0 0.0
    %8124 = vmatpush1.msra.mxu0 0.0
    %8125 = vmatprep.subr.mxu0 0.0
    %8126 = vmatpush1.msra.mxu0 0.0
    %8127 = vmatprep.subr.mxu0 0.0
    %8128 = vmatpush1.msra.mxu0 0.0
    %8129 = vmatprep.subr.mxu0 0.0
    %8130 = vmatpush1.msra.mxu0 0.0
    %8131 = vmatprep.subr.mxu0 0.0
    %8132 = vmatpush1.msra.mxu0 0.0
    %8133 = vmatprep.subr.mxu0 0.0
    %8134 = vmatpush1.msra.mxu0 0.0
    %8135 = vmatprep.subr.mxu0 0.0
    %8136 = vmatpush1.msra.mxu0 0.0
    %8137 = vmatprep.subr.mxu0 0.0
    %8138 = vmatpush1.msra.mxu0 0.0
    %8139 = vmatprep.subr.mxu0 0.0
    %8140 = vmatpush1.msra.mxu0 0.0
    %8141 = vmatprep.subr.mxu0 0.0
    %8142 = vmatpush1.msra.mxu0 0.0
    %8143 = vmatprep.subr.mxu0 0.0
    %8144 = vmatpush1.msra.mxu0 0.0
    %8145 = vmatprep.subr.mxu0 0.0
    %8146 = vmatpush1.msra.mxu0 0.0
    %8147 = vmatprep.subr.mxu0 0.0
    %8148 = vmatpush1.msra.mxu0 0.0
    %8149 = vmatprep.subr.mxu0 0.0
    %8150 = vmatpush1.msra.mxu0 0.0
    %8151 = vmatprep.subr.mxu0 0.0
    %8152 = vmatpush1.msra.mxu0 0.0
    %8153 = vmatprep.subr.mxu0 0.0
    %8154 = vmatpush1.msra.mxu0 0.0
    %8155 = vmatprep.subr.mxu0 0.0
    %8156 = vmatpush1.msra.mxu0 0.0
    %8157 = vmatprep.subr.mxu0 0.0
    %8158 = vmatpush1.msra.mxu0 0.0
    %8159 = vmatprep.subr.mxu0 0.0
    %8160 = vmatpush1.msra.mxu0 0.0
    %8161 = vmatprep.mubr.f32.mxu0 0.0
    %8162 = vmatmul.mubr.f32.gmra.mrb[0].mxu0 %v8095
    %v8163 = vpop.f32.mrb[0].mxu0
    %v8164 = vadd.f32 %v4552, %v8163
    %v8165 = vpop.f32.mrb[0].mxu0
    %8166 = vdwg.mxu0
    %v8167 = vmax.f32 %v8164, 0.0
    %v8169 = vsel %vm362, %v8167, 0
    %8171 = vmatprep.subr.mxu0 0.0
    %8172 = vmatpush1.msra.mxu0 %v153
    %8173 = vmatprep.subr.mxu0 0.0
    %8174 = vmatpush1.msra.mxu0 %v154
    %8175 = vmatprep.subr.mxu0 0.0
    %8176 = vmatpush1.msra.mxu0 %v155
    %8177 = vmatprep.subr.mxu0 0.0
    %8178 = vmatpush1.msra.mxu0 %v156
    %8179 = vmatprep.subr.mxu0 0.0
    %8180 = vmatpush1.msra.mxu0 0.0
    %8181 = vmatprep.subr.mxu0 0.0
    %8182 = vmatpush1.msra.mxu0 0.0
    %8183 = vmatprep.subr.mxu0 0.0
    %8184 = vmatpush1.msra.mxu0 0.0
    %8185 = vmatprep.subr.mxu0 0.0
    %8186 = vmatpush1.msra.mxu0 0.0
    %8187 = vmatprep.subr.mxu0 0.0
    %8188 = vmatpush1.msra.mxu0 0.0
    %8189 = vmatprep.subr.mxu0 0.0
    %8190 = vmatpush1.msra.mxu0 0.0
    %8191 = vmatprep.subr.mxu0 0.0
    %8192 = vmatpush1.msra.mxu0 0.0
    %8193 = vmatprep.subr.mxu0 0.0
    %8194 = vmatpush1.msra.mxu0 0.0
    %8195 = vmatprep.subr.mxu0 0.0
    %8196 = vmatpush1.msra.mxu0 0.0
    %8197 = vmatprep.subr.mxu0 0.0
    %8198 = vmatpush1.msra.mxu0 0.0
    %8199 = vmatprep.subr.mxu0 0.0
    %8200 = vmatpush1.msra.mxu0 0.0
    %8201 = vmatprep.subr.mxu0 0.0
    %8202 = vmatpush1.msra.mxu0 0.0
    %8203 = vmatprep.subr.mxu0 0.0
    %8204 = vmatpush1.msra.mxu0 0.0
    %8205 = vmatprep.subr.mxu0 0.0
    %8206 = vmatpush1.msra.mxu0 0.0
    %8207 = vmatprep.subr.mxu0 0.0
    %8208 = vmatpush1.msra.mxu0 0.0
    %8209 = vmatprep.subr.mxu0 0.0
    %8210 = vmatpush1.msra.mxu0 0.0
    %8211 = vmatprep.subr.mxu0 0.0
    %8212 = vmatpush1.msra.mxu0 0.0
    %8213 = vmatprep.subr.mxu0 0.0
    %8214 = vmatpush1.msra.mxu0 0.0
    %8215 = vmatprep.subr.mxu0 0.0
    %8216 = vmatpush1.msra.mxu0 0.0
    %8217 = vmatprep.subr.mxu0 0.0
    %8218 = vmatpush1.msra.mxu0 0.0
    %8219 = vmatprep.subr.mxu0 0.0
    %8220 = vmatpush1.msra.mxu0 0.0
    %8221 = vmatprep.subr.mxu0 0.0
    %8222 = vmatpush1.msra.mxu0 0.0
    %8223 = vmatprep.subr.mxu0 0.0
    %8224 = vmatpush1.msra.mxu0 0.0
    %8225 = vmatprep.subr.mxu0 0.0
    %8226 = vmatpush1.msra.mxu0 0.0
    %8227 = vmatprep.subr.mxu0 0.0
    %8228 = vmatpush1.msra.mxu0 0.0
    %8229 = vmatprep.subr.mxu0 0.0
    %8230 = vmatpush1.msra.mxu0 0.0
    %8231 = vmatprep.subr.mxu0 0.0
    %8232 = vmatpush1.msra.mxu0 0.0
    %8233 = vmatprep.subr.mxu0 0.0
    %8234 = vmatpush1.msra.mxu0 0.0
    %8235 = vmatprep.mubr.f32.mxu0 0.0
    %8236 = vmatmul.mubr.f32.gmra.mrb[0].mxu0 %v8169
    %v8237 = vpop.f32.mrb[0].mxu0
    %v8238 = vadd.f32 %v4632, %v8237
    %v8239 = vpop.f32.mrb[0].mxu0
    %8240 = vdwg.mxu0
    %v8241 = vsel %vm362, %v8090, 0
    %8243 = vmatprep.subr.mxu0 0.0
    %8244 = vmatpush1.msra.mxu0 %v148
    %8245 = vmatprep.subr.mxu0 0.0
    %8246 = vmatpush1.msra.mxu0 %v149
    %8247 = vmatprep.subr.mxu0 0.0
    %8248 = vmatpush1.msra.mxu0 %v150
    %8249 = vmatprep.subr.mxu0 0.0
    %8250 = vmatpush1.msra.mxu0 %v151
    %8251 = vmatprep.subr.mxu0 0.0
    %8252 = vmatpush1.msra.mxu0 0.0
    %8253 = vmatprep.subr.mxu0 0.0
    %8254 = vmatpush1.msra.mxu0 0.0
    %8255 = vmatprep.subr.mxu0 0.0
    %8256 = vmatpush1.msra.mxu0 0.0
    %8257 = vmatprep.subr.mxu0 0.0
    %8258 = vmatpush1.msra.mxu0 0.0
    %8259 = vmatprep.subr.mxu0 0.0
    %8260 = vmatpush1.msra.mxu0 0.0
    %8261 = vmatprep.subr.mxu0 0.0
    %8262 = vmatpush1.msra.mxu0 0.0
    %8263 = vmatprep.subr.mxu0 0.0
    %8264 = vmatpush1.msra.mxu0 0.0
    %8265 = vmatprep.subr.mxu0 0.0
    %8266 = vmatpush1.msra.mxu0 0.0
    %8267 = vmatprep.subr.mxu0 0.0
    %8268 = vmatpush1.msra.mxu0 0.0
    %8269 = vmatprep.subr.mxu0 0.0
    %8270 = vmatpush1.msra.mxu0 0.0
    %8271 = vmatprep.subr.mxu0 0.0
    %8272 = vmatpush1.msra.mxu0 0.0
    %8273 = vmatprep.subr.mxu0 0.0
    %8274 = vmatpush1.msra.mxu0 0.0
    %8275 = vmatprep.subr.mxu0 0.0
    %8276 = vmatpush1.msra.mxu0 0.0
    %8277 = vmatprep.subr.mxu0 0.0
    %8278 = vmatpush1.msra.mxu0 0.0
    %8279 = vmatprep.subr.mxu0 0.0
    %8280 = vmatpush1.msra.mxu0 0.0
    %8281 = vmatprep.subr.mxu0 0.0
    %8282 = vmatpush1.msra.mxu0 0.0
    %8283 = vmatprep.subr.mxu0 0.0
    %8284 = vmatpush1.msra.mxu0 0.0
    %8285 = vmatprep.subr.mxu0 0.0
    %8286 = vmatpush1.msra.mxu0 0.0
    %8287 = vmatprep.subr.mxu0 0.0
    %8288 = vmatpush1.msra.mxu0 0.0
    %8289 = vmatprep.subr.mxu0 0.0
    %8290 = vmatpush1.msra.mxu0 0.0
    %8291 = vmatprep.subr.mxu0 0.0
    %8292 = vmatpush1.msra.mxu0 0.0
    %8293 = vmatprep.subr.mxu0 0.0
    %8294 = vmatpush1.msra.mxu0 0.0
    %8295 = vmatprep.subr.mxu0 0.0
    %8296 = vmatpush1.msra.mxu0 0.0
    %8297 = vmatprep.subr.mxu0 0.0
    %8298 = vmatpush1.msra.mxu0 0.0
    %8299 = vmatprep.subr.mxu0 0.0
    %8300 = vmatpush1.msra.mxu0 0.0
    %8301 = vmatprep.subr.mxu0 0.0
    %8302 = vmatpush1.msra.mxu0 0.0
    %8303 = vmatprep.subr.mxu0 0.0
    %8304 = vmatpush1.msra.mxu0 0.0
    %8305 = vmatprep.subr.mxu0 0.0
    %8306 = vmatpush1.msra.mxu0 0.0
    %8307 = vmatprep.mubr.f32.mxu0 0.0
    %8308 = vmatmul.mubr.f32.gmra.mrb[0].mxu0 %v8241
    %v8309 = vpop.f32.mrb[0].mxu0
    %v8310 = vadd.f32 %v4711, %v8309
    %v8311 = vpop.f32.mrb[0].mxu0
    %8312 = vdwg.mxu0
    %v8313 = vadd.f32 %v8238, %v8310
    %v8314 = vxor.u32 %v8313, 2147483648
    %v8315 = vmul.f32 %v8314, 1.442695
    %v8316 = vpow.pop %v8315
    %v8317 = vadd.f32 %v8316, 1.0
    %v8318 = vrcp.pop %v8317
    %v8319 = vmul.f32 1.0, %v8318
    %8321 = vrot.lane.b32.xlu0 %v8310, 64
    %v8322 = vpop.permute.xlu0 %8321
    %v8324 = vmul.f32 %v8319, %v8322
    %8326 = vrot.lane.b32.xlu0 %v8324, 64
    %v8327 = vpop.permute.xlu0 %8326
    %v8329 = vadd.f32 %v8238, %v8327
    %v8330 = vtanh.pop %v8329
    %v8331 = vsub.f32 1.0, %v8319
    %8333 = vrot.lane.b32.xlu0 %v8330, 96
    %v8334 = vpop.permute.xlu0 %8333
    %v8336 = vmul.f32 %v8331, %v8334
    %v8337 = vmul.f32 %v8319, %v6574
    %v8338 = vadd.f32 %v8336, %v8337
    %8340 = vrot.lane.b32.xlu0 %v8338, 96
    %v8341 = vpop.permute.xlu0 %8340
    %v8343 = vsel %vm362, %v8341, %v2406
    %v8345 = vlaneseq
    %v8346 = vshrl.u32 %v8345, 7
    %v8347 = vsub.s32 0, %v8346
    %v8348 = vrot.slane %v211, %v8347
    %v8351 = vsel %vm2904, %v8343, 0
    %8353 = vmatprep.subr.mxu0 0.0
    %8354 = vmatpush1.msra.mxu0 %v203
    %8355 = vmatprep.subr.mxu0 0.0
    %8356 = vmatpush1.msra.mxu0 %v204
    %8357 = vmatprep.subr.mxu0 0.0
    %8358 = vmatpush1.msra.mxu0 %v205
    %8359 = vmatprep.subr.mxu0 0.0
    %8360 = vmatpush1.msra.mxu0 %v206
    %8361 = vmatprep.subr.mxu0 0.0
    %8362 = vmatpush1.msra.mxu0 %v207
    %8363 = vmatprep.subr.mxu0 0.0
    %8364 = vmatpush1.msra.mxu0 %v208
    %8365 = vmatprep.subr.mxu0 0.0
    %8366 = vmatpush1.msra.mxu0 %v209
    %8367 = vmatprep.subr.mxu0 0.0
    %8368 = vmatpush1.msra.mxu0 %v210
    %8369 = vmatprep.subr.mxu0 0.0
    %8370 = vmatpush1.msra.mxu0 0.0
    %8371 = vmatprep.subr.mxu0 0.0
    %8372 = vmatpush1.msra.mxu0 0.0
    %8373 = vmatprep.subr.mxu0 0.0
    %8374 = vmatpush1.msra.mxu0 0.0
    %8375 = vmatprep.subr.mxu0 0.0
    %8376 = vmatpush1.msra.mxu0 0.0
    %8377 = vmatprep.subr.mxu0 0.0
    %8378 = vmatpush1.msra.mxu0 0.0
    %8379 = vmatprep.subr.mxu0 0.0
    %8380 = vmatpush1.msra.mxu0 0.0
    %8381 = vmatprep.subr.mxu0 0.0
    %8382 = vmatpush1.msra.mxu0 0.0
    %8383 = vmatprep.subr.mxu0 0.0
    %8384 = vmatpush1.msra.mxu0 0.0
    %8385 = vmatprep.subr.mxu0 0.0
    %8386 = vmatpush1.msra.mxu0 0.0
    %8387 = vmatprep.subr.mxu0 0.0
    %8388 = vmatpush1.msra.mxu0 0.0
    %8389 = vmatprep.subr.mxu0 0.0
    %8390 = vmatpush1.msra.mxu0 0.0
    %8391 = vmatprep.subr.mxu0 0.0
    %8392 = vmatpush1.msra.mxu0 0.0
    %8393 = vmatprep.subr.mxu0 0.0
    %8394 = vmatpush1.msra.mxu0 0.0
    %8395 = vmatprep.subr.mxu0 0.0
    %8396 = vmatpush1.msra.mxu0 0.0
    %8397 = vmatprep.subr.mxu0 0.0
    %8398 = vmatpush1.msra.mxu0 0.0
    %8399 = vmatprep.subr.mxu0 0.0
    %8400 = vmatpush1.msra.mxu0 0.0
    %8401 = vmatprep.subr.mxu0 0.0
    %8402 = vmatpush1.msra.mxu0 0.0
    %8403 = vmatprep.subr.mxu0 0.0
    %8404 = vmatpush1.msra.mxu0 0.0
    %8405 = vmatprep.subr.mxu0 0.0
    %8406 = vmatpush1.msra.mxu0 0.0
    %8407 = vmatprep.subr.mxu0 0.0
    %8408 = vmatpush1.msra.mxu0 0.0
    %8409 = vmatprep.subr.mxu0 0.0
    %8410 = vmatpush1.msra.mxu0 0.0
    %8411 = vmatprep.subr.mxu0 0.0
    %8412 = vmatpush1.msra.mxu0 0.0
    %8413 = vmatprep.subr.mxu0 0.0
    %8414 = vmatpush1.msra.mxu0 0.0
    %8415 = vmatprep.subr.mxu0 0.0
    %8416 = vmatpush1.msra.mxu0 0.0
    %8417 = vmatprep.mubr.f32.mxu0 0.0
    %8418 = vmatmul.mubr.f32.gmra.mrb[0].mxu0 %v8351
    %v8419 = vpop.f32.mrb[0].mxu0
    %v8420 = vadd.f32 %v8348, %v8419
    %v8421 = vpop.f32.mrb[0].mxu0
    %8422 = vdwg.mxu0
    %vm8423 = vcmask 189440
    %8424 = vst.msk [vmem:[#allocation3] sm:$0x3] %vm8423, %v8420
    // Predicated region
    $region126: #{dmn_forward.1} parent=1 // pred_check
      _
    $region127: #{dmn_forward.1} parent=1 // pred_check_branch
      %8426 = sbr.rel (0) target = $region129
    $region128: #{dmn_forward.1} parent=1 // pred_region
      %s8428 = ssub.s32 32, 32
      %8429 = vsyncadd [#allocation4], %s8428
      %s8431 = sshll.u32 [#allocation3], 4
      %s8432 = int_to_ptr.vmem [resolvable:$true] %s8431
      %8434 = dma.vmem_to_hbm [thread:$0]  %s8432, 32, %s63, [#allocation4]
    $region129: #{dmn_forward.1} parent=1 // pred_fallthru
      _
    // Predicated region
    $region130: #{dmn_forward.1} parent=1 // pred_check
      _
    $region131: #{dmn_forward.1} parent=1 // pred_check_branch
      %8436 = sbr.rel (0) target = $region133
    $region132: #{dmn_forward.1} parent=1 // pred_region
      %8437 = dma.done [#allocation4], 32
    $region133: #{dmn_forward.1} parent=1 // pred_fallthru
      _
    %8438 = vsyncpa [#allocation4], 1

</llo_original>
